<compile_context>
chip_gen: v5e
topology: v5e:2x2
jax: 0.10.0
libtpu: 0.0.40
codegen_flags: <defaults>
</compile_context>

<pallas_src>
import jax
import jax.numpy as jnp
from jax.experimental import pallas as pl
from jax.experimental.pallas import tpu as pltpu

IN_FEATURES = 256 * 256          # 65536
OUT_FEATURES = 2

_VMEM_BUDGET_BYTES = 20 * 1024 * 1024   # double-buffered x + W blocks budget
_VMEM_LIMIT_BYTES = 32 * 1024 * 1024    # scoped limit (safe on v5e/v6e/v7x)


def _choose_tiles(batch):
    """Pick (b_tile, k_tile) so double-buffered x + W blocks fit the budget."""
    b_tile = batch if batch <= 256 else 256
    b_pad = ((max(b_tile, 8) + 7) // 8) * 8          # sublane padding of x rows
    k_tile = IN_FEATURES
    # per K step: 2 buffers * (x block (b_pad, k) + W block (8, k)), f32
    while k_tile > 512 and 2 * 4 * k_tile * (b_pad + 8) > _VMEM_BUDGET_BYTES:
        k_tile //= 2
    return b_tile, k_tile


def _linear_logsoftmax_kernel(x_ref, w_ref, b_ref, o_ref):
    """grid = (batch tiles [parallel], K tiles [arbitrary / reduction])."""
    k = pl.program_id(1)
    nb = o_ref.shape[0]
    col = jax.lax.broadcasted_iota(jnp.int32, (nb, OUT_FEATURES), 1)

    @pl.when(k == 0)
    def _():
        # init the VMEM-resident output accumulator with the bias
        o_ref[...] = jnp.where(col == 0, b_ref[0], b_ref[1]).astype(jnp.float32)

    x = x_ref[...].astype(jnp.float32)        # (nb, k_tile)
    w = w_ref[...].astype(jnp.float32)        # (2, k_tile)  lane-dense along K
    p0 = jnp.sum(x * w[0:1, :], axis=-1, keepdims=True)   # (nb, 1)
    p1 = jnp.sum(x * w[1:2, :], axis=-1, keepdims=True)   # (nb, 1)
    o_ref[...] += jnp.where(col == 0, p0, p1)              # (nb, 2)

    @pl.when(k == pl.num_programs(1) - 1)
    def _():
        logits = o_ref[...]
        m = jnp.max(logits, axis=-1, keepdims=True)
        shifted = logits - m
        lse = jnp.log(jnp.sum(jnp.exp(shifted), axis=-1, keepdims=True))
        o_ref[...] = shifted - lse


@jax.jit
def hybrid_model_forward(x, weight, bias):
    """x: (B, 256, 256); weight: (2, 65536) [PyTorch layout]; bias: (2,)."""
    b = x.shape[0]
    x2d = x.reshape(b, IN_FEATURES)
    b_tile, k_tile = _choose_tiles(b)
    assert IN_FEATURES % k_tile == 0, "k_tile must divide IN_FEATURES"
    n_b = pl.cdiv(b, b_tile)
    n_k = IN_FEATURES // k_tile

    cost = pl.CostEstimate(
        flops=2 * b * IN_FEATURES * OUT_FEATURES,
        transcendentals=3 * b * OUT_FEATURES,
        bytes_accessed=(x2d.size * x2d.dtype.itemsize
                        + weight.size * weight.dtype.itemsize
                        + b * OUT_FEATURES * 4),
    )

    grid_spec = pltpu.PrefetchScalarGridSpec(
        num_scalar_prefetch=0,
        grid=(n_b, n_k),
        in_specs=[
            pl.BlockSpec((b_tile, k_tile), lambda i, k: (i, k)),          # x
            pl.BlockSpec((OUT_FEATURES, k_tile), lambda i, k: (0, k)),    # W
            pl.BlockSpec(memory_space=pltpu.MemorySpace.SMEM),            # bias
        ],
        out_specs=pl.BlockSpec((b_tile, OUT_FEATURES), lambda i, k: (i, 0)),
    )

    return pl.pallas_call(
        _linear_logsoftmax_kernel,
        out_shape=jax.ShapeDtypeStruct((b, OUT_FEATURES), jnp.float32),
        grid_spec=grid_spec,
        compiler_params=pltpu.CompilerParams(
            dimension_semantics=("parallel", "arbitrary"),
            vmem_limit_bytes=_VMEM_LIMIT_BYTES,
        ),
        cost_estimate=cost,
    )(x2d, weight, bias)


def init_params(key):
    """Deterministic init mirroring torch.nn.Linear default (uniform +-1/sqrt(fan_in))."""
    kw, kb = jax.random.split(key)
    bound = 1.0 / jnp.sqrt(jnp.float32(IN_FEATURES))
    # native PyTorch Linear layout: (out_features, in_features)
    weight = jax.random.uniform(
        kw, (OUT_FEATURES, IN_FEATURES), jnp.float32, -bound, bound
    )
    bias = jax.random.uniform(kb, (OUT_FEATURES,), jnp.float32, -bound, bound)
    return weight, bias


def reference_forward(x, weight, bias):
    x2d = x.reshape(x.shape[0], IN_FEATURES)
    logits = jnp.dot(x2d, weight.T, precision=jax.lax.Precision.HIGHEST) + bias
    return jax.nn.log_softmax(logits, axis=-1)


if __name__ == "__main__":
    key = jax.random.PRNGKey(0)
    k_x, k_p = jax.random.split(key)

    batch = 2
    x = jax.random.normal(k_x, (batch, 256, 256), jnp.float32)
    weight, bias = init_params(k_p)

    out = hybrid_model_forward(x, weight, bias)
    out = jax.block_until_ready(out)

    ref = reference_forward(x, weight, bias)
    assert out.shape == (batch, OUT_FEATURES)
    assert jnp.allclose(out, ref, atol=2e-4, rtol=2e-4), (out, ref)

    print("KERNEL_OK")
</pallas_src>

<mosaic_0001>
module attributes {stable_mosaic.version = 11 : i64} {
  func.func @_linear_logsoftmax_kernel(%arg0: i32, %arg1: i32, %arg2: memref<2x65536xf32, #tpu.memory_space<vmem>>, %arg3: memref<2x65536xf32, #tpu.memory_space<vmem>>, %arg4: memref<2xf32, #tpu.memory_space<smem>>, %arg5: memref<2x2xf32, #tpu.memory_space<vmem>>) attributes {dimension_semantics = [#tpu.dimension_semantics<parallel>, #tpu.dimension_semantics<arbitrary>], iteration_bounds = array<i64: 1, 1>, scalar_prefetch = 0 : i64, scratch_operands = 0 : i64, tpu.core_type = #tpu.core_type<tc>, window_params = [{transform_indices = @transform_0, window_bounds = array<i64: 2, 65536>}, {transform_indices = @transform_1, window_bounds = array<i64: 2, 65536>}, {transform_indices = @transform_2, window_bounds = array<i64: 2>}, {transform_indices = @transform_3, window_bounds = array<i64: 2, 2>}]} {
    %0 = tpu.iota {dimensions = array<i32: 1>} : vector<2x2xi32>
    %c0_i32 = arith.constant 0 : i32
    %1 = arith.cmpi eq, %arg1, %c0_i32 : i32
    %2 = arith.extui %1 : i1 to i32
    %c0_i32_0 = arith.constant 0 : i32
    %3 = arith.cmpi ne, %2, %c0_i32_0 : i32
    scf.if %3 {
      %c0_i32_12 = arith.constant 0 : i32
      %29 = vector.broadcast %c0_i32_12 : i32 to vector<2x2xi32>
      %30 = arith.cmpi eq, %0, %29 : vector<2x2xi32>
      %c0_13 = arith.constant 0 : index
      %31 = memref.load %arg4[%c0_13] : memref<2xf32, #tpu.memory_space<smem>>
      %c1 = arith.constant 1 : index
      %32 = memref.load %arg4[%c1] : memref<2xf32, #tpu.memory_space<smem>>
      %33 = vector.broadcast %31 : f32 to vector<2x2xf32>
      %34 = vector.broadcast %32 : f32 to vector<2x2xf32>
      %35 = arith.select %30, %33, %34 : vector<2x2xi1>, vector<2x2xf32>
      %c0_14 = arith.constant 0 : index
      %c0_15 = arith.constant 0 : index
      %36 = vector.load %arg5[%c0_14, %c0_15] : memref<2x2xf32, #tpu.memory_space<vmem>>, vector<2x2xf32>
      tpu.vector_store %arg5[%c0_14, %c0_15], %35 {strides = array<i32>} : memref<2x2xf32, #tpu.memory_space<vmem>>, vector<2x2xf32>,
    } else {
    }
    %c0 = arith.constant 0 : index
    %c0_1 = arith.constant 0 : index
    %4 = vector.load %arg2[%c0, %c0_1] : memref<2x65536xf32, #tpu.memory_space<vmem>>, vector<2x65536xf32>
    %c0_2 = arith.constant 0 : index
    %c0_3 = arith.constant 0 : index
    %5 = vector.load %arg3[%c0_2, %c0_3] : memref<2x65536xf32, #tpu.memory_space<vmem>>, vector<2x65536xf32>
    %6 = vector.extract_strided_slice %5 {offsets = [0, 0], sizes = [1, 65536], strides = [1, 1]} : vector<2x65536xf32> to vector<1x65536xf32>
    %7 = vector.broadcast %6 : vector<1x65536xf32> to vector<2x65536xf32>
    %8 = arith.mulf %4, %7 : vector<2x65536xf32>
    %cst = arith.constant dense<0.000000e+00> : vector<2xf32>
    %9 = vector.multi_reduction <add>, %8, %cst [1] : vector<2x65536xf32> to vector<2xf32>
    %10 = vector.shape_cast %9 : vector<2xf32> to vector<2x1xf32>
    %11 = vector.extract_strided_slice %5 {offsets = [1, 0], sizes = [1, 65536], strides = [1, 1]} : vector<2x65536xf32> to vector<1x65536xf32>
    %12 = vector.broadcast %11 : vector<1x65536xf32> to vector<2x65536xf32>
    %13 = arith.mulf %4, %12 : vector<2x65536xf32>
    %cst_4 = arith.constant dense<0.000000e+00> : vector<2xf32>
    %14 = vector.multi_reduction <add>, %13, %cst_4 [1] : vector<2x65536xf32> to vector<2xf32>
    %15 = vector.shape_cast %14 : vector<2xf32> to vector<2x1xf32>
    %c0_5 = arith.constant 0 : index
    %c0_6 = arith.constant 0 : index
    %16 = vector.load %arg5[%c0_5, %c0_6] : memref<2x2xf32, #tpu.memory_space<vmem>>, vector<2x2xf32>
    %c0_i32_7 = arith.constant 0 : i32
    %17 = vector.broadcast %c0_i32_7 : i32 to vector<2x2xi32>
    %18 = arith.cmpi eq, %0, %17 : vector<2x2xi32>
    %19 = vector.shape_cast %10 : vector<2x1xf32> to vector<2x1xf32>
    %20 = vector.broadcast %19 : vector<2x1xf32> to vector<2x2xf32>
    %21 = vector.shape_cast %15 : vector<2x1xf32> to vector<2x1xf32>
    %22 = vector.broadcast %21 : vector<2x1xf32> to vector<2x2xf32>
    %23 = arith.select %18, %20, %22 : vector<2x2xi1>, vector<2x2xf32>
    %24 = arith.addf %16, %23 : vector<2x2xf32>
    %c0_8 = arith.constant 0 : index
    %c0_9 = arith.constant 0 : index
    %25 = vector.load %arg5[%c0_8, %c0_9] : memref<2x2xf32, #tpu.memory_space<vmem>>, vector<2x2xf32>
    tpu.vector_store %arg5[%c0_8, %c0_9], %24 {strides = array<i32>} : memref<2x2xf32, #tpu.memory_space<vmem>>, vector<2x2xf32>,
    %c0_i32_10 = arith.constant 0 : i32
    %26 = arith.cmpi eq, %arg1, %c0_i32_10 : i32
    %27 = arith.extui %26 : i1 to i32
    %c0_i32_11 = arith.constant 0 : i32
    %28 = arith.cmpi ne, %27, %c0_i32_11 : i32
    scf.if %28 {
      %c0_12 = arith.constant 0 : index
      %c0_13 = arith.constant 0 : index
      %29 = vector.load %arg5[%c0_12, %c0_13] : memref<2x2xf32, #tpu.memory_space<vmem>>, vector<2x2xf32>
      %cst_14 = arith.constant dense<0xFF800000> : vector<2xf32>
      %30 = vector.multi_reduction <maximumf>, %29, %cst_14 [1] : vector<2x2xf32> to vector<2xf32>
      %31 = vector.shape_cast %30 : vector<2xf32> to vector<2x1xf32>
      %32 = vector.broadcast %31 : vector<2x1xf32> to vector<2x2xf32>
      %33 = arith.subf %29, %32 : vector<2x2xf32>
      %34 = math.exp %33 : vector<2x2xf32>
      %cst_15 = arith.constant dense<0.000000e+00> : vector<2xf32>
      %35 = vector.multi_reduction <add>, %34, %cst_15 [1] : vector<2x2xf32> to vector<2xf32>
      %36 = vector.shape_cast %35 : vector<2xf32> to vector<2x1xf32>
      %37 = math.log %36 : vector<2x1xf32>
      %38 = vector.broadcast %37 : vector<2x1xf32> to vector<2x2xf32>
      %39 = arith.subf %33, %38 : vector<2x2xf32>
      %c0_16 = arith.constant 0 : index
      %c0_17 = arith.constant 0 : index
      %40 = vector.load %arg5[%c0_16, %c0_17] : memref<2x2xf32, #tpu.memory_space<vmem>>, vector<2x2xf32>
      tpu.vector_store %arg5[%c0_16, %c0_17], %39 {strides = array<i32>} : memref<2x2xf32, #tpu.memory_space<vmem>>, vector<2x2xf32>,
    } else {
    }
    return
  }
  func.func @transform_0(%arg0: i32, %arg1: i32) -> (i32, i32) {
    %c0_i32 = arith.constant 0 : i32
    return %arg0, %arg1 : i32, i32
  }
  func.func @transform_1(%arg0: i32, %arg1: i32) -> (i32, i32) {
    %c0_i32 = arith.constant 0 : i32
    %c0_i32_0 = arith.constant 0 : i32
    return %c0_i32, %arg1 : i32, i32
  }
  func.func @transform_2(%arg0: i32, %arg1: i32) -> i32 {
    %c0_i32 = arith.constant 0 : i32
    %c0_i32_0 = arith.constant 0 : i32
    return %c0_i32 : i32
  }
  func.func @transform_3(%arg0: i32, %arg1: i32) -> (i32, i32) {
    %c0_i32 = arith.constant 0 : i32
    %c0_i32_0 = arith.constant 0 : i32
    return %arg0, %c0_i32 : i32, i32
  }
}

</mosaic_0001>

<llo_original>
// kernel: hybrid_model_forward.1
$region0: #{hybrid_model_forward.1}
  #allocation0 [shape = 'u32[]', space=smem, size = 0x4, offset = 0x4, fixed_abs, tag = 'smem constant byte address 0x4 - core index']
  #allocation1 [shape = 'u32[72,128]{1,0:T(1,128)}', space=vmem, size = 0x9000, scoped, tag = 'internal scratch']
  %s0 = inlined_call_operand.vmem [shape: f32[2,65536], index: 0, kind: input, shape index: {}]
  %s1 = inlined_call_operand.vmem [shape: f32[2,65536], index: 1, kind: input, shape index: {}]
  %s2 = inlined_call_operand.vmem [shape: f32[2], index: 2, kind: input, shape index: {}]
  %s3 = inlined_call_operand.hbm [shape: f32[2,2], index: 3, kind: output, shape index: {}]
  %s4 = sld [smem:[#allocation0]]
  $region34: #{hybrid_model_forward.1} parent=0
    _
  %s6 = ssub.s32 1, %s4
  %s7 = scalar_select 0, %s6, %s4
  $region1: #{hybrid_model_forward.1} parent=0
    #allocation2 [shape = 'u8[512]{0}', space=smem, size = 0x200, scoped, tag = 'input window, operand 2, single buffered']
    #allocation3 [shape = 's32[1]{0}', space=sflag, size = 0x4, scoped, tag = 'scoped memory for hybrid_model_forward.1']
    #allocation4 [shape = 's32[1]{0}', space=sflag, size = 0x4, scoped, tag = 'scoped memory for hybrid_model_forward.1']
    #allocation5 [shape = 'u8[1024]{0}', space=vmem, size = 0x400, scoped, tag = 'output window, operand 0, single buffered']
    %8 = vsyncpa [#allocation4], 0
    %9 = vsyncpa [#allocation3], 0
    // Predicated region
    $region2: #{hybrid_model_forward.1} parent=1 // pred_check
      _
    $region3: #{hybrid_model_forward.1} parent=1 // pred_check_branch
      %11 = sbr.rel (0) target = $region5
    $region4: #{hybrid_model_forward.1} parent=1 // pred_region
      _
    $region5: #{hybrid_model_forward.1} parent=1 // pred_fallthru
      _
    // Predicated region
    $region6: #{hybrid_model_forward.1} parent=1 // pred_check
      _
    $region7: #{hybrid_model_forward.1} parent=1 // pred_check_branch
      %13 = sbr.rel (0) target = $region9
    $region8: #{hybrid_model_forward.1} parent=1 // pred_region
      _
    $region9: #{hybrid_model_forward.1} parent=1 // pred_fallthru
      _
    // Predicated region
    $region10: #{hybrid_model_forward.1} parent=1 // pred_check
      _
    $region11: #{hybrid_model_forward.1} parent=1 // pred_check_branch
      %15 = sbr.rel (0) target = $region13
    $region12: #{hybrid_model_forward.1} parent=1 // pred_region
      %17 = vsyncadd [#allocation4], 0
      %s19 = sshll.u32 %s2, 4
      %s20 = int_to_ptr.vmem [resolvable:$true] %s19
      %22 = dma.vmem_to_smem %s20, 16, [#allocation2], [#allocation4]
    $region13: #{hybrid_model_forward.1} parent=1 // pred_fallthru
      _
    // Predicated region
    $region14: #{hybrid_model_forward.1} parent=1 // pred_check
      _
    $region15: #{hybrid_model_forward.1} parent=1 // pred_check_branch
      %24 = sbr.rel (0) target = $region17
    $region16: #{hybrid_model_forward.1} parent=1 // pred_region
      %26 = dma.done [#allocation4], 16
    $region17: #{hybrid_model_forward.1} parent=1 // pred_fallthru
      _
    %27 = sfence
    %v28 = vlaneseq
    %v29 = vand.u32 %v28, 127
    %p30 = scmp.eq.s32.totalorder 0, 0
    // Predicated region
    $region18: #{hybrid_model_forward.1} parent=1 // pred_check
      %p31 = pneg %p30
    $region19: #{hybrid_model_forward.1} parent=1 // pred_check_branch
      %33 = sbr.rel (%p31) target = $region21
    $region20: #{hybrid_model_forward.1} parent=1 // pred_region
      %vm34 = vcmp.eq.s32.totalorder %v29, 0
      %s35 = sld [smem:[#allocation2]]
      %s36 = sld [smem:[#allocation2 + $0x1]]
      %v37 = vstv %s35
      %v38 = vstv %s36
      %v39 = vsel %vm34, %v37, %v38
      %vm40 = vcmask 9216
      %41 = vst.msk [vmem:[#allocation5] sm:$0x3] %vm40, %v39
    $region21: #{hybrid_model_forward.1} parent=1 // pred_fallthru
      _
    %v42 = vld [vmem:[%s0] sm:$0xff]
    %v43 = vld [vmem:[%s0 + $0x8] sm:$0xff]
    %v44 = vld [vmem:[%s0 + $0x10] sm:$0xff]
    %v45 = vld [vmem:[%s0 + $0x18] sm:$0xff]
    %v46 = vld [vmem:[%s0 + $0x20] sm:$0xff]
    %v47 = vld [vmem:[%s0 + $0x28] sm:$0xff]
    %v48 = vld [vmem:[%s0 + $0x30] sm:$0xff]
    %v49 = vld [vmem:[%s0 + $0x38] sm:$0xff]
    %v50 = vld [vmem:[%s0 + $0x40] sm:$0xff]
    %v51 = vld [vmem:[%s0 + $0x48] sm:$0xff]
    %v52 = vld [vmem:[%s0 + $0x50] sm:$0xff]
    %v53 = vld [vmem:[%s0 + $0x58] sm:$0xff]
    %v54 = vld [vmem:[%s0 + $0x60] sm:$0xff]
    %v55 = vld [vmem:[%s0 + $0x68] sm:$0xff]
    %v56 = vld [vmem:[%s0 + $0x70] sm:$0xff]
    %v57 = vld [vmem:[%s0 + $0x78] sm:$0xff]
    %v58 = vld [vmem:[%s0 + $0x80] sm:$0xff]
    %v59 = vld [vmem:[%s0 + $0x88] sm:$0xff]
    %v60 = vld [vmem:[%s0 + $0x90] sm:$0xff]
    %v61 = vld [vmem:[%s0 + $0x98] sm:$0xff]
    %v62 = vld [vmem:[%s0 + $0xa0] sm:$0xff]
    %v63 = vld [vmem:[%s0 + $0xa8] sm:$0xff]
    %v64 = vld [vmem:[%s0 + $0xb0] sm:$0xff]
    %v65 = vld [vmem:[%s0 + $0xb8] sm:$0xff]
    %v66 = vld [vmem:[%s0 + $0xc0] sm:$0xff]
    %v67 = vld [vmem:[%s0 + $0xc8] sm:$0xff]
    %v68 = vld [vmem:[%s0 + $0xd0] sm:$0xff]
    %v69 = vld [vmem:[%s0 + $0xd8] sm:$0xff]
    %v70 = vld [vmem:[%s0 + $0xe0] sm:$0xff]
    %v71 = vld [vmem:[%s0 + $0xe8] sm:$0xff]
    %v72 = vld [vmem:[%s0 + $0xf0] sm:$0xff]
    %v73 = vld [vmem:[%s0 + $0xf8] sm:$0xff]
    %v74 = vld [vmem:[%s0 + $0x100] sm:$0xff]
    %v75 = vld [vmem:[%s0 + $0x108] sm:$0xff]
    %v76 = vld [vmem:[%s0 + $0x110] sm:$0xff]
    %v77 = vld [vmem:[%s0 + $0x118] sm:$0xff]
    %v78 = vld [vmem:[%s0 + $0x120] sm:$0xff]
    %v79 = vld [vmem:[%s0 + $0x128] sm:$0xff]
    %v80 = vld [vmem:[%s0 + $0x130] sm:$0xff]
    %v81 = vld [vmem:[%s0 + $0x138] sm:$0xff]
    %v82 = vld [vmem:[%s0 + $0x140] sm:$0xff]
    %v83 = vld [vmem:[%s0 + $0x148] sm:$0xff]
    %v84 = vld [vmem:[%s0 + $0x150] sm:$0xff]
    %v85 = vld [vmem:[%s0 + $0x158] sm:$0xff]
    %v86 = vld [vmem:[%s0 + $0x160] sm:$0xff]
    %v87 = vld [vmem:[%s0 + $0x168] sm:$0xff]
    %v88 = vld [vmem:[%s0 + $0x170] sm:$0xff]
    %v89 = vld [vmem:[%s0 + $0x178] sm:$0xff]
    %v90 = vld [vmem:[%s0 + $0x180] sm:$0xff]
    %v91 = vld [vmem:[%s0 + $0x188] sm:$0xff]
    %v92 = vld [vmem:[%s0 + $0x190] sm:$0xff]
    %v93 = vld [vmem:[%s0 + $0x198] sm:$0xff]
    %v94 = vld [vmem:[%s0 + $0x1a0] sm:$0xff]
    %v95 = vld [vmem:[%s0 + $0x1a8] sm:$0xff]
    %v96 = vld [vmem:[%s0 + $0x1b0] sm:$0xff]
    %v97 = vld [vmem:[%s0 + $0x1b8] sm:$0xff]
    %v98 = vld [vmem:[%s0 + $0x1c0] sm:$0xff]
    %v99 = vld [vmem:[%s0 + $0x1c8] sm:$0xff]
    %v100 = vld [vmem:[%s0 + $0x1d0] sm:$0xff]
    %v101 = vld [vmem:[%s0 + $0x1d8] sm:$0xff]
    %v102 = vld [vmem:[%s0 + $0x1e0] sm:$0xff]
    %v103 = vld [vmem:[%s0 + $0x1e8] sm:$0xff]
    %v104 = vld [vmem:[%s0 + $0x1f0] sm:$0xff]
    %v105 = vld [vmem:[%s0 + $0x1f8] sm:$0xff]
    %v106 = vld [vmem:[%s0 + $0x200] sm:$0xff]
    %v107 = vld [vmem:[%s0 + $0x208] sm:$0xff]
    %v108 = vld [vmem:[%s0 + $0x210] sm:$0xff]
    %v109 = vld [vmem:[%s0 + $0x218] sm:$0xff]
    %v110 = vld [vmem:[%s0 + $0x220] sm:$0xff]
    %v111 = vld [vmem:[%s0 + $0x228] sm:$0xff]
    %v112 = vld [vmem:[%s0 + $0x230] sm:$0xff]
    %v113 = vld [vmem:[%s0 + $0x238] sm:$0xff]
    %v114 = vld [vmem:[%s0 + $0x240] sm:$0xff]
    %v115 = vld [vmem:[%s0 + $0x248] sm:$0xff]
    %v116 = vld [vmem:[%s0 + $0x250] sm:$0xff]
    %v117 = vld [vmem:[%s0 + $0x258] sm:$0xff]
    %v118 = vld [vmem:[%s0 + $0x260] sm:$0xff]
    %v119 = vld [vmem:[%s0 + $0x268] sm:$0xff]
    %v120 = vld [vmem:[%s0 + $0x270] sm:$0xff]
    %v121 = vld [vmem:[%s0 + $0x278] sm:$0xff]
    %v122 = vld [vmem:[%s0 + $0x280] sm:$0xff]
    %v123 = vld [vmem:[%s0 + $0x288] sm:$0xff]
    %v124 = vld [vmem:[%s0 + $0x290] sm:$0xff]
    %v125 = vld [vmem:[%s0 + $0x298] sm:$0xff]
    %v126 = vld [vmem:[%s0 + $0x2a0] sm:$0xff]
    %v127 = vld [vmem:[%s0 + $0x2a8] sm:$0xff]
    %v128 = vld [vmem:[%s0 + $0x2b0] sm:$0xff]
    %v129 = vld [vmem:[%s0 + $0x2b8] sm:$0xff]
    %v130 = vld [vmem:[%s0 + $0x2c0] sm:$0xff]
    %v131 = vld [vmem:[%s0 + $0x2c8] sm:$0xff]
    %v132 = vld [vmem:[%s0 + $0x2d0] sm:$0xff]
    %v133 = vld [vmem:[%s0 + $0x2d8] sm:$0xff]
    %v134 = vld [vmem:[%s0 + $0x2e0] sm:$0xff]
    %v135 = vld [vmem:[%s0 + $0x2e8] sm:$0xff]
    %v136 = vld [vmem:[%s0 + $0x2f0] sm:$0xff]
    %v137 = vld [vmem:[%s0 + $0x2f8] sm:$0xff]
    %v138 = vld [vmem:[%s0 + $0x300] sm:$0xff]
    %v139 = vld [vmem:[%s0 + $0x308] sm:$0xff]
    %v140 = vld [vmem:[%s0 + $0x310] sm:$0xff]
    %v141 = vld [vmem:[%s0 + $0x318] sm:$0xff]
    %v142 = vld [vmem:[%s0 + $0x320] sm:$0xff]
    %v143 = vld [vmem:[%s0 + $0x328] sm:$0xff]
    %v144 = vld [vmem:[%s0 + $0x330] sm:$0xff]
    %v145 = vld [vmem:[%s0 + $0x338] sm:$0xff]
    %v146 = vld [vmem:[%s0 + $0x340] sm:$0xff]
    %v147 = vld [vmem:[%s0 + $0x348] sm:$0xff]
    %v148 = vld [vmem:[%s0 + $0x350] sm:$0xff]
    %v149 = vld [vmem:[%s0 + $0x358] sm:$0xff]
    %v150 = vld [vmem:[%s0 + $0x360] sm:$0xff]
    %v151 = vld [vmem:[%s0 + $0x368] sm:$0xff]
    %v152 = vld [vmem:[%s0 + $0x370] sm:$0xff]
    %v153 = vld [vmem:[%s0 + $0x378] sm:$0xff]
    %v154 = vld [vmem:[%s0 + $0x380] sm:$0xff]
    %v155 = vld [vmem:[%s0 + $0x388] sm:$0xff]
    %v156 = vld [vmem:[%s0 + $0x390] sm:$0xff]
    %v157 = vld [vmem:[%s0 + $0x398] sm:$0xff]
    %v158 = vld [vmem:[%s0 + $0x3a0] sm:$0xff]
    %v159 = vld [vmem:[%s0 + $0x3a8] sm:$0xff]
    %v160 = vld [vmem:[%s0 + $0x3b0] sm:$0xff]
    %v161 = vld [vmem:[%s0 + $0x3b8] sm:$0xff]
    %v162 = vld [vmem:[%s0 + $0x3c0] sm:$0xff]
    %v163 = vld [vmem:[%s0 + $0x3c8] sm:$0xff]
    %v164 = vld [vmem:[%s0 + $0x3d0] sm:$0xff]
    %v165 = vld [vmem:[%s0 + $0x3d8] sm:$0xff]
    %v166 = vld [vmem:[%s0 + $0x3e0] sm:$0xff]
    %v167 = vld [vmem:[%s0 + $0x3e8] sm:$0xff]
    %v168 = vld [vmem:[%s0 + $0x3f0] sm:$0xff]
    %v169 = vld [vmem:[%s0 + $0x3f8] sm:$0xff]
    %v170 = vld [vmem:[%s1] sm:$0xff]
    %v171 = vld [vmem:[%s1 + $0x8] sm:$0xff]
    %v172 = vld [vmem:[%s1 + $0x10] sm:$0xff]
    %v173 = vld [vmem:[%s1 + $0x18] sm:$0xff]
    %v174 = vld [vmem:[%s1 + $0x20] sm:$0xff]
    %v175 = vld [vmem:[%s1 + $0x28] sm:$0xff]
    %v176 = vld [vmem:[%s1 + $0x30] sm:$0xff]
    %v177 = vld [vmem:[%s1 + $0x38] sm:$0xff]
    %v178 = vld [vmem:[%s1 + $0x40] sm:$0xff]
    %v179 = vld [vmem:[%s1 + $0x48] sm:$0xff]
    %v180 = vld [vmem:[%s1 + $0x50] sm:$0xff]
    %v181 = vld [vmem:[%s1 + $0x58] sm:$0xff]
    %v182 = vld [vmem:[%s1 + $0x60] sm:$0xff]
    %v183 = vld [vmem:[%s1 + $0x68] sm:$0xff]
    %v184 = vld [vmem:[%s1 + $0x70] sm:$0xff]
    %v185 = vld [vmem:[%s1 + $0x78] sm:$0xff]
    %v186 = vld [vmem:[%s1 + $0x80] sm:$0xff]
    %v187 = vld [vmem:[%s1 + $0x88] sm:$0xff]
    %v188 = vld [vmem:[%s1 + $0x90] sm:$0xff]
    %v189 = vld [vmem:[%s1 + $0x98] sm:$0xff]
    %v190 = vld [vmem:[%s1 + $0xa0] sm:$0xff]
    %v191 = vld [vmem:[%s1 + $0xa8] sm:$0xff]
    %v192 = vld [vmem:[%s1 + $0xb0] sm:$0xff]
    %v193 = vld [vmem:[%s1 + $0xb8] sm:$0xff]
    %v194 = vld [vmem:[%s1 + $0xc0] sm:$0xff]
    %v195 = vld [vmem:[%s1 + $0xc8] sm:$0xff]
    %v196 = vld [vmem:[%s1 + $0xd0] sm:$0xff]
    %v197 = vld [vmem:[%s1 + $0xd8] sm:$0xff]
    %v198 = vld [vmem:[%s1 + $0xe0] sm:$0xff]
    %v199 = vld [vmem:[%s1 + $0xe8] sm:$0xff]
    %v200 = vld [vmem:[%s1 + $0xf0] sm:$0xff]
    %v201 = vld [vmem:[%s1 + $0xf8] sm:$0xff]
    %v202 = vld [vmem:[%s1 + $0x100] sm:$0xff]
    %v203 = vld [vmem:[%s1 + $0x108] sm:$0xff]
    %v204 = vld [vmem:[%s1 + $0x110] sm:$0xff]
    %v205 = vld [vmem:[%s1 + $0x118] sm:$0xff]
    %v206 = vld [vmem:[%s1 + $0x120] sm:$0xff]
    %v207 = vld [vmem:[%s1 + $0x128] sm:$0xff]
    %v208 = vld [vmem:[%s1 + $0x130] sm:$0xff]
    %v209 = vld [vmem:[%s1 + $0x138] sm:$0xff]
    %v210 = vld [vmem:[%s1 + $0x140] sm:$0xff]
    %v211 = vld [vmem:[%s1 + $0x148] sm:$0xff]
    %v212 = vld [vmem:[%s1 + $0x150] sm:$0xff]
    %v213 = vld [vmem:[%s1 + $0x158] sm:$0xff]
    %v214 = vld [vmem:[%s1 + $0x160] sm:$0xff]
    %v215 = vld [vmem:[%s1 + $0x168] sm:$0xff]
    %v216 = vld [vmem:[%s1 + $0x170] sm:$0xff]
    %v217 = vld [vmem:[%s1 + $0x178] sm:$0xff]
    %v218 = vld [vmem:[%s1 + $0x180] sm:$0xff]
    %v219 = vld [vmem:[%s1 + $0x188] sm:$0xff]
    %v220 = vld [vmem:[%s1 + $0x190] sm:$0xff]
    %v221 = vld [vmem:[%s1 + $0x198] sm:$0xff]
    %v222 = vld [vmem:[%s1 + $0x1a0] sm:$0xff]
    %v223 = vld [vmem:[%s1 + $0x1a8] sm:$0xff]
    %v224 = vld [vmem:[%s1 + $0x1b0] sm:$0xff]
    %v225 = vld [vmem:[%s1 + $0x1b8] sm:$0xff]
    %v226 = vld [vmem:[%s1 + $0x1c0] sm:$0xff]
    %v227 = vld [vmem:[%s1 + $0x1c8] sm:$0xff]
    %v228 = vld [vmem:[%s1 + $0x1d0] sm:$0xff]
    %v229 = vld [vmem:[%s1 + $0x1d8] sm:$0xff]
    %v230 = vld [vmem:[%s1 + $0x1e0] sm:$0xff]
    %v231 = vld [vmem:[%s1 + $0x1e8] sm:$0xff]
    %v232 = vld [vmem:[%s1 + $0x1f0] sm:$0xff]
    %v233 = vld [vmem:[%s1 + $0x1f8] sm:$0xff]
    %v234 = vld [vmem:[%s1 + $0x200] sm:$0xff]
    %v235 = vld [vmem:[%s1 + $0x208] sm:$0xff]
    %v236 = vld [vmem:[%s1 + $0x210] sm:$0xff]
    %v237 = vld [vmem:[%s1 + $0x218] sm:$0xff]
    %v238 = vld [vmem:[%s1 + $0x220] sm:$0xff]
    %v239 = vld [vmem:[%s1 + $0x228] sm:$0xff]
    %v240 = vld [vmem:[%s1 + $0x230] sm:$0xff]
    %v241 = vld [vmem:[%s1 + $0x238] sm:$0xff]
    %v242 = vld [vmem:[%s1 + $0x240] sm:$0xff]
    %v243 = vld [vmem:[%s1 + $0x248] sm:$0xff]
    %v244 = vld [vmem:[%s1 + $0x250] sm:$0xff]
    %v245 = vld [vmem:[%s1 + $0x258] sm:$0xff]
    %v246 = vld [vmem:[%s1 + $0x260] sm:$0xff]
    %v247 = vld [vmem:[%s1 + $0x268] sm:$0xff]
    %v248 = vld [vmem:[%s1 + $0x270] sm:$0xff]
    %v249 = vld [vmem:[%s1 + $0x278] sm:$0xff]
    %v250 = vld [vmem:[%s1 + $0x280] sm:$0xff]
    %v251 = vld [vmem:[%s1 + $0x288] sm:$0xff]
    %v252 = vld [vmem:[%s1 + $0x290] sm:$0xff]
    %v253 = vld [vmem:[%s1 + $0x298] sm:$0xff]
    %v254 = vld [vmem:[%s1 + $0x2a0] sm:$0xff]
    %v255 = vld [vmem:[%s1 + $0x2a8] sm:$0xff]
    %v256 = vld [vmem:[%s1 + $0x2b0] sm:$0xff]
    %v257 = vld [vmem:[%s1 + $0x2b8] sm:$0xff]
    %v258 = vld [vmem:[%s1 + $0x2c0] sm:$0xff]
    %v259 = vld [vmem:[%s1 + $0x2c8] sm:$0xff]
    %v260 = vld [vmem:[%s1 + $0x2d0] sm:$0xff]
    %v261 = vld [vmem:[%s1 + $0x2d8] sm:$0xff]
    %v262 = vld [vmem:[%s1 + $0x2e0] sm:$0xff]
    %v263 = vld [vmem:[%s1 + $0x2e8] sm:$0xff]
    %v264 = vld [vmem:[%s1 + $0x2f0] sm:$0xff]
    %v265 = vld [vmem:[%s1 + $0x2f8] sm:$0xff]
    %v266 = vld [vmem:[%s1 + $0x300] sm:$0xff]
    %v267 = vld [vmem:[%s1 + $0x308] sm:$0xff]
    %v268 = vld [vmem:[%s1 + $0x310] sm:$0xff]
    %v269 = vld [vmem:[%s1 + $0x318] sm:$0xff]
    %v270 = vld [vmem:[%s1 + $0x320] sm:$0xff]
    %v271 = vld [vmem:[%s1 + $0x328] sm:$0xff]
    %v272 = vld [vmem:[%s1 + $0x330] sm:$0xff]
    %v273 = vld [vmem:[%s1 + $0x338] sm:$0xff]
    %v274 = vld [vmem:[%s1 + $0x340] sm:$0xff]
    %v275 = vld [vmem:[%s1 + $0x348] sm:$0xff]
    %v276 = vld [vmem:[%s1 + $0x350] sm:$0xff]
    %v277 = vld [vmem:[%s1 + $0x358] sm:$0xff]
    %v278 = vld [vmem:[%s1 + $0x360] sm:$0xff]
    %v279 = vld [vmem:[%s1 + $0x368] sm:$0xff]
    %v280 = vld [vmem:[%s1 + $0x370] sm:$0xff]
    %v281 = vld [vmem:[%s1 + $0x378] sm:$0xff]
    %v282 = vld [vmem:[%s1 + $0x380] sm:$0xff]
    %v283 = vld [vmem:[%s1 + $0x388] sm:$0xff]
    %v284 = vld [vmem:[%s1 + $0x390] sm:$0xff]
    %v285 = vld [vmem:[%s1 + $0x398] sm:$0xff]
    %v286 = vld [vmem:[%s1 + $0x3a0] sm:$0xff]
    %v287 = vld [vmem:[%s1 + $0x3a8] sm:$0xff]
    %v288 = vld [vmem:[%s1 + $0x3b0] sm:$0xff]
    %v289 = vld [vmem:[%s1 + $0x3b8] sm:$0xff]
    %v290 = vld [vmem:[%s1 + $0x3c0] sm:$0xff]
    %v291 = vld [vmem:[%s1 + $0x3c8] sm:$0xff]
    %v292 = vld [vmem:[%s1 + $0x3d0] sm:$0xff]
    %v293 = vld [vmem:[%s1 + $0x3d8] sm:$0xff]
    %v294 = vld [vmem:[%s1 + $0x3e0] sm:$0xff]
    %v295 = vld [vmem:[%s1 + $0x3e8] sm:$0xff]
    %v296 = vld [vmem:[%s1 + $0x3f0] sm:$0xff]
    %v297 = vld [vmem:[%s1 + $0x3f8] sm:$0xff]
    %v426 = vperm.slane %v170, 0
    %v427 = vperm.slane %v170, 2
    %v428 = vperm.slane %v170, 4
    %v429 = vperm.slane %v170, 6
    %v430 = vperm.slane %v171, 0
    %v431 = vperm.slane %v171, 2
    %v432 = vperm.slane %v171, 4
    %v433 = vperm.slane %v171, 6
    %v434 = vperm.slane %v172, 0
    %v435 = vperm.slane %v172, 2
    %v436 = vperm.slane %v172, 4
    %v437 = vperm.slane %v172, 6
    %v438 = vperm.slane %v173, 0
    %v439 = vperm.slane %v173, 2
    %v440 = vperm.slane %v173, 4
    %v441 = vperm.slane %v173, 6
    %v442 = vperm.slane %v174, 0
    %v443 = vperm.slane %v174, 2
    %v444 = vperm.slane %v174, 4
    %v445 = vperm.slane %v174, 6
    %v446 = vperm.slane %v175, 0
    %v447 = vperm.slane %v175, 2
    %v448 = vperm.slane %v175, 4
    %v449 = vperm.slane %v175, 6
    %v450 = vperm.slane %v176, 0
    %v451 = vperm.slane %v176, 2
    %v452 = vperm.slane %v176, 4
    %v453 = vperm.slane %v176, 6
    %v454 = vperm.slane %v177, 0
    %v455 = vperm.slane %v177, 2
    %v456 = vperm.slane %v177, 4
    %v457 = vperm.slane %v177, 6
    %v458 = vperm.slane %v178, 0
    %v459 = vperm.slane %v178, 2
    %v460 = vperm.slane %v178, 4
    %v461 = vperm.slane %v178, 6
    %v462 = vperm.slane %v179, 0
    %v463 = vperm.slane %v179, 2
    %v464 = vperm.slane %v179, 4
    %v465 = vperm.slane %v179, 6
    %v466 = vperm.slane %v180, 0
    %v467 = vperm.slane %v180, 2
    %v468 = vperm.slane %v180, 4
    %v469 = vperm.slane %v180, 6
    %v470 = vperm.slane %v181, 0
    %v471 = vperm.slane %v181, 2
    %v472 = vperm.slane %v181, 4
    %v473 = vperm.slane %v181, 6
    %v474 = vperm.slane %v182, 0
    %v475 = vperm.slane %v182, 2
    %v476 = vperm.slane %v182, 4
    %v477 = vperm.slane %v182, 6
    %v478 = vperm.slane %v183, 0
    %v479 = vperm.slane %v183, 2
    %v480 = vperm.slane %v183, 4
    %v481 = vperm.slane %v183, 6
    %v482 = vperm.slane %v184, 0
    %v483 = vperm.slane %v184, 2
    %v484 = vperm.slane %v184, 4
    %v485 = vperm.slane %v184, 6
    %v486 = vperm.slane %v185, 0
    %v487 = vperm.slane %v185, 2
    %v488 = vperm.slane %v185, 4
    %v489 = vperm.slane %v185, 6
    %v490 = vperm.slane %v186, 0
    %v491 = vperm.slane %v186, 2
    %v492 = vperm.slane %v186, 4
    %v493 = vperm.slane %v186, 6
    %v494 = vperm.slane %v187, 0
    %v495 = vperm.slane %v187, 2
    %v496 = vperm.slane %v187, 4
    %v497 = vperm.slane %v187, 6
    %v498 = vperm.slane %v188, 0
    %v499 = vperm.slane %v188, 2
    %v500 = vperm.slane %v188, 4
    %v501 = vperm.slane %v188, 6
    %v502 = vperm.slane %v189, 0
    %v503 = vperm.slane %v189, 2
    %v504 = vperm.slane %v189, 4
    %v505 = vperm.slane %v189, 6
    %v506 = vperm.slane %v190, 0
    %v507 = vperm.slane %v190, 2
    %v508 = vperm.slane %v190, 4
    %v509 = vperm.slane %v190, 6
    %v510 = vperm.slane %v191, 0
    %v511 = vperm.slane %v191, 2
    %v512 = vperm.slane %v191, 4
    %v513 = vperm.slane %v191, 6
    %v514 = vperm.slane %v192, 0
    %v515 = vperm.slane %v192, 2
    %v516 = vperm.slane %v192, 4
    %v517 = vperm.slane %v192, 6
    %v518 = vperm.slane %v193, 0
    %v519 = vperm.slane %v193, 2
    %v520 = vperm.slane %v193, 4
    %v521 = vperm.slane %v193, 6
    %v522 = vperm.slane %v194, 0
    %v523 = vperm.slane %v194, 2
    %v524 = vperm.slane %v194, 4
    %v525 = vperm.slane %v194, 6
    %v526 = vperm.slane %v195, 0
    %v527 = vperm.slane %v195, 2
    %v528 = vperm.slane %v195, 4
    %v529 = vperm.slane %v195, 6
    %v530 = vperm.slane %v196, 0
    %v531 = vperm.slane %v196, 2
    %v532 = vperm.slane %v196, 4
    %v533 = vperm.slane %v196, 6
    %v534 = vperm.slane %v197, 0
    %v535 = vperm.slane %v197, 2
    %v536 = vperm.slane %v197, 4
    %v537 = vperm.slane %v197, 6
    %v538 = vperm.slane %v198, 0
    %v539 = vperm.slane %v198, 2
    %v540 = vperm.slane %v198, 4
    %v541 = vperm.slane %v198, 6
    %v542 = vperm.slane %v199, 0
    %v543 = vperm.slane %v199, 2
    %v544 = vperm.slane %v199, 4
    %v545 = vperm.slane %v199, 6
    %v546 = vperm.slane %v200, 0
    %v547 = vperm.slane %v200, 2
    %v548 = vperm.slane %v200, 4
    %v549 = vperm.slane %v200, 6
    %v550 = vperm.slane %v201, 0
    %v551 = vperm.slane %v201, 2
    %v552 = vperm.slane %v201, 4
    %v553 = vperm.slane %v201, 6
    %v554 = vperm.slane %v202, 0
    %v555 = vperm.slane %v202, 2
    %v556 = vperm.slane %v202, 4
    %v557 = vperm.slane %v202, 6
    %v558 = vperm.slane %v203, 0
    %v559 = vperm.slane %v203, 2
    %v560 = vperm.slane %v203, 4
    %v561 = vperm.slane %v203, 6
    %v562 = vperm.slane %v204, 0
    %v563 = vperm.slane %v204, 2
    %v564 = vperm.slane %v204, 4
    %v565 = vperm.slane %v204, 6
    %v566 = vperm.slane %v205, 0
    %v567 = vperm.slane %v205, 2
    %v568 = vperm.slane %v205, 4
    %v569 = vperm.slane %v205, 6
    %v570 = vperm.slane %v206, 0
    %v571 = vperm.slane %v206, 2
    %v572 = vperm.slane %v206, 4
    %v573 = vperm.slane %v206, 6
    %v574 = vperm.slane %v207, 0
    %v575 = vperm.slane %v207, 2
    %v576 = vperm.slane %v207, 4
    %v577 = vperm.slane %v207, 6
    %v578 = vperm.slane %v208, 0
    %v579 = vperm.slane %v208, 2
    %v580 = vperm.slane %v208, 4
    %v581 = vperm.slane %v208, 6
    %v582 = vperm.slane %v209, 0
    %v583 = vperm.slane %v209, 2
    %v584 = vperm.slane %v209, 4
    %v585 = vperm.slane %v209, 6
    %v586 = vperm.slane %v210, 0
    %v587 = vperm.slane %v210, 2
    %v588 = vperm.slane %v210, 4
    %v589 = vperm.slane %v210, 6
    %v590 = vperm.slane %v211, 0
    %v591 = vperm.slane %v211, 2
    %v592 = vperm.slane %v211, 4
    %v593 = vperm.slane %v211, 6
    %v594 = vperm.slane %v212, 0
    %v595 = vperm.slane %v212, 2
    %v596 = vperm.slane %v212, 4
    %v597 = vperm.slane %v212, 6
    %v598 = vperm.slane %v213, 0
    %v599 = vperm.slane %v213, 2
    %v600 = vperm.slane %v213, 4
    %v601 = vperm.slane %v213, 6
    %v602 = vperm.slane %v214, 0
    %v603 = vperm.slane %v214, 2
    %v604 = vperm.slane %v214, 4
    %v605 = vperm.slane %v214, 6
    %v606 = vperm.slane %v215, 0
    %v607 = vperm.slane %v215, 2
    %v608 = vperm.slane %v215, 4
    %v609 = vperm.slane %v215, 6
    %v610 = vperm.slane %v216, 0
    %v611 = vperm.slane %v216, 2
    %v612 = vperm.slane %v216, 4
    %v613 = vperm.slane %v216, 6
    %v614 = vperm.slane %v217, 0
    %v615 = vperm.slane %v217, 2
    %v616 = vperm.slane %v217, 4
    %v617 = vperm.slane %v217, 6
    %v618 = vperm.slane %v218, 0
    %v619 = vperm.slane %v218, 2
    %v620 = vperm.slane %v218, 4
    %v621 = vperm.slane %v218, 6
    %v622 = vperm.slane %v219, 0
    %v623 = vperm.slane %v219, 2
    %v624 = vperm.slane %v219, 4
    %v625 = vperm.slane %v219, 6
    %v626 = vperm.slane %v220, 0
    %v627 = vperm.slane %v220, 2
    %v628 = vperm.slane %v220, 4
    %v629 = vperm.slane %v220, 6
    %v630 = vperm.slane %v221, 0
    %v631 = vperm.slane %v221, 2
    %v632 = vperm.slane %v221, 4
    %v633 = vperm.slane %v221, 6
    %v634 = vperm.slane %v222, 0
    %v635 = vperm.slane %v222, 2
    %v636 = vperm.slane %v222, 4
    %v637 = vperm.slane %v222, 6
    %v638 = vperm.slane %v223, 0
    %v639 = vperm.slane %v223, 2
    %v640 = vperm.slane %v223, 4
    %v641 = vperm.slane %v223, 6
    %v642 = vperm.slane %v224, 0
    %v643 = vperm.slane %v224, 2
    %v644 = vperm.slane %v224, 4
    %v645 = vperm.slane %v224, 6
    %v646 = vperm.slane %v225, 0
    %v647 = vperm.slane %v225, 2
    %v648 = vperm.slane %v225, 4
    %v649 = vperm.slane %v225, 6
    %v650 = vperm.slane %v226, 0
    %v651 = vperm.slane %v226, 2
    %v652 = vperm.slane %v226, 4
    %v653 = vperm.slane %v226, 6
    %v654 = vperm.slane %v227, 0
    %v655 = vperm.slane %v227, 2
    %v656 = vperm.slane %v227, 4
    %v657 = vperm.slane %v227, 6
    %v658 = vperm.slane %v228, 0
    %v659 = vperm.slane %v228, 2
    %v660 = vperm.slane %v228, 4
    %v661 = vperm.slane %v228, 6
    %v662 = vperm.slane %v229, 0
    %v663 = vperm.slane %v229, 2
    %v664 = vperm.slane %v229, 4
    %v665 = vperm.slane %v229, 6
    %v666 = vperm.slane %v230, 0
    %v667 = vperm.slane %v230, 2
    %v668 = vperm.slane %v230, 4
    %v669 = vperm.slane %v230, 6
    %v670 = vperm.slane %v231, 0
    %v671 = vperm.slane %v231, 2
    %v672 = vperm.slane %v231, 4
    %v673 = vperm.slane %v231, 6
    %v674 = vperm.slane %v232, 0
    %v675 = vperm.slane %v232, 2
    %v676 = vperm.slane %v232, 4
    %v677 = vperm.slane %v232, 6
    %v678 = vperm.slane %v233, 0
    %v679 = vperm.slane %v233, 2
    %v680 = vperm.slane %v233, 4
    %v681 = vperm.slane %v233, 6
    %v682 = vperm.slane %v234, 0
    %v683 = vperm.slane %v234, 2
    %v684 = vperm.slane %v234, 4
    %v685 = vperm.slane %v234, 6
    %v686 = vperm.slane %v235, 0
    %v687 = vperm.slane %v235, 2
    %v688 = vperm.slane %v235, 4
    %v689 = vperm.slane %v235, 6
    %v690 = vperm.slane %v236, 0
    %v691 = vperm.slane %v236, 2
    %v692 = vperm.slane %v236, 4
    %v693 = vperm.slane %v236, 6
    %v694 = vperm.slane %v237, 0
    %v695 = vperm.slane %v237, 2
    %v696 = vperm.slane %v237, 4
    %v697 = vperm.slane %v237, 6
    %v698 = vperm.slane %v238, 0
    %v699 = vperm.slane %v238, 2
    %v700 = vperm.slane %v238, 4
    %v701 = vperm.slane %v238, 6
    %v702 = vperm.slane %v239, 0
    %v703 = vperm.slane %v239, 2
    %v704 = vperm.slane %v239, 4
    %v705 = vperm.slane %v239, 6
    %v706 = vperm.slane %v240, 0
    %v707 = vperm.slane %v240, 2
    %v708 = vperm.slane %v240, 4
    %v709 = vperm.slane %v240, 6
    %v710 = vperm.slane %v241, 0
    %v711 = vperm.slane %v241, 2
    %v712 = vperm.slane %v241, 4
    %v713 = vperm.slane %v241, 6
    %v714 = vperm.slane %v242, 0
    %v715 = vperm.slane %v242, 2
    %v716 = vperm.slane %v242, 4
    %v717 = vperm.slane %v242, 6
    %v718 = vperm.slane %v243, 0
    %v719 = vperm.slane %v243, 2
    %v720 = vperm.slane %v243, 4
    %v721 = vperm.slane %v243, 6
    %v722 = vperm.slane %v244, 0
    %v723 = vperm.slane %v244, 2
    %v724 = vperm.slane %v244, 4
    %v725 = vperm.slane %v244, 6
    %v726 = vperm.slane %v245, 0
    %v727 = vperm.slane %v245, 2
    %v728 = vperm.slane %v245, 4
    %v729 = vperm.slane %v245, 6
    %v730 = vperm.slane %v246, 0
    %v731 = vperm.slane %v246, 2
    %v732 = vperm.slane %v246, 4
    %v733 = vperm.slane %v246, 6
    %v734 = vperm.slane %v247, 0
    %v735 = vperm.slane %v247, 2
    %v736 = vperm.slane %v247, 4
    %v737 = vperm.slane %v247, 6
    %v738 = vperm.slane %v248, 0
    %v739 = vperm.slane %v248, 2
    %v740 = vperm.slane %v248, 4
    %v741 = vperm.slane %v248, 6
    %v742 = vperm.slane %v249, 0
    %v743 = vperm.slane %v249, 2
    %v744 = vperm.slane %v249, 4
    %v745 = vperm.slane %v249, 6
    %v746 = vperm.slane %v250, 0
    %v747 = vperm.slane %v250, 2
    %v748 = vperm.slane %v250, 4
    %v749 = vperm.slane %v250, 6
    %v750 = vperm.slane %v251, 0
    %v751 = vperm.slane %v251, 2
    %v752 = vperm.slane %v251, 4
    %v753 = vperm.slane %v251, 6
    %v754 = vperm.slane %v252, 0
    %v755 = vperm.slane %v252, 2
    %v756 = vperm.slane %v252, 4
    %v757 = vperm.slane %v252, 6
    %v758 = vperm.slane %v253, 0
    %v759 = vperm.slane %v253, 2
    %v760 = vperm.slane %v253, 4
    %v761 = vperm.slane %v253, 6
    %v762 = vperm.slane %v254, 0
    %v763 = vperm.slane %v254, 2
    %v764 = vperm.slane %v254, 4
    %v765 = vperm.slane %v254, 6
    %v766 = vperm.slane %v255, 0
    %v767 = vperm.slane %v255, 2
    %v768 = vperm.slane %v255, 4
    %v769 = vperm.slane %v255, 6
    %v770 = vperm.slane %v256, 0
    %v771 = vperm.slane %v256, 2
    %v772 = vperm.slane %v256, 4
    %v773 = vperm.slane %v256, 6
    %v774 = vperm.slane %v257, 0
    %v775 = vperm.slane %v257, 2
    %v776 = vperm.slane %v257, 4
    %v777 = vperm.slane %v257, 6
    %v778 = vperm.slane %v258, 0
    %v779 = vperm.slane %v258, 2
    %v780 = vperm.slane %v258, 4
    %v781 = vperm.slane %v258, 6
    %v782 = vperm.slane %v259, 0
    %v783 = vperm.slane %v259, 2
    %v784 = vperm.slane %v259, 4
    %v785 = vperm.slane %v259, 6
    %v786 = vperm.slane %v260, 0
    %v787 = vperm.slane %v260, 2
    %v788 = vperm.slane %v260, 4
    %v789 = vperm.slane %v260, 6
    %v790 = vperm.slane %v261, 0
    %v791 = vperm.slane %v261, 2
    %v792 = vperm.slane %v261, 4
    %v793 = vperm.slane %v261, 6
    %v794 = vperm.slane %v262, 0
    %v795 = vperm.slane %v262, 2
    %v796 = vperm.slane %v262, 4
    %v797 = vperm.slane %v262, 6
    %v798 = vperm.slane %v263, 0
    %v799 = vperm.slane %v263, 2
    %v800 = vperm.slane %v263, 4
    %v801 = vperm.slane %v263, 6
    %v802 = vperm.slane %v264, 0
    %v803 = vperm.slane %v264, 2
    %v804 = vperm.slane %v264, 4
    %v805 = vperm.slane %v264, 6
    %v806 = vperm.slane %v265, 0
    %v807 = vperm.slane %v265, 2
    %v808 = vperm.slane %v265, 4
    %v809 = vperm.slane %v265, 6
    %v810 = vperm.slane %v266, 0
    %v811 = vperm.slane %v266, 2
    %v812 = vperm.slane %v266, 4
    %v813 = vperm.slane %v266, 6
    %v814 = vperm.slane %v267, 0
    %v815 = vperm.slane %v267, 2
    %v816 = vperm.slane %v267, 4
    %v817 = vperm.slane %v267, 6
    %v818 = vperm.slane %v268, 0
    %v819 = vperm.slane %v268, 2
    %v820 = vperm.slane %v268, 4
    %v821 = vperm.slane %v268, 6
    %v822 = vperm.slane %v269, 0
    %v823 = vperm.slane %v269, 2
    %v824 = vperm.slane %v269, 4
    %v825 = vperm.slane %v269, 6
    %v826 = vperm.slane %v270, 0
    %v827 = vperm.slane %v270, 2
    %v828 = vperm.slane %v270, 4
    %v829 = vperm.slane %v270, 6
    %v830 = vperm.slane %v271, 0
    %v831 = vperm.slane %v271, 2
    %v832 = vperm.slane %v271, 4
    %v833 = vperm.slane %v271, 6
    %v834 = vperm.slane %v272, 0
    %v835 = vperm.slane %v272, 2
    %v836 = vperm.slane %v272, 4
    %v837 = vperm.slane %v272, 6
    %v838 = vperm.slane %v273, 0
    %v839 = vperm.slane %v273, 2
    %v840 = vperm.slane %v273, 4
    %v841 = vperm.slane %v273, 6
    %v842 = vperm.slane %v274, 0
    %v843 = vperm.slane %v274, 2
    %v844 = vperm.slane %v274, 4
    %v845 = vperm.slane %v274, 6
    %v846 = vperm.slane %v275, 0
    %v847 = vperm.slane %v275, 2
    %v848 = vperm.slane %v275, 4
    %v849 = vperm.slane %v275, 6
    %v850 = vperm.slane %v276, 0
    %v851 = vperm.slane %v276, 2
    %v852 = vperm.slane %v276, 4
    %v853 = vperm.slane %v276, 6
    %v854 = vperm.slane %v277, 0
    %v855 = vperm.slane %v277, 2
    %v856 = vperm.slane %v277, 4
    %v857 = vperm.slane %v277, 6
    %v858 = vperm.slane %v278, 0
    %v859 = vperm.slane %v278, 2
    %v860 = vperm.slane %v278, 4
    %v861 = vperm.slane %v278, 6
    %v862 = vperm.slane %v279, 0
    %v863 = vperm.slane %v279, 2
    %v864 = vperm.slane %v279, 4
    %v865 = vperm.slane %v279, 6
    %v866 = vperm.slane %v280, 0
    %v867 = vperm.slane %v280, 2
    %v868 = vperm.slane %v280, 4
    %v869 = vperm.slane %v280, 6
    %v870 = vperm.slane %v281, 0
    %v871 = vperm.slane %v281, 2
    %v872 = vperm.slane %v281, 4
    %v873 = vperm.slane %v281, 6
    %v874 = vperm.slane %v282, 0
    %v875 = vperm.slane %v282, 2
    %v876 = vperm.slane %v282, 4
    %v877 = vperm.slane %v282, 6
    %v878 = vperm.slane %v283, 0
    %v879 = vperm.slane %v283, 2
    %v880 = vperm.slane %v283, 4
    %v881 = vperm.slane %v283, 6
    %v882 = vperm.slane %v284, 0
    %v883 = vperm.slane %v284, 2
    %v884 = vperm.slane %v284, 4
    %v885 = vperm.slane %v284, 6
    %v886 = vperm.slane %v285, 0
    %v887 = vperm.slane %v285, 2
    %v888 = vperm.slane %v285, 4
    %v889 = vperm.slane %v285, 6
    %v890 = vperm.slane %v286, 0
    %v891 = vperm.slane %v286, 2
    %v892 = vperm.slane %v286, 4
    %v893 = vperm.slane %v286, 6
    %v894 = vperm.slane %v287, 0
    %v895 = vperm.slane %v287, 2
    %v896 = vperm.slane %v287, 4
    %v897 = vperm.slane %v287, 6
    %v898 = vperm.slane %v288, 0
    %v899 = vperm.slane %v288, 2
    %v900 = vperm.slane %v288, 4
    %v901 = vperm.slane %v288, 6
    %v902 = vperm.slane %v289, 0
    %v903 = vperm.slane %v289, 2
    %v904 = vperm.slane %v289, 4
    %v905 = vperm.slane %v289, 6
    %v906 = vperm.slane %v290, 0
    %v907 = vperm.slane %v290, 2
    %v908 = vperm.slane %v290, 4
    %v909 = vperm.slane %v290, 6
    %v910 = vperm.slane %v291, 0
    %v911 = vperm.slane %v291, 2
    %v912 = vperm.slane %v291, 4
    %v913 = vperm.slane %v291, 6
    %v914 = vperm.slane %v292, 0
    %v915 = vperm.slane %v292, 2
    %v916 = vperm.slane %v292, 4
    %v917 = vperm.slane %v292, 6
    %v918 = vperm.slane %v293, 0
    %v919 = vperm.slane %v293, 2
    %v920 = vperm.slane %v293, 4
    %v921 = vperm.slane %v293, 6
    %v922 = vperm.slane %v294, 0
    %v923 = vperm.slane %v294, 2
    %v924 = vperm.slane %v294, 4
    %v925 = vperm.slane %v294, 6
    %v926 = vperm.slane %v295, 0
    %v927 = vperm.slane %v295, 2
    %v928 = vperm.slane %v295, 4
    %v929 = vperm.slane %v295, 6
    %v930 = vperm.slane %v296, 0
    %v931 = vperm.slane %v296, 2
    %v932 = vperm.slane %v296, 4
    %v933 = vperm.slane %v296, 6
    %v934 = vperm.slane %v297, 0
    %v935 = vperm.slane %v297, 2
    %v936 = vperm.slane %v297, 4
    %v937 = vperm.slane %v297, 6
    %v1450 = vperm.slane %v426, 0
    %v1451 = vperm.slane %v427, 0
    %v1452 = vperm.slane %v428, 0
    %v1453 = vperm.slane %v429, 0
    %v1454 = vperm.slane %v430, 0
    %v1455 = vperm.slane %v431, 0
    %v1456 = vperm.slane %v432, 0
    %v1457 = vperm.slane %v433, 0
    %v1458 = vperm.slane %v434, 0
    %v1459 = vperm.slane %v435, 0
    %v1460 = vperm.slane %v436, 0
    %v1461 = vperm.slane %v437, 0
    %v1462 = vperm.slane %v438, 0
    %v1463 = vperm.slane %v439, 0
    %v1464 = vperm.slane %v440, 0
    %v1465 = vperm.slane %v441, 0
    %v1466 = vperm.slane %v442, 0
    %v1467 = vperm.slane %v443, 0
    %v1468 = vperm.slane %v444, 0
    %v1469 = vperm.slane %v445, 0
    %v1470 = vperm.slane %v446, 0
    %v1471 = vperm.slane %v447, 0
    %v1472 = vperm.slane %v448, 0
    %v1473 = vperm.slane %v449, 0
    %v1474 = vperm.slane %v450, 0
    %v1475 = vperm.slane %v451, 0
    %v1476 = vperm.slane %v452, 0
    %v1477 = vperm.slane %v453, 0
    %v1478 = vperm.slane %v454, 0
    %v1479 = vperm.slane %v455, 0
    %v1480 = vperm.slane %v456, 0
    %v1481 = vperm.slane %v457, 0
    %v1482 = vperm.slane %v458, 0
    %v1483 = vperm.slane %v459, 0
    %v1484 = vperm.slane %v460, 0
    %v1485 = vperm.slane %v461, 0
    %v1486 = vperm.slane %v462, 0
    %v1487 = vperm.slane %v463, 0
    %v1488 = vperm.slane %v464, 0
    %v1489 = vperm.slane %v465, 0
    %v1490 = vperm.slane %v466, 0
    %v1491 = vperm.slane %v467, 0
    %v1492 = vperm.slane %v468, 0
    %v1493 = vperm.slane %v469, 0
    %v1494 = vperm.slane %v470, 0
    %v1495 = vperm.slane %v471, 0
    %v1496 = vperm.slane %v472, 0
    %v1497 = vperm.slane %v473, 0
    %v1498 = vperm.slane %v474, 0
    %v1499 = vperm.slane %v475, 0
    %v1500 = vperm.slane %v476, 0
    %v1501 = vperm.slane %v477, 0
    %v1502 = vperm.slane %v478, 0
    %v1503 = vperm.slane %v479, 0
    %v1504 = vperm.slane %v480, 0
    %v1505 = vperm.slane %v481, 0
    %v1506 = vperm.slane %v482, 0
    %v1507 = vperm.slane %v483, 0
    %v1508 = vperm.slane %v484, 0
    %v1509 = vperm.slane %v485, 0
    %v1510 = vperm.slane %v486, 0
    %v1511 = vperm.slane %v487, 0
    %v1512 = vperm.slane %v488, 0
    %v1513 = vperm.slane %v489, 0
    %v1514 = vperm.slane %v490, 0
    %v1515 = vperm.slane %v491, 0
    %v1516 = vperm.slane %v492, 0
    %v1517 = vperm.slane %v493, 0
    %v1518 = vperm.slane %v494, 0
    %v1519 = vperm.slane %v495, 0
    %v1520 = vperm.slane %v496, 0
    %v1521 = vperm.slane %v497, 0
    %v1522 = vperm.slane %v498, 0
    %v1523 = vperm.slane %v499, 0
    %v1524 = vperm.slane %v500, 0
    %v1525 = vperm.slane %v501, 0
    %v1526 = vperm.slane %v502, 0
    %v1527 = vperm.slane %v503, 0
    %v1528 = vperm.slane %v504, 0
    %v1529 = vperm.slane %v505, 0
    %v1530 = vperm.slane %v506, 0
    %v1531 = vperm.slane %v507, 0
    %v1532 = vperm.slane %v508, 0
    %v1533 = vperm.slane %v509, 0
    %v1534 = vperm.slane %v510, 0
    %v1535 = vperm.slane %v511, 0
    %v1536 = vperm.slane %v512, 0
    %v1537 = vperm.slane %v513, 0
    %v1538 = vperm.slane %v514, 0
    %v1539 = vperm.slane %v515, 0
    %v1540 = vperm.slane %v516, 0
    %v1541 = vperm.slane %v517, 0
    %v1542 = vperm.slane %v518, 0
    %v1543 = vperm.slane %v519, 0
    %v1544 = vperm.slane %v520, 0
    %v1545 = vperm.slane %v521, 0
    %v1546 = vperm.slane %v522, 0
    %v1547 = vperm.slane %v523, 0
    %v1548 = vperm.slane %v524, 0
    %v1549 = vperm.slane %v525, 0
    %v1550 = vperm.slane %v526, 0
    %v1551 = vperm.slane %v527, 0
    %v1552 = vperm.slane %v528, 0
    %v1553 = vperm.slane %v529, 0
    %v1554 = vperm.slane %v530, 0
    %v1555 = vperm.slane %v531, 0
    %v1556 = vperm.slane %v532, 0
    %v1557 = vperm.slane %v533, 0
    %v1558 = vperm.slane %v534, 0
    %v1559 = vperm.slane %v535, 0
    %v1560 = vperm.slane %v536, 0
    %v1561 = vperm.slane %v537, 0
    %v1562 = vperm.slane %v538, 0
    %v1563 = vperm.slane %v539, 0
    %v1564 = vperm.slane %v540, 0
    %v1565 = vperm.slane %v541, 0
    %v1566 = vperm.slane %v542, 0
    %v1567 = vperm.slane %v543, 0
    %v1568 = vperm.slane %v544, 0
    %v1569 = vperm.slane %v545, 0
    %v1570 = vperm.slane %v546, 0
    %v1571 = vperm.slane %v547, 0
    %v1572 = vperm.slane %v548, 0
    %v1573 = vperm.slane %v549, 0
    %v1574 = vperm.slane %v550, 0
    %v1575 = vperm.slane %v551, 0
    %v1576 = vperm.slane %v552, 0
    %v1577 = vperm.slane %v553, 0
    %v1578 = vperm.slane %v554, 0
    %v1579 = vperm.slane %v555, 0
    %v1580 = vperm.slane %v556, 0
    %v1581 = vperm.slane %v557, 0
    %v1582 = vperm.slane %v558, 0
    %v1583 = vperm.slane %v559, 0
    %v1584 = vperm.slane %v560, 0
    %v1585 = vperm.slane %v561, 0
    %v1586 = vperm.slane %v562, 0
    %v1587 = vperm.slane %v563, 0
    %v1588 = vperm.slane %v564, 0
    %v1589 = vperm.slane %v565, 0
    %v1590 = vperm.slane %v566, 0
    %v1591 = vperm.slane %v567, 0
    %v1592 = vperm.slane %v568, 0
    %v1593 = vperm.slane %v569, 0
    %v1594 = vperm.slane %v570, 0
    %v1595 = vperm.slane %v571, 0
    %v1596 = vperm.slane %v572, 0
    %v1597 = vperm.slane %v573, 0
    %v1598 = vperm.slane %v574, 0
    %v1599 = vperm.slane %v575, 0
    %v1600 = vperm.slane %v576, 0
    %v1601 = vperm.slane %v577, 0
    %v1602 = vperm.slane %v578, 0
    %v1603 = vperm.slane %v579, 0
    %v1604 = vperm.slane %v580, 0
    %v1605 = vperm.slane %v581, 0
    %v1606 = vperm.slane %v582, 0
    %v1607 = vperm.slane %v583, 0
    %v1608 = vperm.slane %v584, 0
    %v1609 = vperm.slane %v585, 0
    %v1610 = vperm.slane %v586, 0
    %v1611 = vperm.slane %v587, 0
    %v1612 = vperm.slane %v588, 0
    %v1613 = vperm.slane %v589, 0
    %v1614 = vperm.slane %v590, 0
    %v1615 = vperm.slane %v591, 0
    %v1616 = vperm.slane %v592, 0
    %v1617 = vperm.slane %v593, 0
    %v1618 = vperm.slane %v594, 0
    %v1619 = vperm.slane %v595, 0
    %v1620 = vperm.slane %v596, 0
    %v1621 = vperm.slane %v597, 0
    %v1622 = vperm.slane %v598, 0
    %v1623 = vperm.slane %v599, 0
    %v1624 = vperm.slane %v600, 0
    %v1625 = vperm.slane %v601, 0
    %v1626 = vperm.slane %v602, 0
    %v1627 = vperm.slane %v603, 0
    %v1628 = vperm.slane %v604, 0
    %v1629 = vperm.slane %v605, 0
    %v1630 = vperm.slane %v606, 0
    %v1631 = vperm.slane %v607, 0
    %v1632 = vperm.slane %v608, 0
    %v1633 = vperm.slane %v609, 0
    %v1634 = vperm.slane %v610, 0
    %v1635 = vperm.slane %v611, 0
    %v1636 = vperm.slane %v612, 0
    %v1637 = vperm.slane %v613, 0
    %v1638 = vperm.slane %v614, 0
    %v1639 = vperm.slane %v615, 0
    %v1640 = vperm.slane %v616, 0
    %v1641 = vperm.slane %v617, 0
    %v1642 = vperm.slane %v618, 0
    %v1643 = vperm.slane %v619, 0
    %v1644 = vperm.slane %v620, 0
    %v1645 = vperm.slane %v621, 0
    %v1646 = vperm.slane %v622, 0
    %v1647 = vperm.slane %v623, 0
    %v1648 = vperm.slane %v624, 0
    %v1649 = vperm.slane %v625, 0
    %v1650 = vperm.slane %v626, 0
    %v1651 = vperm.slane %v627, 0
    %v1652 = vperm.slane %v628, 0
    %v1653 = vperm.slane %v629, 0
    %v1654 = vperm.slane %v630, 0
    %v1655 = vperm.slane %v631, 0
    %v1656 = vperm.slane %v632, 0
    %v1657 = vperm.slane %v633, 0
    %v1658 = vperm.slane %v634, 0
    %v1659 = vperm.slane %v635, 0
    %v1660 = vperm.slane %v636, 0
    %v1661 = vperm.slane %v637, 0
    %v1662 = vperm.slane %v638, 0
    %v1663 = vperm.slane %v639, 0
    %v1664 = vperm.slane %v640, 0
    %v1665 = vperm.slane %v641, 0
    %v1666 = vperm.slane %v642, 0
    %v1667 = vperm.slane %v643, 0
    %v1668 = vperm.slane %v644, 0
    %v1669 = vperm.slane %v645, 0
    %v1670 = vperm.slane %v646, 0
    %v1671 = vperm.slane %v647, 0
    %v1672 = vperm.slane %v648, 0
    %v1673 = vperm.slane %v649, 0
    %v1674 = vperm.slane %v650, 0
    %v1675 = vperm.slane %v651, 0
    %v1676 = vperm.slane %v652, 0
    %v1677 = vperm.slane %v653, 0
    %v1678 = vperm.slane %v654, 0
    %v1679 = vperm.slane %v655, 0
    %v1680 = vperm.slane %v656, 0
    %v1681 = vperm.slane %v657, 0
    %v1682 = vperm.slane %v658, 0
    %v1683 = vperm.slane %v659, 0
    %v1684 = vperm.slane %v660, 0
    %v1685 = vperm.slane %v661, 0
    %v1686 = vperm.slane %v662, 0
    %v1687 = vperm.slane %v663, 0
    %v1688 = vperm.slane %v664, 0
    %v1689 = vperm.slane %v665, 0
    %v1690 = vperm.slane %v666, 0
    %v1691 = vperm.slane %v667, 0
    %v1692 = vperm.slane %v668, 0
    %v1693 = vperm.slane %v669, 0
    %v1694 = vperm.slane %v670, 0
    %v1695 = vperm.slane %v671, 0
    %v1696 = vperm.slane %v672, 0
    %v1697 = vperm.slane %v673, 0
    %v1698 = vperm.slane %v674, 0
    %v1699 = vperm.slane %v675, 0
    %v1700 = vperm.slane %v676, 0
    %v1701 = vperm.slane %v677, 0
    %v1702 = vperm.slane %v678, 0
    %v1703 = vperm.slane %v679, 0
    %v1704 = vperm.slane %v680, 0
    %v1705 = vperm.slane %v681, 0
    %v1706 = vperm.slane %v682, 0
    %v1707 = vperm.slane %v683, 0
    %v1708 = vperm.slane %v684, 0
    %v1709 = vperm.slane %v685, 0
    %v1710 = vperm.slane %v686, 0
    %v1711 = vperm.slane %v687, 0
    %v1712 = vperm.slane %v688, 0
    %v1713 = vperm.slane %v689, 0
    %v1714 = vperm.slane %v690, 0
    %v1715 = vperm.slane %v691, 0
    %v1716 = vperm.slane %v692, 0
    %v1717 = vperm.slane %v693, 0
    %v1718 = vperm.slane %v694, 0
    %v1719 = vperm.slane %v695, 0
    %v1720 = vperm.slane %v696, 0
    %v1721 = vperm.slane %v697, 0
    %v1722 = vperm.slane %v698, 0
    %v1723 = vperm.slane %v699, 0
    %v1724 = vperm.slane %v700, 0
    %v1725 = vperm.slane %v701, 0
    %v1726 = vperm.slane %v702, 0
    %v1727 = vperm.slane %v703, 0
    %v1728 = vperm.slane %v704, 0
    %v1729 = vperm.slane %v705, 0
    %v1730 = vperm.slane %v706, 0
    %v1731 = vperm.slane %v707, 0
    %v1732 = vperm.slane %v708, 0
    %v1733 = vperm.slane %v709, 0
    %v1734 = vperm.slane %v710, 0
    %v1735 = vperm.slane %v711, 0
    %v1736 = vperm.slane %v712, 0
    %v1737 = vperm.slane %v713, 0
    %v1738 = vperm.slane %v714, 0
    %v1739 = vperm.slane %v715, 0
    %v1740 = vperm.slane %v716, 0
    %v1741 = vperm.slane %v717, 0
    %v1742 = vperm.slane %v718, 0
    %v1743 = vperm.slane %v719, 0
    %v1744 = vperm.slane %v720, 0
    %v1745 = vperm.slane %v721, 0
    %v1746 = vperm.slane %v722, 0
    %v1747 = vperm.slane %v723, 0
    %v1748 = vperm.slane %v724, 0
    %v1749 = vperm.slane %v725, 0
    %v1750 = vperm.slane %v726, 0
    %v1751 = vperm.slane %v727, 0
    %v1752 = vperm.slane %v728, 0
    %v1753 = vperm.slane %v729, 0
    %v1754 = vperm.slane %v730, 0
    %v1755 = vperm.slane %v731, 0
    %v1756 = vperm.slane %v732, 0
    %v1757 = vperm.slane %v733, 0
    %v1758 = vperm.slane %v734, 0
    %v1759 = vperm.slane %v735, 0
    %v1760 = vperm.slane %v736, 0
    %v1761 = vperm.slane %v737, 0
    %v1762 = vperm.slane %v738, 0
    %v1763 = vperm.slane %v739, 0
    %v1764 = vperm.slane %v740, 0
    %v1765 = vperm.slane %v741, 0
    %v1766 = vperm.slane %v742, 0
    %v1767 = vperm.slane %v743, 0
    %v1768 = vperm.slane %v744, 0
    %v1769 = vperm.slane %v745, 0
    %v1770 = vperm.slane %v746, 0
    %v1771 = vperm.slane %v747, 0
    %v1772 = vperm.slane %v748, 0
    %v1773 = vperm.slane %v749, 0
    %v1774 = vperm.slane %v750, 0
    %v1775 = vperm.slane %v751, 0
    %v1776 = vperm.slane %v752, 0
    %v1777 = vperm.slane %v753, 0
    %v1778 = vperm.slane %v754, 0
    %v1779 = vperm.slane %v755, 0
    %v1780 = vperm.slane %v756, 0
    %v1781 = vperm.slane %v757, 0
    %v1782 = vperm.slane %v758, 0
    %v1783 = vperm.slane %v759, 0
    %v1784 = vperm.slane %v760, 0
    %v1785 = vperm.slane %v761, 0
    %v1786 = vperm.slane %v762, 0
    %v1787 = vperm.slane %v763, 0
    %v1788 = vperm.slane %v764, 0
    %v1789 = vperm.slane %v765, 0
    %v1790 = vperm.slane %v766, 0
    %v1791 = vperm.slane %v767, 0
    %v1792 = vperm.slane %v768, 0
    %v1793 = vperm.slane %v769, 0
    %v1794 = vperm.slane %v770, 0
    %v1795 = vperm.slane %v771, 0
    %v1796 = vperm.slane %v772, 0
    %v1797 = vperm.slane %v773, 0
    %v1798 = vperm.slane %v774, 0
    %v1799 = vperm.slane %v775, 0
    %v1800 = vperm.slane %v776, 0
    %v1801 = vperm.slane %v777, 0
    %v1802 = vperm.slane %v778, 0
    %v1803 = vperm.slane %v779, 0
    %v1804 = vperm.slane %v780, 0
    %v1805 = vperm.slane %v781, 0
    %v1806 = vperm.slane %v782, 0
    %v1807 = vperm.slane %v783, 0
    %v1808 = vperm.slane %v784, 0
    %v1809 = vperm.slane %v785, 0
    %v1810 = vperm.slane %v786, 0
    %v1811 = vperm.slane %v787, 0
    %v1812 = vperm.slane %v788, 0
    %v1813 = vperm.slane %v789, 0
    %v1814 = vperm.slane %v790, 0
    %v1815 = vperm.slane %v791, 0
    %v1816 = vperm.slane %v792, 0
    %v1817 = vperm.slane %v793, 0
    %v1818 = vperm.slane %v794, 0
    %v1819 = vperm.slane %v795, 0
    %v1820 = vperm.slane %v796, 0
    %v1821 = vperm.slane %v797, 0
    %v1822 = vperm.slane %v798, 0
    %v1823 = vperm.slane %v799, 0
    %v1824 = vperm.slane %v800, 0
    %v1825 = vperm.slane %v801, 0
    %v1826 = vperm.slane %v802, 0
    %v1827 = vperm.slane %v803, 0
    %v1828 = vperm.slane %v804, 0
    %v1829 = vperm.slane %v805, 0
    %v1830 = vperm.slane %v806, 0
    %v1831 = vperm.slane %v807, 0
    %v1832 = vperm.slane %v808, 0
    %v1833 = vperm.slane %v809, 0
    %v1834 = vperm.slane %v810, 0
    %v1835 = vperm.slane %v811, 0
    %v1836 = vperm.slane %v812, 0
    %v1837 = vperm.slane %v813, 0
    %v1838 = vperm.slane %v814, 0
    %v1839 = vperm.slane %v815, 0
    %v1840 = vperm.slane %v816, 0
    %v1841 = vperm.slane %v817, 0
    %v1842 = vperm.slane %v818, 0
    %v1843 = vperm.slane %v819, 0
    %v1844 = vperm.slane %v820, 0
    %v1845 = vperm.slane %v821, 0
    %v1846 = vperm.slane %v822, 0
    %v1847 = vperm.slane %v823, 0
    %v1848 = vperm.slane %v824, 0
    %v1849 = vperm.slane %v825, 0
    %v1850 = vperm.slane %v826, 0
    %v1851 = vperm.slane %v827, 0
    %v1852 = vperm.slane %v828, 0
    %v1853 = vperm.slane %v829, 0
    %v1854 = vperm.slane %v830, 0
    %v1855 = vperm.slane %v831, 0
    %v1856 = vperm.slane %v832, 0
    %v1857 = vperm.slane %v833, 0
    %v1858 = vperm.slane %v834, 0
    %v1859 = vperm.slane %v835, 0
    %v1860 = vperm.slane %v836, 0
    %v1861 = vperm.slane %v837, 0
    %v1862 = vperm.slane %v838, 0
    %v1863 = vperm.slane %v839, 0
    %v1864 = vperm.slane %v840, 0
    %v1865 = vperm.slane %v841, 0
    %v1866 = vperm.slane %v842, 0
    %v1867 = vperm.slane %v843, 0
    %v1868 = vperm.slane %v844, 0
    %v1869 = vperm.slane %v845, 0
    %v1870 = vperm.slane %v846, 0
    %v1871 = vperm.slane %v847, 0
    %v1872 = vperm.slane %v848, 0
    %v1873 = vperm.slane %v849, 0
    %v1874 = vperm.slane %v850, 0
    %v1875 = vperm.slane %v851, 0
    %v1876 = vperm.slane %v852, 0
    %v1877 = vperm.slane %v853, 0
    %v1878 = vperm.slane %v854, 0
    %v1879 = vperm.slane %v855, 0
    %v1880 = vperm.slane %v856, 0
    %v1881 = vperm.slane %v857, 0
    %v1882 = vperm.slane %v858, 0
    %v1883 = vperm.slane %v859, 0
    %v1884 = vperm.slane %v860, 0
    %v1885 = vperm.slane %v861, 0
    %v1886 = vperm.slane %v862, 0
    %v1887 = vperm.slane %v863, 0
    %v1888 = vperm.slane %v864, 0
    %v1889 = vperm.slane %v865, 0
    %v1890 = vperm.slane %v866, 0
    %v1891 = vperm.slane %v867, 0
    %v1892 = vperm.slane %v868, 0
    %v1893 = vperm.slane %v869, 0
    %v1894 = vperm.slane %v870, 0
    %v1895 = vperm.slane %v871, 0
    %v1896 = vperm.slane %v872, 0
    %v1897 = vperm.slane %v873, 0
    %v1898 = vperm.slane %v874, 0
    %v1899 = vperm.slane %v875, 0
    %v1900 = vperm.slane %v876, 0
    %v1901 = vperm.slane %v877, 0
    %v1902 = vperm.slane %v878, 0
    %v1903 = vperm.slane %v879, 0
    %v1904 = vperm.slane %v880, 0
    %v1905 = vperm.slane %v881, 0
    %v1906 = vperm.slane %v882, 0
    %v1907 = vperm.slane %v883, 0
    %v1908 = vperm.slane %v884, 0
    %v1909 = vperm.slane %v885, 0
    %v1910 = vperm.slane %v886, 0
    %v1911 = vperm.slane %v887, 0
    %v1912 = vperm.slane %v888, 0
    %v1913 = vperm.slane %v889, 0
    %v1914 = vperm.slane %v890, 0
    %v1915 = vperm.slane %v891, 0
    %v1916 = vperm.slane %v892, 0
    %v1917 = vperm.slane %v893, 0
    %v1918 = vperm.slane %v894, 0
    %v1919 = vperm.slane %v895, 0
    %v1920 = vperm.slane %v896, 0
    %v1921 = vperm.slane %v897, 0
    %v1922 = vperm.slane %v898, 0
    %v1923 = vperm.slane %v899, 0
    %v1924 = vperm.slane %v900, 0
    %v1925 = vperm.slane %v901, 0
    %v1926 = vperm.slane %v902, 0
    %v1927 = vperm.slane %v903, 0
    %v1928 = vperm.slane %v904, 0
    %v1929 = vperm.slane %v905, 0
    %v1930 = vperm.slane %v906, 0
    %v1931 = vperm.slane %v907, 0
    %v1932 = vperm.slane %v908, 0
    %v1933 = vperm.slane %v909, 0
    %v1934 = vperm.slane %v910, 0
    %v1935 = vperm.slane %v911, 0
    %v1936 = vperm.slane %v912, 0
    %v1937 = vperm.slane %v913, 0
    %v1938 = vperm.slane %v914, 0
    %v1939 = vperm.slane %v915, 0
    %v1940 = vperm.slane %v916, 0
    %v1941 = vperm.slane %v917, 0
    %v1942 = vperm.slane %v918, 0
    %v1943 = vperm.slane %v919, 0
    %v1944 = vperm.slane %v920, 0
    %v1945 = vperm.slane %v921, 0
    %v1946 = vperm.slane %v922, 0
    %v1947 = vperm.slane %v923, 0
    %v1948 = vperm.slane %v924, 0
    %v1949 = vperm.slane %v925, 0
    %v1950 = vperm.slane %v926, 0
    %v1951 = vperm.slane %v927, 0
    %v1952 = vperm.slane %v928, 0
    %v1953 = vperm.slane %v929, 0
    %v1954 = vperm.slane %v930, 0
    %v1955 = vperm.slane %v931, 0
    %v1956 = vperm.slane %v932, 0
    %v1957 = vperm.slane %v933, 0
    %v1958 = vperm.slane %v934, 0
    %v1959 = vperm.slane %v935, 0
    %v1960 = vperm.slane %v936, 0
    %v1961 = vperm.slane %v937, 0
    %v2474 = vrot.slane %v1451, 6
    %v2475 = vrot.slane %v1452, 4
    %v2476 = vrot.slane %v1453, 2
    %v2477 = vrot.slane %v1455, 6
    %v2478 = vrot.slane %v1456, 4
    %v2479 = vrot.slane %v1457, 2
    %v2480 = vrot.slane %v1459, 6
    %v2481 = vrot.slane %v1460, 4
    %v2482 = vrot.slane %v1461, 2
    %v2483 = vrot.slane %v1463, 6
    %v2484 = vrot.slane %v1464, 4
    %v2485 = vrot.slane %v1465, 2
    %v2486 = vrot.slane %v1467, 6
    %v2487 = vrot.slane %v1468, 4
    %v2488 = vrot.slane %v1469, 2
    %v2489 = vrot.slane %v1471, 6
    %v2490 = vrot.slane %v1472, 4
    %v2491 = vrot.slane %v1473, 2
    %v2492 = vrot.slane %v1475, 6
    %v2493 = vrot.slane %v1476, 4
    %v2494 = vrot.slane %v1477, 2
    %v2495 = vrot.slane %v1479, 6
    %v2496 = vrot.slane %v1480, 4
    %v2497 = vrot.slane %v1481, 2
    %v2498 = vrot.slane %v1483, 6
    %v2499 = vrot.slane %v1484, 4
    %v2500 = vrot.slane %v1485, 2
    %v2501 = vrot.slane %v1487, 6
    %v2502 = vrot.slane %v1488, 4
    %v2503 = vrot.slane %v1489, 2
    %v2504 = vrot.slane %v1491, 6
    %v2505 = vrot.slane %v1492, 4
    %v2506 = vrot.slane %v1493, 2
    %v2507 = vrot.slane %v1495, 6
    %v2508 = vrot.slane %v1496, 4
    %v2509 = vrot.slane %v1497, 2
    %v2510 = vrot.slane %v1499, 6
    %v2511 = vrot.slane %v1500, 4
    %v2512 = vrot.slane %v1501, 2
    %v2513 = vrot.slane %v1503, 6
    %v2514 = vrot.slane %v1504, 4
    %v2515 = vrot.slane %v1505, 2
    %v2516 = vrot.slane %v1507, 6
    %v2517 = vrot.slane %v1508, 4
    %v2518 = vrot.slane %v1509, 2
    %v2519 = vrot.slane %v1511, 6
    %v2520 = vrot.slane %v1512, 4
    %v2521 = vrot.slane %v1513, 2
    %v2522 = vrot.slane %v1515, 6
    %v2523 = vrot.slane %v1516, 4
    %v2524 = vrot.slane %v1517, 2
    %v2525 = vrot.slane %v1519, 6
    %v2526 = vrot.slane %v1520, 4
    %v2527 = vrot.slane %v1521, 2
    %v2528 = vrot.slane %v1523, 6
    %v2529 = vrot.slane %v1524, 4
    %v2530 = vrot.slane %v1525, 2
    %v2531 = vrot.slane %v1527, 6
    %v2532 = vrot.slane %v1528, 4
    %v2533 = vrot.slane %v1529, 2
    %v2534 = vrot.slane %v1531, 6
    %v2535 = vrot.slane %v1532, 4
    %v2536 = vrot.slane %v1533, 2
    %v2537 = vrot.slane %v1535, 6
    %v2538 = vrot.slane %v1536, 4
    %v2539 = vrot.slane %v1537, 2
    %v2540 = vrot.slane %v1539, 6
    %v2541 = vrot.slane %v1540, 4
    %v2542 = vrot.slane %v1541, 2
    %v2543 = vrot.slane %v1543, 6
    %v2544 = vrot.slane %v1544, 4
    %v2545 = vrot.slane %v1545, 2
    %v2546 = vrot.slane %v1547, 6
    %v2547 = vrot.slane %v1548, 4
    %v2548 = vrot.slane %v1549, 2
    %v2549 = vrot.slane %v1551, 6
    %v2550 = vrot.slane %v1552, 4
    %v2551 = vrot.slane %v1553, 2
    %v2552 = vrot.slane %v1555, 6
    %v2553 = vrot.slane %v1556, 4
    %v2554 = vrot.slane %v1557, 2
    %v2555 = vrot.slane %v1559, 6
    %v2556 = vrot.slane %v1560, 4
    %v2557 = vrot.slane %v1561, 2
    %v2558 = vrot.slane %v1563, 6
    %v2559 = vrot.slane %v1564, 4
    %v2560 = vrot.slane %v1565, 2
    %v2561 = vrot.slane %v1567, 6
    %v2562 = vrot.slane %v1568, 4
    %v2563 = vrot.slane %v1569, 2
    %v2564 = vrot.slane %v1571, 6
    %v2565 = vrot.slane %v1572, 4
    %v2566 = vrot.slane %v1573, 2
    %v2567 = vrot.slane %v1575, 6
    %v2568 = vrot.slane %v1576, 4
    %v2569 = vrot.slane %v1577, 2
    %v2570 = vrot.slane %v1579, 6
    %v2571 = vrot.slane %v1580, 4
    %v2572 = vrot.slane %v1581, 2
    %v2573 = vrot.slane %v1583, 6
    %v2574 = vrot.slane %v1584, 4
    %v2575 = vrot.slane %v1585, 2
    %v2576 = vrot.slane %v1587, 6
    %v2577 = vrot.slane %v1588, 4
    %v2578 = vrot.slane %v1589, 2
    %v2579 = vrot.slane %v1591, 6
    %v2580 = vrot.slane %v1592, 4
    %v2581 = vrot.slane %v1593, 2
    %v2582 = vrot.slane %v1595, 6
    %v2583 = vrot.slane %v1596, 4
    %v2584 = vrot.slane %v1597, 2
    %v2585 = vrot.slane %v1599, 6
    %v2586 = vrot.slane %v1600, 4
    %v2587 = vrot.slane %v1601, 2
    %v2588 = vrot.slane %v1603, 6
    %v2589 = vrot.slane %v1604, 4
    %v2590 = vrot.slane %v1605, 2
    %v2591 = vrot.slane %v1607, 6
    %v2592 = vrot.slane %v1608, 4
    %v2593 = vrot.slane %v1609, 2
    %v2594 = vrot.slane %v1611, 6
    %v2595 = vrot.slane %v1612, 4
    %v2596 = vrot.slane %v1613, 2
    %v2597 = vrot.slane %v1615, 6
    %v2598 = vrot.slane %v1616, 4
    %v2599 = vrot.slane %v1617, 2
    %v2600 = vrot.slane %v1619, 6
    %v2601 = vrot.slane %v1620, 4
    %v2602 = vrot.slane %v1621, 2
    %v2603 = vrot.slane %v1623, 6
    %v2604 = vrot.slane %v1624, 4
    %v2605 = vrot.slane %v1625, 2
    %v2606 = vrot.slane %v1627, 6
    %v2607 = vrot.slane %v1628, 4
    %v2608 = vrot.slane %v1629, 2
    %v2609 = vrot.slane %v1631, 6
    %v2610 = vrot.slane %v1632, 4
    %v2611 = vrot.slane %v1633, 2
    %v2612 = vrot.slane %v1635, 6
    %v2613 = vrot.slane %v1636, 4
    %v2614 = vrot.slane %v1637, 2
    %v2615 = vrot.slane %v1639, 6
    %v2616 = vrot.slane %v1640, 4
    %v2617 = vrot.slane %v1641, 2
    %v2618 = vrot.slane %v1643, 6
    %v2619 = vrot.slane %v1644, 4
    %v2620 = vrot.slane %v1645, 2
    %v2621 = vrot.slane %v1647, 6
    %v2622 = vrot.slane %v1648, 4
    %v2623 = vrot.slane %v1649, 2
    %v2624 = vrot.slane %v1651, 6
    %v2625 = vrot.slane %v1652, 4
    %v2626 = vrot.slane %v1653, 2
    %v2627 = vrot.slane %v1655, 6
    %v2628 = vrot.slane %v1656, 4
    %v2629 = vrot.slane %v1657, 2
    %v2630 = vrot.slane %v1659, 6
    %v2631 = vrot.slane %v1660, 4
    %v2632 = vrot.slane %v1661, 2
    %v2633 = vrot.slane %v1663, 6
    %v2634 = vrot.slane %v1664, 4
    %v2635 = vrot.slane %v1665, 2
    %v2636 = vrot.slane %v1667, 6
    %v2637 = vrot.slane %v1668, 4
    %v2638 = vrot.slane %v1669, 2
    %v2639 = vrot.slane %v1671, 6
    %v2640 = vrot.slane %v1672, 4
    %v2641 = vrot.slane %v1673, 2
    %v2642 = vrot.slane %v1675, 6
    %v2643 = vrot.slane %v1676, 4
    %v2644 = vrot.slane %v1677, 2
    %v2645 = vrot.slane %v1679, 6
    %v2646 = vrot.slane %v1680, 4
    %v2647 = vrot.slane %v1681, 2
    %v2648 = vrot.slane %v1683, 6
    %v2649 = vrot.slane %v1684, 4
    %v2650 = vrot.slane %v1685, 2
    %v2651 = vrot.slane %v1687, 6
    %v2652 = vrot.slane %v1688, 4
    %v2653 = vrot.slane %v1689, 2
    %v2654 = vrot.slane %v1691, 6
    %v2655 = vrot.slane %v1692, 4
    %v2656 = vrot.slane %v1693, 2
    %v2657 = vrot.slane %v1695, 6
    %v2658 = vrot.slane %v1696, 4
    %v2659 = vrot.slane %v1697, 2
    %v2660 = vrot.slane %v1699, 6
    %v2661 = vrot.slane %v1700, 4
    %v2662 = vrot.slane %v1701, 2
    %v2663 = vrot.slane %v1703, 6
    %v2664 = vrot.slane %v1704, 4
    %v2665 = vrot.slane %v1705, 2
    %v2666 = vrot.slane %v1707, 6
    %v2667 = vrot.slane %v1708, 4
    %v2668 = vrot.slane %v1709, 2
    %v2669 = vrot.slane %v1711, 6
    %v2670 = vrot.slane %v1712, 4
    %v2671 = vrot.slane %v1713, 2
    %v2672 = vrot.slane %v1715, 6
    %v2673 = vrot.slane %v1716, 4
    %v2674 = vrot.slane %v1717, 2
    %v2675 = vrot.slane %v1719, 6
    %v2676 = vrot.slane %v1720, 4
    %v2677 = vrot.slane %v1721, 2
    %v2678 = vrot.slane %v1723, 6
    %v2679 = vrot.slane %v1724, 4
    %v2680 = vrot.slane %v1725, 2
    %v2681 = vrot.slane %v1727, 6
    %v2682 = vrot.slane %v1728, 4
    %v2683 = vrot.slane %v1729, 2
    %v2684 = vrot.slane %v1731, 6
    %v2685 = vrot.slane %v1732, 4
    %v2686 = vrot.slane %v1733, 2
    %v2687 = vrot.slane %v1735, 6
    %v2688 = vrot.slane %v1736, 4
    %v2689 = vrot.slane %v1737, 2
    %v2690 = vrot.slane %v1739, 6
    %v2691 = vrot.slane %v1740, 4
    %v2692 = vrot.slane %v1741, 2
    %v2693 = vrot.slane %v1743, 6
    %v2694 = vrot.slane %v1744, 4
    %v2695 = vrot.slane %v1745, 2
    %v2696 = vrot.slane %v1747, 6
    %v2697 = vrot.slane %v1748, 4
    %v2698 = vrot.slane %v1749, 2
    %v2699 = vrot.slane %v1751, 6
    %v2700 = vrot.slane %v1752, 4
    %v2701 = vrot.slane %v1753, 2
    %v2702 = vrot.slane %v1755, 6
    %v2703 = vrot.slane %v1756, 4
    %v2704 = vrot.slane %v1757, 2
    %v2705 = vrot.slane %v1759, 6
    %v2706 = vrot.slane %v1760, 4
    %v2707 = vrot.slane %v1761, 2
    %v2708 = vrot.slane %v1763, 6
    %v2709 = vrot.slane %v1764, 4
    %v2710 = vrot.slane %v1765, 2
    %v2711 = vrot.slane %v1767, 6
    %v2712 = vrot.slane %v1768, 4
    %v2713 = vrot.slane %v1769, 2
    %v2714 = vrot.slane %v1771, 6
    %v2715 = vrot.slane %v1772, 4
    %v2716 = vrot.slane %v1773, 2
    %v2717 = vrot.slane %v1775, 6
    %v2718 = vrot.slane %v1776, 4
    %v2719 = vrot.slane %v1777, 2
    %v2720 = vrot.slane %v1779, 6
    %v2721 = vrot.slane %v1780, 4
    %v2722 = vrot.slane %v1781, 2
    %v2723 = vrot.slane %v1783, 6
    %v2724 = vrot.slane %v1784, 4
    %v2725 = vrot.slane %v1785, 2
    %v2726 = vrot.slane %v1787, 6
    %v2727 = vrot.slane %v1788, 4
    %v2728 = vrot.slane %v1789, 2
    %v2729 = vrot.slane %v1791, 6
    %v2730 = vrot.slane %v1792, 4
    %v2731 = vrot.slane %v1793, 2
    %v2732 = vrot.slane %v1795, 6
    %v2733 = vrot.slane %v1796, 4
    %v2734 = vrot.slane %v1797, 2
    %v2735 = vrot.slane %v1799, 6
    %v2736 = vrot.slane %v1800, 4
    %v2737 = vrot.slane %v1801, 2
    %v2738 = vrot.slane %v1803, 6
    %v2739 = vrot.slane %v1804, 4
    %v2740 = vrot.slane %v1805, 2
    %v2741 = vrot.slane %v1807, 6
    %v2742 = vrot.slane %v1808, 4
    %v2743 = vrot.slane %v1809, 2
    %v2744 = vrot.slane %v1811, 6
    %v2745 = vrot.slane %v1812, 4
    %v2746 = vrot.slane %v1813, 2
    %v2747 = vrot.slane %v1815, 6
    %v2748 = vrot.slane %v1816, 4
    %v2749 = vrot.slane %v1817, 2
    %v2750 = vrot.slane %v1819, 6
    %v2751 = vrot.slane %v1820, 4
    %v2752 = vrot.slane %v1821, 2
    %v2753 = vrot.slane %v1823, 6
    %v2754 = vrot.slane %v1824, 4
    %v2755 = vrot.slane %v1825, 2
    %v2756 = vrot.slane %v1827, 6
    %v2757 = vrot.slane %v1828, 4
    %v2758 = vrot.slane %v1829, 2
    %v2759 = vrot.slane %v1831, 6
    %v2760 = vrot.slane %v1832, 4
    %v2761 = vrot.slane %v1833, 2
    %v2762 = vrot.slane %v1835, 6
    %v2763 = vrot.slane %v1836, 4
    %v2764 = vrot.slane %v1837, 2
    %v2765 = vrot.slane %v1839, 6
    %v2766 = vrot.slane %v1840, 4
    %v2767 = vrot.slane %v1841, 2
    %v2768 = vrot.slane %v1843, 6
    %v2769 = vrot.slane %v1844, 4
    %v2770 = vrot.slane %v1845, 2
    %v2771 = vrot.slane %v1847, 6
    %v2772 = vrot.slane %v1848, 4
    %v2773 = vrot.slane %v1849, 2
    %v2774 = vrot.slane %v1851, 6
    %v2775 = vrot.slane %v1852, 4
    %v2776 = vrot.slane %v1853, 2
    %v2777 = vrot.slane %v1855, 6
    %v2778 = vrot.slane %v1856, 4
    %v2779 = vrot.slane %v1857, 2
    %v2780 = vrot.slane %v1859, 6
    %v2781 = vrot.slane %v1860, 4
    %v2782 = vrot.slane %v1861, 2
    %v2783 = vrot.slane %v1863, 6
    %v2784 = vrot.slane %v1864, 4
    %v2785 = vrot.slane %v1865, 2
    %v2786 = vrot.slane %v1867, 6
    %v2787 = vrot.slane %v1868, 4
    %v2788 = vrot.slane %v1869, 2
    %v2789 = vrot.slane %v1871, 6
    %v2790 = vrot.slane %v1872, 4
    %v2791 = vrot.slane %v1873, 2
    %v2792 = vrot.slane %v1875, 6
    %v2793 = vrot.slane %v1876, 4
    %v2794 = vrot.slane %v1877, 2
    %v2795 = vrot.slane %v1879, 6
    %v2796 = vrot.slane %v1880, 4
    %v2797 = vrot.slane %v1881, 2
    %v2798 = vrot.slane %v1883, 6
    %v2799 = vrot.slane %v1884, 4
    %v2800 = vrot.slane %v1885, 2
    %v2801 = vrot.slane %v1887, 6
    %v2802 = vrot.slane %v1888, 4
    %v2803 = vrot.slane %v1889, 2
    %v2804 = vrot.slane %v1891, 6
    %v2805 = vrot.slane %v1892, 4
    %v2806 = vrot.slane %v1893, 2
    %v2807 = vrot.slane %v1895, 6
    %v2808 = vrot.slane %v1896, 4
    %v2809 = vrot.slane %v1897, 2
    %v2810 = vrot.slane %v1899, 6
    %v2811 = vrot.slane %v1900, 4
    %v2812 = vrot.slane %v1901, 2
    %v2813 = vrot.slane %v1903, 6
    %v2814 = vrot.slane %v1904, 4
    %v2815 = vrot.slane %v1905, 2
    %v2816 = vrot.slane %v1907, 6
    %v2817 = vrot.slane %v1908, 4
    %v2818 = vrot.slane %v1909, 2
    %v2819 = vrot.slane %v1911, 6
    %v2820 = vrot.slane %v1912, 4
    %v2821 = vrot.slane %v1913, 2
    %v2822 = vrot.slane %v1915, 6
    %v2823 = vrot.slane %v1916, 4
    %v2824 = vrot.slane %v1917, 2
    %v2825 = vrot.slane %v1919, 6
    %v2826 = vrot.slane %v1920, 4
    %v2827 = vrot.slane %v1921, 2
    %v2828 = vrot.slane %v1923, 6
    %v2829 = vrot.slane %v1924, 4
    %v2830 = vrot.slane %v1925, 2
    %v2831 = vrot.slane %v1927, 6
    %v2832 = vrot.slane %v1928, 4
    %v2833 = vrot.slane %v1929, 2
    %v2834 = vrot.slane %v1931, 6
    %v2835 = vrot.slane %v1932, 4
    %v2836 = vrot.slane %v1933, 2
    %v2837 = vrot.slane %v1935, 6
    %v2838 = vrot.slane %v1936, 4
    %v2839 = vrot.slane %v1937, 2
    %v2840 = vrot.slane %v1939, 6
    %v2841 = vrot.slane %v1940, 4
    %v2842 = vrot.slane %v1941, 2
    %v2843 = vrot.slane %v1943, 6
    %v2844 = vrot.slane %v1944, 4
    %v2845 = vrot.slane %v1945, 2
    %v2846 = vrot.slane %v1947, 6
    %v2847 = vrot.slane %v1948, 4
    %v2848 = vrot.slane %v1949, 2
    %v2849 = vrot.slane %v1951, 6
    %v2850 = vrot.slane %v1952, 4
    %v2851 = vrot.slane %v1953, 2
    %v2852 = vrot.slane %v1955, 6
    %v2853 = vrot.slane %v1956, 4
    %v2854 = vrot.slane %v1957, 2
    %v2855 = vrot.slane %v1959, 6
    %v2856 = vrot.slane %v1960, 4
    %v2857 = vrot.slane %v1961, 2
    %vm2858 = vcmask 1041408
    %v2859 = vsel %vm2858, %v1450, %v2474
    %vm2860 = vcmask 1045508
    %v2861 = vsel %vm2860, %v2475, %v2476
    %vm2862 = vcmask 1043456
    %v2863 = vsel %vm2862, %v2859, %v2861
    %v2864 = vsel %vm2858, %v1454, %v2477
    %v2865 = vsel %vm2860, %v2478, %v2479
    %v2866 = vsel %vm2862, %v2864, %v2865
    %v2867 = vsel %vm2858, %v1458, %v2480
    %v2868 = vsel %vm2860, %v2481, %v2482
    %v2869 = vsel %vm2862, %v2867, %v2868
    %v2870 = vsel %vm2858, %v1462, %v2483
    %v2871 = vsel %vm2860, %v2484, %v2485
    %v2872 = vsel %vm2862, %v2870, %v2871
    %v2873 = vsel %vm2858, %v1466, %v2486
    %v2874 = vsel %vm2860, %v2487, %v2488
    %v2875 = vsel %vm2862, %v2873, %v2874
    %v2876 = vsel %vm2858, %v1470, %v2489
    %v2877 = vsel %vm2860, %v2490, %v2491
    %v2878 = vsel %vm2862, %v2876, %v2877
    %v2879 = vsel %vm2858, %v1474, %v2492
    %v2880 = vsel %vm2860, %v2493, %v2494
    %v2881 = vsel %vm2862, %v2879, %v2880
    %v2882 = vsel %vm2858, %v1478, %v2495
    %v2883 = vsel %vm2860, %v2496, %v2497
    %v2884 = vsel %vm2862, %v2882, %v2883
    %v2885 = vsel %vm2858, %v1482, %v2498
    %v2886 = vsel %vm2860, %v2499, %v2500
    %v2887 = vsel %vm2862, %v2885, %v2886
    %v2888 = vsel %vm2858, %v1486, %v2501
    %v2889 = vsel %vm2860, %v2502, %v2503
    %v2890 = vsel %vm2862, %v2888, %v2889
    %v2891 = vsel %vm2858, %v1490, %v2504
    %v2892 = vsel %vm2860, %v2505, %v2506
    %v2893 = vsel %vm2862, %v2891, %v2892
    %v2894 = vsel %vm2858, %v1494, %v2507
    %v2895 = vsel %vm2860, %v2508, %v2509
    %v2896 = vsel %vm2862, %v2894, %v2895
    %v2897 = vsel %vm2858, %v1498, %v2510
    %v2898 = vsel %vm2860, %v2511, %v2512
    %v2899 = vsel %vm2862, %v2897, %v2898
    %v2900 = vsel %vm2858, %v1502, %v2513
    %v2901 = vsel %vm2860, %v2514, %v2515
    %v2902 = vsel %vm2862, %v2900, %v2901
    %v2903 = vsel %vm2858, %v1506, %v2516
    %v2904 = vsel %vm2860, %v2517, %v2518
    %v2905 = vsel %vm2862, %v2903, %v2904
    %v2906 = vsel %vm2858, %v1510, %v2519
    %v2907 = vsel %vm2860, %v2520, %v2521
    %v2908 = vsel %vm2862, %v2906, %v2907
    %v2909 = vsel %vm2858, %v1514, %v2522
    %v2910 = vsel %vm2860, %v2523, %v2524
    %v2911 = vsel %vm2862, %v2909, %v2910
    %v2912 = vsel %vm2858, %v1518, %v2525
    %v2913 = vsel %vm2860, %v2526, %v2527
    %v2914 = vsel %vm2862, %v2912, %v2913
    %v2915 = vsel %vm2858, %v1522, %v2528
    %v2916 = vsel %vm2860, %v2529, %v2530
    %v2917 = vsel %vm2862, %v2915, %v2916
    %v2918 = vsel %vm2858, %v1526, %v2531
    %v2919 = vsel %vm2860, %v2532, %v2533
    %v2920 = vsel %vm2862, %v2918, %v2919
    %v2921 = vsel %vm2858, %v1530, %v2534
    %v2922 = vsel %vm2860, %v2535, %v2536
    %v2923 = vsel %vm2862, %v2921, %v2922
    %v2924 = vsel %vm2858, %v1534, %v2537
    %v2925 = vsel %vm2860, %v2538, %v2539
    %v2926 = vsel %vm2862, %v2924, %v2925
    %v2927 = vsel %vm2858, %v1538, %v2540
    %v2928 = vsel %vm2860, %v2541, %v2542
    %v2929 = vsel %vm2862, %v2927, %v2928
    %v2930 = vsel %vm2858, %v1542, %v2543
    %v2931 = vsel %vm2860, %v2544, %v2545
    %v2932 = vsel %vm2862, %v2930, %v2931
    %v2933 = vsel %vm2858, %v1546, %v2546
    %v2934 = vsel %vm2860, %v2547, %v2548
    %v2935 = vsel %vm2862, %v2933, %v2934
    %v2936 = vsel %vm2858, %v1550, %v2549
    %v2937 = vsel %vm2860, %v2550, %v2551
    %v2938 = vsel %vm2862, %v2936, %v2937
    %v2939 = vsel %vm2858, %v1554, %v2552
    %v2940 = vsel %vm2860, %v2553, %v2554
    %v2941 = vsel %vm2862, %v2939, %v2940
    %v2942 = vsel %vm2858, %v1558, %v2555
    %v2943 = vsel %vm2860, %v2556, %v2557
    %v2944 = vsel %vm2862, %v2942, %v2943
    %v2945 = vsel %vm2858, %v1562, %v2558
    %v2946 = vsel %vm2860, %v2559, %v2560
    %v2947 = vsel %vm2862, %v2945, %v2946
    %v2948 = vsel %vm2858, %v1566, %v2561
    %v2949 = vsel %vm2860, %v2562, %v2563
    %v2950 = vsel %vm2862, %v2948, %v2949
    %v2951 = vsel %vm2858, %v1570, %v2564
    %v2952 = vsel %vm2860, %v2565, %v2566
    %v2953 = vsel %vm2862, %v2951, %v2952
    %v2954 = vsel %vm2858, %v1574, %v2567
    %v2955 = vsel %vm2860, %v2568, %v2569
    %v2956 = vsel %vm2862, %v2954, %v2955
    %v2957 = vsel %vm2858, %v1578, %v2570
    %v2958 = vsel %vm2860, %v2571, %v2572
    %v2959 = vsel %vm2862, %v2957, %v2958
    %v2960 = vsel %vm2858, %v1582, %v2573
    %v2961 = vsel %vm2860, %v2574, %v2575
    %v2962 = vsel %vm2862, %v2960, %v2961
    %v2963 = vsel %vm2858, %v1586, %v2576
    %v2964 = vsel %vm2860, %v2577, %v2578
    %v2965 = vsel %vm2862, %v2963, %v2964
    %v2966 = vsel %vm2858, %v1590, %v2579
    %v2967 = vsel %vm2860, %v2580, %v2581
    %v2968 = vsel %vm2862, %v2966, %v2967
    %v2969 = vsel %vm2858, %v1594, %v2582
    %v2970 = vsel %vm2860, %v2583, %v2584
    %v2971 = vsel %vm2862, %v2969, %v2970
    %v2972 = vsel %vm2858, %v1598, %v2585
    %v2973 = vsel %vm2860, %v2586, %v2587
    %v2974 = vsel %vm2862, %v2972, %v2973
    %v2975 = vsel %vm2858, %v1602, %v2588
    %v2976 = vsel %vm2860, %v2589, %v2590
    %v2977 = vsel %vm2862, %v2975, %v2976
    %v2978 = vsel %vm2858, %v1606, %v2591
    %v2979 = vsel %vm2860, %v2592, %v2593
    %v2980 = vsel %vm2862, %v2978, %v2979
    %v2981 = vsel %vm2858, %v1610, %v2594
    %v2982 = vsel %vm2860, %v2595, %v2596
    %v2983 = vsel %vm2862, %v2981, %v2982
    %v2984 = vsel %vm2858, %v1614, %v2597
    %v2985 = vsel %vm2860, %v2598, %v2599
    %v2986 = vsel %vm2862, %v2984, %v2985
    %v2987 = vsel %vm2858, %v1618, %v2600
    %v2988 = vsel %vm2860, %v2601, %v2602
    %v2989 = vsel %vm2862, %v2987, %v2988
    %v2990 = vsel %vm2858, %v1622, %v2603
    %v2991 = vsel %vm2860, %v2604, %v2605
    %v2992 = vsel %vm2862, %v2990, %v2991
    %v2993 = vsel %vm2858, %v1626, %v2606
    %v2994 = vsel %vm2860, %v2607, %v2608
    %v2995 = vsel %vm2862, %v2993, %v2994
    %v2996 = vsel %vm2858, %v1630, %v2609
    %v2997 = vsel %vm2860, %v2610, %v2611
    %v2998 = vsel %vm2862, %v2996, %v2997
    %v2999 = vsel %vm2858, %v1634, %v2612
    %v3000 = vsel %vm2860, %v2613, %v2614
    %v3001 = vsel %vm2862, %v2999, %v3000
    %v3002 = vsel %vm2858, %v1638, %v2615
    %v3003 = vsel %vm2860, %v2616, %v2617
    %v3004 = vsel %vm2862, %v3002, %v3003
    %v3005 = vsel %vm2858, %v1642, %v2618
    %v3006 = vsel %vm2860, %v2619, %v2620
    %v3007 = vsel %vm2862, %v3005, %v3006
    %v3008 = vsel %vm2858, %v1646, %v2621
    %v3009 = vsel %vm2860, %v2622, %v2623
    %v3010 = vsel %vm2862, %v3008, %v3009
    %v3011 = vsel %vm2858, %v1650, %v2624
    %v3012 = vsel %vm2860, %v2625, %v2626
    %v3013 = vsel %vm2862, %v3011, %v3012
    %v3014 = vsel %vm2858, %v1654, %v2627
    %v3015 = vsel %vm2860, %v2628, %v2629
    %v3016 = vsel %vm2862, %v3014, %v3015
    %v3017 = vsel %vm2858, %v1658, %v2630
    %v3018 = vsel %vm2860, %v2631, %v2632
    %v3019 = vsel %vm2862, %v3017, %v3018
    %v3020 = vsel %vm2858, %v1662, %v2633
    %v3021 = vsel %vm2860, %v2634, %v2635
    %v3022 = vsel %vm2862, %v3020, %v3021
    %v3023 = vsel %vm2858, %v1666, %v2636
    %v3024 = vsel %vm2860, %v2637, %v2638
    %v3025 = vsel %vm2862, %v3023, %v3024
    %v3026 = vsel %vm2858, %v1670, %v2639
    %v3027 = vsel %vm2860, %v2640, %v2641
    %v3028 = vsel %vm2862, %v3026, %v3027
    %v3029 = vsel %vm2858, %v1674, %v2642
    %v3030 = vsel %vm2860, %v2643, %v2644
    %v3031 = vsel %vm2862, %v3029, %v3030
    %v3032 = vsel %vm2858, %v1678, %v2645
    %v3033 = vsel %vm2860, %v2646, %v2647
    %v3034 = vsel %vm2862, %v3032, %v3033
    %v3035 = vsel %vm2858, %v1682, %v2648
    %v3036 = vsel %vm2860, %v2649, %v2650
    %v3037 = vsel %vm2862, %v3035, %v3036
    %v3038 = vsel %vm2858, %v1686, %v2651
    %v3039 = vsel %vm2860, %v2652, %v2653
    %v3040 = vsel %vm2862, %v3038, %v3039
    %v3041 = vsel %vm2858, %v1690, %v2654
    %v3042 = vsel %vm2860, %v2655, %v2656
    %v3043 = vsel %vm2862, %v3041, %v3042
    %v3044 = vsel %vm2858, %v1694, %v2657
    %v3045 = vsel %vm2860, %v2658, %v2659
    %v3046 = vsel %vm2862, %v3044, %v3045
    %v3047 = vsel %vm2858, %v1698, %v2660
    %v3048 = vsel %vm2860, %v2661, %v2662
    %v3049 = vsel %vm2862, %v3047, %v3048
    %v3050 = vsel %vm2858, %v1702, %v2663
    %v3051 = vsel %vm2860, %v2664, %v2665
    %v3052 = vsel %vm2862, %v3050, %v3051
    %v3053 = vsel %vm2858, %v1706, %v2666
    %v3054 = vsel %vm2860, %v2667, %v2668
    %v3055 = vsel %vm2862, %v3053, %v3054
    %v3056 = vsel %vm2858, %v1710, %v2669
    %v3057 = vsel %vm2860, %v2670, %v2671
    %v3058 = vsel %vm2862, %v3056, %v3057
    %v3059 = vsel %vm2858, %v1714, %v2672
    %v3060 = vsel %vm2860, %v2673, %v2674
    %v3061 = vsel %vm2862, %v3059, %v3060
    %v3062 = vsel %vm2858, %v1718, %v2675
    %v3063 = vsel %vm2860, %v2676, %v2677
    %v3064 = vsel %vm2862, %v3062, %v3063
    %v3065 = vsel %vm2858, %v1722, %v2678
    %v3066 = vsel %vm2860, %v2679, %v2680
    %v3067 = vsel %vm2862, %v3065, %v3066
    %v3068 = vsel %vm2858, %v1726, %v2681
    %v3069 = vsel %vm2860, %v2682, %v2683
    %v3070 = vsel %vm2862, %v3068, %v3069
    %v3071 = vsel %vm2858, %v1730, %v2684
    %v3072 = vsel %vm2860, %v2685, %v2686
    %v3073 = vsel %vm2862, %v3071, %v3072
    %v3074 = vsel %vm2858, %v1734, %v2687
    %v3075 = vsel %vm2860, %v2688, %v2689
    %v3076 = vsel %vm2862, %v3074, %v3075
    %v3077 = vsel %vm2858, %v1738, %v2690
    %v3078 = vsel %vm2860, %v2691, %v2692
    %v3079 = vsel %vm2862, %v3077, %v3078
    %v3080 = vsel %vm2858, %v1742, %v2693
    %v3081 = vsel %vm2860, %v2694, %v2695
    %v3082 = vsel %vm2862, %v3080, %v3081
    %v3083 = vsel %vm2858, %v1746, %v2696
    %v3084 = vsel %vm2860, %v2697, %v2698
    %v3085 = vsel %vm2862, %v3083, %v3084
    %v3086 = vsel %vm2858, %v1750, %v2699
    %v3087 = vsel %vm2860, %v2700, %v2701
    %v3088 = vsel %vm2862, %v3086, %v3087
    %v3089 = vsel %vm2858, %v1754, %v2702
    %v3090 = vsel %vm2860, %v2703, %v2704
    %v3091 = vsel %vm2862, %v3089, %v3090
    %v3092 = vsel %vm2858, %v1758, %v2705
    %v3093 = vsel %vm2860, %v2706, %v2707
    %v3094 = vsel %vm2862, %v3092, %v3093
    %v3095 = vsel %vm2858, %v1762, %v2708
    %v3096 = vsel %vm2860, %v2709, %v2710
    %v3097 = vsel %vm2862, %v3095, %v3096
    %v3098 = vsel %vm2858, %v1766, %v2711
    %v3099 = vsel %vm2860, %v2712, %v2713
    %v3100 = vsel %vm2862, %v3098, %v3099
    %v3101 = vsel %vm2858, %v1770, %v2714
    %v3102 = vsel %vm2860, %v2715, %v2716
    %v3103 = vsel %vm2862, %v3101, %v3102
    %v3104 = vsel %vm2858, %v1774, %v2717
    %v3105 = vsel %vm2860, %v2718, %v2719
    %v3106 = vsel %vm2862, %v3104, %v3105
    %v3107 = vsel %vm2858, %v1778, %v2720
    %v3108 = vsel %vm2860, %v2721, %v2722
    %v3109 = vsel %vm2862, %v3107, %v3108
    %v3110 = vsel %vm2858, %v1782, %v2723
    %v3111 = vsel %vm2860, %v2724, %v2725
    %v3112 = vsel %vm2862, %v3110, %v3111
    %v3113 = vsel %vm2858, %v1786, %v2726
    %v3114 = vsel %vm2860, %v2727, %v2728
    %v3115 = vsel %vm2862, %v3113, %v3114
    %v3116 = vsel %vm2858, %v1790, %v2729
    %v3117 = vsel %vm2860, %v2730, %v2731
    %v3118 = vsel %vm2862, %v3116, %v3117
    %v3119 = vsel %vm2858, %v1794, %v2732
    %v3120 = vsel %vm2860, %v2733, %v2734
    %v3121 = vsel %vm2862, %v3119, %v3120
    %v3122 = vsel %vm2858, %v1798, %v2735
    %v3123 = vsel %vm2860, %v2736, %v2737
    %v3124 = vsel %vm2862, %v3122, %v3123
    %v3125 = vsel %vm2858, %v1802, %v2738
    %v3126 = vsel %vm2860, %v2739, %v2740
    %v3127 = vsel %vm2862, %v3125, %v3126
    %v3128 = vsel %vm2858, %v1806, %v2741
    %v3129 = vsel %vm2860, %v2742, %v2743
    %v3130 = vsel %vm2862, %v3128, %v3129
    %v3131 = vsel %vm2858, %v1810, %v2744
    %v3132 = vsel %vm2860, %v2745, %v2746
    %v3133 = vsel %vm2862, %v3131, %v3132
    %v3134 = vsel %vm2858, %v1814, %v2747
    %v3135 = vsel %vm2860, %v2748, %v2749
    %v3136 = vsel %vm2862, %v3134, %v3135
    %v3137 = vsel %vm2858, %v1818, %v2750
    %v3138 = vsel %vm2860, %v2751, %v2752
    %v3139 = vsel %vm2862, %v3137, %v3138
    %v3140 = vsel %vm2858, %v1822, %v2753
    %v3141 = vsel %vm2860, %v2754, %v2755
    %v3142 = vsel %vm2862, %v3140, %v3141
    %v3143 = vsel %vm2858, %v1826, %v2756
    %v3144 = vsel %vm2860, %v2757, %v2758
    %v3145 = vsel %vm2862, %v3143, %v3144
    %v3146 = vsel %vm2858, %v1830, %v2759
    %v3147 = vsel %vm2860, %v2760, %v2761
    %v3148 = vsel %vm2862, %v3146, %v3147
    %v3149 = vsel %vm2858, %v1834, %v2762
    %v3150 = vsel %vm2860, %v2763, %v2764
    %v3151 = vsel %vm2862, %v3149, %v3150
    %v3152 = vsel %vm2858, %v1838, %v2765
    %v3153 = vsel %vm2860, %v2766, %v2767
    %v3154 = vsel %vm2862, %v3152, %v3153
    %v3155 = vsel %vm2858, %v1842, %v2768
    %v3156 = vsel %vm2860, %v2769, %v2770
    %v3157 = vsel %vm2862, %v3155, %v3156
    %v3158 = vsel %vm2858, %v1846, %v2771
    %v3159 = vsel %vm2860, %v2772, %v2773
    %v3160 = vsel %vm2862, %v3158, %v3159
    %v3161 = vsel %vm2858, %v1850, %v2774
    %v3162 = vsel %vm2860, %v2775, %v2776
    %v3163 = vsel %vm2862, %v3161, %v3162
    %v3164 = vsel %vm2858, %v1854, %v2777
    %v3165 = vsel %vm2860, %v2778, %v2779
    %v3166 = vsel %vm2862, %v3164, %v3165
    %v3167 = vsel %vm2858, %v1858, %v2780
    %v3168 = vsel %vm2860, %v2781, %v2782
    %v3169 = vsel %vm2862, %v3167, %v3168
    %v3170 = vsel %vm2858, %v1862, %v2783
    %v3171 = vsel %vm2860, %v2784, %v2785
    %v3172 = vsel %vm2862, %v3170, %v3171
    %v3173 = vsel %vm2858, %v1866, %v2786
    %v3174 = vsel %vm2860, %v2787, %v2788
    %v3175 = vsel %vm2862, %v3173, %v3174
    %v3176 = vsel %vm2858, %v1870, %v2789
    %v3177 = vsel %vm2860, %v2790, %v2791
    %v3178 = vsel %vm2862, %v3176, %v3177
    %v3179 = vsel %vm2858, %v1874, %v2792
    %v3180 = vsel %vm2860, %v2793, %v2794
    %v3181 = vsel %vm2862, %v3179, %v3180
    %v3182 = vsel %vm2858, %v1878, %v2795
    %v3183 = vsel %vm2860, %v2796, %v2797
    %v3184 = vsel %vm2862, %v3182, %v3183
    %v3185 = vsel %vm2858, %v1882, %v2798
    %v3186 = vsel %vm2860, %v2799, %v2800
    %v3187 = vsel %vm2862, %v3185, %v3186
    %v3188 = vsel %vm2858, %v1886, %v2801
    %v3189 = vsel %vm2860, %v2802, %v2803
    %v3190 = vsel %vm2862, %v3188, %v3189
    %v3191 = vsel %vm2858, %v1890, %v2804
    %v3192 = vsel %vm2860, %v2805, %v2806
    %v3193 = vsel %vm2862, %v3191, %v3192
    %v3194 = vsel %vm2858, %v1894, %v2807
    %v3195 = vsel %vm2860, %v2808, %v2809
    %v3196 = vsel %vm2862, %v3194, %v3195
    %v3197 = vsel %vm2858, %v1898, %v2810
    %v3198 = vsel %vm2860, %v2811, %v2812
    %v3199 = vsel %vm2862, %v3197, %v3198
    %v3200 = vsel %vm2858, %v1902, %v2813
    %v3201 = vsel %vm2860, %v2814, %v2815
    %v3202 = vsel %vm2862, %v3200, %v3201
    %v3203 = vsel %vm2858, %v1906, %v2816
    %v3204 = vsel %vm2860, %v2817, %v2818
    %v3205 = vsel %vm2862, %v3203, %v3204
    %v3206 = vsel %vm2858, %v1910, %v2819
    %v3207 = vsel %vm2860, %v2820, %v2821
    %v3208 = vsel %vm2862, %v3206, %v3207
    %v3209 = vsel %vm2858, %v1914, %v2822
    %v3210 = vsel %vm2860, %v2823, %v2824
    %v3211 = vsel %vm2862, %v3209, %v3210
    %v3212 = vsel %vm2858, %v1918, %v2825
    %v3213 = vsel %vm2860, %v2826, %v2827
    %v3214 = vsel %vm2862, %v3212, %v3213
    %v3215 = vsel %vm2858, %v1922, %v2828
    %v3216 = vsel %vm2860, %v2829, %v2830
    %v3217 = vsel %vm2862, %v3215, %v3216
    %v3218 = vsel %vm2858, %v1926, %v2831
    %v3219 = vsel %vm2860, %v2832, %v2833
    %v3220 = vsel %vm2862, %v3218, %v3219
    %v3221 = vsel %vm2858, %v1930, %v2834
    %v3222 = vsel %vm2860, %v2835, %v2836
    %v3223 = vsel %vm2862, %v3221, %v3222
    %v3224 = vsel %vm2858, %v1934, %v2837
    %v3225 = vsel %vm2860, %v2838, %v2839
    %v3226 = vsel %vm2862, %v3224, %v3225
    %v3227 = vsel %vm2858, %v1938, %v2840
    %v3228 = vsel %vm2860, %v2841, %v2842
    %v3229 = vsel %vm2862, %v3227, %v3228
    %v3230 = vsel %vm2858, %v1942, %v2843
    %v3231 = vsel %vm2860, %v2844, %v2845
    %v3232 = vsel %vm2862, %v3230, %v3231
    %v3233 = vsel %vm2858, %v1946, %v2846
    %v3234 = vsel %vm2860, %v2847, %v2848
    %v3235 = vsel %vm2862, %v3233, %v3234
    %v3236 = vsel %vm2858, %v1950, %v2849
    %v3237 = vsel %vm2860, %v2850, %v2851
    %v3238 = vsel %vm2862, %v3236, %v3237
    %v3239 = vsel %vm2858, %v1954, %v2852
    %v3240 = vsel %vm2860, %v2853, %v2854
    %v3241 = vsel %vm2862, %v3239, %v3240
    %v3242 = vsel %vm2858, %v1958, %v2855
    %v3243 = vsel %vm2860, %v2856, %v2857
    %v3244 = vsel %vm2862, %v3242, %v3243
    %v3373 = vmul.f32 %v42, %v2863
    %v3374 = vmul.f32 %v43, %v2866
    %v3375 = vmul.f32 %v44, %v2869
    %v3376 = vmul.f32 %v45, %v2872
    %v3377 = vmul.f32 %v46, %v2875
    %v3378 = vmul.f32 %v47, %v2878
    %v3379 = vmul.f32 %v48, %v2881
    %v3380 = vmul.f32 %v49, %v2884
    %v3381 = vmul.f32 %v50, %v2887
    %v3382 = vmul.f32 %v51, %v2890
    %v3383 = vmul.f32 %v52, %v2893
    %v3384 = vmul.f32 %v53, %v2896
    %v3385 = vmul.f32 %v54, %v2899
    %v3386 = vmul.f32 %v55, %v2902
    %v3387 = vmul.f32 %v56, %v2905
    %v3388 = vmul.f32 %v57, %v2908
    %v3389 = vmul.f32 %v58, %v2911
    %v3390 = vmul.f32 %v59, %v2914
    %v3391 = vmul.f32 %v60, %v2917
    %v3392 = vmul.f32 %v61, %v2920
    %v3393 = vmul.f32 %v62, %v2923
    %v3394 = vmul.f32 %v63, %v2926
    %v3395 = vmul.f32 %v64, %v2929
    %v3396 = vmul.f32 %v65, %v2932
    %v3397 = vmul.f32 %v66, %v2935
    %v3398 = vmul.f32 %v67, %v2938
    %v3399 = vmul.f32 %v68, %v2941
    %v3400 = vmul.f32 %v69, %v2944
    %v3401 = vmul.f32 %v70, %v2947
    %v3402 = vmul.f32 %v71, %v2950
    %v3403 = vmul.f32 %v72, %v2953
    %v3404 = vmul.f32 %v73, %v2956
    %v3405 = vmul.f32 %v74, %v2959
    %v3406 = vmul.f32 %v75, %v2962
    %v3407 = vmul.f32 %v76, %v2965
    %v3408 = vmul.f32 %v77, %v2968
    %v3409 = vmul.f32 %v78, %v2971
    %v3410 = vmul.f32 %v79, %v2974
    %v3411 = vmul.f32 %v80, %v2977
    %v3412 = vmul.f32 %v81, %v2980
    %v3413 = vmul.f32 %v82, %v2983
    %v3414 = vmul.f32 %v83, %v2986
    %v3415 = vmul.f32 %v84, %v2989
    %v3416 = vmul.f32 %v85, %v2992
    %v3417 = vmul.f32 %v86, %v2995
    %v3418 = vmul.f32 %v87, %v2998
    %v3419 = vmul.f32 %v88, %v3001
    %v3420 = vmul.f32 %v89, %v3004
    %v3421 = vmul.f32 %v90, %v3007
    %v3422 = vmul.f32 %v91, %v3010
    %v3423 = vmul.f32 %v92, %v3013
    %v3424 = vmul.f32 %v93, %v3016
    %v3425 = vmul.f32 %v94, %v3019
    %v3426 = vmul.f32 %v95, %v3022
    %v3427 = vmul.f32 %v96, %v3025
    %v3428 = vmul.f32 %v97, %v3028
    %v3429 = vmul.f32 %v98, %v3031
    %v3430 = vmul.f32 %v99, %v3034
    %v3431 = vmul.f32 %v100, %v3037
    %v3432 = vmul.f32 %v101, %v3040
    %v3433 = vmul.f32 %v102, %v3043
    %v3434 = vmul.f32 %v103, %v3046
    %v3435 = vmul.f32 %v104, %v3049
    %v3436 = vmul.f32 %v105, %v3052
    %v3437 = vmul.f32 %v106, %v3055
    %v3438 = vmul.f32 %v107, %v3058
    %v3439 = vmul.f32 %v108, %v3061
    %v3440 = vmul.f32 %v109, %v3064
    %v3441 = vmul.f32 %v110, %v3067
    %v3442 = vmul.f32 %v111, %v3070
    %v3443 = vmul.f32 %v112, %v3073
    %v3444 = vmul.f32 %v113, %v3076
    %v3445 = vmul.f32 %v114, %v3079
    %v3446 = vmul.f32 %v115, %v3082
    %v3447 = vmul.f32 %v116, %v3085
    %v3448 = vmul.f32 %v117, %v3088
    %v3449 = vmul.f32 %v118, %v3091
    %v3450 = vmul.f32 %v119, %v3094
    %v3451 = vmul.f32 %v120, %v3097
    %v3452 = vmul.f32 %v121, %v3100
    %v3453 = vmul.f32 %v122, %v3103
    %v3454 = vmul.f32 %v123, %v3106
    %v3455 = vmul.f32 %v124, %v3109
    %v3456 = vmul.f32 %v125, %v3112
    %v3457 = vmul.f32 %v126, %v3115
    %v3458 = vmul.f32 %v127, %v3118
    %v3459 = vmul.f32 %v128, %v3121
    %v3460 = vmul.f32 %v129, %v3124
    %v3461 = vmul.f32 %v130, %v3127
    %v3462 = vmul.f32 %v131, %v3130
    %v3463 = vmul.f32 %v132, %v3133
    %v3464 = vmul.f32 %v133, %v3136
    %v3465 = vmul.f32 %v134, %v3139
    %v3466 = vmul.f32 %v135, %v3142
    %v3467 = vmul.f32 %v136, %v3145
    %v3468 = vmul.f32 %v137, %v3148
    %v3469 = vmul.f32 %v138, %v3151
    %v3470 = vmul.f32 %v139, %v3154
    %v3471 = vmul.f32 %v140, %v3157
    %v3472 = vmul.f32 %v141, %v3160
    %v3473 = vmul.f32 %v142, %v3163
    %v3474 = vmul.f32 %v143, %v3166
    %v3475 = vmul.f32 %v144, %v3169
    %v3476 = vmul.f32 %v145, %v3172
    %v3477 = vmul.f32 %v146, %v3175
    %v3478 = vmul.f32 %v147, %v3178
    %v3479 = vmul.f32 %v148, %v3181
    %v3480 = vmul.f32 %v149, %v3184
    %v3481 = vmul.f32 %v150, %v3187
    %v3482 = vmul.f32 %v151, %v3190
    %v3483 = vmul.f32 %v152, %v3193
    %v3484 = vmul.f32 %v153, %v3196
    %v3485 = vmul.f32 %v154, %v3199
    %v3486 = vmul.f32 %v155, %v3202
    %v3487 = vmul.f32 %v156, %v3205
    %v3488 = vmul.f32 %v157, %v3208
    %v3489 = vmul.f32 %v158, %v3211
    %v3490 = vmul.f32 %v159, %v3214
    %v3491 = vmul.f32 %v160, %v3217
    %v3492 = vmul.f32 %v161, %v3220
    %v3493 = vmul.f32 %v162, %v3223
    %v3494 = vmul.f32 %v163, %v3226
    %v3495 = vmul.f32 %v164, %v3229
    %v3496 = vmul.f32 %v165, %v3232
    %v3497 = vmul.f32 %v166, %v3235
    %v3498 = vmul.f32 %v167, %v3238
    %v3499 = vmul.f32 %v168, %v3241
    %v3500 = vmul.f32 %v169, %v3244
    %3629 = vst [vmem:[#allocation1] ss:$4 sm:$0xff] %v3373
    %s3630 = scalar_lea.vmem [#allocation1], 32
    %3631 = vst [vmem:[%s3630] ss:$4 sm:$0xff] %v3374
    %v3632 = vld.sshfl [vmem:[#allocation1] sm:$0xff pattern:$0x73625140]
    %v3633 = vld.sshfl [vmem:[#allocation1 + $0x8] sm:$0xff pattern:$0x73625140]
    %v3634 = vld.sshfl [vmem:[#allocation1 + $0x10] sm:$0xff pattern:$0x73625140]
    %v3635 = vld.sshfl [vmem:[#allocation1 + $0x18] sm:$0xff pattern:$0x73625140]
    %v3636 = vld.sshfl [vmem:[#allocation1 + $0x20] sm:$0xff pattern:$0x73625140]
    %v3637 = vld.sshfl [vmem:[#allocation1 + $0x28] sm:$0xff pattern:$0x73625140]
    %v3638 = vld.sshfl [vmem:[#allocation1 + $0x30] sm:$0xff pattern:$0x73625140]
    %v3639 = vld.sshfl [vmem:[#allocation1 + $0x38] sm:$0xff pattern:$0x73625140]
    %3640 = vst [vmem:[#allocation1] ss:$4 sm:$0xff] %v3375
    %3641 = vst [vmem:[%s3630] ss:$4 sm:$0xff] %v3376
    %v3642 = vld.sshfl [vmem:[#allocation1] sm:$0xff pattern:$0x73625140]
    %v3643 = vld.sshfl [vmem:[#allocation1 + $0x8] sm:$0xff pattern:$0x73625140]
    %v3644 = vld.sshfl [vmem:[#allocation1 + $0x10] sm:$0xff pattern:$0x73625140]
    %v3645 = vld.sshfl [vmem:[#allocation1 + $0x18] sm:$0xff pattern:$0x73625140]
    %v3646 = vld.sshfl [vmem:[#allocation1 + $0x20] sm:$0xff pattern:$0x73625140]
    %v3647 = vld.sshfl [vmem:[#allocation1 + $0x28] sm:$0xff pattern:$0x73625140]
    %v3648 = vld.sshfl [vmem:[#allocation1 + $0x30] sm:$0xff pattern:$0x73625140]
    %v3649 = vld.sshfl [vmem:[#allocation1 + $0x38] sm:$0xff pattern:$0x73625140]
    %3650 = vst [vmem:[#allocation1] ss:$4 sm:$0xff] %v3377
    %3651 = vst [vmem:[%s3630] ss:$4 sm:$0xff] %v3378
    %v3652 = vld.sshfl [vmem:[#allocation1] sm:$0xff pattern:$0x73625140]
    %v3653 = vld.sshfl [vmem:[#allocation1 + $0x8] sm:$0xff pattern:$0x73625140]
    %v3654 = vld.sshfl [vmem:[#allocation1 + $0x10] sm:$0xff pattern:$0x73625140]
    %v3655 = vld.sshfl [vmem:[#allocation1 + $0x18] sm:$0xff pattern:$0x73625140]
    %v3656 = vld.sshfl [vmem:[#allocation1 + $0x20] sm:$0xff pattern:$0x73625140]
    %v3657 = vld.sshfl [vmem:[#allocation1 + $0x28] sm:$0xff pattern:$0x73625140]
    %v3658 = vld.sshfl [vmem:[#allocation1 + $0x30] sm:$0xff pattern:$0x73625140]
    %v3659 = vld.sshfl [vmem:[#allocation1 + $0x38] sm:$0xff pattern:$0x73625140]
    %3660 = vst [vmem:[#allocation1] ss:$4 sm:$0xff] %v3379
    %3661 = vst [vmem:[%s3630] ss:$4 sm:$0xff] %v3380
    %v3662 = vld.sshfl [vmem:[#allocation1] sm:$0xff pattern:$0x73625140]
    %v3663 = vld.sshfl [vmem:[#allocation1 + $0x8] sm:$0xff pattern:$0x73625140]
    %v3664 = vld.sshfl [vmem:[#allocation1 + $0x10] sm:$0xff pattern:$0x73625140]
    %v3665 = vld.sshfl [vmem:[#allocation1 + $0x18] sm:$0xff pattern:$0x73625140]
    %v3666 = vld.sshfl [vmem:[#allocation1 + $0x20] sm:$0xff pattern:$0x73625140]
    %v3667 = vld.sshfl [vmem:[#allocation1 + $0x28] sm:$0xff pattern:$0x73625140]
    %v3668 = vld.sshfl [vmem:[#allocation1 + $0x30] sm:$0xff pattern:$0x73625140]
    %v3669 = vld.sshfl [vmem:[#allocation1 + $0x38] sm:$0xff pattern:$0x73625140]
    %3670 = vst [vmem:[#allocation1] ss:$4 sm:$0xff] %v3381
    %3671 = vst [vmem:[%s3630] ss:$4 sm:$0xff] %v3382
    %v3672 = vld.sshfl [vmem:[#allocation1] sm:$0xff pattern:$0x73625140]
    %v3673 = vld.sshfl [vmem:[#allocation1 + $0x8] sm:$0xff pattern:$0x73625140]
    %v3674 = vld.sshfl [vmem:[#allocation1 + $0x10] sm:$0xff pattern:$0x73625140]
    %v3675 = vld.sshfl [vmem:[#allocation1 + $0x18] sm:$0xff pattern:$0x73625140]
    %v3676 = vld.sshfl [vmem:[#allocation1 + $0x20] sm:$0xff pattern:$0x73625140]
    %v3677 = vld.sshfl [vmem:[#allocation1 + $0x28] sm:$0xff pattern:$0x73625140]
    %v3678 = vld.sshfl [vmem:[#allocation1 + $0x30] sm:$0xff pattern:$0x73625140]
    %v3679 = vld.sshfl [vmem:[#allocation1 + $0x38] sm:$0xff pattern:$0x73625140]
    %3680 = vst [vmem:[#allocation1] ss:$4 sm:$0xff] %v3383
    %3681 = vst [vmem:[%s3630] ss:$4 sm:$0xff] %v3384
    %v3682 = vld.sshfl [vmem:[#allocation1] sm:$0xff pattern:$0x73625140]
    %v3683 = vld.sshfl [vmem:[#allocation1 + $0x8] sm:$0xff pattern:$0x73625140]
    %v3684 = vld.sshfl [vmem:[#allocation1 + $0x10] sm:$0xff pattern:$0x73625140]
    %v3685 = vld.sshfl [vmem:[#allocation1 + $0x18] sm:$0xff pattern:$0x73625140]
    %v3686 = vld.sshfl [vmem:[#allocation1 + $0x20] sm:$0xff pattern:$0x73625140]
    %v3687 = vld.sshfl [vmem:[#allocation1 + $0x28] sm:$0xff pattern:$0x73625140]
    %v3688 = vld.sshfl [vmem:[#allocation1 + $0x30] sm:$0xff pattern:$0x73625140]
    %v3689 = vld.sshfl [vmem:[#allocation1 + $0x38] sm:$0xff pattern:$0x73625140]
    %3690 = vst [vmem:[#allocation1] ss:$4 sm:$0xff] %v3385
    %3691 = vst [vmem:[%s3630] ss:$4 sm:$0xff] %v3386
    %v3692 = vld.sshfl [vmem:[#allocation1] sm:$0xff pattern:$0x73625140]
    %v3693 = vld.sshfl [vmem:[#allocation1 + $0x8] sm:$0xff pattern:$0x73625140]
    %v3694 = vld.sshfl [vmem:[#allocation1 + $0x10] sm:$0xff pattern:$0x73625140]
    %v3695 = vld.sshfl [vmem:[#allocation1 + $0x18] sm:$0xff pattern:$0x73625140]
    %v3696 = vld.sshfl [vmem:[#allocation1 + $0x20] sm:$0xff pattern:$0x73625140]
    %v3697 = vld.sshfl [vmem:[#allocation1 + $0x28] sm:$0xff pattern:$0x73625140]
    %v3698 = vld.sshfl [vmem:[#allocation1 + $0x30] sm:$0xff pattern:$0x73625140]
    %v3699 = vld.sshfl [vmem:[#allocation1 + $0x38] sm:$0xff pattern:$0x73625140]
    %3700 = vst [vmem:[#allocation1] ss:$4 sm:$0xff] %v3387
    %3701 = vst [vmem:[%s3630] ss:$4 sm:$0xff] %v3388
    %v3702 = vld.sshfl [vmem:[#allocation1] sm:$0xff pattern:$0x73625140]
    %v3703 = vld.sshfl [vmem:[#allocation1 + $0x8] sm:$0xff pattern:$0x73625140]
    %v3704 = vld.sshfl [vmem:[#allocation1 + $0x10] sm:$0xff pattern:$0x73625140]
    %v3705 = vld.sshfl [vmem:[#allocation1 + $0x18] sm:$0xff pattern:$0x73625140]
    %v3706 = vld.sshfl [vmem:[#allocation1 + $0x20] sm:$0xff pattern:$0x73625140]
    %v3707 = vld.sshfl [vmem:[#allocation1 + $0x28] sm:$0xff pattern:$0x73625140]
    %v3708 = vld.sshfl [vmem:[#allocation1 + $0x30] sm:$0xff pattern:$0x73625140]
    %v3709 = vld.sshfl [vmem:[#allocation1 + $0x38] sm:$0xff pattern:$0x73625140]
    %3710 = vst [vmem:[#allocation1] ss:$4 sm:$0xff] %v3389
    %3711 = vst [vmem:[%s3630] ss:$4 sm:$0xff] %v3390
    %v3712 = vld.sshfl [vmem:[#allocation1] sm:$0xff pattern:$0x73625140]
    %v3713 = vld.sshfl [vmem:[#allocation1 + $0x8] sm:$0xff pattern:$0x73625140]
    %v3714 = vld.sshfl [vmem:[#allocation1 + $0x10] sm:$0xff pattern:$0x73625140]
    %v3715 = vld.sshfl [vmem:[#allocation1 + $0x18] sm:$0xff pattern:$0x73625140]
    %v3716 = vld.sshfl [vmem:[#allocation1 + $0x20] sm:$0xff pattern:$0x73625140]
    %v3717 = vld.sshfl [vmem:[#allocation1 + $0x28] sm:$0xff pattern:$0x73625140]
    %v3718 = vld.sshfl [vmem:[#allocation1 + $0x30] sm:$0xff pattern:$0x73625140]
    %v3719 = vld.sshfl [vmem:[#allocation1 + $0x38] sm:$0xff pattern:$0x73625140]
    %3720 = vst [vmem:[#allocation1] ss:$4 sm:$0xff] %v3391
    %3721 = vst [vmem:[%s3630] ss:$4 sm:$0xff] %v3392
    %v3722 = vld.sshfl [vmem:[#allocation1] sm:$0xff pattern:$0x73625140]
    %v3723 = vld.sshfl [vmem:[#allocation1 + $0x8] sm:$0xff pattern:$0x73625140]
    %v3724 = vld.sshfl [vmem:[#allocation1 + $0x10] sm:$0xff pattern:$0x73625140]
    %v3725 = vld.sshfl [vmem:[#allocation1 + $0x18] sm:$0xff pattern:$0x73625140]
    %v3726 = vld.sshfl [vmem:[#allocation1 + $0x20] sm:$0xff pattern:$0x73625140]
    %v3727 = vld.sshfl [vmem:[#allocation1 + $0x28] sm:$0xff pattern:$0x73625140]
    %v3728 = vld.sshfl [vmem:[#allocation1 + $0x30] sm:$0xff pattern:$0x73625140]
    %v3729 = vld.sshfl [vmem:[#allocation1 + $0x38] sm:$0xff pattern:$0x73625140]
    %3730 = vst [vmem:[#allocation1] ss:$4 sm:$0xff] %v3393
    %3731 = vst [vmem:[%s3630] ss:$4 sm:$0xff] %v3394
    %v3732 = vld.sshfl [vmem:[#allocation1] sm:$0xff pattern:$0x73625140]
    %v3733 = vld.sshfl [vmem:[#allocation1 + $0x8] sm:$0xff pattern:$0x73625140]
    %v3734 = vld.sshfl [vmem:[#allocation1 + $0x10] sm:$0xff pattern:$0x73625140]
    %v3735 = vld.sshfl [vmem:[#allocation1 + $0x18] sm:$0xff pattern:$0x73625140]
    %v3736 = vld.sshfl [vmem:[#allocation1 + $0x20] sm:$0xff pattern:$0x73625140]
    %v3737 = vld.sshfl [vmem:[#allocation1 + $0x28] sm:$0xff pattern:$0x73625140]
    %v3738 = vld.sshfl [vmem:[#allocation1 + $0x30] sm:$0xff pattern:$0x73625140]
    %v3739 = vld.sshfl [vmem:[#allocation1 + $0x38] sm:$0xff pattern:$0x73625140]
    %3740 = vst [vmem:[#allocation1] ss:$4 sm:$0xff] %v3395
    %3741 = vst [vmem:[%s3630] ss:$4 sm:$0xff] %v3396
    %v3742 = vld.sshfl [vmem:[#allocation1] sm:$0xff pattern:$0x73625140]
    %v3743 = vld.sshfl [vmem:[#allocation1 + $0x8] sm:$0xff pattern:$0x73625140]
    %v3744 = vld.sshfl [vmem:[#allocation1 + $0x10] sm:$0xff pattern:$0x73625140]
    %v3745 = vld.sshfl [vmem:[#allocation1 + $0x18] sm:$0xff pattern:$0x73625140]
    %v3746 = vld.sshfl [vmem:[#allocation1 + $0x20] sm:$0xff pattern:$0x73625140]
    %v3747 = vld.sshfl [vmem:[#allocation1 + $0x28] sm:$0xff pattern:$0x73625140]
    %v3748 = vld.sshfl [vmem:[#allocation1 + $0x30] sm:$0xff pattern:$0x73625140]
    %v3749 = vld.sshfl [vmem:[#allocation1 + $0x38] sm:$0xff pattern:$0x73625140]
    %3750 = vst [vmem:[#allocation1] ss:$4 sm:$0xff] %v3397
    %3751 = vst [vmem:[%s3630] ss:$4 sm:$0xff] %v3398
    %v3752 = vld.sshfl [vmem:[#allocation1] sm:$0xff pattern:$0x73625140]
    %v3753 = vld.sshfl [vmem:[#allocation1 + $0x8] sm:$0xff pattern:$0x73625140]
    %v3754 = vld.sshfl [vmem:[#allocation1 + $0x10] sm:$0xff pattern:$0x73625140]
    %v3755 = vld.sshfl [vmem:[#allocation1 + $0x18] sm:$0xff pattern:$0x73625140]
    %v3756 = vld.sshfl [vmem:[#allocation1 + $0x20] sm:$0xff pattern:$0x73625140]
    %v3757 = vld.sshfl [vmem:[#allocation1 + $0x28] sm:$0xff pattern:$0x73625140]
    %v3758 = vld.sshfl [vmem:[#allocation1 + $0x30] sm:$0xff pattern:$0x73625140]
    %v3759 = vld.sshfl [vmem:[#allocation1 + $0x38] sm:$0xff pattern:$0x73625140]
    %3760 = vst [vmem:[#allocation1] ss:$4 sm:$0xff] %v3399
    %3761 = vst [vmem:[%s3630] ss:$4 sm:$0xff] %v3400
    %v3762 = vld.sshfl [vmem:[#allocation1] sm:$0xff pattern:$0x73625140]
    %v3763 = vld.sshfl [vmem:[#allocation1 + $0x8] sm:$0xff pattern:$0x73625140]
    %v3764 = vld.sshfl [vmem:[#allocation1 + $0x10] sm:$0xff pattern:$0x73625140]
    %v3765 = vld.sshfl [vmem:[#allocation1 + $0x18] sm:$0xff pattern:$0x73625140]
    %v3766 = vld.sshfl [vmem:[#allocation1 + $0x20] sm:$0xff pattern:$0x73625140]
    %v3767 = vld.sshfl [vmem:[#allocation1 + $0x28] sm:$0xff pattern:$0x73625140]
    %v3768 = vld.sshfl [vmem:[#allocation1 + $0x30] sm:$0xff pattern:$0x73625140]
    %v3769 = vld.sshfl [vmem:[#allocation1 + $0x38] sm:$0xff pattern:$0x73625140]
    %3770 = vst [vmem:[#allocation1] ss:$4 sm:$0xff] %v3401
    %3771 = vst [vmem:[%s3630] ss:$4 sm:$0xff] %v3402
    %v3772 = vld.sshfl [vmem:[#allocation1] sm:$0xff pattern:$0x73625140]
    %v3773 = vld.sshfl [vmem:[#allocation1 + $0x8] sm:$0xff pattern:$0x73625140]
    %v3774 = vld.sshfl [vmem:[#allocation1 + $0x10] sm:$0xff pattern:$0x73625140]
    %v3775 = vld.sshfl [vmem:[#allocation1 + $0x18] sm:$0xff pattern:$0x73625140]
    %v3776 = vld.sshfl [vmem:[#allocation1 + $0x20] sm:$0xff pattern:$0x73625140]
    %v3777 = vld.sshfl [vmem:[#allocation1 + $0x28] sm:$0xff pattern:$0x73625140]
    %v3778 = vld.sshfl [vmem:[#allocation1 + $0x30] sm:$0xff pattern:$0x73625140]
    %v3779 = vld.sshfl [vmem:[#allocation1 + $0x38] sm:$0xff pattern:$0x73625140]
    %3780 = vst [vmem:[#allocation1] ss:$4 sm:$0xff] %v3403
    %3781 = vst [vmem:[%s3630] ss:$4 sm:$0xff] %v3404
    %v3782 = vld.sshfl [vmem:[#allocation1] sm:$0xff pattern:$0x73625140]
    %v3783 = vld.sshfl [vmem:[#allocation1 + $0x8] sm:$0xff pattern:$0x73625140]
    %v3784 = vld.sshfl [vmem:[#allocation1 + $0x10] sm:$0xff pattern:$0x73625140]
    %v3785 = vld.sshfl [vmem:[#allocation1 + $0x18] sm:$0xff pattern:$0x73625140]
    %v3786 = vld.sshfl [vmem:[#allocation1 + $0x20] sm:$0xff pattern:$0x73625140]
    %v3787 = vld.sshfl [vmem:[#allocation1 + $0x28] sm:$0xff pattern:$0x73625140]
    %v3788 = vld.sshfl [vmem:[#allocation1 + $0x30] sm:$0xff pattern:$0x73625140]
    %v3789 = vld.sshfl [vmem:[#allocation1 + $0x38] sm:$0xff pattern:$0x73625140]
    %3790 = vst [vmem:[#allocation1] ss:$4 sm:$0xff] %v3405
    %3791 = vst [vmem:[%s3630] ss:$4 sm:$0xff] %v3406
    %v3792 = vld.sshfl [vmem:[#allocation1] sm:$0xff pattern:$0x73625140]
    %v3793 = vld.sshfl [vmem:[#allocation1 + $0x8] sm:$0xff pattern:$0x73625140]
    %v3794 = vld.sshfl [vmem:[#allocation1 + $0x10] sm:$0xff pattern:$0x73625140]
    %v3795 = vld.sshfl [vmem:[#allocation1 + $0x18] sm:$0xff pattern:$0x73625140]
    %v3796 = vld.sshfl [vmem:[#allocation1 + $0x20] sm:$0xff pattern:$0x73625140]
    %v3797 = vld.sshfl [vmem:[#allocation1 + $0x28] sm:$0xff pattern:$0x73625140]
    %v3798 = vld.sshfl [vmem:[#allocation1 + $0x30] sm:$0xff pattern:$0x73625140]
    %v3799 = vld.sshfl [vmem:[#allocation1 + $0x38] sm:$0xff pattern:$0x73625140]
    %3800 = vst [vmem:[#allocation1] ss:$4 sm:$0xff] %v3407
    %3801 = vst [vmem:[%s3630] ss:$4 sm:$0xff] %v3408
    %v3802 = vld.sshfl [vmem:[#allocation1] sm:$0xff pattern:$0x73625140]
    %v3803 = vld.sshfl [vmem:[#allocation1 + $0x8] sm:$0xff pattern:$0x73625140]
    %v3804 = vld.sshfl [vmem:[#allocation1 + $0x10] sm:$0xff pattern:$0x73625140]
    %v3805 = vld.sshfl [vmem:[#allocation1 + $0x18] sm:$0xff pattern:$0x73625140]
    %v3806 = vld.sshfl [vmem:[#allocation1 + $0x20] sm:$0xff pattern:$0x73625140]
    %v3807 = vld.sshfl [vmem:[#allocation1 + $0x28] sm:$0xff pattern:$0x73625140]
    %v3808 = vld.sshfl [vmem:[#allocation1 + $0x30] sm:$0xff pattern:$0x73625140]
    %v3809 = vld.sshfl [vmem:[#allocation1 + $0x38] sm:$0xff pattern:$0x73625140]
    %3810 = vst [vmem:[#allocation1] ss:$4 sm:$0xff] %v3409
    %3811 = vst [vmem:[%s3630] ss:$4 sm:$0xff] %v3410
    %v3812 = vld.sshfl [vmem:[#allocation1] sm:$0xff pattern:$0x73625140]
    %v3813 = vld.sshfl [vmem:[#allocation1 + $0x8] sm:$0xff pattern:$0x73625140]
    %v3814 = vld.sshfl [vmem:[#allocation1 + $0x10] sm:$0xff pattern:$0x73625140]
    %v3815 = vld.sshfl [vmem:[#allocation1 + $0x18] sm:$0xff pattern:$0x73625140]
    %v3816 = vld.sshfl [vmem:[#allocation1 + $0x20] sm:$0xff pattern:$0x73625140]
    %v3817 = vld.sshfl [vmem:[#allocation1 + $0x28] sm:$0xff pattern:$0x73625140]
    %v3818 = vld.sshfl [vmem:[#allocation1 + $0x30] sm:$0xff pattern:$0x73625140]
    %v3819 = vld.sshfl [vmem:[#allocation1 + $0x38] sm:$0xff pattern:$0x73625140]
    %3820 = vst [vmem:[#allocation1] ss:$4 sm:$0xff] %v3411
    %3821 = vst [vmem:[%s3630] ss:$4 sm:$0xff] %v3412
    %v3822 = vld.sshfl [vmem:[#allocation1] sm:$0xff pattern:$0x73625140]
    %v3823 = vld.sshfl [vmem:[#allocation1 + $0x8] sm:$0xff pattern:$0x73625140]
    %v3824 = vld.sshfl [vmem:[#allocation1 + $0x10] sm:$0xff pattern:$0x73625140]
    %v3825 = vld.sshfl [vmem:[#allocation1 + $0x18] sm:$0xff pattern:$0x73625140]
    %v3826 = vld.sshfl [vmem:[#allocation1 + $0x20] sm:$0xff pattern:$0x73625140]
    %v3827 = vld.sshfl [vmem:[#allocation1 + $0x28] sm:$0xff pattern:$0x73625140]
    %v3828 = vld.sshfl [vmem:[#allocation1 + $0x30] sm:$0xff pattern:$0x73625140]
    %v3829 = vld.sshfl [vmem:[#allocation1 + $0x38] sm:$0xff pattern:$0x73625140]
    %3830 = vst [vmem:[#allocation1] ss:$4 sm:$0xff] %v3413
    %3831 = vst [vmem:[%s3630] ss:$4 sm:$0xff] %v3414
    %v3832 = vld.sshfl [vmem:[#allocation1] sm:$0xff pattern:$0x73625140]
    %v3833 = vld.sshfl [vmem:[#allocation1 + $0x8] sm:$0xff pattern:$0x73625140]
    %v3834 = vld.sshfl [vmem:[#allocation1 + $0x10] sm:$0xff pattern:$0x73625140]
    %v3835 = vld.sshfl [vmem:[#allocation1 + $0x18] sm:$0xff pattern:$0x73625140]
    %v3836 = vld.sshfl [vmem:[#allocation1 + $0x20] sm:$0xff pattern:$0x73625140]
    %v3837 = vld.sshfl [vmem:[#allocation1 + $0x28] sm:$0xff pattern:$0x73625140]
    %v3838 = vld.sshfl [vmem:[#allocation1 + $0x30] sm:$0xff pattern:$0x73625140]
    %v3839 = vld.sshfl [vmem:[#allocation1 + $0x38] sm:$0xff pattern:$0x73625140]
    %3840 = vst [vmem:[#allocation1] ss:$4 sm:$0xff] %v3415
    %3841 = vst [vmem:[%s3630] ss:$4 sm:$0xff] %v3416
    %v3842 = vld.sshfl [vmem:[#allocation1] sm:$0xff pattern:$0x73625140]
    %v3843 = vld.sshfl [vmem:[#allocation1 + $0x8] sm:$0xff pattern:$0x73625140]
    %v3844 = vld.sshfl [vmem:[#allocation1 + $0x10] sm:$0xff pattern:$0x73625140]
    %v3845 = vld.sshfl [vmem:[#allocation1 + $0x18] sm:$0xff pattern:$0x73625140]
    %v3846 = vld.sshfl [vmem:[#allocation1 + $0x20] sm:$0xff pattern:$0x73625140]
    %v3847 = vld.sshfl [vmem:[#allocation1 + $0x28] sm:$0xff pattern:$0x73625140]
    %v3848 = vld.sshfl [vmem:[#allocation1 + $0x30] sm:$0xff pattern:$0x73625140]
    %v3849 = vld.sshfl [vmem:[#allocation1 + $0x38] sm:$0xff pattern:$0x73625140]
    %3850 = vst [vmem:[#allocation1] ss:$4 sm:$0xff] %v3417
    %3851 = vst [vmem:[%s3630] ss:$4 sm:$0xff] %v3418
    %v3852 = vld.sshfl [vmem:[#allocation1] sm:$0xff pattern:$0x73625140]
    %v3853 = vld.sshfl [vmem:[#allocation1 + $0x8] sm:$0xff pattern:$0x73625140]
    %v3854 = vld.sshfl [vmem:[#allocation1 + $0x10] sm:$0xff pattern:$0x73625140]
    %v3855 = vld.sshfl [vmem:[#allocation1 + $0x18] sm:$0xff pattern:$0x73625140]
    %v3856 = vld.sshfl [vmem:[#allocation1 + $0x20] sm:$0xff pattern:$0x73625140]
    %v3857 = vld.sshfl [vmem:[#allocation1 + $0x28] sm:$0xff pattern:$0x73625140]
    %v3858 = vld.sshfl [vmem:[#allocation1 + $0x30] sm:$0xff pattern:$0x73625140]
    %v3859 = vld.sshfl [vmem:[#allocation1 + $0x38] sm:$0xff pattern:$0x73625140]
    %3860 = vst [vmem:[#allocation1] ss:$4 sm:$0xff] %v3419
    %3861 = vst [vmem:[%s3630] ss:$4 sm:$0xff] %v3420
    %v3862 = vld.sshfl [vmem:[#allocation1] sm:$0xff pattern:$0x73625140]
    %v3863 = vld.sshfl [vmem:[#allocation1 + $0x8] sm:$0xff pattern:$0x73625140]
    %v3864 = vld.sshfl [vmem:[#allocation1 + $0x10] sm:$0xff pattern:$0x73625140]
    %v3865 = vld.sshfl [vmem:[#allocation1 + $0x18] sm:$0xff pattern:$0x73625140]
    %v3866 = vld.sshfl [vmem:[#allocation1 + $0x20] sm:$0xff pattern:$0x73625140]
    %v3867 = vld.sshfl [vmem:[#allocation1 + $0x28] sm:$0xff pattern:$0x73625140]
    %v3868 = vld.sshfl [vmem:[#allocation1 + $0x30] sm:$0xff pattern:$0x73625140]
    %v3869 = vld.sshfl [vmem:[#allocation1 + $0x38] sm:$0xff pattern:$0x73625140]
    %3870 = vst [vmem:[#allocation1] ss:$4 sm:$0xff] %v3421
    %3871 = vst [vmem:[%s3630] ss:$4 sm:$0xff] %v3422
    %v3872 = vld.sshfl [vmem:[#allocation1] sm:$0xff pattern:$0x73625140]
    %v3873 = vld.sshfl [vmem:[#allocation1 + $0x8] sm:$0xff pattern:$0x73625140]
    %v3874 = vld.sshfl [vmem:[#allocation1 + $0x10] sm:$0xff pattern:$0x73625140]
    %v3875 = vld.sshfl [vmem:[#allocation1 + $0x18] sm:$0xff pattern:$0x73625140]
    %v3876 = vld.sshfl [vmem:[#allocation1 + $0x20] sm:$0xff pattern:$0x73625140]
    %v3877 = vld.sshfl [vmem:[#allocation1 + $0x28] sm:$0xff pattern:$0x73625140]
    %v3878 = vld.sshfl [vmem:[#allocation1 + $0x30] sm:$0xff pattern:$0x73625140]
    %v3879 = vld.sshfl [vmem:[#allocation1 + $0x38] sm:$0xff pattern:$0x73625140]
    %3880 = vst [vmem:[#allocation1] ss:$4 sm:$0xff] %v3423
    %3881 = vst [vmem:[%s3630] ss:$4 sm:$0xff] %v3424
    %v3882 = vld.sshfl [vmem:[#allocation1] sm:$0xff pattern:$0x73625140]
    %v3883 = vld.sshfl [vmem:[#allocation1 + $0x8] sm:$0xff pattern:$0x73625140]
    %v3884 = vld.sshfl [vmem:[#allocation1 + $0x10] sm:$0xff pattern:$0x73625140]
    %v3885 = vld.sshfl [vmem:[#allocation1 + $0x18] sm:$0xff pattern:$0x73625140]
    %v3886 = vld.sshfl [vmem:[#allocation1 + $0x20] sm:$0xff pattern:$0x73625140]
    %v3887 = vld.sshfl [vmem:[#allocation1 + $0x28] sm:$0xff pattern:$0x73625140]
    %v3888 = vld.sshfl [vmem:[#allocation1 + $0x30] sm:$0xff pattern:$0x73625140]
    %v3889 = vld.sshfl [vmem:[#allocation1 + $0x38] sm:$0xff pattern:$0x73625140]
    %3890 = vst [vmem:[#allocation1] ss:$4 sm:$0xff] %v3425
    %3891 = vst [vmem:[%s3630] ss:$4 sm:$0xff] %v3426
    %v3892 = vld.sshfl [vmem:[#allocation1] sm:$0xff pattern:$0x73625140]
    %v3893 = vld.sshfl [vmem:[#allocation1 + $0x8] sm:$0xff pattern:$0x73625140]
    %v3894 = vld.sshfl [vmem:[#allocation1 + $0x10] sm:$0xff pattern:$0x73625140]
    %v3895 = vld.sshfl [vmem:[#allocation1 + $0x18] sm:$0xff pattern:$0x73625140]
    %v3896 = vld.sshfl [vmem:[#allocation1 + $0x20] sm:$0xff pattern:$0x73625140]
    %v3897 = vld.sshfl [vmem:[#allocation1 + $0x28] sm:$0xff pattern:$0x73625140]
    %v3898 = vld.sshfl [vmem:[#allocation1 + $0x30] sm:$0xff pattern:$0x73625140]
    %v3899 = vld.sshfl [vmem:[#allocation1 + $0x38] sm:$0xff pattern:$0x73625140]
    %3900 = vst [vmem:[#allocation1] ss:$4 sm:$0xff] %v3427
    %3901 = vst [vmem:[%s3630] ss:$4 sm:$0xff] %v3428
    %v3902 = vld.sshfl [vmem:[#allocation1] sm:$0xff pattern:$0x73625140]
    %v3903 = vld.sshfl [vmem:[#allocation1 + $0x8] sm:$0xff pattern:$0x73625140]
    %v3904 = vld.sshfl [vmem:[#allocation1 + $0x10] sm:$0xff pattern:$0x73625140]
    %v3905 = vld.sshfl [vmem:[#allocation1 + $0x18] sm:$0xff pattern:$0x73625140]
    %v3906 = vld.sshfl [vmem:[#allocation1 + $0x20] sm:$0xff pattern:$0x73625140]
    %v3907 = vld.sshfl [vmem:[#allocation1 + $0x28] sm:$0xff pattern:$0x73625140]
    %v3908 = vld.sshfl [vmem:[#allocation1 + $0x30] sm:$0xff pattern:$0x73625140]
    %v3909 = vld.sshfl [vmem:[#allocation1 + $0x38] sm:$0xff pattern:$0x73625140]
    %3910 = vst [vmem:[#allocation1] ss:$4 sm:$0xff] %v3429
    %3911 = vst [vmem:[%s3630] ss:$4 sm:$0xff] %v3430
    %v3912 = vld.sshfl [vmem:[#allocation1] sm:$0xff pattern:$0x73625140]
    %v3913 = vld.sshfl [vmem:[#allocation1 + $0x8] sm:$0xff pattern:$0x73625140]
    %v3914 = vld.sshfl [vmem:[#allocation1 + $0x10] sm:$0xff pattern:$0x73625140]
    %v3915 = vld.sshfl [vmem:[#allocation1 + $0x18] sm:$0xff pattern:$0x73625140]
    %v3916 = vld.sshfl [vmem:[#allocation1 + $0x20] sm:$0xff pattern:$0x73625140]
    %v3917 = vld.sshfl [vmem:[#allocation1 + $0x28] sm:$0xff pattern:$0x73625140]
    %v3918 = vld.sshfl [vmem:[#allocation1 + $0x30] sm:$0xff pattern:$0x73625140]
    %v3919 = vld.sshfl [vmem:[#allocation1 + $0x38] sm:$0xff pattern:$0x73625140]
    %3920 = vst [vmem:[#allocation1] ss:$4 sm:$0xff] %v3431
    %3921 = vst [vmem:[%s3630] ss:$4 sm:$0xff] %v3432
    %v3922 = vld.sshfl [vmem:[#allocation1] sm:$0xff pattern:$0x73625140]
    %v3923 = vld.sshfl [vmem:[#allocation1 + $0x8] sm:$0xff pattern:$0x73625140]
    %v3924 = vld.sshfl [vmem:[#allocation1 + $0x10] sm:$0xff pattern:$0x73625140]
    %v3925 = vld.sshfl [vmem:[#allocation1 + $0x18] sm:$0xff pattern:$0x73625140]
    %v3926 = vld.sshfl [vmem:[#allocation1 + $0x20] sm:$0xff pattern:$0x73625140]
    %v3927 = vld.sshfl [vmem:[#allocation1 + $0x28] sm:$0xff pattern:$0x73625140]
    %v3928 = vld.sshfl [vmem:[#allocation1 + $0x30] sm:$0xff pattern:$0x73625140]
    %v3929 = vld.sshfl [vmem:[#allocation1 + $0x38] sm:$0xff pattern:$0x73625140]
    %3930 = vst [vmem:[#allocation1] ss:$4 sm:$0xff] %v3433
    %3931 = vst [vmem:[%s3630] ss:$4 sm:$0xff] %v3434
    %v3932 = vld.sshfl [vmem:[#allocation1] sm:$0xff pattern:$0x73625140]
    %v3933 = vld.sshfl [vmem:[#allocation1 + $0x8] sm:$0xff pattern:$0x73625140]
    %v3934 = vld.sshfl [vmem:[#allocation1 + $0x10] sm:$0xff pattern:$0x73625140]
    %v3935 = vld.sshfl [vmem:[#allocation1 + $0x18] sm:$0xff pattern:$0x73625140]
    %v3936 = vld.sshfl [vmem:[#allocation1 + $0x20] sm:$0xff pattern:$0x73625140]
    %v3937 = vld.sshfl [vmem:[#allocation1 + $0x28] sm:$0xff pattern:$0x73625140]
    %v3938 = vld.sshfl [vmem:[#allocation1 + $0x30] sm:$0xff pattern:$0x73625140]
    %v3939 = vld.sshfl [vmem:[#allocation1 + $0x38] sm:$0xff pattern:$0x73625140]
    %3940 = vst [vmem:[#allocation1] ss:$4 sm:$0xff] %v3435
    %3941 = vst [vmem:[%s3630] ss:$4 sm:$0xff] %v3436
    %v3942 = vld.sshfl [vmem:[#allocation1] sm:$0xff pattern:$0x73625140]
    %v3943 = vld.sshfl [vmem:[#allocation1 + $0x8] sm:$0xff pattern:$0x73625140]
    %v3944 = vld.sshfl [vmem:[#allocation1 + $0x10] sm:$0xff pattern:$0x73625140]
    %v3945 = vld.sshfl [vmem:[#allocation1 + $0x18] sm:$0xff pattern:$0x73625140]
    %v3946 = vld.sshfl [vmem:[#allocation1 + $0x20] sm:$0xff pattern:$0x73625140]
    %v3947 = vld.sshfl [vmem:[#allocation1 + $0x28] sm:$0xff pattern:$0x73625140]
    %v3948 = vld.sshfl [vmem:[#allocation1 + $0x30] sm:$0xff pattern:$0x73625140]
    %v3949 = vld.sshfl [vmem:[#allocation1 + $0x38] sm:$0xff pattern:$0x73625140]
    %3950 = vst [vmem:[#allocation1] ss:$4 sm:$0xff] %v3437
    %3951 = vst [vmem:[%s3630] ss:$4 sm:$0xff] %v3438
    %v3952 = vld.sshfl [vmem:[#allocation1] sm:$0xff pattern:$0x73625140]
    %v3953 = vld.sshfl [vmem:[#allocation1 + $0x8] sm:$0xff pattern:$0x73625140]
    %v3954 = vld.sshfl [vmem:[#allocation1 + $0x10] sm:$0xff pattern:$0x73625140]
    %v3955 = vld.sshfl [vmem:[#allocation1 + $0x18] sm:$0xff pattern:$0x73625140]
    %v3956 = vld.sshfl [vmem:[#allocation1 + $0x20] sm:$0xff pattern:$0x73625140]
    %v3957 = vld.sshfl [vmem:[#allocation1 + $0x28] sm:$0xff pattern:$0x73625140]
    %v3958 = vld.sshfl [vmem:[#allocation1 + $0x30] sm:$0xff pattern:$0x73625140]
    %v3959 = vld.sshfl [vmem:[#allocation1 + $0x38] sm:$0xff pattern:$0x73625140]
    %3960 = vst [vmem:[#allocation1] ss:$4 sm:$0xff] %v3439
    %3961 = vst [vmem:[%s3630] ss:$4 sm:$0xff] %v3440
    %v3962 = vld.sshfl [vmem:[#allocation1] sm:$0xff pattern:$0x73625140]
    %v3963 = vld.sshfl [vmem:[#allocation1 + $0x8] sm:$0xff pattern:$0x73625140]
    %v3964 = vld.sshfl [vmem:[#allocation1 + $0x10] sm:$0xff pattern:$0x73625140]
    %v3965 = vld.sshfl [vmem:[#allocation1 + $0x18] sm:$0xff pattern:$0x73625140]
    %v3966 = vld.sshfl [vmem:[#allocation1 + $0x20] sm:$0xff pattern:$0x73625140]
    %v3967 = vld.sshfl [vmem:[#allocation1 + $0x28] sm:$0xff pattern:$0x73625140]
    %v3968 = vld.sshfl [vmem:[#allocation1 + $0x30] sm:$0xff pattern:$0x73625140]
    %v3969 = vld.sshfl [vmem:[#allocation1 + $0x38] sm:$0xff pattern:$0x73625140]
    %3970 = vst [vmem:[#allocation1] ss:$4 sm:$0xff] %v3441
    %3971 = vst [vmem:[%s3630] ss:$4 sm:$0xff] %v3442
    %v3972 = vld.sshfl [vmem:[#allocation1] sm:$0xff pattern:$0x73625140]
    %v3973 = vld.sshfl [vmem:[#allocation1 + $0x8] sm:$0xff pattern:$0x73625140]
    %v3974 = vld.sshfl [vmem:[#allocation1 + $0x10] sm:$0xff pattern:$0x73625140]
    %v3975 = vld.sshfl [vmem:[#allocation1 + $0x18] sm:$0xff pattern:$0x73625140]
    %v3976 = vld.sshfl [vmem:[#allocation1 + $0x20] sm:$0xff pattern:$0x73625140]
    %v3977 = vld.sshfl [vmem:[#allocation1 + $0x28] sm:$0xff pattern:$0x73625140]
    %v3978 = vld.sshfl [vmem:[#allocation1 + $0x30] sm:$0xff pattern:$0x73625140]
    %v3979 = vld.sshfl [vmem:[#allocation1 + $0x38] sm:$0xff pattern:$0x73625140]
    %3980 = vst [vmem:[#allocation1] ss:$4 sm:$0xff] %v3443
    %3981 = vst [vmem:[%s3630] ss:$4 sm:$0xff] %v3444
    %v3982 = vld.sshfl [vmem:[#allocation1] sm:$0xff pattern:$0x73625140]
    %v3983 = vld.sshfl [vmem:[#allocation1 + $0x8] sm:$0xff pattern:$0x73625140]
    %v3984 = vld.sshfl [vmem:[#allocation1 + $0x10] sm:$0xff pattern:$0x73625140]
    %v3985 = vld.sshfl [vmem:[#allocation1 + $0x18] sm:$0xff pattern:$0x73625140]
    %v3986 = vld.sshfl [vmem:[#allocation1 + $0x20] sm:$0xff pattern:$0x73625140]
    %v3987 = vld.sshfl [vmem:[#allocation1 + $0x28] sm:$0xff pattern:$0x73625140]
    %v3988 = vld.sshfl [vmem:[#allocation1 + $0x30] sm:$0xff pattern:$0x73625140]
    %v3989 = vld.sshfl [vmem:[#allocation1 + $0x38] sm:$0xff pattern:$0x73625140]
    %3990 = vst [vmem:[#allocation1] ss:$4 sm:$0xff] %v3445
    %3991 = vst [vmem:[%s3630] ss:$4 sm:$0xff] %v3446
    %v3992 = vld.sshfl [vmem:[#allocation1] sm:$0xff pattern:$0x73625140]
    %v3993 = vld.sshfl [vmem:[#allocation1 + $0x8] sm:$0xff pattern:$0x73625140]
    %v3994 = vld.sshfl [vmem:[#allocation1 + $0x10] sm:$0xff pattern:$0x73625140]
    %v3995 = vld.sshfl [vmem:[#allocation1 + $0x18] sm:$0xff pattern:$0x73625140]
    %v3996 = vld.sshfl [vmem:[#allocation1 + $0x20] sm:$0xff pattern:$0x73625140]
    %v3997 = vld.sshfl [vmem:[#allocation1 + $0x28] sm:$0xff pattern:$0x73625140]
    %v3998 = vld.sshfl [vmem:[#allocation1 + $0x30] sm:$0xff pattern:$0x73625140]
    %v3999 = vld.sshfl [vmem:[#allocation1 + $0x38] sm:$0xff pattern:$0x73625140]
    %4000 = vst [vmem:[#allocation1] ss:$4 sm:$0xff] %v3447
    %4001 = vst [vmem:[%s3630] ss:$4 sm:$0xff] %v3448
    %v4002 = vld.sshfl [vmem:[#allocation1] sm:$0xff pattern:$0x73625140]
    %v4003 = vld.sshfl [vmem:[#allocation1 + $0x8] sm:$0xff pattern:$0x73625140]
    %v4004 = vld.sshfl [vmem:[#allocation1 + $0x10] sm:$0xff pattern:$0x73625140]
    %v4005 = vld.sshfl [vmem:[#allocation1 + $0x18] sm:$0xff pattern:$0x73625140]
    %v4006 = vld.sshfl [vmem:[#allocation1 + $0x20] sm:$0xff pattern:$0x73625140]
    %v4007 = vld.sshfl [vmem:[#allocation1 + $0x28] sm:$0xff pattern:$0x73625140]
    %v4008 = vld.sshfl [vmem:[#allocation1 + $0x30] sm:$0xff pattern:$0x73625140]
    %v4009 = vld.sshfl [vmem:[#allocation1 + $0x38] sm:$0xff pattern:$0x73625140]
    %4010 = vst [vmem:[#allocation1] ss:$4 sm:$0xff] %v3449
    %4011 = vst [vmem:[%s3630] ss:$4 sm:$0xff] %v3450
    %v4012 = vld.sshfl [vmem:[#allocation1] sm:$0xff pattern:$0x73625140]
    %v4013 = vld.sshfl [vmem:[#allocation1 + $0x8] sm:$0xff pattern:$0x73625140]
    %v4014 = vld.sshfl [vmem:[#allocation1 + $0x10] sm:$0xff pattern:$0x73625140]
    %v4015 = vld.sshfl [vmem:[#allocation1 + $0x18] sm:$0xff pattern:$0x73625140]
    %v4016 = vld.sshfl [vmem:[#allocation1 + $0x20] sm:$0xff pattern:$0x73625140]
    %v4017 = vld.sshfl [vmem:[#allocation1 + $0x28] sm:$0xff pattern:$0x73625140]
    %v4018 = vld.sshfl [vmem:[#allocation1 + $0x30] sm:$0xff pattern:$0x73625140]
    %v4019 = vld.sshfl [vmem:[#allocation1 + $0x38] sm:$0xff pattern:$0x73625140]
    %4020 = vst [vmem:[#allocation1] ss:$4 sm:$0xff] %v3451
    %4021 = vst [vmem:[%s3630] ss:$4 sm:$0xff] %v3452
    %v4022 = vld.sshfl [vmem:[#allocation1] sm:$0xff pattern:$0x73625140]
    %v4023 = vld.sshfl [vmem:[#allocation1 + $0x8] sm:$0xff pattern:$0x73625140]
    %v4024 = vld.sshfl [vmem:[#allocation1 + $0x10] sm:$0xff pattern:$0x73625140]
    %v4025 = vld.sshfl [vmem:[#allocation1 + $0x18] sm:$0xff pattern:$0x73625140]
    %v4026 = vld.sshfl [vmem:[#allocation1 + $0x20] sm:$0xff pattern:$0x73625140]
    %v4027 = vld.sshfl [vmem:[#allocation1 + $0x28] sm:$0xff pattern:$0x73625140]
    %v4028 = vld.sshfl [vmem:[#allocation1 + $0x30] sm:$0xff pattern:$0x73625140]
    %v4029 = vld.sshfl [vmem:[#allocation1 + $0x38] sm:$0xff pattern:$0x73625140]
    %4030 = vst [vmem:[#allocation1] ss:$4 sm:$0xff] %v3453
    %4031 = vst [vmem:[%s3630] ss:$4 sm:$0xff] %v3454
    %v4032 = vld.sshfl [vmem:[#allocation1] sm:$0xff pattern:$0x73625140]
    %v4033 = vld.sshfl [vmem:[#allocation1 + $0x8] sm:$0xff pattern:$0x73625140]
    %v4034 = vld.sshfl [vmem:[#allocation1 + $0x10] sm:$0xff pattern:$0x73625140]
    %v4035 = vld.sshfl [vmem:[#allocation1 + $0x18] sm:$0xff pattern:$0x73625140]
    %v4036 = vld.sshfl [vmem:[#allocation1 + $0x20] sm:$0xff pattern:$0x73625140]
    %v4037 = vld.sshfl [vmem:[#allocation1 + $0x28] sm:$0xff pattern:$0x73625140]
    %v4038 = vld.sshfl [vmem:[#allocation1 + $0x30] sm:$0xff pattern:$0x73625140]
    %v4039 = vld.sshfl [vmem:[#allocation1 + $0x38] sm:$0xff pattern:$0x73625140]
    %4040 = vst [vmem:[#allocation1] ss:$4 sm:$0xff] %v3455
    %4041 = vst [vmem:[%s3630] ss:$4 sm:$0xff] %v3456
    %v4042 = vld.sshfl [vmem:[#allocation1] sm:$0xff pattern:$0x73625140]
    %v4043 = vld.sshfl [vmem:[#allocation1 + $0x8] sm:$0xff pattern:$0x73625140]
    %v4044 = vld.sshfl [vmem:[#allocation1 + $0x10] sm:$0xff pattern:$0x73625140]
    %v4045 = vld.sshfl [vmem:[#allocation1 + $0x18] sm:$0xff pattern:$0x73625140]
    %v4046 = vld.sshfl [vmem:[#allocation1 + $0x20] sm:$0xff pattern:$0x73625140]
    %v4047 = vld.sshfl [vmem:[#allocation1 + $0x28] sm:$0xff pattern:$0x73625140]
    %v4048 = vld.sshfl [vmem:[#allocation1 + $0x30] sm:$0xff pattern:$0x73625140]
    %v4049 = vld.sshfl [vmem:[#allocation1 + $0x38] sm:$0xff pattern:$0x73625140]
    %4050 = vst [vmem:[#allocation1] ss:$4 sm:$0xff] %v3457
    %4051 = vst [vmem:[%s3630] ss:$4 sm:$0xff] %v3458
    %v4052 = vld.sshfl [vmem:[#allocation1] sm:$0xff pattern:$0x73625140]
    %v4053 = vld.sshfl [vmem:[#allocation1 + $0x8] sm:$0xff pattern:$0x73625140]
    %v4054 = vld.sshfl [vmem:[#allocation1 + $0x10] sm:$0xff pattern:$0x73625140]
    %v4055 = vld.sshfl [vmem:[#allocation1 + $0x18] sm:$0xff pattern:$0x73625140]
    %v4056 = vld.sshfl [vmem:[#allocation1 + $0x20] sm:$0xff pattern:$0x73625140]
    %v4057 = vld.sshfl [vmem:[#allocation1 + $0x28] sm:$0xff pattern:$0x73625140]
    %v4058 = vld.sshfl [vmem:[#allocation1 + $0x30] sm:$0xff pattern:$0x73625140]
    %v4059 = vld.sshfl [vmem:[#allocation1 + $0x38] sm:$0xff pattern:$0x73625140]
    %4060 = vst [vmem:[#allocation1] ss:$4 sm:$0xff] %v3459
    %4061 = vst [vmem:[%s3630] ss:$4 sm:$0xff] %v3460
    %v4062 = vld.sshfl [vmem:[#allocation1] sm:$0xff pattern:$0x73625140]
    %v4063 = vld.sshfl [vmem:[#allocation1 + $0x8] sm:$0xff pattern:$0x73625140]
    %v4064 = vld.sshfl [vmem:[#allocation1 + $0x10] sm:$0xff pattern:$0x73625140]
    %v4065 = vld.sshfl [vmem:[#allocation1 + $0x18] sm:$0xff pattern:$0x73625140]
    %v4066 = vld.sshfl [vmem:[#allocation1 + $0x20] sm:$0xff pattern:$0x73625140]
    %v4067 = vld.sshfl [vmem:[#allocation1 + $0x28] sm:$0xff pattern:$0x73625140]
    %v4068 = vld.sshfl [vmem:[#allocation1 + $0x30] sm:$0xff pattern:$0x73625140]
    %v4069 = vld.sshfl [vmem:[#allocation1 + $0x38] sm:$0xff pattern:$0x73625140]
    %4070 = vst [vmem:[#allocation1] ss:$4 sm:$0xff] %v3461
    %4071 = vst [vmem:[%s3630] ss:$4 sm:$0xff] %v3462
    %v4072 = vld.sshfl [vmem:[#allocation1] sm:$0xff pattern:$0x73625140]
    %v4073 = vld.sshfl [vmem:[#allocation1 + $0x8] sm:$0xff pattern:$0x73625140]
    %v4074 = vld.sshfl [vmem:[#allocation1 + $0x10] sm:$0xff pattern:$0x73625140]
    %v4075 = vld.sshfl [vmem:[#allocation1 + $0x18] sm:$0xff pattern:$0x73625140]
    %v4076 = vld.sshfl [vmem:[#allocation1 + $0x20] sm:$0xff pattern:$0x73625140]
    %v4077 = vld.sshfl [vmem:[#allocation1 + $0x28] sm:$0xff pattern:$0x73625140]
    %v4078 = vld.sshfl [vmem:[#allocation1 + $0x30] sm:$0xff pattern:$0x73625140]
    %v4079 = vld.sshfl [vmem:[#allocation1 + $0x38] sm:$0xff pattern:$0x73625140]
    %4080 = vst [vmem:[#allocation1] ss:$4 sm:$0xff] %v3463
    %4081 = vst [vmem:[%s3630] ss:$4 sm:$0xff] %v3464
    %v4082 = vld.sshfl [vmem:[#allocation1] sm:$0xff pattern:$0x73625140]
    %v4083 = vld.sshfl [vmem:[#allocation1 + $0x8] sm:$0xff pattern:$0x73625140]
    %v4084 = vld.sshfl [vmem:[#allocation1 + $0x10] sm:$0xff pattern:$0x73625140]
    %v4085 = vld.sshfl [vmem:[#allocation1 + $0x18] sm:$0xff pattern:$0x73625140]
    %v4086 = vld.sshfl [vmem:[#allocation1 + $0x20] sm:$0xff pattern:$0x73625140]
    %v4087 = vld.sshfl [vmem:[#allocation1 + $0x28] sm:$0xff pattern:$0x73625140]
    %v4088 = vld.sshfl [vmem:[#allocation1 + $0x30] sm:$0xff pattern:$0x73625140]
    %v4089 = vld.sshfl [vmem:[#allocation1 + $0x38] sm:$0xff pattern:$0x73625140]
    %4090 = vst [vmem:[#allocation1] ss:$4 sm:$0xff] %v3465
    %4091 = vst [vmem:[%s3630] ss:$4 sm:$0xff] %v3466
    %v4092 = vld.sshfl [vmem:[#allocation1] sm:$0xff pattern:$0x73625140]
    %v4093 = vld.sshfl [vmem:[#allocation1 + $0x8] sm:$0xff pattern:$0x73625140]
    %v4094 = vld.sshfl [vmem:[#allocation1 + $0x10] sm:$0xff pattern:$0x73625140]
    %v4095 = vld.sshfl [vmem:[#allocation1 + $0x18] sm:$0xff pattern:$0x73625140]
    %v4096 = vld.sshfl [vmem:[#allocation1 + $0x20] sm:$0xff pattern:$0x73625140]
    %v4097 = vld.sshfl [vmem:[#allocation1 + $0x28] sm:$0xff pattern:$0x73625140]
    %v4098 = vld.sshfl [vmem:[#allocation1 + $0x30] sm:$0xff pattern:$0x73625140]
    %v4099 = vld.sshfl [vmem:[#allocation1 + $0x38] sm:$0xff pattern:$0x73625140]
    %4100 = vst [vmem:[#allocation1] ss:$4 sm:$0xff] %v3467
    %4101 = vst [vmem:[%s3630] ss:$4 sm:$0xff] %v3468
    %v4102 = vld.sshfl [vmem:[#allocation1] sm:$0xff pattern:$0x73625140]
    %v4103 = vld.sshfl [vmem:[#allocation1 + $0x8] sm:$0xff pattern:$0x73625140]
    %v4104 = vld.sshfl [vmem:[#allocation1 + $0x10] sm:$0xff pattern:$0x73625140]
    %v4105 = vld.sshfl [vmem:[#allocation1 + $0x18] sm:$0xff pattern:$0x73625140]
    %v4106 = vld.sshfl [vmem:[#allocation1 + $0x20] sm:$0xff pattern:$0x73625140]
    %v4107 = vld.sshfl [vmem:[#allocation1 + $0x28] sm:$0xff pattern:$0x73625140]
    %v4108 = vld.sshfl [vmem:[#allocation1 + $0x30] sm:$0xff pattern:$0x73625140]
    %v4109 = vld.sshfl [vmem:[#allocation1 + $0x38] sm:$0xff pattern:$0x73625140]
    %4110 = vst [vmem:[#allocation1] ss:$4 sm:$0xff] %v3469
    %4111 = vst [vmem:[%s3630] ss:$4 sm:$0xff] %v3470
    %v4112 = vld.sshfl [vmem:[#allocation1] sm:$0xff pattern:$0x73625140]
    %v4113 = vld.sshfl [vmem:[#allocation1 + $0x8] sm:$0xff pattern:$0x73625140]
    %v4114 = vld.sshfl [vmem:[#allocation1 + $0x10] sm:$0xff pattern:$0x73625140]
    %v4115 = vld.sshfl [vmem:[#allocation1 + $0x18] sm:$0xff pattern:$0x73625140]
    %v4116 = vld.sshfl [vmem:[#allocation1 + $0x20] sm:$0xff pattern:$0x73625140]
    %v4117 = vld.sshfl [vmem:[#allocation1 + $0x28] sm:$0xff pattern:$0x73625140]
    %v4118 = vld.sshfl [vmem:[#allocation1 + $0x30] sm:$0xff pattern:$0x73625140]
    %v4119 = vld.sshfl [vmem:[#allocation1 + $0x38] sm:$0xff pattern:$0x73625140]
    %4120 = vst [vmem:[#allocation1] ss:$4 sm:$0xff] %v3471
    %4121 = vst [vmem:[%s3630] ss:$4 sm:$0xff] %v3472
    %v4122 = vld.sshfl [vmem:[#allocation1] sm:$0xff pattern:$0x73625140]
    %v4123 = vld.sshfl [vmem:[#allocation1 + $0x8] sm:$0xff pattern:$0x73625140]
    %v4124 = vld.sshfl [vmem:[#allocation1 + $0x10] sm:$0xff pattern:$0x73625140]
    %v4125 = vld.sshfl [vmem:[#allocation1 + $0x18] sm:$0xff pattern:$0x73625140]
    %v4126 = vld.sshfl [vmem:[#allocation1 + $0x20] sm:$0xff pattern:$0x73625140]
    %v4127 = vld.sshfl [vmem:[#allocation1 + $0x28] sm:$0xff pattern:$0x73625140]
    %v4128 = vld.sshfl [vmem:[#allocation1 + $0x30] sm:$0xff pattern:$0x73625140]
    %v4129 = vld.sshfl [vmem:[#allocation1 + $0x38] sm:$0xff pattern:$0x73625140]
    %4130 = vst [vmem:[#allocation1] ss:$4 sm:$0xff] %v3473
    %4131 = vst [vmem:[%s3630] ss:$4 sm:$0xff] %v3474
    %v4132 = vld.sshfl [vmem:[#allocation1] sm:$0xff pattern:$0x73625140]
    %v4133 = vld.sshfl [vmem:[#allocation1 + $0x8] sm:$0xff pattern:$0x73625140]
    %v4134 = vld.sshfl [vmem:[#allocation1 + $0x10] sm:$0xff pattern:$0x73625140]
    %v4135 = vld.sshfl [vmem:[#allocation1 + $0x18] sm:$0xff pattern:$0x73625140]
    %v4136 = vld.sshfl [vmem:[#allocation1 + $0x20] sm:$0xff pattern:$0x73625140]
    %v4137 = vld.sshfl [vmem:[#allocation1 + $0x28] sm:$0xff pattern:$0x73625140]
    %v4138 = vld.sshfl [vmem:[#allocation1 + $0x30] sm:$0xff pattern:$0x73625140]
    %v4139 = vld.sshfl [vmem:[#allocation1 + $0x38] sm:$0xff pattern:$0x73625140]
    %4140 = vst [vmem:[#allocation1] ss:$4 sm:$0xff] %v3475
    %4141 = vst [vmem:[%s3630] ss:$4 sm:$0xff] %v3476
    %v4142 = vld.sshfl [vmem:[#allocation1] sm:$0xff pattern:$0x73625140]
    %v4143 = vld.sshfl [vmem:[#allocation1 + $0x8] sm:$0xff pattern:$0x73625140]
    %v4144 = vld.sshfl [vmem:[#allocation1 + $0x10] sm:$0xff pattern:$0x73625140]
    %v4145 = vld.sshfl [vmem:[#allocation1 + $0x18] sm:$0xff pattern:$0x73625140]
    %v4146 = vld.sshfl [vmem:[#allocation1 + $0x20] sm:$0xff pattern:$0x73625140]
    %v4147 = vld.sshfl [vmem:[#allocation1 + $0x28] sm:$0xff pattern:$0x73625140]
    %v4148 = vld.sshfl [vmem:[#allocation1 + $0x30] sm:$0xff pattern:$0x73625140]
    %v4149 = vld.sshfl [vmem:[#allocation1 + $0x38] sm:$0xff pattern:$0x73625140]
    %4150 = vst [vmem:[#allocation1] ss:$4 sm:$0xff] %v3477
    %4151 = vst [vmem:[%s3630] ss:$4 sm:$0xff] %v3478
    %v4152 = vld.sshfl [vmem:[#allocation1] sm:$0xff pattern:$0x73625140]
    %v4153 = vld.sshfl [vmem:[#allocation1 + $0x8] sm:$0xff pattern:$0x73625140]
    %v4154 = vld.sshfl [vmem:[#allocation1 + $0x10] sm:$0xff pattern:$0x73625140]
    %v4155 = vld.sshfl [vmem:[#allocation1 + $0x18] sm:$0xff pattern:$0x73625140]
    %v4156 = vld.sshfl [vmem:[#allocation1 + $0x20] sm:$0xff pattern:$0x73625140]
    %v4157 = vld.sshfl [vmem:[#allocation1 + $0x28] sm:$0xff pattern:$0x73625140]
    %v4158 = vld.sshfl [vmem:[#allocation1 + $0x30] sm:$0xff pattern:$0x73625140]
    %v4159 = vld.sshfl [vmem:[#allocation1 + $0x38] sm:$0xff pattern:$0x73625140]
    %4160 = vst [vmem:[#allocation1] ss:$4 sm:$0xff] %v3479
    %4161 = vst [vmem:[%s3630] ss:$4 sm:$0xff] %v3480
    %v4162 = vld.sshfl [vmem:[#allocation1] sm:$0xff pattern:$0x73625140]
    %v4163 = vld.sshfl [vmem:[#allocation1 + $0x8] sm:$0xff pattern:$0x73625140]
    %v4164 = vld.sshfl [vmem:[#allocation1 + $0x10] sm:$0xff pattern:$0x73625140]
    %v4165 = vld.sshfl [vmem:[#allocation1 + $0x18] sm:$0xff pattern:$0x73625140]
    %v4166 = vld.sshfl [vmem:[#allocation1 + $0x20] sm:$0xff pattern:$0x73625140]
    %v4167 = vld.sshfl [vmem:[#allocation1 + $0x28] sm:$0xff pattern:$0x73625140]
    %v4168 = vld.sshfl [vmem:[#allocation1 + $0x30] sm:$0xff pattern:$0x73625140]
    %v4169 = vld.sshfl [vmem:[#allocation1 + $0x38] sm:$0xff pattern:$0x73625140]
    %4170 = vst [vmem:[#allocation1] ss:$4 sm:$0xff] %v3481
    %4171 = vst [vmem:[%s3630] ss:$4 sm:$0xff] %v3482
    %v4172 = vld.sshfl [vmem:[#allocation1] sm:$0xff pattern:$0x73625140]
    %v4173 = vld.sshfl [vmem:[#allocation1 + $0x8] sm:$0xff pattern:$0x73625140]
    %v4174 = vld.sshfl [vmem:[#allocation1 + $0x10] sm:$0xff pattern:$0x73625140]
    %v4175 = vld.sshfl [vmem:[#allocation1 + $0x18] sm:$0xff pattern:$0x73625140]
    %v4176 = vld.sshfl [vmem:[#allocation1 + $0x20] sm:$0xff pattern:$0x73625140]
    %v4177 = vld.sshfl [vmem:[#allocation1 + $0x28] sm:$0xff pattern:$0x73625140]
    %v4178 = vld.sshfl [vmem:[#allocation1 + $0x30] sm:$0xff pattern:$0x73625140]
    %v4179 = vld.sshfl [vmem:[#allocation1 + $0x38] sm:$0xff pattern:$0x73625140]
    %4180 = vst [vmem:[#allocation1] ss:$4 sm:$0xff] %v3483
    %4181 = vst [vmem:[%s3630] ss:$4 sm:$0xff] %v3484
    %v4182 = vld.sshfl [vmem:[#allocation1] sm:$0xff pattern:$0x73625140]
    %v4183 = vld.sshfl [vmem:[#allocation1 + $0x8] sm:$0xff pattern:$0x73625140]
    %v4184 = vld.sshfl [vmem:[#allocation1 + $0x10] sm:$0xff pattern:$0x73625140]
    %v4185 = vld.sshfl [vmem:[#allocation1 + $0x18] sm:$0xff pattern:$0x73625140]
    %v4186 = vld.sshfl [vmem:[#allocation1 + $0x20] sm:$0xff pattern:$0x73625140]
    %v4187 = vld.sshfl [vmem:[#allocation1 + $0x28] sm:$0xff pattern:$0x73625140]
    %v4188 = vld.sshfl [vmem:[#allocation1 + $0x30] sm:$0xff pattern:$0x73625140]
    %v4189 = vld.sshfl [vmem:[#allocation1 + $0x38] sm:$0xff pattern:$0x73625140]
    %4190 = vst [vmem:[#allocation1] ss:$4 sm:$0xff] %v3485
    %4191 = vst [vmem:[%s3630] ss:$4 sm:$0xff] %v3486
    %v4192 = vld.sshfl [vmem:[#allocation1] sm:$0xff pattern:$0x73625140]
    %v4193 = vld.sshfl [vmem:[#allocation1 + $0x8] sm:$0xff pattern:$0x73625140]
    %v4194 = vld.sshfl [vmem:[#allocation1 + $0x10] sm:$0xff pattern:$0x73625140]
    %v4195 = vld.sshfl [vmem:[#allocation1 + $0x18] sm:$0xff pattern:$0x73625140]
    %v4196 = vld.sshfl [vmem:[#allocation1 + $0x20] sm:$0xff pattern:$0x73625140]
    %v4197 = vld.sshfl [vmem:[#allocation1 + $0x28] sm:$0xff pattern:$0x73625140]
    %v4198 = vld.sshfl [vmem:[#allocation1 + $0x30] sm:$0xff pattern:$0x73625140]
    %v4199 = vld.sshfl [vmem:[#allocation1 + $0x38] sm:$0xff pattern:$0x73625140]
    %4200 = vst [vmem:[#allocation1] ss:$4 sm:$0xff] %v3487
    %4201 = vst [vmem:[%s3630] ss:$4 sm:$0xff] %v3488
    %v4202 = vld.sshfl [vmem:[#allocation1] sm:$0xff pattern:$0x73625140]
    %v4203 = vld.sshfl [vmem:[#allocation1 + $0x8] sm:$0xff pattern:$0x73625140]
    %v4204 = vld.sshfl [vmem:[#allocation1 + $0x10] sm:$0xff pattern:$0x73625140]
    %v4205 = vld.sshfl [vmem:[#allocation1 + $0x18] sm:$0xff pattern:$0x73625140]
    %v4206 = vld.sshfl [vmem:[#allocation1 + $0x20] sm:$0xff pattern:$0x73625140]
    %v4207 = vld.sshfl [vmem:[#allocation1 + $0x28] sm:$0xff pattern:$0x73625140]
    %v4208 = vld.sshfl [vmem:[#allocation1 + $0x30] sm:$0xff pattern:$0x73625140]
    %v4209 = vld.sshfl [vmem:[#allocation1 + $0x38] sm:$0xff pattern:$0x73625140]
    %4210 = vst [vmem:[#allocation1] ss:$4 sm:$0xff] %v3489
    %4211 = vst [vmem:[%s3630] ss:$4 sm:$0xff] %v3490
    %v4212 = vld.sshfl [vmem:[#allocation1] sm:$0xff pattern:$0x73625140]
    %v4213 = vld.sshfl [vmem:[#allocation1 + $0x8] sm:$0xff pattern:$0x73625140]
    %v4214 = vld.sshfl [vmem:[#allocation1 + $0x10] sm:$0xff pattern:$0x73625140]
    %v4215 = vld.sshfl [vmem:[#allocation1 + $0x18] sm:$0xff pattern:$0x73625140]
    %v4216 = vld.sshfl [vmem:[#allocation1 + $0x20] sm:$0xff pattern:$0x73625140]
    %v4217 = vld.sshfl [vmem:[#allocation1 + $0x28] sm:$0xff pattern:$0x73625140]
    %v4218 = vld.sshfl [vmem:[#allocation1 + $0x30] sm:$0xff pattern:$0x73625140]
    %v4219 = vld.sshfl [vmem:[#allocation1 + $0x38] sm:$0xff pattern:$0x73625140]
    %4220 = vst [vmem:[#allocation1] ss:$4 sm:$0xff] %v3491
    %4221 = vst [vmem:[%s3630] ss:$4 sm:$0xff] %v3492
    %v4222 = vld.sshfl [vmem:[#allocation1] sm:$0xff pattern:$0x73625140]
    %v4223 = vld.sshfl [vmem:[#allocation1 + $0x8] sm:$0xff pattern:$0x73625140]
    %v4224 = vld.sshfl [vmem:[#allocation1 + $0x10] sm:$0xff pattern:$0x73625140]
    %v4225 = vld.sshfl [vmem:[#allocation1 + $0x18] sm:$0xff pattern:$0x73625140]
    %v4226 = vld.sshfl [vmem:[#allocation1 + $0x20] sm:$0xff pattern:$0x73625140]
    %v4227 = vld.sshfl [vmem:[#allocation1 + $0x28] sm:$0xff pattern:$0x73625140]
    %v4228 = vld.sshfl [vmem:[#allocation1 + $0x30] sm:$0xff pattern:$0x73625140]
    %v4229 = vld.sshfl [vmem:[#allocation1 + $0x38] sm:$0xff pattern:$0x73625140]
    %4230 = vst [vmem:[#allocation1] ss:$4 sm:$0xff] %v3493
    %4231 = vst [vmem:[%s3630] ss:$4 sm:$0xff] %v3494
    %v4232 = vld.sshfl [vmem:[#allocation1] sm:$0xff pattern:$0x73625140]
    %v4233 = vld.sshfl [vmem:[#allocation1 + $0x8] sm:$0xff pattern:$0x73625140]
    %v4234 = vld.sshfl [vmem:[#allocation1 + $0x10] sm:$0xff pattern:$0x73625140]
    %v4235 = vld.sshfl [vmem:[#allocation1 + $0x18] sm:$0xff pattern:$0x73625140]
    %v4236 = vld.sshfl [vmem:[#allocation1 + $0x20] sm:$0xff pattern:$0x73625140]
    %v4237 = vld.sshfl [vmem:[#allocation1 + $0x28] sm:$0xff pattern:$0x73625140]
    %v4238 = vld.sshfl [vmem:[#allocation1 + $0x30] sm:$0xff pattern:$0x73625140]
    %v4239 = vld.sshfl [vmem:[#allocation1 + $0x38] sm:$0xff pattern:$0x73625140]
    %4240 = vst [vmem:[#allocation1] ss:$4 sm:$0xff] %v3495
    %4241 = vst [vmem:[%s3630] ss:$4 sm:$0xff] %v3496
    %v4242 = vld.sshfl [vmem:[#allocation1] sm:$0xff pattern:$0x73625140]
    %v4243 = vld.sshfl [vmem:[#allocation1 + $0x8] sm:$0xff pattern:$0x73625140]
    %v4244 = vld.sshfl [vmem:[#allocation1 + $0x10] sm:$0xff pattern:$0x73625140]
    %v4245 = vld.sshfl [vmem:[#allocation1 + $0x18] sm:$0xff pattern:$0x73625140]
    %v4246 = vld.sshfl [vmem:[#allocation1 + $0x20] sm:$0xff pattern:$0x73625140]
    %v4247 = vld.sshfl [vmem:[#allocation1 + $0x28] sm:$0xff pattern:$0x73625140]
    %v4248 = vld.sshfl [vmem:[#allocation1 + $0x30] sm:$0xff pattern:$0x73625140]
    %v4249 = vld.sshfl [vmem:[#allocation1 + $0x38] sm:$0xff pattern:$0x73625140]
    %4250 = vst [vmem:[#allocation1] ss:$4 sm:$0xff] %v3497
    %4251 = vst [vmem:[%s3630] ss:$4 sm:$0xff] %v3498
    %v4252 = vld.sshfl [vmem:[#allocation1] sm:$0xff pattern:$0x73625140]
    %v4253 = vld.sshfl [vmem:[#allocation1 + $0x8] sm:$0xff pattern:$0x73625140]
    %v4254 = vld.sshfl [vmem:[#allocation1 + $0x10] sm:$0xff pattern:$0x73625140]
    %v4255 = vld.sshfl [vmem:[#allocation1 + $0x18] sm:$0xff pattern:$0x73625140]
    %v4256 = vld.sshfl [vmem:[#allocation1 + $0x20] sm:$0xff pattern:$0x73625140]
    %v4257 = vld.sshfl [vmem:[#allocation1 + $0x28] sm:$0xff pattern:$0x73625140]
    %v4258 = vld.sshfl [vmem:[#allocation1 + $0x30] sm:$0xff pattern:$0x73625140]
    %v4259 = vld.sshfl [vmem:[#allocation1 + $0x38] sm:$0xff pattern:$0x73625140]
    %4260 = vst [vmem:[#allocation1] ss:$4 sm:$0xff] %v3499
    %4261 = vst [vmem:[%s3630] ss:$4 sm:$0xff] %v3500
    %v4262 = vld.sshfl [vmem:[#allocation1] sm:$0xff pattern:$0x73625140]
    %v4263 = vld.sshfl [vmem:[#allocation1 + $0x8] sm:$0xff pattern:$0x73625140]
    %v4264 = vld.sshfl [vmem:[#allocation1 + $0x10] sm:$0xff pattern:$0x73625140]
    %v4265 = vld.sshfl [vmem:[#allocation1 + $0x18] sm:$0xff pattern:$0x73625140]
    %v4266 = vld.sshfl [vmem:[#allocation1 + $0x20] sm:$0xff pattern:$0x73625140]
    %v4267 = vld.sshfl [vmem:[#allocation1 + $0x28] sm:$0xff pattern:$0x73625140]
    %v4268 = vld.sshfl [vmem:[#allocation1 + $0x30] sm:$0xff pattern:$0x73625140]
    %v4269 = vld.sshfl [vmem:[#allocation1 + $0x38] sm:$0xff pattern:$0x73625140]
    %v4782 = vsel %vm2858, %v3632, 0.0
    %v4783 = vsel %vm2858, %v3633, 0.0
    %v4784 = vadd.f32 %v4782, %v4783
    %v4785 = vsel %vm2858, %v3634, 0.0
    %v4786 = vadd.f32 %v4784, %v4785
    %v4787 = vsel %vm2858, %v3635, 0.0
    %v4788 = vadd.f32 %v4786, %v4787
    %v4789 = vsel %vm2858, %v3636, 0.0
    %v4790 = vadd.f32 %v4788, %v4789
    %v4791 = vsel %vm2858, %v3637, 0.0
    %v4792 = vadd.f32 %v4790, %v4791
    %v4793 = vsel %vm2858, %v3638, 0.0
    %v4794 = vadd.f32 %v4792, %v4793
    %v4795 = vsel %vm2858, %v3639, 0.0
    %v4796 = vadd.f32 %v4794, %v4795
    %v4797 = vsel %vm2858, %v3642, 0.0
    %v4798 = vadd.f32 %v4796, %v4797
    %v4799 = vsel %vm2858, %v3643, 0.0
    %v4800 = vadd.f32 %v4798, %v4799
    %v4801 = vsel %vm2858, %v3644, 0.0
    %v4802 = vadd.f32 %v4800, %v4801
    %v4803 = vsel %vm2858, %v3645, 0.0
    %v4804 = vadd.f32 %v4802, %v4803
    %v4805 = vsel %vm2858, %v3646, 0.0
    %v4806 = vadd.f32 %v4804, %v4805
    %v4807 = vsel %vm2858, %v3647, 0.0
    %v4808 = vadd.f32 %v4806, %v4807
    %v4809 = vsel %vm2858, %v3648, 0.0
    %v4810 = vadd.f32 %v4808, %v4809
    %v4811 = vsel %vm2858, %v3649, 0.0
    %v4812 = vadd.f32 %v4810, %v4811
    %v4813 = vsel %vm2858, %v3652, 0.0
    %v4814 = vadd.f32 %v4812, %v4813
    %v4815 = vsel %vm2858, %v3653, 0.0
    %v4816 = vadd.f32 %v4814, %v4815
    %v4817 = vsel %vm2858, %v3654, 0.0
    %v4818 = vadd.f32 %v4816, %v4817
    %v4819 = vsel %vm2858, %v3655, 0.0
    %v4820 = vadd.f32 %v4818, %v4819
    %v4821 = vsel %vm2858, %v3656, 0.0
    %v4822 = vadd.f32 %v4820, %v4821
    %v4823 = vsel %vm2858, %v3657, 0.0
    %v4824 = vadd.f32 %v4822, %v4823
    %v4825 = vsel %vm2858, %v3658, 0.0
    %v4826 = vadd.f32 %v4824, %v4825
    %v4827 = vsel %vm2858, %v3659, 0.0
    %v4828 = vadd.f32 %v4826, %v4827
    %v4829 = vsel %vm2858, %v3662, 0.0
    %v4830 = vadd.f32 %v4828, %v4829
    %v4831 = vsel %vm2858, %v3663, 0.0
    %v4832 = vadd.f32 %v4830, %v4831
    %v4833 = vsel %vm2858, %v3664, 0.0
    %v4834 = vadd.f32 %v4832, %v4833
    %v4835 = vsel %vm2858, %v3665, 0.0
    %v4836 = vadd.f32 %v4834, %v4835
    %v4837 = vsel %vm2858, %v3666, 0.0
    %v4838 = vadd.f32 %v4836, %v4837
    %v4839 = vsel %vm2858, %v3667, 0.0
    %v4840 = vadd.f32 %v4838, %v4839
    %v4841 = vsel %vm2858, %v3668, 0.0
    %v4842 = vadd.f32 %v4840, %v4841
    %v4843 = vsel %vm2858, %v3669, 0.0
    %v4844 = vadd.f32 %v4842, %v4843
    %v4845 = vsel %vm2858, %v3672, 0.0
    %v4846 = vadd.f32 %v4844, %v4845
    %v4847 = vsel %vm2858, %v3673, 0.0
    %v4848 = vadd.f32 %v4846, %v4847
    %v4849 = vsel %vm2858, %v3674, 0.0
    %v4850 = vadd.f32 %v4848, %v4849
    %v4851 = vsel %vm2858, %v3675, 0.0
    %v4852 = vadd.f32 %v4850, %v4851
    %v4853 = vsel %vm2858, %v3676, 0.0
    %v4854 = vadd.f32 %v4852, %v4853
    %v4855 = vsel %vm2858, %v3677, 0.0
    %v4856 = vadd.f32 %v4854, %v4855
    %v4857 = vsel %vm2858, %v3678, 0.0
    %v4858 = vadd.f32 %v4856, %v4857
    %v4859 = vsel %vm2858, %v3679, 0.0
    %v4860 = vadd.f32 %v4858, %v4859
    %v4861 = vsel %vm2858, %v3682, 0.0
    %v4862 = vadd.f32 %v4860, %v4861
    %v4863 = vsel %vm2858, %v3683, 0.0
    %v4864 = vadd.f32 %v4862, %v4863
    %v4865 = vsel %vm2858, %v3684, 0.0
    %v4866 = vadd.f32 %v4864, %v4865
    %v4867 = vsel %vm2858, %v3685, 0.0
    %v4868 = vadd.f32 %v4866, %v4867
    %v4869 = vsel %vm2858, %v3686, 0.0
    %v4870 = vadd.f32 %v4868, %v4869
    %v4871 = vsel %vm2858, %v3687, 0.0
    %v4872 = vadd.f32 %v4870, %v4871
    %v4873 = vsel %vm2858, %v3688, 0.0
    %v4874 = vadd.f32 %v4872, %v4873
    %v4875 = vsel %vm2858, %v3689, 0.0
    %v4876 = vadd.f32 %v4874, %v4875
    %v4877 = vsel %vm2858, %v3692, 0.0
    %v4878 = vadd.f32 %v4876, %v4877
    %v4879 = vsel %vm2858, %v3693, 0.0
    %v4880 = vadd.f32 %v4878, %v4879
    %v4881 = vsel %vm2858, %v3694, 0.0
    %v4882 = vadd.f32 %v4880, %v4881
    %v4883 = vsel %vm2858, %v3695, 0.0
    %v4884 = vadd.f32 %v4882, %v4883
    %v4885 = vsel %vm2858, %v3696, 0.0
    %v4886 = vadd.f32 %v4884, %v4885
    %v4887 = vsel %vm2858, %v3697, 0.0
    %v4888 = vadd.f32 %v4886, %v4887
    %v4889 = vsel %vm2858, %v3698, 0.0
    %v4890 = vadd.f32 %v4888, %v4889
    %v4891 = vsel %vm2858, %v3699, 0.0
    %v4892 = vadd.f32 %v4890, %v4891
    %v4893 = vsel %vm2858, %v3702, 0.0
    %v4894 = vadd.f32 %v4892, %v4893
    %v4895 = vsel %vm2858, %v3703, 0.0
    %v4896 = vadd.f32 %v4894, %v4895
    %v4897 = vsel %vm2858, %v3704, 0.0
    %v4898 = vadd.f32 %v4896, %v4897
    %v4899 = vsel %vm2858, %v3705, 0.0
    %v4900 = vadd.f32 %v4898, %v4899
    %v4901 = vsel %vm2858, %v3706, 0.0
    %v4902 = vadd.f32 %v4900, %v4901
    %v4903 = vsel %vm2858, %v3707, 0.0
    %v4904 = vadd.f32 %v4902, %v4903
    %v4905 = vsel %vm2858, %v3708, 0.0
    %v4906 = vadd.f32 %v4904, %v4905
    %v4907 = vsel %vm2858, %v3709, 0.0
    %v4908 = vadd.f32 %v4906, %v4907
    %v4909 = vsel %vm2858, %v3712, 0.0
    %v4910 = vadd.f32 %v4908, %v4909
    %v4911 = vsel %vm2858, %v3713, 0.0
    %v4912 = vadd.f32 %v4910, %v4911
    %v4913 = vsel %vm2858, %v3714, 0.0
    %v4914 = vadd.f32 %v4912, %v4913
    %v4915 = vsel %vm2858, %v3715, 0.0
    %v4916 = vadd.f32 %v4914, %v4915
    %v4917 = vsel %vm2858, %v3716, 0.0
    %v4918 = vadd.f32 %v4916, %v4917
    %v4919 = vsel %vm2858, %v3717, 0.0
    %v4920 = vadd.f32 %v4918, %v4919
    %v4921 = vsel %vm2858, %v3718, 0.0
    %v4922 = vadd.f32 %v4920, %v4921
    %v4923 = vsel %vm2858, %v3719, 0.0
    %v4924 = vadd.f32 %v4922, %v4923
    %v4925 = vsel %vm2858, %v3722, 0.0
    %v4926 = vadd.f32 %v4924, %v4925
    %v4927 = vsel %vm2858, %v3723, 0.0
    %v4928 = vadd.f32 %v4926, %v4927
    %v4929 = vsel %vm2858, %v3724, 0.0
    %v4930 = vadd.f32 %v4928, %v4929
    %v4931 = vsel %vm2858, %v3725, 0.0
    %v4932 = vadd.f32 %v4930, %v4931
    %v4933 = vsel %vm2858, %v3726, 0.0
    %v4934 = vadd.f32 %v4932, %v4933
    %v4935 = vsel %vm2858, %v3727, 0.0
    %v4936 = vadd.f32 %v4934, %v4935
    %v4937 = vsel %vm2858, %v3728, 0.0
    %v4938 = vadd.f32 %v4936, %v4937
    %v4939 = vsel %vm2858, %v3729, 0.0
    %v4940 = vadd.f32 %v4938, %v4939
    %v4941 = vsel %vm2858, %v3732, 0.0
    %v4942 = vadd.f32 %v4940, %v4941
    %v4943 = vsel %vm2858, %v3733, 0.0
    %v4944 = vadd.f32 %v4942, %v4943
    %v4945 = vsel %vm2858, %v3734, 0.0
    %v4946 = vadd.f32 %v4944, %v4945
    %v4947 = vsel %vm2858, %v3735, 0.0
    %v4948 = vadd.f32 %v4946, %v4947
    %v4949 = vsel %vm2858, %v3736, 0.0
    %v4950 = vadd.f32 %v4948, %v4949
    %v4951 = vsel %vm2858, %v3737, 0.0
    %v4952 = vadd.f32 %v4950, %v4951
    %v4953 = vsel %vm2858, %v3738, 0.0
    %v4954 = vadd.f32 %v4952, %v4953
    %v4955 = vsel %vm2858, %v3739, 0.0
    %v4956 = vadd.f32 %v4954, %v4955
    %v4957 = vsel %vm2858, %v3742, 0.0
    %v4958 = vadd.f32 %v4956, %v4957
    %v4959 = vsel %vm2858, %v3743, 0.0
    %v4960 = vadd.f32 %v4958, %v4959
    %v4961 = vsel %vm2858, %v3744, 0.0
    %v4962 = vadd.f32 %v4960, %v4961
    %v4963 = vsel %vm2858, %v3745, 0.0
    %v4964 = vadd.f32 %v4962, %v4963
    %v4965 = vsel %vm2858, %v3746, 0.0
    %v4966 = vadd.f32 %v4964, %v4965
    %v4967 = vsel %vm2858, %v3747, 0.0
    %v4968 = vadd.f32 %v4966, %v4967
    %v4969 = vsel %vm2858, %v3748, 0.0
    %v4970 = vadd.f32 %v4968, %v4969
    %v4971 = vsel %vm2858, %v3749, 0.0
    %v4972 = vadd.f32 %v4970, %v4971
    %v4973 = vsel %vm2858, %v3752, 0.0
    %v4974 = vadd.f32 %v4972, %v4973
    %v4975 = vsel %vm2858, %v3753, 0.0
    %v4976 = vadd.f32 %v4974, %v4975
    %v4977 = vsel %vm2858, %v3754, 0.0
    %v4978 = vadd.f32 %v4976, %v4977
    %v4979 = vsel %vm2858, %v3755, 0.0
    %v4980 = vadd.f32 %v4978, %v4979
    %v4981 = vsel %vm2858, %v3756, 0.0
    %v4982 = vadd.f32 %v4980, %v4981
    %v4983 = vsel %vm2858, %v3757, 0.0
    %v4984 = vadd.f32 %v4982, %v4983
    %v4985 = vsel %vm2858, %v3758, 0.0
    %v4986 = vadd.f32 %v4984, %v4985
    %v4987 = vsel %vm2858, %v3759, 0.0
    %v4988 = vadd.f32 %v4986, %v4987
    %v4989 = vsel %vm2858, %v3762, 0.0
    %v4990 = vadd.f32 %v4988, %v4989
    %v4991 = vsel %vm2858, %v3763, 0.0
    %v4992 = vadd.f32 %v4990, %v4991
    %v4993 = vsel %vm2858, %v3764, 0.0
    %v4994 = vadd.f32 %v4992, %v4993
    %v4995 = vsel %vm2858, %v3765, 0.0
    %v4996 = vadd.f32 %v4994, %v4995
    %v4997 = vsel %vm2858, %v3766, 0.0
    %v4998 = vadd.f32 %v4996, %v4997
    %v4999 = vsel %vm2858, %v3767, 0.0
    %v5000 = vadd.f32 %v4998, %v4999
    %v5001 = vsel %vm2858, %v3768, 0.0
    %v5002 = vadd.f32 %v5000, %v5001
    %v5003 = vsel %vm2858, %v3769, 0.0
    %v5004 = vadd.f32 %v5002, %v5003
    %v5005 = vsel %vm2858, %v3772, 0.0
    %v5006 = vadd.f32 %v5004, %v5005
    %v5007 = vsel %vm2858, %v3773, 0.0
    %v5008 = vadd.f32 %v5006, %v5007
    %v5009 = vsel %vm2858, %v3774, 0.0
    %v5010 = vadd.f32 %v5008, %v5009
    %v5011 = vsel %vm2858, %v3775, 0.0
    %v5012 = vadd.f32 %v5010, %v5011
    %v5013 = vsel %vm2858, %v3776, 0.0
    %v5014 = vadd.f32 %v5012, %v5013
    %v5015 = vsel %vm2858, %v3777, 0.0
    %v5016 = vadd.f32 %v5014, %v5015
    %v5017 = vsel %vm2858, %v3778, 0.0
    %v5018 = vadd.f32 %v5016, %v5017
    %v5019 = vsel %vm2858, %v3779, 0.0
    %v5020 = vadd.f32 %v5018, %v5019
    %v5021 = vsel %vm2858, %v3782, 0.0
    %v5022 = vadd.f32 %v5020, %v5021
    %v5023 = vsel %vm2858, %v3783, 0.0
    %v5024 = vadd.f32 %v5022, %v5023
    %v5025 = vsel %vm2858, %v3784, 0.0
    %v5026 = vadd.f32 %v5024, %v5025
    %v5027 = vsel %vm2858, %v3785, 0.0
    %v5028 = vadd.f32 %v5026, %v5027
    %v5029 = vsel %vm2858, %v3786, 0.0
    %v5030 = vadd.f32 %v5028, %v5029
    %v5031 = vsel %vm2858, %v3787, 0.0
    %v5032 = vadd.f32 %v5030, %v5031
    %v5033 = vsel %vm2858, %v3788, 0.0
    %v5034 = vadd.f32 %v5032, %v5033
    %v5035 = vsel %vm2858, %v3789, 0.0
    %v5036 = vadd.f32 %v5034, %v5035
    %v5037 = vsel %vm2858, %v3792, 0.0
    %v5038 = vadd.f32 %v5036, %v5037
    %v5039 = vsel %vm2858, %v3793, 0.0
    %v5040 = vadd.f32 %v5038, %v5039
    %v5041 = vsel %vm2858, %v3794, 0.0
    %v5042 = vadd.f32 %v5040, %v5041
    %v5043 = vsel %vm2858, %v3795, 0.0
    %v5044 = vadd.f32 %v5042, %v5043
    %v5045 = vsel %vm2858, %v3796, 0.0
    %v5046 = vadd.f32 %v5044, %v5045
    %v5047 = vsel %vm2858, %v3797, 0.0
    %v5048 = vadd.f32 %v5046, %v5047
    %v5049 = vsel %vm2858, %v3798, 0.0
    %v5050 = vadd.f32 %v5048, %v5049
    %v5051 = vsel %vm2858, %v3799, 0.0
    %v5052 = vadd.f32 %v5050, %v5051
    %v5053 = vsel %vm2858, %v3802, 0.0
    %v5054 = vadd.f32 %v5052, %v5053
    %v5055 = vsel %vm2858, %v3803, 0.0
    %v5056 = vadd.f32 %v5054, %v5055
    %v5057 = vsel %vm2858, %v3804, 0.0
    %v5058 = vadd.f32 %v5056, %v5057
    %v5059 = vsel %vm2858, %v3805, 0.0
    %v5060 = vadd.f32 %v5058, %v5059
    %v5061 = vsel %vm2858, %v3806, 0.0
    %v5062 = vadd.f32 %v5060, %v5061
    %v5063 = vsel %vm2858, %v3807, 0.0
    %v5064 = vadd.f32 %v5062, %v5063
    %v5065 = vsel %vm2858, %v3808, 0.0
    %v5066 = vadd.f32 %v5064, %v5065
    %v5067 = vsel %vm2858, %v3809, 0.0
    %v5068 = vadd.f32 %v5066, %v5067
    %v5069 = vsel %vm2858, %v3812, 0.0
    %v5070 = vadd.f32 %v5068, %v5069
    %v5071 = vsel %vm2858, %v3813, 0.0
    %v5072 = vadd.f32 %v5070, %v5071
    %v5073 = vsel %vm2858, %v3814, 0.0
    %v5074 = vadd.f32 %v5072, %v5073
    %v5075 = vsel %vm2858, %v3815, 0.0
    %v5076 = vadd.f32 %v5074, %v5075
    %v5077 = vsel %vm2858, %v3816, 0.0
    %v5078 = vadd.f32 %v5076, %v5077
    %v5079 = vsel %vm2858, %v3817, 0.0
    %v5080 = vadd.f32 %v5078, %v5079
    %v5081 = vsel %vm2858, %v3818, 0.0
    %v5082 = vadd.f32 %v5080, %v5081
    %v5083 = vsel %vm2858, %v3819, 0.0
    %v5084 = vadd.f32 %v5082, %v5083
    %v5085 = vsel %vm2858, %v3822, 0.0
    %v5086 = vadd.f32 %v5084, %v5085
    %v5087 = vsel %vm2858, %v3823, 0.0
    %v5088 = vadd.f32 %v5086, %v5087
    %v5089 = vsel %vm2858, %v3824, 0.0
    %v5090 = vadd.f32 %v5088, %v5089
    %v5091 = vsel %vm2858, %v3825, 0.0
    %v5092 = vadd.f32 %v5090, %v5091
    %v5093 = vsel %vm2858, %v3826, 0.0
    %v5094 = vadd.f32 %v5092, %v5093
    %v5095 = vsel %vm2858, %v3827, 0.0
    %v5096 = vadd.f32 %v5094, %v5095
    %v5097 = vsel %vm2858, %v3828, 0.0
    %v5098 = vadd.f32 %v5096, %v5097
    %v5099 = vsel %vm2858, %v3829, 0.0
    %v5100 = vadd.f32 %v5098, %v5099
    %v5101 = vsel %vm2858, %v3832, 0.0
    %v5102 = vadd.f32 %v5100, %v5101
    %v5103 = vsel %vm2858, %v3833, 0.0
    %v5104 = vadd.f32 %v5102, %v5103
    %v5105 = vsel %vm2858, %v3834, 0.0
    %v5106 = vadd.f32 %v5104, %v5105
    %v5107 = vsel %vm2858, %v3835, 0.0
    %v5108 = vadd.f32 %v5106, %v5107
    %v5109 = vsel %vm2858, %v3836, 0.0
    %v5110 = vadd.f32 %v5108, %v5109
    %v5111 = vsel %vm2858, %v3837, 0.0
    %v5112 = vadd.f32 %v5110, %v5111
    %v5113 = vsel %vm2858, %v3838, 0.0
    %v5114 = vadd.f32 %v5112, %v5113
    %v5115 = vsel %vm2858, %v3839, 0.0
    %v5116 = vadd.f32 %v5114, %v5115
    %v5117 = vsel %vm2858, %v3842, 0.0
    %v5118 = vadd.f32 %v5116, %v5117
    %v5119 = vsel %vm2858, %v3843, 0.0
    %v5120 = vadd.f32 %v5118, %v5119
    %v5121 = vsel %vm2858, %v3844, 0.0
    %v5122 = vadd.f32 %v5120, %v5121
    %v5123 = vsel %vm2858, %v3845, 0.0
    %v5124 = vadd.f32 %v5122, %v5123
    %v5125 = vsel %vm2858, %v3846, 0.0
    %v5126 = vadd.f32 %v5124, %v5125
    %v5127 = vsel %vm2858, %v3847, 0.0
    %v5128 = vadd.f32 %v5126, %v5127
    %v5129 = vsel %vm2858, %v3848, 0.0
    %v5130 = vadd.f32 %v5128, %v5129
    %v5131 = vsel %vm2858, %v3849, 0.0
    %v5132 = vadd.f32 %v5130, %v5131
    %v5133 = vsel %vm2858, %v3852, 0.0
    %v5134 = vadd.f32 %v5132, %v5133
    %v5135 = vsel %vm2858, %v3853, 0.0
    %v5136 = vadd.f32 %v5134, %v5135
    %v5137 = vsel %vm2858, %v3854, 0.0
    %v5138 = vadd.f32 %v5136, %v5137
    %v5139 = vsel %vm2858, %v3855, 0.0
    %v5140 = vadd.f32 %v5138, %v5139
    %v5141 = vsel %vm2858, %v3856, 0.0
    %v5142 = vadd.f32 %v5140, %v5141
    %v5143 = vsel %vm2858, %v3857, 0.0
    %v5144 = vadd.f32 %v5142, %v5143
    %v5145 = vsel %vm2858, %v3858, 0.0
    %v5146 = vadd.f32 %v5144, %v5145
    %v5147 = vsel %vm2858, %v3859, 0.0
    %v5148 = vadd.f32 %v5146, %v5147
    %v5149 = vsel %vm2858, %v3862, 0.0
    %v5150 = vadd.f32 %v5148, %v5149
    %v5151 = vsel %vm2858, %v3863, 0.0
    %v5152 = vadd.f32 %v5150, %v5151
    %v5153 = vsel %vm2858, %v3864, 0.0
    %v5154 = vadd.f32 %v5152, %v5153
    %v5155 = vsel %vm2858, %v3865, 0.0
    %v5156 = vadd.f32 %v5154, %v5155
    %v5157 = vsel %vm2858, %v3866, 0.0
    %v5158 = vadd.f32 %v5156, %v5157
    %v5159 = vsel %vm2858, %v3867, 0.0
    %v5160 = vadd.f32 %v5158, %v5159
    %v5161 = vsel %vm2858, %v3868, 0.0
    %v5162 = vadd.f32 %v5160, %v5161
    %v5163 = vsel %vm2858, %v3869, 0.0
    %v5164 = vadd.f32 %v5162, %v5163
    %v5165 = vsel %vm2858, %v3872, 0.0
    %v5166 = vadd.f32 %v5164, %v5165
    %v5167 = vsel %vm2858, %v3873, 0.0
    %v5168 = vadd.f32 %v5166, %v5167
    %v5169 = vsel %vm2858, %v3874, 0.0
    %v5170 = vadd.f32 %v5168, %v5169
    %v5171 = vsel %vm2858, %v3875, 0.0
    %v5172 = vadd.f32 %v5170, %v5171
    %v5173 = vsel %vm2858, %v3876, 0.0
    %v5174 = vadd.f32 %v5172, %v5173
    %v5175 = vsel %vm2858, %v3877, 0.0
    %v5176 = vadd.f32 %v5174, %v5175
    %v5177 = vsel %vm2858, %v3878, 0.0
    %v5178 = vadd.f32 %v5176, %v5177
    %v5179 = vsel %vm2858, %v3879, 0.0
    %v5180 = vadd.f32 %v5178, %v5179
    %v5181 = vsel %vm2858, %v3882, 0.0
    %v5182 = vadd.f32 %v5180, %v5181
    %v5183 = vsel %vm2858, %v3883, 0.0
    %v5184 = vadd.f32 %v5182, %v5183
    %v5185 = vsel %vm2858, %v3884, 0.0
    %v5186 = vadd.f32 %v5184, %v5185
    %v5187 = vsel %vm2858, %v3885, 0.0
    %v5188 = vadd.f32 %v5186, %v5187
    %v5189 = vsel %vm2858, %v3886, 0.0
    %v5190 = vadd.f32 %v5188, %v5189
    %v5191 = vsel %vm2858, %v3887, 0.0
    %v5192 = vadd.f32 %v5190, %v5191
    %v5193 = vsel %vm2858, %v3888, 0.0
    %v5194 = vadd.f32 %v5192, %v5193
    %v5195 = vsel %vm2858, %v3889, 0.0
    %v5196 = vadd.f32 %v5194, %v5195
    %v5197 = vsel %vm2858, %v3892, 0.0
    %v5198 = vadd.f32 %v5196, %v5197
    %v5199 = vsel %vm2858, %v3893, 0.0
    %v5200 = vadd.f32 %v5198, %v5199
    %v5201 = vsel %vm2858, %v3894, 0.0
    %v5202 = vadd.f32 %v5200, %v5201
    %v5203 = vsel %vm2858, %v3895, 0.0
    %v5204 = vadd.f32 %v5202, %v5203
    %v5205 = vsel %vm2858, %v3896, 0.0
    %v5206 = vadd.f32 %v5204, %v5205
    %v5207 = vsel %vm2858, %v3897, 0.0
    %v5208 = vadd.f32 %v5206, %v5207
    %v5209 = vsel %vm2858, %v3898, 0.0
    %v5210 = vadd.f32 %v5208, %v5209
    %v5211 = vsel %vm2858, %v3899, 0.0
    %v5212 = vadd.f32 %v5210, %v5211
    %v5213 = vsel %vm2858, %v3902, 0.0
    %v5214 = vadd.f32 %v5212, %v5213
    %v5215 = vsel %vm2858, %v3903, 0.0
    %v5216 = vadd.f32 %v5214, %v5215
    %v5217 = vsel %vm2858, %v3904, 0.0
    %v5218 = vadd.f32 %v5216, %v5217
    %v5219 = vsel %vm2858, %v3905, 0.0
    %v5220 = vadd.f32 %v5218, %v5219
    %v5221 = vsel %vm2858, %v3906, 0.0
    %v5222 = vadd.f32 %v5220, %v5221
    %v5223 = vsel %vm2858, %v3907, 0.0
    %v5224 = vadd.f32 %v5222, %v5223
    %v5225 = vsel %vm2858, %v3908, 0.0
    %v5226 = vadd.f32 %v5224, %v5225
    %v5227 = vsel %vm2858, %v3909, 0.0
    %v5228 = vadd.f32 %v5226, %v5227
    %v5229 = vsel %vm2858, %v3912, 0.0
    %v5230 = vadd.f32 %v5228, %v5229
    %v5231 = vsel %vm2858, %v3913, 0.0
    %v5232 = vadd.f32 %v5230, %v5231
    %v5233 = vsel %vm2858, %v3914, 0.0
    %v5234 = vadd.f32 %v5232, %v5233
    %v5235 = vsel %vm2858, %v3915, 0.0
    %v5236 = vadd.f32 %v5234, %v5235
    %v5237 = vsel %vm2858, %v3916, 0.0
    %v5238 = vadd.f32 %v5236, %v5237
    %v5239 = vsel %vm2858, %v3917, 0.0
    %v5240 = vadd.f32 %v5238, %v5239
    %v5241 = vsel %vm2858, %v3918, 0.0
    %v5242 = vadd.f32 %v5240, %v5241
    %v5243 = vsel %vm2858, %v3919, 0.0
    %v5244 = vadd.f32 %v5242, %v5243
    %v5245 = vsel %vm2858, %v3922, 0.0
    %v5246 = vadd.f32 %v5244, %v5245
    %v5247 = vsel %vm2858, %v3923, 0.0
    %v5248 = vadd.f32 %v5246, %v5247
    %v5249 = vsel %vm2858, %v3924, 0.0
    %v5250 = vadd.f32 %v5248, %v5249
    %v5251 = vsel %vm2858, %v3925, 0.0
    %v5252 = vadd.f32 %v5250, %v5251
    %v5253 = vsel %vm2858, %v3926, 0.0
    %v5254 = vadd.f32 %v5252, %v5253
    %v5255 = vsel %vm2858, %v3927, 0.0
    %v5256 = vadd.f32 %v5254, %v5255
    %v5257 = vsel %vm2858, %v3928, 0.0
    %v5258 = vadd.f32 %v5256, %v5257
    %v5259 = vsel %vm2858, %v3929, 0.0
    %v5260 = vadd.f32 %v5258, %v5259
    %v5261 = vsel %vm2858, %v3932, 0.0
    %v5262 = vadd.f32 %v5260, %v5261
    %v5263 = vsel %vm2858, %v3933, 0.0
    %v5264 = vadd.f32 %v5262, %v5263
    %v5265 = vsel %vm2858, %v3934, 0.0
    %v5266 = vadd.f32 %v5264, %v5265
    %v5267 = vsel %vm2858, %v3935, 0.0
    %v5268 = vadd.f32 %v5266, %v5267
    %v5269 = vsel %vm2858, %v3936, 0.0
    %v5270 = vadd.f32 %v5268, %v5269
    %v5271 = vsel %vm2858, %v3937, 0.0
    %v5272 = vadd.f32 %v5270, %v5271
    %v5273 = vsel %vm2858, %v3938, 0.0
    %v5274 = vadd.f32 %v5272, %v5273
    %v5275 = vsel %vm2858, %v3939, 0.0
    %v5276 = vadd.f32 %v5274, %v5275
    %v5277 = vsel %vm2858, %v3942, 0.0
    %v5278 = vadd.f32 %v5276, %v5277
    %v5279 = vsel %vm2858, %v3943, 0.0
    %v5280 = vadd.f32 %v5278, %v5279
    %v5281 = vsel %vm2858, %v3944, 0.0
    %v5282 = vadd.f32 %v5280, %v5281
    %v5283 = vsel %vm2858, %v3945, 0.0
    %v5284 = vadd.f32 %v5282, %v5283
    %v5285 = vsel %vm2858, %v3946, 0.0
    %v5286 = vadd.f32 %v5284, %v5285
    %v5287 = vsel %vm2858, %v3947, 0.0
    %v5288 = vadd.f32 %v5286, %v5287
    %v5289 = vsel %vm2858, %v3948, 0.0
    %v5290 = vadd.f32 %v5288, %v5289
    %v5291 = vsel %vm2858, %v3949, 0.0
    %v5292 = vadd.f32 %v5290, %v5291
    %v5293 = vsel %vm2858, %v3952, 0.0
    %v5294 = vadd.f32 %v5292, %v5293
    %v5295 = vsel %vm2858, %v3953, 0.0
    %v5296 = vadd.f32 %v5294, %v5295
    %v5297 = vsel %vm2858, %v3954, 0.0
    %v5298 = vadd.f32 %v5296, %v5297
    %v5299 = vsel %vm2858, %v3955, 0.0
    %v5300 = vadd.f32 %v5298, %v5299
    %v5301 = vsel %vm2858, %v3956, 0.0
    %v5302 = vadd.f32 %v5300, %v5301
    %v5303 = vsel %vm2858, %v3957, 0.0
    %v5304 = vadd.f32 %v5302, %v5303
    %v5305 = vsel %vm2858, %v3958, 0.0
    %v5306 = vadd.f32 %v5304, %v5305
    %v5307 = vsel %vm2858, %v3959, 0.0
    %v5308 = vadd.f32 %v5306, %v5307
    %v5309 = vsel %vm2858, %v3962, 0.0
    %v5310 = vadd.f32 %v5308, %v5309
    %v5311 = vsel %vm2858, %v3963, 0.0
    %v5312 = vadd.f32 %v5310, %v5311
    %v5313 = vsel %vm2858, %v3964, 0.0
    %v5314 = vadd.f32 %v5312, %v5313
    %v5315 = vsel %vm2858, %v3965, 0.0
    %v5316 = vadd.f32 %v5314, %v5315
    %v5317 = vsel %vm2858, %v3966, 0.0
    %v5318 = vadd.f32 %v5316, %v5317
    %v5319 = vsel %vm2858, %v3967, 0.0
    %v5320 = vadd.f32 %v5318, %v5319
    %v5321 = vsel %vm2858, %v3968, 0.0
    %v5322 = vadd.f32 %v5320, %v5321
    %v5323 = vsel %vm2858, %v3969, 0.0
    %v5324 = vadd.f32 %v5322, %v5323
    %v5325 = vsel %vm2858, %v3972, 0.0
    %v5326 = vadd.f32 %v5324, %v5325
    %v5327 = vsel %vm2858, %v3973, 0.0
    %v5328 = vadd.f32 %v5326, %v5327
    %v5329 = vsel %vm2858, %v3974, 0.0
    %v5330 = vadd.f32 %v5328, %v5329
    %v5331 = vsel %vm2858, %v3975, 0.0
    %v5332 = vadd.f32 %v5330, %v5331
    %v5333 = vsel %vm2858, %v3976, 0.0
    %v5334 = vadd.f32 %v5332, %v5333
    %v5335 = vsel %vm2858, %v3977, 0.0
    %v5336 = vadd.f32 %v5334, %v5335
    %v5337 = vsel %vm2858, %v3978, 0.0
    %v5338 = vadd.f32 %v5336, %v5337
    %v5339 = vsel %vm2858, %v3979, 0.0
    %v5340 = vadd.f32 %v5338, %v5339
    %v5341 = vsel %vm2858, %v3982, 0.0
    %v5342 = vadd.f32 %v5340, %v5341
    %v5343 = vsel %vm2858, %v3983, 0.0
    %v5344 = vadd.f32 %v5342, %v5343
    %v5345 = vsel %vm2858, %v3984, 0.0
    %v5346 = vadd.f32 %v5344, %v5345
    %v5347 = vsel %vm2858, %v3985, 0.0
    %v5348 = vadd.f32 %v5346, %v5347
    %v5349 = vsel %vm2858, %v3986, 0.0
    %v5350 = vadd.f32 %v5348, %v5349
    %v5351 = vsel %vm2858, %v3987, 0.0
    %v5352 = vadd.f32 %v5350, %v5351
    %v5353 = vsel %vm2858, %v3988, 0.0
    %v5354 = vadd.f32 %v5352, %v5353
    %v5355 = vsel %vm2858, %v3989, 0.0
    %v5356 = vadd.f32 %v5354, %v5355
    %v5357 = vsel %vm2858, %v3992, 0.0
    %v5358 = vadd.f32 %v5356, %v5357
    %v5359 = vsel %vm2858, %v3993, 0.0
    %v5360 = vadd.f32 %v5358, %v5359
    %v5361 = vsel %vm2858, %v3994, 0.0
    %v5362 = vadd.f32 %v5360, %v5361
    %v5363 = vsel %vm2858, %v3995, 0.0
    %v5364 = vadd.f32 %v5362, %v5363
    %v5365 = vsel %vm2858, %v3996, 0.0
    %v5366 = vadd.f32 %v5364, %v5365
    %v5367 = vsel %vm2858, %v3997, 0.0
    %v5368 = vadd.f32 %v5366, %v5367
    %v5369 = vsel %vm2858, %v3998, 0.0
    %v5370 = vadd.f32 %v5368, %v5369
    %v5371 = vsel %vm2858, %v3999, 0.0
    %v5372 = vadd.f32 %v5370, %v5371
    %v5373 = vsel %vm2858, %v4002, 0.0
    %v5374 = vadd.f32 %v5372, %v5373
    %v5375 = vsel %vm2858, %v4003, 0.0
    %v5376 = vadd.f32 %v5374, %v5375
    %v5377 = vsel %vm2858, %v4004, 0.0
    %v5378 = vadd.f32 %v5376, %v5377
    %v5379 = vsel %vm2858, %v4005, 0.0
    %v5380 = vadd.f32 %v5378, %v5379
    %v5381 = vsel %vm2858, %v4006, 0.0
    %v5382 = vadd.f32 %v5380, %v5381
    %v5383 = vsel %vm2858, %v4007, 0.0
    %v5384 = vadd.f32 %v5382, %v5383
    %v5385 = vsel %vm2858, %v4008, 0.0
    %v5386 = vadd.f32 %v5384, %v5385
    %v5387 = vsel %vm2858, %v4009, 0.0
    %v5388 = vadd.f32 %v5386, %v5387
    %v5389 = vsel %vm2858, %v4012, 0.0
    %v5390 = vadd.f32 %v5388, %v5389
    %v5391 = vsel %vm2858, %v4013, 0.0
    %v5392 = vadd.f32 %v5390, %v5391
    %v5393 = vsel %vm2858, %v4014, 0.0
    %v5394 = vadd.f32 %v5392, %v5393
    %v5395 = vsel %vm2858, %v4015, 0.0
    %v5396 = vadd.f32 %v5394, %v5395
    %v5397 = vsel %vm2858, %v4016, 0.0
    %v5398 = vadd.f32 %v5396, %v5397
    %v5399 = vsel %vm2858, %v4017, 0.0
    %v5400 = vadd.f32 %v5398, %v5399
    %v5401 = vsel %vm2858, %v4018, 0.0
    %v5402 = vadd.f32 %v5400, %v5401
    %v5403 = vsel %vm2858, %v4019, 0.0
    %v5404 = vadd.f32 %v5402, %v5403
    %v5405 = vsel %vm2858, %v4022, 0.0
    %v5406 = vadd.f32 %v5404, %v5405
    %v5407 = vsel %vm2858, %v4023, 0.0
    %v5408 = vadd.f32 %v5406, %v5407
    %v5409 = vsel %vm2858, %v4024, 0.0
    %v5410 = vadd.f32 %v5408, %v5409
    %v5411 = vsel %vm2858, %v4025, 0.0
    %v5412 = vadd.f32 %v5410, %v5411
    %v5413 = vsel %vm2858, %v4026, 0.0
    %v5414 = vadd.f32 %v5412, %v5413
    %v5415 = vsel %vm2858, %v4027, 0.0
    %v5416 = vadd.f32 %v5414, %v5415
    %v5417 = vsel %vm2858, %v4028, 0.0
    %v5418 = vadd.f32 %v5416, %v5417
    %v5419 = vsel %vm2858, %v4029, 0.0
    %v5420 = vadd.f32 %v5418, %v5419
    %v5421 = vsel %vm2858, %v4032, 0.0
    %v5422 = vadd.f32 %v5420, %v5421
    %v5423 = vsel %vm2858, %v4033, 0.0
    %v5424 = vadd.f32 %v5422, %v5423
    %v5425 = vsel %vm2858, %v4034, 0.0
    %v5426 = vadd.f32 %v5424, %v5425
    %v5427 = vsel %vm2858, %v4035, 0.0
    %v5428 = vadd.f32 %v5426, %v5427
    %v5429 = vsel %vm2858, %v4036, 0.0
    %v5430 = vadd.f32 %v5428, %v5429
    %v5431 = vsel %vm2858, %v4037, 0.0
    %v5432 = vadd.f32 %v5430, %v5431
    %v5433 = vsel %vm2858, %v4038, 0.0
    %v5434 = vadd.f32 %v5432, %v5433
    %v5435 = vsel %vm2858, %v4039, 0.0
    %v5436 = vadd.f32 %v5434, %v5435
    %v5437 = vsel %vm2858, %v4042, 0.0
    %v5438 = vadd.f32 %v5436, %v5437
    %v5439 = vsel %vm2858, %v4043, 0.0
    %v5440 = vadd.f32 %v5438, %v5439
    %v5441 = vsel %vm2858, %v4044, 0.0
    %v5442 = vadd.f32 %v5440, %v5441
    %v5443 = vsel %vm2858, %v4045, 0.0
    %v5444 = vadd.f32 %v5442, %v5443
    %v5445 = vsel %vm2858, %v4046, 0.0
    %v5446 = vadd.f32 %v5444, %v5445
    %v5447 = vsel %vm2858, %v4047, 0.0
    %v5448 = vadd.f32 %v5446, %v5447
    %v5449 = vsel %vm2858, %v4048, 0.0
    %v5450 = vadd.f32 %v5448, %v5449
    %v5451 = vsel %vm2858, %v4049, 0.0
    %v5452 = vadd.f32 %v5450, %v5451
    %v5453 = vsel %vm2858, %v4052, 0.0
    %v5454 = vadd.f32 %v5452, %v5453
    %v5455 = vsel %vm2858, %v4053, 0.0
    %v5456 = vadd.f32 %v5454, %v5455
    %v5457 = vsel %vm2858, %v4054, 0.0
    %v5458 = vadd.f32 %v5456, %v5457
    %v5459 = vsel %vm2858, %v4055, 0.0
    %v5460 = vadd.f32 %v5458, %v5459
    %v5461 = vsel %vm2858, %v4056, 0.0
    %v5462 = vadd.f32 %v5460, %v5461
    %v5463 = vsel %vm2858, %v4057, 0.0
    %v5464 = vadd.f32 %v5462, %v5463
    %v5465 = vsel %vm2858, %v4058, 0.0
    %v5466 = vadd.f32 %v5464, %v5465
    %v5467 = vsel %vm2858, %v4059, 0.0
    %v5468 = vadd.f32 %v5466, %v5467
    %v5469 = vsel %vm2858, %v4062, 0.0
    %v5470 = vadd.f32 %v5468, %v5469
    %v5471 = vsel %vm2858, %v4063, 0.0
    %v5472 = vadd.f32 %v5470, %v5471
    %v5473 = vsel %vm2858, %v4064, 0.0
    %v5474 = vadd.f32 %v5472, %v5473
    %v5475 = vsel %vm2858, %v4065, 0.0
    %v5476 = vadd.f32 %v5474, %v5475
    %v5477 = vsel %vm2858, %v4066, 0.0
    %v5478 = vadd.f32 %v5476, %v5477
    %v5479 = vsel %vm2858, %v4067, 0.0
    %v5480 = vadd.f32 %v5478, %v5479
    %v5481 = vsel %vm2858, %v4068, 0.0
    %v5482 = vadd.f32 %v5480, %v5481
    %v5483 = vsel %vm2858, %v4069, 0.0
    %v5484 = vadd.f32 %v5482, %v5483
    %v5485 = vsel %vm2858, %v4072, 0.0
    %v5486 = vadd.f32 %v5484, %v5485
    %v5487 = vsel %vm2858, %v4073, 0.0
    %v5488 = vadd.f32 %v5486, %v5487
    %v5489 = vsel %vm2858, %v4074, 0.0
    %v5490 = vadd.f32 %v5488, %v5489
    %v5491 = vsel %vm2858, %v4075, 0.0
    %v5492 = vadd.f32 %v5490, %v5491
    %v5493 = vsel %vm2858, %v4076, 0.0
    %v5494 = vadd.f32 %v5492, %v5493
    %v5495 = vsel %vm2858, %v4077, 0.0
    %v5496 = vadd.f32 %v5494, %v5495
    %v5497 = vsel %vm2858, %v4078, 0.0
    %v5498 = vadd.f32 %v5496, %v5497
    %v5499 = vsel %vm2858, %v4079, 0.0
    %v5500 = vadd.f32 %v5498, %v5499
    %v5501 = vsel %vm2858, %v4082, 0.0
    %v5502 = vadd.f32 %v5500, %v5501
    %v5503 = vsel %vm2858, %v4083, 0.0
    %v5504 = vadd.f32 %v5502, %v5503
    %v5505 = vsel %vm2858, %v4084, 0.0
    %v5506 = vadd.f32 %v5504, %v5505
    %v5507 = vsel %vm2858, %v4085, 0.0
    %v5508 = vadd.f32 %v5506, %v5507
    %v5509 = vsel %vm2858, %v4086, 0.0
    %v5510 = vadd.f32 %v5508, %v5509
    %v5511 = vsel %vm2858, %v4087, 0.0
    %v5512 = vadd.f32 %v5510, %v5511
    %v5513 = vsel %vm2858, %v4088, 0.0
    %v5514 = vadd.f32 %v5512, %v5513
    %v5515 = vsel %vm2858, %v4089, 0.0
    %v5516 = vadd.f32 %v5514, %v5515
    %v5517 = vsel %vm2858, %v4092, 0.0
    %v5518 = vadd.f32 %v5516, %v5517
    %v5519 = vsel %vm2858, %v4093, 0.0
    %v5520 = vadd.f32 %v5518, %v5519
    %v5521 = vsel %vm2858, %v4094, 0.0
    %v5522 = vadd.f32 %v5520, %v5521
    %v5523 = vsel %vm2858, %v4095, 0.0
    %v5524 = vadd.f32 %v5522, %v5523
    %v5525 = vsel %vm2858, %v4096, 0.0
    %v5526 = vadd.f32 %v5524, %v5525
    %v5527 = vsel %vm2858, %v4097, 0.0
    %v5528 = vadd.f32 %v5526, %v5527
    %v5529 = vsel %vm2858, %v4098, 0.0
    %v5530 = vadd.f32 %v5528, %v5529
    %v5531 = vsel %vm2858, %v4099, 0.0
    %v5532 = vadd.f32 %v5530, %v5531
    %v5533 = vsel %vm2858, %v4102, 0.0
    %v5534 = vadd.f32 %v5532, %v5533
    %v5535 = vsel %vm2858, %v4103, 0.0
    %v5536 = vadd.f32 %v5534, %v5535
    %v5537 = vsel %vm2858, %v4104, 0.0
    %v5538 = vadd.f32 %v5536, %v5537
    %v5539 = vsel %vm2858, %v4105, 0.0
    %v5540 = vadd.f32 %v5538, %v5539
    %v5541 = vsel %vm2858, %v4106, 0.0
    %v5542 = vadd.f32 %v5540, %v5541
    %v5543 = vsel %vm2858, %v4107, 0.0
    %v5544 = vadd.f32 %v5542, %v5543
    %v5545 = vsel %vm2858, %v4108, 0.0
    %v5546 = vadd.f32 %v5544, %v5545
    %v5547 = vsel %vm2858, %v4109, 0.0
    %v5548 = vadd.f32 %v5546, %v5547
    %v5549 = vsel %vm2858, %v4112, 0.0
    %v5550 = vadd.f32 %v5548, %v5549
    %v5551 = vsel %vm2858, %v4113, 0.0
    %v5552 = vadd.f32 %v5550, %v5551
    %v5553 = vsel %vm2858, %v4114, 0.0
    %v5554 = vadd.f32 %v5552, %v5553
    %v5555 = vsel %vm2858, %v4115, 0.0
    %v5556 = vadd.f32 %v5554, %v5555
    %v5557 = vsel %vm2858, %v4116, 0.0
    %v5558 = vadd.f32 %v5556, %v5557
    %v5559 = vsel %vm2858, %v4117, 0.0
    %v5560 = vadd.f32 %v5558, %v5559
    %v5561 = vsel %vm2858, %v4118, 0.0
    %v5562 = vadd.f32 %v5560, %v5561
    %v5563 = vsel %vm2858, %v4119, 0.0
    %v5564 = vadd.f32 %v5562, %v5563
    %v5565 = vsel %vm2858, %v4122, 0.0
    %v5566 = vadd.f32 %v5564, %v5565
    %v5567 = vsel %vm2858, %v4123, 0.0
    %v5568 = vadd.f32 %v5566, %v5567
    %v5569 = vsel %vm2858, %v4124, 0.0
    %v5570 = vadd.f32 %v5568, %v5569
    %v5571 = vsel %vm2858, %v4125, 0.0
    %v5572 = vadd.f32 %v5570, %v5571
    %v5573 = vsel %vm2858, %v4126, 0.0
    %v5574 = vadd.f32 %v5572, %v5573
    %v5575 = vsel %vm2858, %v4127, 0.0
    %v5576 = vadd.f32 %v5574, %v5575
    %v5577 = vsel %vm2858, %v4128, 0.0
    %v5578 = vadd.f32 %v5576, %v5577
    %v5579 = vsel %vm2858, %v4129, 0.0
    %v5580 = vadd.f32 %v5578, %v5579
    %v5581 = vsel %vm2858, %v4132, 0.0
    %v5582 = vadd.f32 %v5580, %v5581
    %v5583 = vsel %vm2858, %v4133, 0.0
    %v5584 = vadd.f32 %v5582, %v5583
    %v5585 = vsel %vm2858, %v4134, 0.0
    %v5586 = vadd.f32 %v5584, %v5585
    %v5587 = vsel %vm2858, %v4135, 0.0
    %v5588 = vadd.f32 %v5586, %v5587
    %v5589 = vsel %vm2858, %v4136, 0.0
    %v5590 = vadd.f32 %v5588, %v5589
    %v5591 = vsel %vm2858, %v4137, 0.0
    %v5592 = vadd.f32 %v5590, %v5591
    %v5593 = vsel %vm2858, %v4138, 0.0
    %v5594 = vadd.f32 %v5592, %v5593
    %v5595 = vsel %vm2858, %v4139, 0.0
    %v5596 = vadd.f32 %v5594, %v5595
    %v5597 = vsel %vm2858, %v4142, 0.0
    %v5598 = vadd.f32 %v5596, %v5597
    %v5599 = vsel %vm2858, %v4143, 0.0
    %v5600 = vadd.f32 %v5598, %v5599
    %v5601 = vsel %vm2858, %v4144, 0.0
    %v5602 = vadd.f32 %v5600, %v5601
    %v5603 = vsel %vm2858, %v4145, 0.0
    %v5604 = vadd.f32 %v5602, %v5603
    %v5605 = vsel %vm2858, %v4146, 0.0
    %v5606 = vadd.f32 %v5604, %v5605
    %v5607 = vsel %vm2858, %v4147, 0.0
    %v5608 = vadd.f32 %v5606, %v5607
    %v5609 = vsel %vm2858, %v4148, 0.0
    %v5610 = vadd.f32 %v5608, %v5609
    %v5611 = vsel %vm2858, %v4149, 0.0
    %v5612 = vadd.f32 %v5610, %v5611
    %v5613 = vsel %vm2858, %v4152, 0.0
    %v5614 = vadd.f32 %v5612, %v5613
    %v5615 = vsel %vm2858, %v4153, 0.0
    %v5616 = vadd.f32 %v5614, %v5615
    %v5617 = vsel %vm2858, %v4154, 0.0
    %v5618 = vadd.f32 %v5616, %v5617
    %v5619 = vsel %vm2858, %v4155, 0.0
    %v5620 = vadd.f32 %v5618, %v5619
    %v5621 = vsel %vm2858, %v4156, 0.0
    %v5622 = vadd.f32 %v5620, %v5621
    %v5623 = vsel %vm2858, %v4157, 0.0
    %v5624 = vadd.f32 %v5622, %v5623
    %v5625 = vsel %vm2858, %v4158, 0.0
    %v5626 = vadd.f32 %v5624, %v5625
    %v5627 = vsel %vm2858, %v4159, 0.0
    %v5628 = vadd.f32 %v5626, %v5627
    %v5629 = vsel %vm2858, %v4162, 0.0
    %v5630 = vadd.f32 %v5628, %v5629
    %v5631 = vsel %vm2858, %v4163, 0.0
    %v5632 = vadd.f32 %v5630, %v5631
    %v5633 = vsel %vm2858, %v4164, 0.0
    %v5634 = vadd.f32 %v5632, %v5633
    %v5635 = vsel %vm2858, %v4165, 0.0
    %v5636 = vadd.f32 %v5634, %v5635
    %v5637 = vsel %vm2858, %v4166, 0.0
    %v5638 = vadd.f32 %v5636, %v5637
    %v5639 = vsel %vm2858, %v4167, 0.0
    %v5640 = vadd.f32 %v5638, %v5639
    %v5641 = vsel %vm2858, %v4168, 0.0
    %v5642 = vadd.f32 %v5640, %v5641
    %v5643 = vsel %vm2858, %v4169, 0.0
    %v5644 = vadd.f32 %v5642, %v5643
    %v5645 = vsel %vm2858, %v4172, 0.0
    %v5646 = vadd.f32 %v5644, %v5645
    %v5647 = vsel %vm2858, %v4173, 0.0
    %v5648 = vadd.f32 %v5646, %v5647
    %v5649 = vsel %vm2858, %v4174, 0.0
    %v5650 = vadd.f32 %v5648, %v5649
    %v5651 = vsel %vm2858, %v4175, 0.0
    %v5652 = vadd.f32 %v5650, %v5651
    %v5653 = vsel %vm2858, %v4176, 0.0
    %v5654 = vadd.f32 %v5652, %v5653
    %v5655 = vsel %vm2858, %v4177, 0.0
    %v5656 = vadd.f32 %v5654, %v5655
    %v5657 = vsel %vm2858, %v4178, 0.0
    %v5658 = vadd.f32 %v5656, %v5657
    %v5659 = vsel %vm2858, %v4179, 0.0
    %v5660 = vadd.f32 %v5658, %v5659
    %v5661 = vsel %vm2858, %v4182, 0.0
    %v5662 = vadd.f32 %v5660, %v5661
    %v5663 = vsel %vm2858, %v4183, 0.0
    %v5664 = vadd.f32 %v5662, %v5663
    %v5665 = vsel %vm2858, %v4184, 0.0
    %v5666 = vadd.f32 %v5664, %v5665
    %v5667 = vsel %vm2858, %v4185, 0.0
    %v5668 = vadd.f32 %v5666, %v5667
    %v5669 = vsel %vm2858, %v4186, 0.0
    %v5670 = vadd.f32 %v5668, %v5669
    %v5671 = vsel %vm2858, %v4187, 0.0
    %v5672 = vadd.f32 %v5670, %v5671
    %v5673 = vsel %vm2858, %v4188, 0.0
    %v5674 = vadd.f32 %v5672, %v5673
    %v5675 = vsel %vm2858, %v4189, 0.0
    %v5676 = vadd.f32 %v5674, %v5675
    %v5677 = vsel %vm2858, %v4192, 0.0
    %v5678 = vadd.f32 %v5676, %v5677
    %v5679 = vsel %vm2858, %v4193, 0.0
    %v5680 = vadd.f32 %v5678, %v5679
    %v5681 = vsel %vm2858, %v4194, 0.0
    %v5682 = vadd.f32 %v5680, %v5681
    %v5683 = vsel %vm2858, %v4195, 0.0
    %v5684 = vadd.f32 %v5682, %v5683
    %v5685 = vsel %vm2858, %v4196, 0.0
    %v5686 = vadd.f32 %v5684, %v5685
    %v5687 = vsel %vm2858, %v4197, 0.0
    %v5688 = vadd.f32 %v5686, %v5687
    %v5689 = vsel %vm2858, %v4198, 0.0
    %v5690 = vadd.f32 %v5688, %v5689
    %v5691 = vsel %vm2858, %v4199, 0.0
    %v5692 = vadd.f32 %v5690, %v5691
    %v5693 = vsel %vm2858, %v4202, 0.0
    %v5694 = vadd.f32 %v5692, %v5693
    %v5695 = vsel %vm2858, %v4203, 0.0
    %v5696 = vadd.f32 %v5694, %v5695
    %v5697 = vsel %vm2858, %v4204, 0.0
    %v5698 = vadd.f32 %v5696, %v5697
    %v5699 = vsel %vm2858, %v4205, 0.0
    %v5700 = vadd.f32 %v5698, %v5699
    %v5701 = vsel %vm2858, %v4206, 0.0
    %v5702 = vadd.f32 %v5700, %v5701
    %v5703 = vsel %vm2858, %v4207, 0.0
    %v5704 = vadd.f32 %v5702, %v5703
    %v5705 = vsel %vm2858, %v4208, 0.0
    %v5706 = vadd.f32 %v5704, %v5705
    %v5707 = vsel %vm2858, %v4209, 0.0
    %v5708 = vadd.f32 %v5706, %v5707
    %v5709 = vsel %vm2858, %v4212, 0.0
    %v5710 = vadd.f32 %v5708, %v5709
    %v5711 = vsel %vm2858, %v4213, 0.0
    %v5712 = vadd.f32 %v5710, %v5711
    %v5713 = vsel %vm2858, %v4214, 0.0
    %v5714 = vadd.f32 %v5712, %v5713
    %v5715 = vsel %vm2858, %v4215, 0.0
    %v5716 = vadd.f32 %v5714, %v5715
    %v5717 = vsel %vm2858, %v4216, 0.0
    %v5718 = vadd.f32 %v5716, %v5717
    %v5719 = vsel %vm2858, %v4217, 0.0
    %v5720 = vadd.f32 %v5718, %v5719
    %v5721 = vsel %vm2858, %v4218, 0.0
    %v5722 = vadd.f32 %v5720, %v5721
    %v5723 = vsel %vm2858, %v4219, 0.0
    %v5724 = vadd.f32 %v5722, %v5723
    %v5725 = vsel %vm2858, %v4222, 0.0
    %v5726 = vadd.f32 %v5724, %v5725
    %v5727 = vsel %vm2858, %v4223, 0.0
    %v5728 = vadd.f32 %v5726, %v5727
    %v5729 = vsel %vm2858, %v4224, 0.0
    %v5730 = vadd.f32 %v5728, %v5729
    %v5731 = vsel %vm2858, %v4225, 0.0
    %v5732 = vadd.f32 %v5730, %v5731
    %v5733 = vsel %vm2858, %v4226, 0.0
    %v5734 = vadd.f32 %v5732, %v5733
    %v5735 = vsel %vm2858, %v4227, 0.0
    %v5736 = vadd.f32 %v5734, %v5735
    %v5737 = vsel %vm2858, %v4228, 0.0
    %v5738 = vadd.f32 %v5736, %v5737
    %v5739 = vsel %vm2858, %v4229, 0.0
    %v5740 = vadd.f32 %v5738, %v5739
    %v5741 = vsel %vm2858, %v4232, 0.0
    %v5742 = vadd.f32 %v5740, %v5741
    %v5743 = vsel %vm2858, %v4233, 0.0
    %v5744 = vadd.f32 %v5742, %v5743
    %v5745 = vsel %vm2858, %v4234, 0.0
    %v5746 = vadd.f32 %v5744, %v5745
    %v5747 = vsel %vm2858, %v4235, 0.0
    %v5748 = vadd.f32 %v5746, %v5747
    %v5749 = vsel %vm2858, %v4236, 0.0
    %v5750 = vadd.f32 %v5748, %v5749
    %v5751 = vsel %vm2858, %v4237, 0.0
    %v5752 = vadd.f32 %v5750, %v5751
    %v5753 = vsel %vm2858, %v4238, 0.0
    %v5754 = vadd.f32 %v5752, %v5753
    %v5755 = vsel %vm2858, %v4239, 0.0
    %v5756 = vadd.f32 %v5754, %v5755
    %v5757 = vsel %vm2858, %v4242, 0.0
    %v5758 = vadd.f32 %v5756, %v5757
    %v5759 = vsel %vm2858, %v4243, 0.0
    %v5760 = vadd.f32 %v5758, %v5759
    %v5761 = vsel %vm2858, %v4244, 0.0
    %v5762 = vadd.f32 %v5760, %v5761
    %v5763 = vsel %vm2858, %v4245, 0.0
    %v5764 = vadd.f32 %v5762, %v5763
    %v5765 = vsel %vm2858, %v4246, 0.0
    %v5766 = vadd.f32 %v5764, %v5765
    %v5767 = vsel %vm2858, %v4247, 0.0
    %v5768 = vadd.f32 %v5766, %v5767
    %v5769 = vsel %vm2858, %v4248, 0.0
    %v5770 = vadd.f32 %v5768, %v5769
    %v5771 = vsel %vm2858, %v4249, 0.0
    %v5772 = vadd.f32 %v5770, %v5771
    %v5773 = vsel %vm2858, %v4252, 0.0
    %v5774 = vadd.f32 %v5772, %v5773
    %v5775 = vsel %vm2858, %v4253, 0.0
    %v5776 = vadd.f32 %v5774, %v5775
    %v5777 = vsel %vm2858, %v4254, 0.0
    %v5778 = vadd.f32 %v5776, %v5777
    %v5779 = vsel %vm2858, %v4255, 0.0
    %v5780 = vadd.f32 %v5778, %v5779
    %v5781 = vsel %vm2858, %v4256, 0.0
    %v5782 = vadd.f32 %v5780, %v5781
    %v5783 = vsel %vm2858, %v4257, 0.0
    %v5784 = vadd.f32 %v5782, %v5783
    %v5785 = vsel %vm2858, %v4258, 0.0
    %v5786 = vadd.f32 %v5784, %v5785
    %v5787 = vsel %vm2858, %v4259, 0.0
    %v5788 = vadd.f32 %v5786, %v5787
    %v5789 = vsel %vm2858, %v4262, 0.0
    %v5790 = vadd.f32 %v5788, %v5789
    %v5791 = vsel %vm2858, %v4263, 0.0
    %v5792 = vadd.f32 %v5790, %v5791
    %v5793 = vsel %vm2858, %v4264, 0.0
    %v5794 = vadd.f32 %v5792, %v5793
    %v5795 = vsel %vm2858, %v4265, 0.0
    %v5796 = vadd.f32 %v5794, %v5795
    %v5797 = vsel %vm2858, %v4266, 0.0
    %v5798 = vadd.f32 %v5796, %v5797
    %v5799 = vsel %vm2858, %v4267, 0.0
    %v5800 = vadd.f32 %v5798, %v5799
    %v5801 = vsel %vm2858, %v4268, 0.0
    %v5802 = vadd.f32 %v5800, %v5801
    %v5803 = vsel %vm2858, %v4269, 0.0
    %v5804 = vadd.f32 %v5802, %v5803
    %5805 = vadd.xlane.f32.xlu0 %v5804
    %v5806 = vpop.xlane.xlu0 %5805
    %v5807 = vperm.slane %v170, 1
    %v5808 = vperm.slane %v170, 3
    %v5809 = vperm.slane %v170, 5
    %v5810 = vperm.slane %v170, 7
    %v5811 = vperm.slane %v171, 1
    %v5812 = vperm.slane %v171, 3
    %v5813 = vperm.slane %v171, 5
    %v5814 = vperm.slane %v171, 7
    %v5815 = vperm.slane %v172, 1
    %v5816 = vperm.slane %v172, 3
    %v5817 = vperm.slane %v172, 5
    %v5818 = vperm.slane %v172, 7
    %v5819 = vperm.slane %v173, 1
    %v5820 = vperm.slane %v173, 3
    %v5821 = vperm.slane %v173, 5
    %v5822 = vperm.slane %v173, 7
    %v5823 = vperm.slane %v174, 1
    %v5824 = vperm.slane %v174, 3
    %v5825 = vperm.slane %v174, 5
    %v5826 = vperm.slane %v174, 7
    %v5827 = vperm.slane %v175, 1
    %v5828 = vperm.slane %v175, 3
    %v5829 = vperm.slane %v175, 5
    %v5830 = vperm.slane %v175, 7
    %v5831 = vperm.slane %v176, 1
    %v5832 = vperm.slane %v176, 3
    %v5833 = vperm.slane %v176, 5
    %v5834 = vperm.slane %v176, 7
    %v5835 = vperm.slane %v177, 1
    %v5836 = vperm.slane %v177, 3
    %v5837 = vperm.slane %v177, 5
    %v5838 = vperm.slane %v177, 7
    %v5839 = vperm.slane %v178, 1
    %v5840 = vperm.slane %v178, 3
    %v5841 = vperm.slane %v178, 5
    %v5842 = vperm.slane %v178, 7
    %v5843 = vperm.slane %v179, 1
    %v5844 = vperm.slane %v179, 3
    %v5845 = vperm.slane %v179, 5
    %v5846 = vperm.slane %v179, 7
    %v5847 = vperm.slane %v180, 1
    %v5848 = vperm.slane %v180, 3
    %v5849 = vperm.slane %v180, 5
    %v5850 = vperm.slane %v180, 7
    %v5851 = vperm.slane %v181, 1
    %v5852 = vperm.slane %v181, 3
    %v5853 = vperm.slane %v181, 5
    %v5854 = vperm.slane %v181, 7
    %v5855 = vperm.slane %v182, 1
    %v5856 = vperm.slane %v182, 3
    %v5857 = vperm.slane %v182, 5
    %v5858 = vperm.slane %v182, 7
    %v5859 = vperm.slane %v183, 1
    %v5860 = vperm.slane %v183, 3
    %v5861 = vperm.slane %v183, 5
    %v5862 = vperm.slane %v183, 7
    %v5863 = vperm.slane %v184, 1
    %v5864 = vperm.slane %v184, 3
    %v5865 = vperm.slane %v184, 5
    %v5866 = vperm.slane %v184, 7
    %v5867 = vperm.slane %v185, 1
    %v5868 = vperm.slane %v185, 3
    %v5869 = vperm.slane %v185, 5
    %v5870 = vperm.slane %v185, 7
    %v5871 = vperm.slane %v186, 1
    %v5872 = vperm.slane %v186, 3
    %v5873 = vperm.slane %v186, 5
    %v5874 = vperm.slane %v186, 7
    %v5875 = vperm.slane %v187, 1
    %v5876 = vperm.slane %v187, 3
    %v5877 = vperm.slane %v187, 5
    %v5878 = vperm.slane %v187, 7
    %v5879 = vperm.slane %v188, 1
    %v5880 = vperm.slane %v188, 3
    %v5881 = vperm.slane %v188, 5
    %v5882 = vperm.slane %v188, 7
    %v5883 = vperm.slane %v189, 1
    %v5884 = vperm.slane %v189, 3
    %v5885 = vperm.slane %v189, 5
    %v5886 = vperm.slane %v189, 7
    %v5887 = vperm.slane %v190, 1
    %v5888 = vperm.slane %v190, 3
    %v5889 = vperm.slane %v190, 5
    %v5890 = vperm.slane %v190, 7
    %v5891 = vperm.slane %v191, 1
    %v5892 = vperm.slane %v191, 3
    %v5893 = vperm.slane %v191, 5
    %v5894 = vperm.slane %v191, 7
    %v5895 = vperm.slane %v192, 1
    %v5896 = vperm.slane %v192, 3
    %v5897 = vperm.slane %v192, 5
    %v5898 = vperm.slane %v192, 7
    %v5899 = vperm.slane %v193, 1
    %v5900 = vperm.slane %v193, 3
    %v5901 = vperm.slane %v193, 5
    %v5902 = vperm.slane %v193, 7
    %v5903 = vperm.slane %v194, 1
    %v5904 = vperm.slane %v194, 3
    %v5905 = vperm.slane %v194, 5
    %v5906 = vperm.slane %v194, 7
    %v5907 = vperm.slane %v195, 1
    %v5908 = vperm.slane %v195, 3
    %v5909 = vperm.slane %v195, 5
    %v5910 = vperm.slane %v195, 7
    %v5911 = vperm.slane %v196, 1
    %v5912 = vperm.slane %v196, 3
    %v5913 = vperm.slane %v196, 5
    %v5914 = vperm.slane %v196, 7
    %v5915 = vperm.slane %v197, 1
    %v5916 = vperm.slane %v197, 3
    %v5917 = vperm.slane %v197, 5
    %v5918 = vperm.slane %v197, 7
    %v5919 = vperm.slane %v198, 1
    %v5920 = vperm.slane %v198, 3
    %v5921 = vperm.slane %v198, 5
    %v5922 = vperm.slane %v198, 7
    %v5923 = vperm.slane %v199, 1
    %v5924 = vperm.slane %v199, 3
    %v5925 = vperm.slane %v199, 5
    %v5926 = vperm.slane %v199, 7
    %v5927 = vperm.slane %v200, 1
    %v5928 = vperm.slane %v200, 3
    %v5929 = vperm.slane %v200, 5
    %v5930 = vperm.slane %v200, 7
    %v5931 = vperm.slane %v201, 1
    %v5932 = vperm.slane %v201, 3
    %v5933 = vperm.slane %v201, 5
    %v5934 = vperm.slane %v201, 7
    %v5935 = vperm.slane %v202, 1
    %v5936 = vperm.slane %v202, 3
    %v5937 = vperm.slane %v202, 5
    %v5938 = vperm.slane %v202, 7
    %v5939 = vperm.slane %v203, 1
    %v5940 = vperm.slane %v203, 3
    %v5941 = vperm.slane %v203, 5
    %v5942 = vperm.slane %v203, 7
    %v5943 = vperm.slane %v204, 1
    %v5944 = vperm.slane %v204, 3
    %v5945 = vperm.slane %v204, 5
    %v5946 = vperm.slane %v204, 7
    %v5947 = vperm.slane %v205, 1
    %v5948 = vperm.slane %v205, 3
    %v5949 = vperm.slane %v205, 5
    %v5950 = vperm.slane %v205, 7
    %v5951 = vperm.slane %v206, 1
    %v5952 = vperm.slane %v206, 3
    %v5953 = vperm.slane %v206, 5
    %v5954 = vperm.slane %v206, 7
    %v5955 = vperm.slane %v207, 1
    %v5956 = vperm.slane %v207, 3
    %v5957 = vperm.slane %v207, 5
    %v5958 = vperm.slane %v207, 7
    %v5959 = vperm.slane %v208, 1
    %v5960 = vperm.slane %v208, 3
    %v5961 = vperm.slane %v208, 5
    %v5962 = vperm.slane %v208, 7
    %v5963 = vperm.slane %v209, 1
    %v5964 = vperm.slane %v209, 3
    %v5965 = vperm.slane %v209, 5
    %v5966 = vperm.slane %v209, 7
    %v5967 = vperm.slane %v210, 1
    %v5968 = vperm.slane %v210, 3
    %v5969 = vperm.slane %v210, 5
    %v5970 = vperm.slane %v210, 7
    %v5971 = vperm.slane %v211, 1
    %v5972 = vperm.slane %v211, 3
    %v5973 = vperm.slane %v211, 5
    %v5974 = vperm.slane %v211, 7
    %v5975 = vperm.slane %v212, 1
    %v5976 = vperm.slane %v212, 3
    %v5977 = vperm.slane %v212, 5
    %v5978 = vperm.slane %v212, 7
    %v5979 = vperm.slane %v213, 1
    %v5980 = vperm.slane %v213, 3
    %v5981 = vperm.slane %v213, 5
    %v5982 = vperm.slane %v213, 7
    %v5983 = vperm.slane %v214, 1
    %v5984 = vperm.slane %v214, 3
    %v5985 = vperm.slane %v214, 5
    %v5986 = vperm.slane %v214, 7
    %v5987 = vperm.slane %v215, 1
    %v5988 = vperm.slane %v215, 3
    %v5989 = vperm.slane %v215, 5
    %v5990 = vperm.slane %v215, 7
    %v5991 = vperm.slane %v216, 1
    %v5992 = vperm.slane %v216, 3
    %v5993 = vperm.slane %v216, 5
    %v5994 = vperm.slane %v216, 7
    %v5995 = vperm.slane %v217, 1
    %v5996 = vperm.slane %v217, 3
    %v5997 = vperm.slane %v217, 5
    %v5998 = vperm.slane %v217, 7
    %v5999 = vperm.slane %v218, 1
    %v6000 = vperm.slane %v218, 3
    %v6001 = vperm.slane %v218, 5
    %v6002 = vperm.slane %v218, 7
    %v6003 = vperm.slane %v219, 1
    %v6004 = vperm.slane %v219, 3
    %v6005 = vperm.slane %v219, 5
    %v6006 = vperm.slane %v219, 7
    %v6007 = vperm.slane %v220, 1
    %v6008 = vperm.slane %v220, 3
    %v6009 = vperm.slane %v220, 5
    %v6010 = vperm.slane %v220, 7
    %v6011 = vperm.slane %v221, 1
    %v6012 = vperm.slane %v221, 3
    %v6013 = vperm.slane %v221, 5
    %v6014 = vperm.slane %v221, 7
    %v6015 = vperm.slane %v222, 1
    %v6016 = vperm.slane %v222, 3
    %v6017 = vperm.slane %v222, 5
    %v6018 = vperm.slane %v222, 7
    %v6019 = vperm.slane %v223, 1
    %v6020 = vperm.slane %v223, 3
    %v6021 = vperm.slane %v223, 5
    %v6022 = vperm.slane %v223, 7
    %v6023 = vperm.slane %v224, 1
    %v6024 = vperm.slane %v224, 3
    %v6025 = vperm.slane %v224, 5
    %v6026 = vperm.slane %v224, 7
    %v6027 = vperm.slane %v225, 1
    %v6028 = vperm.slane %v225, 3
    %v6029 = vperm.slane %v225, 5
    %v6030 = vperm.slane %v225, 7
    %v6031 = vperm.slane %v226, 1
    %v6032 = vperm.slane %v226, 3
    %v6033 = vperm.slane %v226, 5
    %v6034 = vperm.slane %v226, 7
    %v6035 = vperm.slane %v227, 1
    %v6036 = vperm.slane %v227, 3
    %v6037 = vperm.slane %v227, 5
    %v6038 = vperm.slane %v227, 7
    %v6039 = vperm.slane %v228, 1
    %v6040 = vperm.slane %v228, 3
    %v6041 = vperm.slane %v228, 5
    %v6042 = vperm.slane %v228, 7
    %v6043 = vperm.slane %v229, 1
    %v6044 = vperm.slane %v229, 3
    %v6045 = vperm.slane %v229, 5
    %v6046 = vperm.slane %v229, 7
    %v6047 = vperm.slane %v230, 1
    %v6048 = vperm.slane %v230, 3
    %v6049 = vperm.slane %v230, 5
    %v6050 = vperm.slane %v230, 7
    %v6051 = vperm.slane %v231, 1
    %v6052 = vperm.slane %v231, 3
    %v6053 = vperm.slane %v231, 5
    %v6054 = vperm.slane %v231, 7
    %v6055 = vperm.slane %v232, 1
    %v6056 = vperm.slane %v232, 3
    %v6057 = vperm.slane %v232, 5
    %v6058 = vperm.slane %v232, 7
    %v6059 = vperm.slane %v233, 1
    %v6060 = vperm.slane %v233, 3
    %v6061 = vperm.slane %v233, 5
    %v6062 = vperm.slane %v233, 7
    %v6063 = vperm.slane %v234, 1
    %v6064 = vperm.slane %v234, 3
    %v6065 = vperm.slane %v234, 5
    %v6066 = vperm.slane %v234, 7
    %v6067 = vperm.slane %v235, 1
    %v6068 = vperm.slane %v235, 3
    %v6069 = vperm.slane %v235, 5
    %v6070 = vperm.slane %v235, 7
    %v6071 = vperm.slane %v236, 1
    %v6072 = vperm.slane %v236, 3
    %v6073 = vperm.slane %v236, 5
    %v6074 = vperm.slane %v236, 7
    %v6075 = vperm.slane %v237, 1
    %v6076 = vperm.slane %v237, 3
    %v6077 = vperm.slane %v237, 5
    %v6078 = vperm.slane %v237, 7
    %v6079 = vperm.slane %v238, 1
    %v6080 = vperm.slane %v238, 3
    %v6081 = vperm.slane %v238, 5
    %v6082 = vperm.slane %v238, 7
    %v6083 = vperm.slane %v239, 1
    %v6084 = vperm.slane %v239, 3
    %v6085 = vperm.slane %v239, 5
    %v6086 = vperm.slane %v239, 7
    %v6087 = vperm.slane %v240, 1
    %v6088 = vperm.slane %v240, 3
    %v6089 = vperm.slane %v240, 5
    %v6090 = vperm.slane %v240, 7
    %v6091 = vperm.slane %v241, 1
    %v6092 = vperm.slane %v241, 3
    %v6093 = vperm.slane %v241, 5
    %v6094 = vperm.slane %v241, 7
    %v6095 = vperm.slane %v242, 1
    %v6096 = vperm.slane %v242, 3
    %v6097 = vperm.slane %v242, 5
    %v6098 = vperm.slane %v242, 7
    %v6099 = vperm.slane %v243, 1
    %v6100 = vperm.slane %v243, 3
    %v6101 = vperm.slane %v243, 5
    %v6102 = vperm.slane %v243, 7
    %v6103 = vperm.slane %v244, 1
    %v6104 = vperm.slane %v244, 3
    %v6105 = vperm.slane %v244, 5
    %v6106 = vperm.slane %v244, 7
    %v6107 = vperm.slane %v245, 1
    %v6108 = vperm.slane %v245, 3
    %v6109 = vperm.slane %v245, 5
    %v6110 = vperm.slane %v245, 7
    %v6111 = vperm.slane %v246, 1
    %v6112 = vperm.slane %v246, 3
    %v6113 = vperm.slane %v246, 5
    %v6114 = vperm.slane %v246, 7
    %v6115 = vperm.slane %v247, 1
    %v6116 = vperm.slane %v247, 3
    %v6117 = vperm.slane %v247, 5
    %v6118 = vperm.slane %v247, 7
    %v6119 = vperm.slane %v248, 1
    %v6120 = vperm.slane %v248, 3
    %v6121 = vperm.slane %v248, 5
    %v6122 = vperm.slane %v248, 7
    %v6123 = vperm.slane %v249, 1
    %v6124 = vperm.slane %v249, 3
    %v6125 = vperm.slane %v249, 5
    %v6126 = vperm.slane %v249, 7
    %v6127 = vperm.slane %v250, 1
    %v6128 = vperm.slane %v250, 3
    %v6129 = vperm.slane %v250, 5
    %v6130 = vperm.slane %v250, 7
    %v6131 = vperm.slane %v251, 1
    %v6132 = vperm.slane %v251, 3
    %v6133 = vperm.slane %v251, 5
    %v6134 = vperm.slane %v251, 7
    %v6135 = vperm.slane %v252, 1
    %v6136 = vperm.slane %v252, 3
    %v6137 = vperm.slane %v252, 5
    %v6138 = vperm.slane %v252, 7
    %v6139 = vperm.slane %v253, 1
    %v6140 = vperm.slane %v253, 3
    %v6141 = vperm.slane %v253, 5
    %v6142 = vperm.slane %v253, 7
    %v6143 = vperm.slane %v254, 1
    %v6144 = vperm.slane %v254, 3
    %v6145 = vperm.slane %v254, 5
    %v6146 = vperm.slane %v254, 7
    %v6147 = vperm.slane %v255, 1
    %v6148 = vperm.slane %v255, 3
    %v6149 = vperm.slane %v255, 5
    %v6150 = vperm.slane %v255, 7
    %v6151 = vperm.slane %v256, 1
    %v6152 = vperm.slane %v256, 3
    %v6153 = vperm.slane %v256, 5
    %v6154 = vperm.slane %v256, 7
    %v6155 = vperm.slane %v257, 1
    %v6156 = vperm.slane %v257, 3
    %v6157 = vperm.slane %v257, 5
    %v6158 = vperm.slane %v257, 7
    %v6159 = vperm.slane %v258, 1
    %v6160 = vperm.slane %v258, 3
    %v6161 = vperm.slane %v258, 5
    %v6162 = vperm.slane %v258, 7
    %v6163 = vperm.slane %v259, 1
    %v6164 = vperm.slane %v259, 3
    %v6165 = vperm.slane %v259, 5
    %v6166 = vperm.slane %v259, 7
    %v6167 = vperm.slane %v260, 1
    %v6168 = vperm.slane %v260, 3
    %v6169 = vperm.slane %v260, 5
    %v6170 = vperm.slane %v260, 7
    %v6171 = vperm.slane %v261, 1
    %v6172 = vperm.slane %v261, 3
    %v6173 = vperm.slane %v261, 5
    %v6174 = vperm.slane %v261, 7
    %v6175 = vperm.slane %v262, 1
    %v6176 = vperm.slane %v262, 3
    %v6177 = vperm.slane %v262, 5
    %v6178 = vperm.slane %v262, 7
    %v6179 = vperm.slane %v263, 1
    %v6180 = vperm.slane %v263, 3
    %v6181 = vperm.slane %v263, 5
    %v6182 = vperm.slane %v263, 7
    %v6183 = vperm.slane %v264, 1
    %v6184 = vperm.slane %v264, 3
    %v6185 = vperm.slane %v264, 5
    %v6186 = vperm.slane %v264, 7
    %v6187 = vperm.slane %v265, 1
    %v6188 = vperm.slane %v265, 3
    %v6189 = vperm.slane %v265, 5
    %v6190 = vperm.slane %v265, 7
    %v6191 = vperm.slane %v266, 1
    %v6192 = vperm.slane %v266, 3
    %v6193 = vperm.slane %v266, 5
    %v6194 = vperm.slane %v266, 7
    %v6195 = vperm.slane %v267, 1
    %v6196 = vperm.slane %v267, 3
    %v6197 = vperm.slane %v267, 5
    %v6198 = vperm.slane %v267, 7
    %v6199 = vperm.slane %v268, 1
    %v6200 = vperm.slane %v268, 3
    %v6201 = vperm.slane %v268, 5
    %v6202 = vperm.slane %v268, 7
    %v6203 = vperm.slane %v269, 1
    %v6204 = vperm.slane %v269, 3
    %v6205 = vperm.slane %v269, 5
    %v6206 = vperm.slane %v269, 7
    %v6207 = vperm.slane %v270, 1
    %v6208 = vperm.slane %v270, 3
    %v6209 = vperm.slane %v270, 5
    %v6210 = vperm.slane %v270, 7
    %v6211 = vperm.slane %v271, 1
    %v6212 = vperm.slane %v271, 3
    %v6213 = vperm.slane %v271, 5
    %v6214 = vperm.slane %v271, 7
    %v6215 = vperm.slane %v272, 1
    %v6216 = vperm.slane %v272, 3
    %v6217 = vperm.slane %v272, 5
    %v6218 = vperm.slane %v272, 7
    %v6219 = vperm.slane %v273, 1
    %v6220 = vperm.slane %v273, 3
    %v6221 = vperm.slane %v273, 5
    %v6222 = vperm.slane %v273, 7
    %v6223 = vperm.slane %v274, 1
    %v6224 = vperm.slane %v274, 3
    %v6225 = vperm.slane %v274, 5
    %v6226 = vperm.slane %v274, 7
    %v6227 = vperm.slane %v275, 1
    %v6228 = vperm.slane %v275, 3
    %v6229 = vperm.slane %v275, 5
    %v6230 = vperm.slane %v275, 7
    %v6231 = vperm.slane %v276, 1
    %v6232 = vperm.slane %v276, 3
    %v6233 = vperm.slane %v276, 5
    %v6234 = vperm.slane %v276, 7
    %v6235 = vperm.slane %v277, 1
    %v6236 = vperm.slane %v277, 3
    %v6237 = vperm.slane %v277, 5
    %v6238 = vperm.slane %v277, 7
    %v6239 = vperm.slane %v278, 1
    %v6240 = vperm.slane %v278, 3
    %v6241 = vperm.slane %v278, 5
    %v6242 = vperm.slane %v278, 7
    %v6243 = vperm.slane %v279, 1
    %v6244 = vperm.slane %v279, 3
    %v6245 = vperm.slane %v279, 5
    %v6246 = vperm.slane %v279, 7
    %v6247 = vperm.slane %v280, 1
    %v6248 = vperm.slane %v280, 3
    %v6249 = vperm.slane %v280, 5
    %v6250 = vperm.slane %v280, 7
    %v6251 = vperm.slane %v281, 1
    %v6252 = vperm.slane %v281, 3
    %v6253 = vperm.slane %v281, 5
    %v6254 = vperm.slane %v281, 7
    %v6255 = vperm.slane %v282, 1
    %v6256 = vperm.slane %v282, 3
    %v6257 = vperm.slane %v282, 5
    %v6258 = vperm.slane %v282, 7
    %v6259 = vperm.slane %v283, 1
    %v6260 = vperm.slane %v283, 3
    %v6261 = vperm.slane %v283, 5
    %v6262 = vperm.slane %v283, 7
    %v6263 = vperm.slane %v284, 1
    %v6264 = vperm.slane %v284, 3
    %v6265 = vperm.slane %v284, 5
    %v6266 = vperm.slane %v284, 7
    %v6267 = vperm.slane %v285, 1
    %v6268 = vperm.slane %v285, 3
    %v6269 = vperm.slane %v285, 5
    %v6270 = vperm.slane %v285, 7
    %v6271 = vperm.slane %v286, 1
    %v6272 = vperm.slane %v286, 3
    %v6273 = vperm.slane %v286, 5
    %v6274 = vperm.slane %v286, 7
    %v6275 = vperm.slane %v287, 1
    %v6276 = vperm.slane %v287, 3
    %v6277 = vperm.slane %v287, 5
    %v6278 = vperm.slane %v287, 7
    %v6279 = vperm.slane %v288, 1
    %v6280 = vperm.slane %v288, 3
    %v6281 = vperm.slane %v288, 5
    %v6282 = vperm.slane %v288, 7
    %v6283 = vperm.slane %v289, 1
    %v6284 = vperm.slane %v289, 3
    %v6285 = vperm.slane %v289, 5
    %v6286 = vperm.slane %v289, 7
    %v6287 = vperm.slane %v290, 1
    %v6288 = vperm.slane %v290, 3
    %v6289 = vperm.slane %v290, 5
    %v6290 = vperm.slane %v290, 7
    %v6291 = vperm.slane %v291, 1
    %v6292 = vperm.slane %v291, 3
    %v6293 = vperm.slane %v291, 5
    %v6294 = vperm.slane %v291, 7
    %v6295 = vperm.slane %v292, 1
    %v6296 = vperm.slane %v292, 3
    %v6297 = vperm.slane %v292, 5
    %v6298 = vperm.slane %v292, 7
    %v6299 = vperm.slane %v293, 1
    %v6300 = vperm.slane %v293, 3
    %v6301 = vperm.slane %v293, 5
    %v6302 = vperm.slane %v293, 7
    %v6303 = vperm.slane %v294, 1
    %v6304 = vperm.slane %v294, 3
    %v6305 = vperm.slane %v294, 5
    %v6306 = vperm.slane %v294, 7
    %v6307 = vperm.slane %v295, 1
    %v6308 = vperm.slane %v295, 3
    %v6309 = vperm.slane %v295, 5
    %v6310 = vperm.slane %v295, 7
    %v6311 = vperm.slane %v296, 1
    %v6312 = vperm.slane %v296, 3
    %v6313 = vperm.slane %v296, 5
    %v6314 = vperm.slane %v296, 7
    %v6315 = vperm.slane %v297, 1
    %v6316 = vperm.slane %v297, 3
    %v6317 = vperm.slane %v297, 5
    %v6318 = vperm.slane %v297, 7
    %v6831 = vperm.slane %v5807, 1
    %v6832 = vperm.slane %v5808, 1
    %v6833 = vperm.slane %v5809, 1
    %v6834 = vperm.slane %v5810, 1
    %v6835 = vperm.slane %v5811, 1
    %v6836 = vperm.slane %v5812, 1
    %v6837 = vperm.slane %v5813, 1
    %v6838 = vperm.slane %v5814, 1
    %v6839 = vperm.slane %v5815, 1
    %v6840 = vperm.slane %v5816, 1
    %v6841 = vperm.slane %v5817, 1
    %v6842 = vperm.slane %v5818, 1
    %v6843 = vperm.slane %v5819, 1
    %v6844 = vperm.slane %v5820, 1
    %v6845 = vperm.slane %v5821, 1
    %v6846 = vperm.slane %v5822, 1
    %v6847 = vperm.slane %v5823, 1
    %v6848 = vperm.slane %v5824, 1
    %v6849 = vperm.slane %v5825, 1
    %v6850 = vperm.slane %v5826, 1
    %v6851 = vperm.slane %v5827, 1
    %v6852 = vperm.slane %v5828, 1
    %v6853 = vperm.slane %v5829, 1
    %v6854 = vperm.slane %v5830, 1
    %v6855 = vperm.slane %v5831, 1
    %v6856 = vperm.slane %v5832, 1
    %v6857 = vperm.slane %v5833, 1
    %v6858 = vperm.slane %v5834, 1
    %v6859 = vperm.slane %v5835, 1
    %v6860 = vperm.slane %v5836, 1
    %v6861 = vperm.slane %v5837, 1
    %v6862 = vperm.slane %v5838, 1
    %v6863 = vperm.slane %v5839, 1
    %v6864 = vperm.slane %v5840, 1
    %v6865 = vperm.slane %v5841, 1
    %v6866 = vperm.slane %v5842, 1
    %v6867 = vperm.slane %v5843, 1
    %v6868 = vperm.slane %v5844, 1
    %v6869 = vperm.slane %v5845, 1
    %v6870 = vperm.slane %v5846, 1
    %v6871 = vperm.slane %v5847, 1
    %v6872 = vperm.slane %v5848, 1
    %v6873 = vperm.slane %v5849, 1
    %v6874 = vperm.slane %v5850, 1
    %v6875 = vperm.slane %v5851, 1
    %v6876 = vperm.slane %v5852, 1
    %v6877 = vperm.slane %v5853, 1
    %v6878 = vperm.slane %v5854, 1
    %v6879 = vperm.slane %v5855, 1
    %v6880 = vperm.slane %v5856, 1
    %v6881 = vperm.slane %v5857, 1
    %v6882 = vperm.slane %v5858, 1
    %v6883 = vperm.slane %v5859, 1
    %v6884 = vperm.slane %v5860, 1
    %v6885 = vperm.slane %v5861, 1
    %v6886 = vperm.slane %v5862, 1
    %v6887 = vperm.slane %v5863, 1
    %v6888 = vperm.slane %v5864, 1
    %v6889 = vperm.slane %v5865, 1
    %v6890 = vperm.slane %v5866, 1
    %v6891 = vperm.slane %v5867, 1
    %v6892 = vperm.slane %v5868, 1
    %v6893 = vperm.slane %v5869, 1
    %v6894 = vperm.slane %v5870, 1
    %v6895 = vperm.slane %v5871, 1
    %v6896 = vperm.slane %v5872, 1
    %v6897 = vperm.slane %v5873, 1
    %v6898 = vperm.slane %v5874, 1
    %v6899 = vperm.slane %v5875, 1
    %v6900 = vperm.slane %v5876, 1
    %v6901 = vperm.slane %v5877, 1
    %v6902 = vperm.slane %v5878, 1
    %v6903 = vperm.slane %v5879, 1
    %v6904 = vperm.slane %v5880, 1
    %v6905 = vperm.slane %v5881, 1
    %v6906 = vperm.slane %v5882, 1
    %v6907 = vperm.slane %v5883, 1
    %v6908 = vperm.slane %v5884, 1
    %v6909 = vperm.slane %v5885, 1
    %v6910 = vperm.slane %v5886, 1
    %v6911 = vperm.slane %v5887, 1
    %v6912 = vperm.slane %v5888, 1
    %v6913 = vperm.slane %v5889, 1
    %v6914 = vperm.slane %v5890, 1
    %v6915 = vperm.slane %v5891, 1
    %v6916 = vperm.slane %v5892, 1
    %v6917 = vperm.slane %v5893, 1
    %v6918 = vperm.slane %v5894, 1
    %v6919 = vperm.slane %v5895, 1
    %v6920 = vperm.slane %v5896, 1
    %v6921 = vperm.slane %v5897, 1
    %v6922 = vperm.slane %v5898, 1
    %v6923 = vperm.slane %v5899, 1
    %v6924 = vperm.slane %v5900, 1
    %v6925 = vperm.slane %v5901, 1
    %v6926 = vperm.slane %v5902, 1
    %v6927 = vperm.slane %v5903, 1
    %v6928 = vperm.slane %v5904, 1
    %v6929 = vperm.slane %v5905, 1
    %v6930 = vperm.slane %v5906, 1
    %v6931 = vperm.slane %v5907, 1
    %v6932 = vperm.slane %v5908, 1
    %v6933 = vperm.slane %v5909, 1
    %v6934 = vperm.slane %v5910, 1
    %v6935 = vperm.slane %v5911, 1
    %v6936 = vperm.slane %v5912, 1
    %v6937 = vperm.slane %v5913, 1
    %v6938 = vperm.slane %v5914, 1
    %v6939 = vperm.slane %v5915, 1
    %v6940 = vperm.slane %v5916, 1
    %v6941 = vperm.slane %v5917, 1
    %v6942 = vperm.slane %v5918, 1
    %v6943 = vperm.slane %v5919, 1
    %v6944 = vperm.slane %v5920, 1
    %v6945 = vperm.slane %v5921, 1
    %v6946 = vperm.slane %v5922, 1
    %v6947 = vperm.slane %v5923, 1
    %v6948 = vperm.slane %v5924, 1
    %v6949 = vperm.slane %v5925, 1
    %v6950 = vperm.slane %v5926, 1
    %v6951 = vperm.slane %v5927, 1
    %v6952 = vperm.slane %v5928, 1
    %v6953 = vperm.slane %v5929, 1
    %v6954 = vperm.slane %v5930, 1
    %v6955 = vperm.slane %v5931, 1
    %v6956 = vperm.slane %v5932, 1
    %v6957 = vperm.slane %v5933, 1
    %v6958 = vperm.slane %v5934, 1
    %v6959 = vperm.slane %v5935, 1
    %v6960 = vperm.slane %v5936, 1
    %v6961 = vperm.slane %v5937, 1
    %v6962 = vperm.slane %v5938, 1
    %v6963 = vperm.slane %v5939, 1
    %v6964 = vperm.slane %v5940, 1
    %v6965 = vperm.slane %v5941, 1
    %v6966 = vperm.slane %v5942, 1
    %v6967 = vperm.slane %v5943, 1
    %v6968 = vperm.slane %v5944, 1
    %v6969 = vperm.slane %v5945, 1
    %v6970 = vperm.slane %v5946, 1
    %v6971 = vperm.slane %v5947, 1
    %v6972 = vperm.slane %v5948, 1
    %v6973 = vperm.slane %v5949, 1
    %v6974 = vperm.slane %v5950, 1
    %v6975 = vperm.slane %v5951, 1
    %v6976 = vperm.slane %v5952, 1
    %v6977 = vperm.slane %v5953, 1
    %v6978 = vperm.slane %v5954, 1
    %v6979 = vperm.slane %v5955, 1
    %v6980 = vperm.slane %v5956, 1
    %v6981 = vperm.slane %v5957, 1
    %v6982 = vperm.slane %v5958, 1
    %v6983 = vperm.slane %v5959, 1
    %v6984 = vperm.slane %v5960, 1
    %v6985 = vperm.slane %v5961, 1
    %v6986 = vperm.slane %v5962, 1
    %v6987 = vperm.slane %v5963, 1
    %v6988 = vperm.slane %v5964, 1
    %v6989 = vperm.slane %v5965, 1
    %v6990 = vperm.slane %v5966, 1
    %v6991 = vperm.slane %v5967, 1
    %v6992 = vperm.slane %v5968, 1
    %v6993 = vperm.slane %v5969, 1
    %v6994 = vperm.slane %v5970, 1
    %v6995 = vperm.slane %v5971, 1
    %v6996 = vperm.slane %v5972, 1
    %v6997 = vperm.slane %v5973, 1
    %v6998 = vperm.slane %v5974, 1
    %v6999 = vperm.slane %v5975, 1
    %v7000 = vperm.slane %v5976, 1
    %v7001 = vperm.slane %v5977, 1
    %v7002 = vperm.slane %v5978, 1
    %v7003 = vperm.slane %v5979, 1
    %v7004 = vperm.slane %v5980, 1
    %v7005 = vperm.slane %v5981, 1
    %v7006 = vperm.slane %v5982, 1
    %v7007 = vperm.slane %v5983, 1
    %v7008 = vperm.slane %v5984, 1
    %v7009 = vperm.slane %v5985, 1
    %v7010 = vperm.slane %v5986, 1
    %v7011 = vperm.slane %v5987, 1
    %v7012 = vperm.slane %v5988, 1
    %v7013 = vperm.slane %v5989, 1
    %v7014 = vperm.slane %v5990, 1
    %v7015 = vperm.slane %v5991, 1
    %v7016 = vperm.slane %v5992, 1
    %v7017 = vperm.slane %v5993, 1
    %v7018 = vperm.slane %v5994, 1
    %v7019 = vperm.slane %v5995, 1
    %v7020 = vperm.slane %v5996, 1
    %v7021 = vperm.slane %v5997, 1
    %v7022 = vperm.slane %v5998, 1
    %v7023 = vperm.slane %v5999, 1
    %v7024 = vperm.slane %v6000, 1
    %v7025 = vperm.slane %v6001, 1
    %v7026 = vperm.slane %v6002, 1
    %v7027 = vperm.slane %v6003, 1
    %v7028 = vperm.slane %v6004, 1
    %v7029 = vperm.slane %v6005, 1
    %v7030 = vperm.slane %v6006, 1
    %v7031 = vperm.slane %v6007, 1
    %v7032 = vperm.slane %v6008, 1
    %v7033 = vperm.slane %v6009, 1
    %v7034 = vperm.slane %v6010, 1
    %v7035 = vperm.slane %v6011, 1
    %v7036 = vperm.slane %v6012, 1
    %v7037 = vperm.slane %v6013, 1
    %v7038 = vperm.slane %v6014, 1
    %v7039 = vperm.slane %v6015, 1
    %v7040 = vperm.slane %v6016, 1
    %v7041 = vperm.slane %v6017, 1
    %v7042 = vperm.slane %v6018, 1
    %v7043 = vperm.slane %v6019, 1
    %v7044 = vperm.slane %v6020, 1
    %v7045 = vperm.slane %v6021, 1
    %v7046 = vperm.slane %v6022, 1
    %v7047 = vperm.slane %v6023, 1
    %v7048 = vperm.slane %v6024, 1
    %v7049 = vperm.slane %v6025, 1
    %v7050 = vperm.slane %v6026, 1
    %v7051 = vperm.slane %v6027, 1
    %v7052 = vperm.slane %v6028, 1
    %v7053 = vperm.slane %v6029, 1
    %v7054 = vperm.slane %v6030, 1
    %v7055 = vperm.slane %v6031, 1
    %v7056 = vperm.slane %v6032, 1
    %v7057 = vperm.slane %v6033, 1
    %v7058 = vperm.slane %v6034, 1
    %v7059 = vperm.slane %v6035, 1
    %v7060 = vperm.slane %v6036, 1
    %v7061 = vperm.slane %v6037, 1
    %v7062 = vperm.slane %v6038, 1
    %v7063 = vperm.slane %v6039, 1
    %v7064 = vperm.slane %v6040, 1
    %v7065 = vperm.slane %v6041, 1
    %v7066 = vperm.slane %v6042, 1
    %v7067 = vperm.slane %v6043, 1
    %v7068 = vperm.slane %v6044, 1
    %v7069 = vperm.slane %v6045, 1
    %v7070 = vperm.slane %v6046, 1
    %v7071 = vperm.slane %v6047, 1
    %v7072 = vperm.slane %v6048, 1
    %v7073 = vperm.slane %v6049, 1
    %v7074 = vperm.slane %v6050, 1
    %v7075 = vperm.slane %v6051, 1
    %v7076 = vperm.slane %v6052, 1
    %v7077 = vperm.slane %v6053, 1
    %v7078 = vperm.slane %v6054, 1
    %v7079 = vperm.slane %v6055, 1
    %v7080 = vperm.slane %v6056, 1
    %v7081 = vperm.slane %v6057, 1
    %v7082 = vperm.slane %v6058, 1
    %v7083 = vperm.slane %v6059, 1
    %v7084 = vperm.slane %v6060, 1
    %v7085 = vperm.slane %v6061, 1
    %v7086 = vperm.slane %v6062, 1
    %v7087 = vperm.slane %v6063, 1
    %v7088 = vperm.slane %v6064, 1
    %v7089 = vperm.slane %v6065, 1
    %v7090 = vperm.slane %v6066, 1
    %v7091 = vperm.slane %v6067, 1
    %v7092 = vperm.slane %v6068, 1
    %v7093 = vperm.slane %v6069, 1
    %v7094 = vperm.slane %v6070, 1
    %v7095 = vperm.slane %v6071, 1
    %v7096 = vperm.slane %v6072, 1
    %v7097 = vperm.slane %v6073, 1
    %v7098 = vperm.slane %v6074, 1
    %v7099 = vperm.slane %v6075, 1
    %v7100 = vperm.slane %v6076, 1
    %v7101 = vperm.slane %v6077, 1
    %v7102 = vperm.slane %v6078, 1
    %v7103 = vperm.slane %v6079, 1
    %v7104 = vperm.slane %v6080, 1
    %v7105 = vperm.slane %v6081, 1
    %v7106 = vperm.slane %v6082, 1
    %v7107 = vperm.slane %v6083, 1
    %v7108 = vperm.slane %v6084, 1
    %v7109 = vperm.slane %v6085, 1
    %v7110 = vperm.slane %v6086, 1
    %v7111 = vperm.slane %v6087, 1
    %v7112 = vperm.slane %v6088, 1
    %v7113 = vperm.slane %v6089, 1
    %v7114 = vperm.slane %v6090, 1
    %v7115 = vperm.slane %v6091, 1
    %v7116 = vperm.slane %v6092, 1
    %v7117 = vperm.slane %v6093, 1
    %v7118 = vperm.slane %v6094, 1
    %v7119 = vperm.slane %v6095, 1
    %v7120 = vperm.slane %v6096, 1
    %v7121 = vperm.slane %v6097, 1
    %v7122 = vperm.slane %v6098, 1
    %v7123 = vperm.slane %v6099, 1
    %v7124 = vperm.slane %v6100, 1
    %v7125 = vperm.slane %v6101, 1
    %v7126 = vperm.slane %v6102, 1
    %v7127 = vperm.slane %v6103, 1
    %v7128 = vperm.slane %v6104, 1
    %v7129 = vperm.slane %v6105, 1
    %v7130 = vperm.slane %v6106, 1
    %v7131 = vperm.slane %v6107, 1
    %v7132 = vperm.slane %v6108, 1
    %v7133 = vperm.slane %v6109, 1
    %v7134 = vperm.slane %v6110, 1
    %v7135 = vperm.slane %v6111, 1
    %v7136 = vperm.slane %v6112, 1
    %v7137 = vperm.slane %v6113, 1
    %v7138 = vperm.slane %v6114, 1
    %v7139 = vperm.slane %v6115, 1
    %v7140 = vperm.slane %v6116, 1
    %v7141 = vperm.slane %v6117, 1
    %v7142 = vperm.slane %v6118, 1
    %v7143 = vperm.slane %v6119, 1
    %v7144 = vperm.slane %v6120, 1
    %v7145 = vperm.slane %v6121, 1
    %v7146 = vperm.slane %v6122, 1
    %v7147 = vperm.slane %v6123, 1
    %v7148 = vperm.slane %v6124, 1
    %v7149 = vperm.slane %v6125, 1
    %v7150 = vperm.slane %v6126, 1
    %v7151 = vperm.slane %v6127, 1
    %v7152 = vperm.slane %v6128, 1
    %v7153 = vperm.slane %v6129, 1
    %v7154 = vperm.slane %v6130, 1
    %v7155 = vperm.slane %v6131, 1
    %v7156 = vperm.slane %v6132, 1
    %v7157 = vperm.slane %v6133, 1
    %v7158 = vperm.slane %v6134, 1
    %v7159 = vperm.slane %v6135, 1
    %v7160 = vperm.slane %v6136, 1
    %v7161 = vperm.slane %v6137, 1
    %v7162 = vperm.slane %v6138, 1
    %v7163 = vperm.slane %v6139, 1
    %v7164 = vperm.slane %v6140, 1
    %v7165 = vperm.slane %v6141, 1
    %v7166 = vperm.slane %v6142, 1
    %v7167 = vperm.slane %v6143, 1
    %v7168 = vperm.slane %v6144, 1
    %v7169 = vperm.slane %v6145, 1
    %v7170 = vperm.slane %v6146, 1
    %v7171 = vperm.slane %v6147, 1
    %v7172 = vperm.slane %v6148, 1
    %v7173 = vperm.slane %v6149, 1
    %v7174 = vperm.slane %v6150, 1
    %v7175 = vperm.slane %v6151, 1
    %v7176 = vperm.slane %v6152, 1
    %v7177 = vperm.slane %v6153, 1
    %v7178 = vperm.slane %v6154, 1
    %v7179 = vperm.slane %v6155, 1
    %v7180 = vperm.slane %v6156, 1
    %v7181 = vperm.slane %v6157, 1
    %v7182 = vperm.slane %v6158, 1
    %v7183 = vperm.slane %v6159, 1
    %v7184 = vperm.slane %v6160, 1
    %v7185 = vperm.slane %v6161, 1
    %v7186 = vperm.slane %v6162, 1
    %v7187 = vperm.slane %v6163, 1
    %v7188 = vperm.slane %v6164, 1
    %v7189 = vperm.slane %v6165, 1
    %v7190 = vperm.slane %v6166, 1
    %v7191 = vperm.slane %v6167, 1
    %v7192 = vperm.slane %v6168, 1
    %v7193 = vperm.slane %v6169, 1
    %v7194 = vperm.slane %v6170, 1
    %v7195 = vperm.slane %v6171, 1
    %v7196 = vperm.slane %v6172, 1
    %v7197 = vperm.slane %v6173, 1
    %v7198 = vperm.slane %v6174, 1
    %v7199 = vperm.slane %v6175, 1
    %v7200 = vperm.slane %v6176, 1
    %v7201 = vperm.slane %v6177, 1
    %v7202 = vperm.slane %v6178, 1
    %v7203 = vperm.slane %v6179, 1
    %v7204 = vperm.slane %v6180, 1
    %v7205 = vperm.slane %v6181, 1
    %v7206 = vperm.slane %v6182, 1
    %v7207 = vperm.slane %v6183, 1
    %v7208 = vperm.slane %v6184, 1
    %v7209 = vperm.slane %v6185, 1
    %v7210 = vperm.slane %v6186, 1
    %v7211 = vperm.slane %v6187, 1
    %v7212 = vperm.slane %v6188, 1
    %v7213 = vperm.slane %v6189, 1
    %v7214 = vperm.slane %v6190, 1
    %v7215 = vperm.slane %v6191, 1
    %v7216 = vperm.slane %v6192, 1
    %v7217 = vperm.slane %v6193, 1
    %v7218 = vperm.slane %v6194, 1
    %v7219 = vperm.slane %v6195, 1
    %v7220 = vperm.slane %v6196, 1
    %v7221 = vperm.slane %v6197, 1
    %v7222 = vperm.slane %v6198, 1
    %v7223 = vperm.slane %v6199, 1
    %v7224 = vperm.slane %v6200, 1
    %v7225 = vperm.slane %v6201, 1
    %v7226 = vperm.slane %v6202, 1
    %v7227 = vperm.slane %v6203, 1
    %v7228 = vperm.slane %v6204, 1
    %v7229 = vperm.slane %v6205, 1
    %v7230 = vperm.slane %v6206, 1
    %v7231 = vperm.slane %v6207, 1
    %v7232 = vperm.slane %v6208, 1
    %v7233 = vperm.slane %v6209, 1
    %v7234 = vperm.slane %v6210, 1
    %v7235 = vperm.slane %v6211, 1
    %v7236 = vperm.slane %v6212, 1
    %v7237 = vperm.slane %v6213, 1
    %v7238 = vperm.slane %v6214, 1
    %v7239 = vperm.slane %v6215, 1
    %v7240 = vperm.slane %v6216, 1
    %v7241 = vperm.slane %v6217, 1
    %v7242 = vperm.slane %v6218, 1
    %v7243 = vperm.slane %v6219, 1
    %v7244 = vperm.slane %v6220, 1
    %v7245 = vperm.slane %v6221, 1
    %v7246 = vperm.slane %v6222, 1
    %v7247 = vperm.slane %v6223, 1
    %v7248 = vperm.slane %v6224, 1
    %v7249 = vperm.slane %v6225, 1
    %v7250 = vperm.slane %v6226, 1
    %v7251 = vperm.slane %v6227, 1
    %v7252 = vperm.slane %v6228, 1
    %v7253 = vperm.slane %v6229, 1
    %v7254 = vperm.slane %v6230, 1
    %v7255 = vperm.slane %v6231, 1
    %v7256 = vperm.slane %v6232, 1
    %v7257 = vperm.slane %v6233, 1
    %v7258 = vperm.slane %v6234, 1
    %v7259 = vperm.slane %v6235, 1
    %v7260 = vperm.slane %v6236, 1
    %v7261 = vperm.slane %v6237, 1
    %v7262 = vperm.slane %v6238, 1
    %v7263 = vperm.slane %v6239, 1
    %v7264 = vperm.slane %v6240, 1
    %v7265 = vperm.slane %v6241, 1
    %v7266 = vperm.slane %v6242, 1
    %v7267 = vperm.slane %v6243, 1
    %v7268 = vperm.slane %v6244, 1
    %v7269 = vperm.slane %v6245, 1
    %v7270 = vperm.slane %v6246, 1
    %v7271 = vperm.slane %v6247, 1
    %v7272 = vperm.slane %v6248, 1
    %v7273 = vperm.slane %v6249, 1
    %v7274 = vperm.slane %v6250, 1
    %v7275 = vperm.slane %v6251, 1
    %v7276 = vperm.slane %v6252, 1
    %v7277 = vperm.slane %v6253, 1
    %v7278 = vperm.slane %v6254, 1
    %v7279 = vperm.slane %v6255, 1
    %v7280 = vperm.slane %v6256, 1
    %v7281 = vperm.slane %v6257, 1
    %v7282 = vperm.slane %v6258, 1
    %v7283 = vperm.slane %v6259, 1
    %v7284 = vperm.slane %v6260, 1
    %v7285 = vperm.slane %v6261, 1
    %v7286 = vperm.slane %v6262, 1
    %v7287 = vperm.slane %v6263, 1
    %v7288 = vperm.slane %v6264, 1
    %v7289 = vperm.slane %v6265, 1
    %v7290 = vperm.slane %v6266, 1
    %v7291 = vperm.slane %v6267, 1
    %v7292 = vperm.slane %v6268, 1
    %v7293 = vperm.slane %v6269, 1
    %v7294 = vperm.slane %v6270, 1
    %v7295 = vperm.slane %v6271, 1
    %v7296 = vperm.slane %v6272, 1
    %v7297 = vperm.slane %v6273, 1
    %v7298 = vperm.slane %v6274, 1
    %v7299 = vperm.slane %v6275, 1
    %v7300 = vperm.slane %v6276, 1
    %v7301 = vperm.slane %v6277, 1
    %v7302 = vperm.slane %v6278, 1
    %v7303 = vperm.slane %v6279, 1
    %v7304 = vperm.slane %v6280, 1
    %v7305 = vperm.slane %v6281, 1
    %v7306 = vperm.slane %v6282, 1
    %v7307 = vperm.slane %v6283, 1
    %v7308 = vperm.slane %v6284, 1
    %v7309 = vperm.slane %v6285, 1
    %v7310 = vperm.slane %v6286, 1
    %v7311 = vperm.slane %v6287, 1
    %v7312 = vperm.slane %v6288, 1
    %v7313 = vperm.slane %v6289, 1
    %v7314 = vperm.slane %v6290, 1
    %v7315 = vperm.slane %v6291, 1
    %v7316 = vperm.slane %v6292, 1
    %v7317 = vperm.slane %v6293, 1
    %v7318 = vperm.slane %v6294, 1
    %v7319 = vperm.slane %v6295, 1
    %v7320 = vperm.slane %v6296, 1
    %v7321 = vperm.slane %v6297, 1
    %v7322 = vperm.slane %v6298, 1
    %v7323 = vperm.slane %v6299, 1
    %v7324 = vperm.slane %v6300, 1
    %v7325 = vperm.slane %v6301, 1
    %v7326 = vperm.slane %v6302, 1
    %v7327 = vperm.slane %v6303, 1
    %v7328 = vperm.slane %v6304, 1
    %v7329 = vperm.slane %v6305, 1
    %v7330 = vperm.slane %v6306, 1
    %v7331 = vperm.slane %v6307, 1
    %v7332 = vperm.slane %v6308, 1
    %v7333 = vperm.slane %v6309, 1
    %v7334 = vperm.slane %v6310, 1
    %v7335 = vperm.slane %v6311, 1
    %v7336 = vperm.slane %v6312, 1
    %v7337 = vperm.slane %v6313, 1
    %v7338 = vperm.slane %v6314, 1
    %v7339 = vperm.slane %v6315, 1
    %v7340 = vperm.slane %v6316, 1
    %v7341 = vperm.slane %v6317, 1
    %v7342 = vperm.slane %v6318, 1
    %v7855 = vrot.slane %v6832, 6
    %v7856 = vrot.slane %v6833, 4
    %v7857 = vrot.slane %v6834, 2
    %v7858 = vrot.slane %v6836, 6
    %v7859 = vrot.slane %v6837, 4
    %v7860 = vrot.slane %v6838, 2
    %v7861 = vrot.slane %v6840, 6
    %v7862 = vrot.slane %v6841, 4
    %v7863 = vrot.slane %v6842, 2
    %v7864 = vrot.slane %v6844, 6
    %v7865 = vrot.slane %v6845, 4
    %v7866 = vrot.slane %v6846, 2
    %v7867 = vrot.slane %v6848, 6
    %v7868 = vrot.slane %v6849, 4
    %v7869 = vrot.slane %v6850, 2
    %v7870 = vrot.slane %v6852, 6
    %v7871 = vrot.slane %v6853, 4
    %v7872 = vrot.slane %v6854, 2
    %v7873 = vrot.slane %v6856, 6
    %v7874 = vrot.slane %v6857, 4
    %v7875 = vrot.slane %v6858, 2
    %v7876 = vrot.slane %v6860, 6
    %v7877 = vrot.slane %v6861, 4
    %v7878 = vrot.slane %v6862, 2
    %v7879 = vrot.slane %v6864, 6
    %v7880 = vrot.slane %v6865, 4
    %v7881 = vrot.slane %v6866, 2
    %v7882 = vrot.slane %v6868, 6
    %v7883 = vrot.slane %v6869, 4
    %v7884 = vrot.slane %v6870, 2
    %v7885 = vrot.slane %v6872, 6
    %v7886 = vrot.slane %v6873, 4
    %v7887 = vrot.slane %v6874, 2
    %v7888 = vrot.slane %v6876, 6
    %v7889 = vrot.slane %v6877, 4
    %v7890 = vrot.slane %v6878, 2
    %v7891 = vrot.slane %v6880, 6
    %v7892 = vrot.slane %v6881, 4
    %v7893 = vrot.slane %v6882, 2
    %v7894 = vrot.slane %v6884, 6
    %v7895 = vrot.slane %v6885, 4
    %v7896 = vrot.slane %v6886, 2
    %v7897 = vrot.slane %v6888, 6
    %v7898 = vrot.slane %v6889, 4
    %v7899 = vrot.slane %v6890, 2
    %v7900 = vrot.slane %v6892, 6
    %v7901 = vrot.slane %v6893, 4
    %v7902 = vrot.slane %v6894, 2
    %v7903 = vrot.slane %v6896, 6
    %v7904 = vrot.slane %v6897, 4
    %v7905 = vrot.slane %v6898, 2
    %v7906 = vrot.slane %v6900, 6
    %v7907 = vrot.slane %v6901, 4
    %v7908 = vrot.slane %v6902, 2
    %v7909 = vrot.slane %v6904, 6
    %v7910 = vrot.slane %v6905, 4
    %v7911 = vrot.slane %v6906, 2
    %v7912 = vrot.slane %v6908, 6
    %v7913 = vrot.slane %v6909, 4
    %v7914 = vrot.slane %v6910, 2
    %v7915 = vrot.slane %v6912, 6
    %v7916 = vrot.slane %v6913, 4
    %v7917 = vrot.slane %v6914, 2
    %v7918 = vrot.slane %v6916, 6
    %v7919 = vrot.slane %v6917, 4
    %v7920 = vrot.slane %v6918, 2
    %v7921 = vrot.slane %v6920, 6
    %v7922 = vrot.slane %v6921, 4
    %v7923 = vrot.slane %v6922, 2
    %v7924 = vrot.slane %v6924, 6
    %v7925 = vrot.slane %v6925, 4
    %v7926 = vrot.slane %v6926, 2
    %v7927 = vrot.slane %v6928, 6
    %v7928 = vrot.slane %v6929, 4
    %v7929 = vrot.slane %v6930, 2
    %v7930 = vrot.slane %v6932, 6
    %v7931 = vrot.slane %v6933, 4
    %v7932 = vrot.slane %v6934, 2
    %v7933 = vrot.slane %v6936, 6
    %v7934 = vrot.slane %v6937, 4
    %v7935 = vrot.slane %v6938, 2
    %v7936 = vrot.slane %v6940, 6
    %v7937 = vrot.slane %v6941, 4
    %v7938 = vrot.slane %v6942, 2
    %v7939 = vrot.slane %v6944, 6
    %v7940 = vrot.slane %v6945, 4
    %v7941 = vrot.slane %v6946, 2
    %v7942 = vrot.slane %v6948, 6
    %v7943 = vrot.slane %v6949, 4
    %v7944 = vrot.slane %v6950, 2
    %v7945 = vrot.slane %v6952, 6
    %v7946 = vrot.slane %v6953, 4
    %v7947 = vrot.slane %v6954, 2
    %v7948 = vrot.slane %v6956, 6
    %v7949 = vrot.slane %v6957, 4
    %v7950 = vrot.slane %v6958, 2
    %v7951 = vrot.slane %v6960, 6
    %v7952 = vrot.slane %v6961, 4
    %v7953 = vrot.slane %v6962, 2
    %v7954 = vrot.slane %v6964, 6
    %v7955 = vrot.slane %v6965, 4
    %v7956 = vrot.slane %v6966, 2
    %v7957 = vrot.slane %v6968, 6
    %v7958 = vrot.slane %v6969, 4
    %v7959 = vrot.slane %v6970, 2
    %v7960 = vrot.slane %v6972, 6
    %v7961 = vrot.slane %v6973, 4
    %v7962 = vrot.slane %v6974, 2
    %v7963 = vrot.slane %v6976, 6
    %v7964 = vrot.slane %v6977, 4
    %v7965 = vrot.slane %v6978, 2
    %v7966 = vrot.slane %v6980, 6
    %v7967 = vrot.slane %v6981, 4
    %v7968 = vrot.slane %v6982, 2
    %v7969 = vrot.slane %v6984, 6
    %v7970 = vrot.slane %v6985, 4
    %v7971 = vrot.slane %v6986, 2
    %v7972 = vrot.slane %v6988, 6
    %v7973 = vrot.slane %v6989, 4
    %v7974 = vrot.slane %v6990, 2
    %v7975 = vrot.slane %v6992, 6
    %v7976 = vrot.slane %v6993, 4
    %v7977 = vrot.slane %v6994, 2
    %v7978 = vrot.slane %v6996, 6
    %v7979 = vrot.slane %v6997, 4
    %v7980 = vrot.slane %v6998, 2
    %v7981 = vrot.slane %v7000, 6
    %v7982 = vrot.slane %v7001, 4
    %v7983 = vrot.slane %v7002, 2
    %v7984 = vrot.slane %v7004, 6
    %v7985 = vrot.slane %v7005, 4
    %v7986 = vrot.slane %v7006, 2
    %v7987 = vrot.slane %v7008, 6
    %v7988 = vrot.slane %v7009, 4
    %v7989 = vrot.slane %v7010, 2
    %v7990 = vrot.slane %v7012, 6
    %v7991 = vrot.slane %v7013, 4
    %v7992 = vrot.slane %v7014, 2
    %v7993 = vrot.slane %v7016, 6
    %v7994 = vrot.slane %v7017, 4
    %v7995 = vrot.slane %v7018, 2
    %v7996 = vrot.slane %v7020, 6
    %v7997 = vrot.slane %v7021, 4
    %v7998 = vrot.slane %v7022, 2
    %v7999 = vrot.slane %v7024, 6
    %v8000 = vrot.slane %v7025, 4
    %v8001 = vrot.slane %v7026, 2
    %v8002 = vrot.slane %v7028, 6
    %v8003 = vrot.slane %v7029, 4
    %v8004 = vrot.slane %v7030, 2
    %v8005 = vrot.slane %v7032, 6
    %v8006 = vrot.slane %v7033, 4
    %v8007 = vrot.slane %v7034, 2
    %v8008 = vrot.slane %v7036, 6
    %v8009 = vrot.slane %v7037, 4
    %v8010 = vrot.slane %v7038, 2
    %v8011 = vrot.slane %v7040, 6
    %v8012 = vrot.slane %v7041, 4
    %v8013 = vrot.slane %v7042, 2
    %v8014 = vrot.slane %v7044, 6
    %v8015 = vrot.slane %v7045, 4
    %v8016 = vrot.slane %v7046, 2
    %v8017 = vrot.slane %v7048, 6
    %v8018 = vrot.slane %v7049, 4
    %v8019 = vrot.slane %v7050, 2
    %v8020 = vrot.slane %v7052, 6
    %v8021 = vrot.slane %v7053, 4
    %v8022 = vrot.slane %v7054, 2
    %v8023 = vrot.slane %v7056, 6
    %v8024 = vrot.slane %v7057, 4
    %v8025 = vrot.slane %v7058, 2
    %v8026 = vrot.slane %v7060, 6
    %v8027 = vrot.slane %v7061, 4
    %v8028 = vrot.slane %v7062, 2
    %v8029 = vrot.slane %v7064, 6
    %v8030 = vrot.slane %v7065, 4
    %v8031 = vrot.slane %v7066, 2
    %v8032 = vrot.slane %v7068, 6
    %v8033 = vrot.slane %v7069, 4
    %v8034 = vrot.slane %v7070, 2
    %v8035 = vrot.slane %v7072, 6
    %v8036 = vrot.slane %v7073, 4
    %v8037 = vrot.slane %v7074, 2
    %v8038 = vrot.slane %v7076, 6
    %v8039 = vrot.slane %v7077, 4
    %v8040 = vrot.slane %v7078, 2
    %v8041 = vrot.slane %v7080, 6
    %v8042 = vrot.slane %v7081, 4
    %v8043 = vrot.slane %v7082, 2
    %v8044 = vrot.slane %v7084, 6
    %v8045 = vrot.slane %v7085, 4
    %v8046 = vrot.slane %v7086, 2
    %v8047 = vrot.slane %v7088, 6
    %v8048 = vrot.slane %v7089, 4
    %v8049 = vrot.slane %v7090, 2
    %v8050 = vrot.slane %v7092, 6
    %v8051 = vrot.slane %v7093, 4
    %v8052 = vrot.slane %v7094, 2
    %v8053 = vrot.slane %v7096, 6
    %v8054 = vrot.slane %v7097, 4
    %v8055 = vrot.slane %v7098, 2
    %v8056 = vrot.slane %v7100, 6
    %v8057 = vrot.slane %v7101, 4
    %v8058 = vrot.slane %v7102, 2
    %v8059 = vrot.slane %v7104, 6
    %v8060 = vrot.slane %v7105, 4
    %v8061 = vrot.slane %v7106, 2
    %v8062 = vrot.slane %v7108, 6
    %v8063 = vrot.slane %v7109, 4
    %v8064 = vrot.slane %v7110, 2
    %v8065 = vrot.slane %v7112, 6
    %v8066 = vrot.slane %v7113, 4
    %v8067 = vrot.slane %v7114, 2
    %v8068 = vrot.slane %v7116, 6
    %v8069 = vrot.slane %v7117, 4
    %v8070 = vrot.slane %v7118, 2
    %v8071 = vrot.slane %v7120, 6
    %v8072 = vrot.slane %v7121, 4
    %v8073 = vrot.slane %v7122, 2
    %v8074 = vrot.slane %v7124, 6
    %v8075 = vrot.slane %v7125, 4
    %v8076 = vrot.slane %v7126, 2
    %v8077 = vrot.slane %v7128, 6
    %v8078 = vrot.slane %v7129, 4
    %v8079 = vrot.slane %v7130, 2
    %v8080 = vrot.slane %v7132, 6
    %v8081 = vrot.slane %v7133, 4
    %v8082 = vrot.slane %v7134, 2
    %v8083 = vrot.slane %v7136, 6
    %v8084 = vrot.slane %v7137, 4
    %v8085 = vrot.slane %v7138, 2
    %v8086 = vrot.slane %v7140, 6
    %v8087 = vrot.slane %v7141, 4
    %v8088 = vrot.slane %v7142, 2
    %v8089 = vrot.slane %v7144, 6
    %v8090 = vrot.slane %v7145, 4
    %v8091 = vrot.slane %v7146, 2
    %v8092 = vrot.slane %v7148, 6
    %v8093 = vrot.slane %v7149, 4
    %v8094 = vrot.slane %v7150, 2
    %v8095 = vrot.slane %v7152, 6
    %v8096 = vrot.slane %v7153, 4
    %v8097 = vrot.slane %v7154, 2
    %v8098 = vrot.slane %v7156, 6
    %v8099 = vrot.slane %v7157, 4
    %v8100 = vrot.slane %v7158, 2
    %v8101 = vrot.slane %v7160, 6
    %v8102 = vrot.slane %v7161, 4
    %v8103 = vrot.slane %v7162, 2
    %v8104 = vrot.slane %v7164, 6
    %v8105 = vrot.slane %v7165, 4
    %v8106 = vrot.slane %v7166, 2
    %v8107 = vrot.slane %v7168, 6
    %v8108 = vrot.slane %v7169, 4
    %v8109 = vrot.slane %v7170, 2
    %v8110 = vrot.slane %v7172, 6
    %v8111 = vrot.slane %v7173, 4
    %v8112 = vrot.slane %v7174, 2
    %v8113 = vrot.slane %v7176, 6
    %v8114 = vrot.slane %v7177, 4
    %v8115 = vrot.slane %v7178, 2
    %v8116 = vrot.slane %v7180, 6
    %v8117 = vrot.slane %v7181, 4
    %v8118 = vrot.slane %v7182, 2
    %v8119 = vrot.slane %v7184, 6
    %v8120 = vrot.slane %v7185, 4
    %v8121 = vrot.slane %v7186, 2
    %v8122 = vrot.slane %v7188, 6
    %v8123 = vrot.slane %v7189, 4
    %v8124 = vrot.slane %v7190, 2
    %v8125 = vrot.slane %v7192, 6
    %v8126 = vrot.slane %v7193, 4
    %v8127 = vrot.slane %v7194, 2
    %v8128 = vrot.slane %v7196, 6
    %v8129 = vrot.slane %v7197, 4
    %v8130 = vrot.slane %v7198, 2
    %v8131 = vrot.slane %v7200, 6
    %v8132 = vrot.slane %v7201, 4
    %v8133 = vrot.slane %v7202, 2
    %v8134 = vrot.slane %v7204, 6
    %v8135 = vrot.slane %v7205, 4
    %v8136 = vrot.slane %v7206, 2
    %v8137 = vrot.slane %v7208, 6
    %v8138 = vrot.slane %v7209, 4
    %v8139 = vrot.slane %v7210, 2
    %v8140 = vrot.slane %v7212, 6
    %v8141 = vrot.slane %v7213, 4
    %v8142 = vrot.slane %v7214, 2
    %v8143 = vrot.slane %v7216, 6
    %v8144 = vrot.slane %v7217, 4
    %v8145 = vrot.slane %v7218, 2
    %v8146 = vrot.slane %v7220, 6
    %v8147 = vrot.slane %v7221, 4
    %v8148 = vrot.slane %v7222, 2
    %v8149 = vrot.slane %v7224, 6
    %v8150 = vrot.slane %v7225, 4
    %v8151 = vrot.slane %v7226, 2
    %v8152 = vrot.slane %v7228, 6
    %v8153 = vrot.slane %v7229, 4
    %v8154 = vrot.slane %v7230, 2
    %v8155 = vrot.slane %v7232, 6
    %v8156 = vrot.slane %v7233, 4
    %v8157 = vrot.slane %v7234, 2
    %v8158 = vrot.slane %v7236, 6
    %v8159 = vrot.slane %v7237, 4
    %v8160 = vrot.slane %v7238, 2
    %v8161 = vrot.slane %v7240, 6
    %v8162 = vrot.slane %v7241, 4
    %v8163 = vrot.slane %v7242, 2
    %v8164 = vrot.slane %v7244, 6
    %v8165 = vrot.slane %v7245, 4
    %v8166 = vrot.slane %v7246, 2
    %v8167 = vrot.slane %v7248, 6
    %v8168 = vrot.slane %v7249, 4
    %v8169 = vrot.slane %v7250, 2
    %v8170 = vrot.slane %v7252, 6
    %v8171 = vrot.slane %v7253, 4
    %v8172 = vrot.slane %v7254, 2
    %v8173 = vrot.slane %v7256, 6
    %v8174 = vrot.slane %v7257, 4
    %v8175 = vrot.slane %v7258, 2
    %v8176 = vrot.slane %v7260, 6
    %v8177 = vrot.slane %v7261, 4
    %v8178 = vrot.slane %v7262, 2
    %v8179 = vrot.slane %v7264, 6
    %v8180 = vrot.slane %v7265, 4
    %v8181 = vrot.slane %v7266, 2
    %v8182 = vrot.slane %v7268, 6
    %v8183 = vrot.slane %v7269, 4
    %v8184 = vrot.slane %v7270, 2
    %v8185 = vrot.slane %v7272, 6
    %v8186 = vrot.slane %v7273, 4
    %v8187 = vrot.slane %v7274, 2
    %v8188 = vrot.slane %v7276, 6
    %v8189 = vrot.slane %v7277, 4
    %v8190 = vrot.slane %v7278, 2
    %v8191 = vrot.slane %v7280, 6
    %v8192 = vrot.slane %v7281, 4
    %v8193 = vrot.slane %v7282, 2
    %v8194 = vrot.slane %v7284, 6
    %v8195 = vrot.slane %v7285, 4
    %v8196 = vrot.slane %v7286, 2
    %v8197 = vrot.slane %v7288, 6
    %v8198 = vrot.slane %v7289, 4
    %v8199 = vrot.slane %v7290, 2
    %v8200 = vrot.slane %v7292, 6
    %v8201 = vrot.slane %v7293, 4
    %v8202 = vrot.slane %v7294, 2
    %v8203 = vrot.slane %v7296, 6
    %v8204 = vrot.slane %v7297, 4
    %v8205 = vrot.slane %v7298, 2
    %v8206 = vrot.slane %v7300, 6
    %v8207 = vrot.slane %v7301, 4
    %v8208 = vrot.slane %v7302, 2
    %v8209 = vrot.slane %v7304, 6
    %v8210 = vrot.slane %v7305, 4
    %v8211 = vrot.slane %v7306, 2
    %v8212 = vrot.slane %v7308, 6
    %v8213 = vrot.slane %v7309, 4
    %v8214 = vrot.slane %v7310, 2
    %v8215 = vrot.slane %v7312, 6
    %v8216 = vrot.slane %v7313, 4
    %v8217 = vrot.slane %v7314, 2
    %v8218 = vrot.slane %v7316, 6
    %v8219 = vrot.slane %v7317, 4
    %v8220 = vrot.slane %v7318, 2
    %v8221 = vrot.slane %v7320, 6
    %v8222 = vrot.slane %v7321, 4
    %v8223 = vrot.slane %v7322, 2
    %v8224 = vrot.slane %v7324, 6
    %v8225 = vrot.slane %v7325, 4
    %v8226 = vrot.slane %v7326, 2
    %v8227 = vrot.slane %v7328, 6
    %v8228 = vrot.slane %v7329, 4
    %v8229 = vrot.slane %v7330, 2
    %v8230 = vrot.slane %v7332, 6
    %v8231 = vrot.slane %v7333, 4
    %v8232 = vrot.slane %v7334, 2
    %v8233 = vrot.slane %v7336, 6
    %v8234 = vrot.slane %v7337, 4
    %v8235 = vrot.slane %v7338, 2
    %v8236 = vrot.slane %v7340, 6
    %v8237 = vrot.slane %v7341, 4
    %v8238 = vrot.slane %v7342, 2
    %v8239 = vsel %vm2858, %v6831, %v7855
    %v8240 = vsel %vm2860, %v7856, %v7857
    %v8241 = vsel %vm2862, %v8239, %v8240
    %v8242 = vsel %vm2858, %v6835, %v7858
    %v8243 = vsel %vm2860, %v7859, %v7860
    %v8244 = vsel %vm2862, %v8242, %v8243
    %v8245 = vsel %vm2858, %v6839, %v7861
    %v8246 = vsel %vm2860, %v7862, %v7863
    %v8247 = vsel %vm2862, %v8245, %v8246
    %v8248 = vsel %vm2858, %v6843, %v7864
    %v8249 = vsel %vm2860, %v7865, %v7866
    %v8250 = vsel %vm2862, %v8248, %v8249
    %v8251 = vsel %vm2858, %v6847, %v7867
    %v8252 = vsel %vm2860, %v7868, %v7869
    %v8253 = vsel %vm2862, %v8251, %v8252
    %v8254 = vsel %vm2858, %v6851, %v7870
    %v8255 = vsel %vm2860, %v7871, %v7872
    %v8256 = vsel %vm2862, %v8254, %v8255
    %v8257 = vsel %vm2858, %v6855, %v7873
    %v8258 = vsel %vm2860, %v7874, %v7875
    %v8259 = vsel %vm2862, %v8257, %v8258
    %v8260 = vsel %vm2858, %v6859, %v7876
    %v8261 = vsel %vm2860, %v7877, %v7878
    %v8262 = vsel %vm2862, %v8260, %v8261
    %v8263 = vsel %vm2858, %v6863, %v7879
    %v8264 = vsel %vm2860, %v7880, %v7881
    %v8265 = vsel %vm2862, %v8263, %v8264
    %v8266 = vsel %vm2858, %v6867, %v7882
    %v8267 = vsel %vm2860, %v7883, %v7884
    %v8268 = vsel %vm2862, %v8266, %v8267
    %v8269 = vsel %vm2858, %v6871, %v7885
    %v8270 = vsel %vm2860, %v7886, %v7887
    %v8271 = vsel %vm2862, %v8269, %v8270
    %v8272 = vsel %vm2858, %v6875, %v7888
    %v8273 = vsel %vm2860, %v7889, %v7890
    %v8274 = vsel %vm2862, %v8272, %v8273
    %v8275 = vsel %vm2858, %v6879, %v7891
    %v8276 = vsel %vm2860, %v7892, %v7893
    %v8277 = vsel %vm2862, %v8275, %v8276
    %v8278 = vsel %vm2858, %v6883, %v7894
    %v8279 = vsel %vm2860, %v7895, %v7896
    %v8280 = vsel %vm2862, %v8278, %v8279
    %v8281 = vsel %vm2858, %v6887, %v7897
    %v8282 = vsel %vm2860, %v7898, %v7899
    %v8283 = vsel %vm2862, %v8281, %v8282
    %v8284 = vsel %vm2858, %v6891, %v7900
    %v8285 = vsel %vm2860, %v7901, %v7902
    %v8286 = vsel %vm2862, %v8284, %v8285
    %v8287 = vsel %vm2858, %v6895, %v7903
    %v8288 = vsel %vm2860, %v7904, %v7905
    %v8289 = vsel %vm2862, %v8287, %v8288
    %v8290 = vsel %vm2858, %v6899, %v7906
    %v8291 = vsel %vm2860, %v7907, %v7908
    %v8292 = vsel %vm2862, %v8290, %v8291
    %v8293 = vsel %vm2858, %v6903, %v7909
    %v8294 = vsel %vm2860, %v7910, %v7911
    %v8295 = vsel %vm2862, %v8293, %v8294
    %v8296 = vsel %vm2858, %v6907, %v7912
    %v8297 = vsel %vm2860, %v7913, %v7914
    %v8298 = vsel %vm2862, %v8296, %v8297
    %v8299 = vsel %vm2858, %v6911, %v7915
    %v8300 = vsel %vm2860, %v7916, %v7917
    %v8301 = vsel %vm2862, %v8299, %v8300
    %v8302 = vsel %vm2858, %v6915, %v7918
    %v8303 = vsel %vm2860, %v7919, %v7920
    %v8304 = vsel %vm2862, %v8302, %v8303
    %v8305 = vsel %vm2858, %v6919, %v7921
    %v8306 = vsel %vm2860, %v7922, %v7923
    %v8307 = vsel %vm2862, %v8305, %v8306
    %v8308 = vsel %vm2858, %v6923, %v7924
    %v8309 = vsel %vm2860, %v7925, %v7926
    %v8310 = vsel %vm2862, %v8308, %v8309
    %v8311 = vsel %vm2858, %v6927, %v7927
    %v8312 = vsel %vm2860, %v7928, %v7929
    %v8313 = vsel %vm2862, %v8311, %v8312
    %v8314 = vsel %vm2858, %v6931, %v7930
    %v8315 = vsel %vm2860, %v7931, %v7932
    %v8316 = vsel %vm2862, %v8314, %v8315
    %v8317 = vsel %vm2858, %v6935, %v7933
    %v8318 = vsel %vm2860, %v7934, %v7935
    %v8319 = vsel %vm2862, %v8317, %v8318
    %v8320 = vsel %vm2858, %v6939, %v7936
    %v8321 = vsel %vm2860, %v7937, %v7938
    %v8322 = vsel %vm2862, %v8320, %v8321
    %v8323 = vsel %vm2858, %v6943, %v7939
    %v8324 = vsel %vm2860, %v7940, %v7941
    %v8325 = vsel %vm2862, %v8323, %v8324
    %v8326 = vsel %vm2858, %v6947, %v7942
    %v8327 = vsel %vm2860, %v7943, %v7944
    %v8328 = vsel %vm2862, %v8326, %v8327
    %v8329 = vsel %vm2858, %v6951, %v7945
    %v8330 = vsel %vm2860, %v7946, %v7947
    %v8331 = vsel %vm2862, %v8329, %v8330
    %v8332 = vsel %vm2858, %v6955, %v7948
    %v8333 = vsel %vm2860, %v7949, %v7950
    %v8334 = vsel %vm2862, %v8332, %v8333
    %v8335 = vsel %vm2858, %v6959, %v7951
    %v8336 = vsel %vm2860, %v7952, %v7953
    %v8337 = vsel %vm2862, %v8335, %v8336
    %v8338 = vsel %vm2858, %v6963, %v7954
    %v8339 = vsel %vm2860, %v7955, %v7956
    %v8340 = vsel %vm2862, %v8338, %v8339
    %v8341 = vsel %vm2858, %v6967, %v7957
    %v8342 = vsel %vm2860, %v7958, %v7959
    %v8343 = vsel %vm2862, %v8341, %v8342
    %v8344 = vsel %vm2858, %v6971, %v7960
    %v8345 = vsel %vm2860, %v7961, %v7962
    %v8346 = vsel %vm2862, %v8344, %v8345
    %v8347 = vsel %vm2858, %v6975, %v7963
    %v8348 = vsel %vm2860, %v7964, %v7965
    %v8349 = vsel %vm2862, %v8347, %v8348
    %v8350 = vsel %vm2858, %v6979, %v7966
    %v8351 = vsel %vm2860, %v7967, %v7968
    %v8352 = vsel %vm2862, %v8350, %v8351
    %v8353 = vsel %vm2858, %v6983, %v7969
    %v8354 = vsel %vm2860, %v7970, %v7971
    %v8355 = vsel %vm2862, %v8353, %v8354
    %v8356 = vsel %vm2858, %v6987, %v7972
    %v8357 = vsel %vm2860, %v7973, %v7974
    %v8358 = vsel %vm2862, %v8356, %v8357
    %v8359 = vsel %vm2858, %v6991, %v7975
    %v8360 = vsel %vm2860, %v7976, %v7977
    %v8361 = vsel %vm2862, %v8359, %v8360
    %v8362 = vsel %vm2858, %v6995, %v7978
    %v8363 = vsel %vm2860, %v7979, %v7980
    %v8364 = vsel %vm2862, %v8362, %v8363
    %v8365 = vsel %vm2858, %v6999, %v7981
    %v8366 = vsel %vm2860, %v7982, %v7983
    %v8367 = vsel %vm2862, %v8365, %v8366
    %v8368 = vsel %vm2858, %v7003, %v7984
    %v8369 = vsel %vm2860, %v7985, %v7986
    %v8370 = vsel %vm2862, %v8368, %v8369
    %v8371 = vsel %vm2858, %v7007, %v7987
    %v8372 = vsel %vm2860, %v7988, %v7989
    %v8373 = vsel %vm2862, %v8371, %v8372
    %v8374 = vsel %vm2858, %v7011, %v7990
    %v8375 = vsel %vm2860, %v7991, %v7992
    %v8376 = vsel %vm2862, %v8374, %v8375
    %v8377 = vsel %vm2858, %v7015, %v7993
    %v8378 = vsel %vm2860, %v7994, %v7995
    %v8379 = vsel %vm2862, %v8377, %v8378
    %v8380 = vsel %vm2858, %v7019, %v7996
    %v8381 = vsel %vm2860, %v7997, %v7998
    %v8382 = vsel %vm2862, %v8380, %v8381
    %v8383 = vsel %vm2858, %v7023, %v7999
    %v8384 = vsel %vm2860, %v8000, %v8001
    %v8385 = vsel %vm2862, %v8383, %v8384
    %v8386 = vsel %vm2858, %v7027, %v8002
    %v8387 = vsel %vm2860, %v8003, %v8004
    %v8388 = vsel %vm2862, %v8386, %v8387
    %v8389 = vsel %vm2858, %v7031, %v8005
    %v8390 = vsel %vm2860, %v8006, %v8007
    %v8391 = vsel %vm2862, %v8389, %v8390
    %v8392 = vsel %vm2858, %v7035, %v8008
    %v8393 = vsel %vm2860, %v8009, %v8010
    %v8394 = vsel %vm2862, %v8392, %v8393
    %v8395 = vsel %vm2858, %v7039, %v8011
    %v8396 = vsel %vm2860, %v8012, %v8013
    %v8397 = vsel %vm2862, %v8395, %v8396
    %v8398 = vsel %vm2858, %v7043, %v8014
    %v8399 = vsel %vm2860, %v8015, %v8016
    %v8400 = vsel %vm2862, %v8398, %v8399
    %v8401 = vsel %vm2858, %v7047, %v8017
    %v8402 = vsel %vm2860, %v8018, %v8019
    %v8403 = vsel %vm2862, %v8401, %v8402
    %v8404 = vsel %vm2858, %v7051, %v8020
    %v8405 = vsel %vm2860, %v8021, %v8022
    %v8406 = vsel %vm2862, %v8404, %v8405
    %v8407 = vsel %vm2858, %v7055, %v8023
    %v8408 = vsel %vm2860, %v8024, %v8025
    %v8409 = vsel %vm2862, %v8407, %v8408
    %v8410 = vsel %vm2858, %v7059, %v8026
    %v8411 = vsel %vm2860, %v8027, %v8028
    %v8412 = vsel %vm2862, %v8410, %v8411
    %v8413 = vsel %vm2858, %v7063, %v8029
    %v8414 = vsel %vm2860, %v8030, %v8031
    %v8415 = vsel %vm2862, %v8413, %v8414
    %v8416 = vsel %vm2858, %v7067, %v8032
    %v8417 = vsel %vm2860, %v8033, %v8034
    %v8418 = vsel %vm2862, %v8416, %v8417
    %v8419 = vsel %vm2858, %v7071, %v8035
    %v8420 = vsel %vm2860, %v8036, %v8037
    %v8421 = vsel %vm2862, %v8419, %v8420
    %v8422 = vsel %vm2858, %v7075, %v8038
    %v8423 = vsel %vm2860, %v8039, %v8040
    %v8424 = vsel %vm2862, %v8422, %v8423
    %v8425 = vsel %vm2858, %v7079, %v8041
    %v8426 = vsel %vm2860, %v8042, %v8043
    %v8427 = vsel %vm2862, %v8425, %v8426
    %v8428 = vsel %vm2858, %v7083, %v8044
    %v8429 = vsel %vm2860, %v8045, %v8046
    %v8430 = vsel %vm2862, %v8428, %v8429
    %v8431 = vsel %vm2858, %v7087, %v8047
    %v8432 = vsel %vm2860, %v8048, %v8049
    %v8433 = vsel %vm2862, %v8431, %v8432
    %v8434 = vsel %vm2858, %v7091, %v8050
    %v8435 = vsel %vm2860, %v8051, %v8052
    %v8436 = vsel %vm2862, %v8434, %v8435
    %v8437 = vsel %vm2858, %v7095, %v8053
    %v8438 = vsel %vm2860, %v8054, %v8055
    %v8439 = vsel %vm2862, %v8437, %v8438
    %v8440 = vsel %vm2858, %v7099, %v8056
    %v8441 = vsel %vm2860, %v8057, %v8058
    %v8442 = vsel %vm2862, %v8440, %v8441
    %v8443 = vsel %vm2858, %v7103, %v8059
    %v8444 = vsel %vm2860, %v8060, %v8061
    %v8445 = vsel %vm2862, %v8443, %v8444
    %v8446 = vsel %vm2858, %v7107, %v8062
    %v8447 = vsel %vm2860, %v8063, %v8064
    %v8448 = vsel %vm2862, %v8446, %v8447
    %v8449 = vsel %vm2858, %v7111, %v8065
    %v8450 = vsel %vm2860, %v8066, %v8067
    %v8451 = vsel %vm2862, %v8449, %v8450
    %v8452 = vsel %vm2858, %v7115, %v8068
    %v8453 = vsel %vm2860, %v8069, %v8070
    %v8454 = vsel %vm2862, %v8452, %v8453
    %v8455 = vsel %vm2858, %v7119, %v8071
    %v8456 = vsel %vm2860, %v8072, %v8073
    %v8457 = vsel %vm2862, %v8455, %v8456
    %v8458 = vsel %vm2858, %v7123, %v8074
    %v8459 = vsel %vm2860, %v8075, %v8076
    %v8460 = vsel %vm2862, %v8458, %v8459
    %v8461 = vsel %vm2858, %v7127, %v8077
    %v8462 = vsel %vm2860, %v8078, %v8079
    %v8463 = vsel %vm2862, %v8461, %v8462
    %v8464 = vsel %vm2858, %v7131, %v8080
    %v8465 = vsel %vm2860, %v8081, %v8082
    %v8466 = vsel %vm2862, %v8464, %v8465
    %v8467 = vsel %vm2858, %v7135, %v8083
    %v8468 = vsel %vm2860, %v8084, %v8085
    %v8469 = vsel %vm2862, %v8467, %v8468
    %v8470 = vsel %vm2858, %v7139, %v8086
    %v8471 = vsel %vm2860, %v8087, %v8088
    %v8472 = vsel %vm2862, %v8470, %v8471
    %v8473 = vsel %vm2858, %v7143, %v8089
    %v8474 = vsel %vm2860, %v8090, %v8091
    %v8475 = vsel %vm2862, %v8473, %v8474
    %v8476 = vsel %vm2858, %v7147, %v8092
    %v8477 = vsel %vm2860, %v8093, %v8094
    %v8478 = vsel %vm2862, %v8476, %v8477
    %v8479 = vsel %vm2858, %v7151, %v8095
    %v8480 = vsel %vm2860, %v8096, %v8097
    %v8481 = vsel %vm2862, %v8479, %v8480
    %v8482 = vsel %vm2858, %v7155, %v8098
    %v8483 = vsel %vm2860, %v8099, %v8100
    %v8484 = vsel %vm2862, %v8482, %v8483
    %v8485 = vsel %vm2858, %v7159, %v8101
    %v8486 = vsel %vm2860, %v8102, %v8103
    %v8487 = vsel %vm2862, %v8485, %v8486
    %v8488 = vsel %vm2858, %v7163, %v8104
    %v8489 = vsel %vm2860, %v8105, %v8106
    %v8490 = vsel %vm2862, %v8488, %v8489
    %v8491 = vsel %vm2858, %v7167, %v8107
    %v8492 = vsel %vm2860, %v8108, %v8109
    %v8493 = vsel %vm2862, %v8491, %v8492
    %v8494 = vsel %vm2858, %v7171, %v8110
    %v8495 = vsel %vm2860, %v8111, %v8112
    %v8496 = vsel %vm2862, %v8494, %v8495
    %v8497 = vsel %vm2858, %v7175, %v8113
    %v8498 = vsel %vm2860, %v8114, %v8115
    %v8499 = vsel %vm2862, %v8497, %v8498
    %v8500 = vsel %vm2858, %v7179, %v8116
    %v8501 = vsel %vm2860, %v8117, %v8118
    %v8502 = vsel %vm2862, %v8500, %v8501
    %v8503 = vsel %vm2858, %v7183, %v8119
    %v8504 = vsel %vm2860, %v8120, %v8121
    %v8505 = vsel %vm2862, %v8503, %v8504
    %v8506 = vsel %vm2858, %v7187, %v8122
    %v8507 = vsel %vm2860, %v8123, %v8124
    %v8508 = vsel %vm2862, %v8506, %v8507
    %v8509 = vsel %vm2858, %v7191, %v8125
    %v8510 = vsel %vm2860, %v8126, %v8127
    %v8511 = vsel %vm2862, %v8509, %v8510
    %v8512 = vsel %vm2858, %v7195, %v8128
    %v8513 = vsel %vm2860, %v8129, %v8130
    %v8514 = vsel %vm2862, %v8512, %v8513
    %v8515 = vsel %vm2858, %v7199, %v8131
    %v8516 = vsel %vm2860, %v8132, %v8133
    %v8517 = vsel %vm2862, %v8515, %v8516
    %v8518 = vsel %vm2858, %v7203, %v8134
    %v8519 = vsel %vm2860, %v8135, %v8136
    %v8520 = vsel %vm2862, %v8518, %v8519
    %v8521 = vsel %vm2858, %v7207, %v8137
    %v8522 = vsel %vm2860, %v8138, %v8139
    %v8523 = vsel %vm2862, %v8521, %v8522
    %v8524 = vsel %vm2858, %v7211, %v8140
    %v8525 = vsel %vm2860, %v8141, %v8142
    %v8526 = vsel %vm2862, %v8524, %v8525
    %v8527 = vsel %vm2858, %v7215, %v8143
    %v8528 = vsel %vm2860, %v8144, %v8145
    %v8529 = vsel %vm2862, %v8527, %v8528
    %v8530 = vsel %vm2858, %v7219, %v8146
    %v8531 = vsel %vm2860, %v8147, %v8148
    %v8532 = vsel %vm2862, %v8530, %v8531
    %v8533 = vsel %vm2858, %v7223, %v8149
    %v8534 = vsel %vm2860, %v8150, %v8151
    %v8535 = vsel %vm2862, %v8533, %v8534
    %v8536 = vsel %vm2858, %v7227, %v8152
    %v8537 = vsel %vm2860, %v8153, %v8154
    %v8538 = vsel %vm2862, %v8536, %v8537
    %v8539 = vsel %vm2858, %v7231, %v8155
    %v8540 = vsel %vm2860, %v8156, %v8157
    %v8541 = vsel %vm2862, %v8539, %v8540
    %v8542 = vsel %vm2858, %v7235, %v8158
    %v8543 = vsel %vm2860, %v8159, %v8160
    %v8544 = vsel %vm2862, %v8542, %v8543
    %v8545 = vsel %vm2858, %v7239, %v8161
    %v8546 = vsel %vm2860, %v8162, %v8163
    %v8547 = vsel %vm2862, %v8545, %v8546
    %v8548 = vsel %vm2858, %v7243, %v8164
    %v8549 = vsel %vm2860, %v8165, %v8166
    %v8550 = vsel %vm2862, %v8548, %v8549
    %v8551 = vsel %vm2858, %v7247, %v8167
    %v8552 = vsel %vm2860, %v8168, %v8169
    %v8553 = vsel %vm2862, %v8551, %v8552
    %v8554 = vsel %vm2858, %v7251, %v8170
    %v8555 = vsel %vm2860, %v8171, %v8172
    %v8556 = vsel %vm2862, %v8554, %v8555
    %v8557 = vsel %vm2858, %v7255, %v8173
    %v8558 = vsel %vm2860, %v8174, %v8175
    %v8559 = vsel %vm2862, %v8557, %v8558
    %v8560 = vsel %vm2858, %v7259, %v8176
    %v8561 = vsel %vm2860, %v8177, %v8178
    %v8562 = vsel %vm2862, %v8560, %v8561
    %v8563 = vsel %vm2858, %v7263, %v8179
    %v8564 = vsel %vm2860, %v8180, %v8181
    %v8565 = vsel %vm2862, %v8563, %v8564
    %v8566 = vsel %vm2858, %v7267, %v8182
    %v8567 = vsel %vm2860, %v8183, %v8184
    %v8568 = vsel %vm2862, %v8566, %v8567
    %v8569 = vsel %vm2858, %v7271, %v8185
    %v8570 = vsel %vm2860, %v8186, %v8187
    %v8571 = vsel %vm2862, %v8569, %v8570
    %v8572 = vsel %vm2858, %v7275, %v8188
    %v8573 = vsel %vm2860, %v8189, %v8190
    %v8574 = vsel %vm2862, %v8572, %v8573
    %v8575 = vsel %vm2858, %v7279, %v8191
    %v8576 = vsel %vm2860, %v8192, %v8193
    %v8577 = vsel %vm2862, %v8575, %v8576
    %v8578 = vsel %vm2858, %v7283, %v8194
    %v8579 = vsel %vm2860, %v8195, %v8196
    %v8580 = vsel %vm2862, %v8578, %v8579
    %v8581 = vsel %vm2858, %v7287, %v8197
    %v8582 = vsel %vm2860, %v8198, %v8199
    %v8583 = vsel %vm2862, %v8581, %v8582
    %v8584 = vsel %vm2858, %v7291, %v8200
    %v8585 = vsel %vm2860, %v8201, %v8202
    %v8586 = vsel %vm2862, %v8584, %v8585
    %v8587 = vsel %vm2858, %v7295, %v8203
    %v8588 = vsel %vm2860, %v8204, %v8205
    %v8589 = vsel %vm2862, %v8587, %v8588
    %v8590 = vsel %vm2858, %v7299, %v8206
    %v8591 = vsel %vm2860, %v8207, %v8208
    %v8592 = vsel %vm2862, %v8590, %v8591
    %v8593 = vsel %vm2858, %v7303, %v8209
    %v8594 = vsel %vm2860, %v8210, %v8211
    %v8595 = vsel %vm2862, %v8593, %v8594
    %v8596 = vsel %vm2858, %v7307, %v8212
    %v8597 = vsel %vm2860, %v8213, %v8214
    %v8598 = vsel %vm2862, %v8596, %v8597
    %v8599 = vsel %vm2858, %v7311, %v8215
    %v8600 = vsel %vm2860, %v8216, %v8217
    %v8601 = vsel %vm2862, %v8599, %v8600
    %v8602 = vsel %vm2858, %v7315, %v8218
    %v8603 = vsel %vm2860, %v8219, %v8220
    %v8604 = vsel %vm2862, %v8602, %v8603
    %v8605 = vsel %vm2858, %v7319, %v8221
    %v8606 = vsel %vm2860, %v8222, %v8223
    %v8607 = vsel %vm2862, %v8605, %v8606
    %v8608 = vsel %vm2858, %v7323, %v8224
    %v8609 = vsel %vm2860, %v8225, %v8226
    %v8610 = vsel %vm2862, %v8608, %v8609
    %v8611 = vsel %vm2858, %v7327, %v8227
    %v8612 = vsel %vm2860, %v8228, %v8229
    %v8613 = vsel %vm2862, %v8611, %v8612
    %v8614 = vsel %vm2858, %v7331, %v8230
    %v8615 = vsel %vm2860, %v8231, %v8232
    %v8616 = vsel %vm2862, %v8614, %v8615
    %v8617 = vsel %vm2858, %v7335, %v8233
    %v8618 = vsel %vm2860, %v8234, %v8235
    %v8619 = vsel %vm2862, %v8617, %v8618
    %v8620 = vsel %vm2858, %v7339, %v8236
    %v8621 = vsel %vm2860, %v8237, %v8238
    %v8622 = vsel %vm2862, %v8620, %v8621
    %v8751 = vmul.f32 %v42, %v8241
    %v8752 = vmul.f32 %v43, %v8244
    %v8753 = vmul.f32 %v44, %v8247
    %v8754 = vmul.f32 %v45, %v8250
    %v8755 = vmul.f32 %v46, %v8253
    %v8756 = vmul.f32 %v47, %v8256
    %v8757 = vmul.f32 %v48, %v8259
    %v8758 = vmul.f32 %v49, %v8262
    %v8759 = vmul.f32 %v50, %v8265
    %v8760 = vmul.f32 %v51, %v8268
    %v8761 = vmul.f32 %v52, %v8271
    %v8762 = vmul.f32 %v53, %v8274
    %v8763 = vmul.f32 %v54, %v8277
    %v8764 = vmul.f32 %v55, %v8280
    %v8765 = vmul.f32 %v56, %v8283
    %v8766 = vmul.f32 %v57, %v8286
    %v8767 = vmul.f32 %v58, %v8289
    %v8768 = vmul.f32 %v59, %v8292
    %v8769 = vmul.f32 %v60, %v8295
    %v8770 = vmul.f32 %v61, %v8298
    %v8771 = vmul.f32 %v62, %v8301
    %v8772 = vmul.f32 %v63, %v8304
    %v8773 = vmul.f32 %v64, %v8307
    %v8774 = vmul.f32 %v65, %v8310
    %v8775 = vmul.f32 %v66, %v8313
    %v8776 = vmul.f32 %v67, %v8316
    %v8777 = vmul.f32 %v68, %v8319
    %v8778 = vmul.f32 %v69, %v8322
    %v8779 = vmul.f32 %v70, %v8325
    %v8780 = vmul.f32 %v71, %v8328
    %v8781 = vmul.f32 %v72, %v8331
    %v8782 = vmul.f32 %v73, %v8334
    %v8783 = vmul.f32 %v74, %v8337
    %v8784 = vmul.f32 %v75, %v8340
    %v8785 = vmul.f32 %v76, %v8343
    %v8786 = vmul.f32 %v77, %v8346
    %v8787 = vmul.f32 %v78, %v8349
    %v8788 = vmul.f32 %v79, %v8352
    %v8789 = vmul.f32 %v80, %v8355
    %v8790 = vmul.f32 %v81, %v8358
    %v8791 = vmul.f32 %v82, %v8361
    %v8792 = vmul.f32 %v83, %v8364
    %v8793 = vmul.f32 %v84, %v8367
    %v8794 = vmul.f32 %v85, %v8370
    %v8795 = vmul.f32 %v86, %v8373
    %v8796 = vmul.f32 %v87, %v8376
    %v8797 = vmul.f32 %v88, %v8379
    %v8798 = vmul.f32 %v89, %v8382
    %v8799 = vmul.f32 %v90, %v8385
    %v8800 = vmul.f32 %v91, %v8388
    %v8801 = vmul.f32 %v92, %v8391
    %v8802 = vmul.f32 %v93, %v8394
    %v8803 = vmul.f32 %v94, %v8397
    %v8804 = vmul.f32 %v95, %v8400
    %v8805 = vmul.f32 %v96, %v8403
    %v8806 = vmul.f32 %v97, %v8406
    %v8807 = vmul.f32 %v98, %v8409
    %v8808 = vmul.f32 %v99, %v8412
    %v8809 = vmul.f32 %v100, %v8415
    %v8810 = vmul.f32 %v101, %v8418
    %v8811 = vmul.f32 %v102, %v8421
    %v8812 = vmul.f32 %v103, %v8424
    %v8813 = vmul.f32 %v104, %v8427
    %v8814 = vmul.f32 %v105, %v8430
    %v8815 = vmul.f32 %v106, %v8433
    %v8816 = vmul.f32 %v107, %v8436
    %v8817 = vmul.f32 %v108, %v8439
    %v8818 = vmul.f32 %v109, %v8442
    %v8819 = vmul.f32 %v110, %v8445
    %v8820 = vmul.f32 %v111, %v8448
    %v8821 = vmul.f32 %v112, %v8451
    %v8822 = vmul.f32 %v113, %v8454
    %v8823 = vmul.f32 %v114, %v8457
    %v8824 = vmul.f32 %v115, %v8460
    %v8825 = vmul.f32 %v116, %v8463
    %v8826 = vmul.f32 %v117, %v8466
    %v8827 = vmul.f32 %v118, %v8469
    %v8828 = vmul.f32 %v119, %v8472
    %v8829 = vmul.f32 %v120, %v8475
    %v8830 = vmul.f32 %v121, %v8478
    %v8831 = vmul.f32 %v122, %v8481
    %v8832 = vmul.f32 %v123, %v8484
    %v8833 = vmul.f32 %v124, %v8487
    %v8834 = vmul.f32 %v125, %v8490
    %v8835 = vmul.f32 %v126, %v8493
    %v8836 = vmul.f32 %v127, %v8496
    %v8837 = vmul.f32 %v128, %v8499
    %v8838 = vmul.f32 %v129, %v8502
    %v8839 = vmul.f32 %v130, %v8505
    %v8840 = vmul.f32 %v131, %v8508
    %v8841 = vmul.f32 %v132, %v8511
    %v8842 = vmul.f32 %v133, %v8514
    %v8843 = vmul.f32 %v134, %v8517
    %v8844 = vmul.f32 %v135, %v8520
    %v8845 = vmul.f32 %v136, %v8523
    %v8846 = vmul.f32 %v137, %v8526
    %v8847 = vmul.f32 %v138, %v8529
    %v8848 = vmul.f32 %v139, %v8532
    %v8849 = vmul.f32 %v140, %v8535
    %v8850 = vmul.f32 %v141, %v8538
    %v8851 = vmul.f32 %v142, %v8541
    %v8852 = vmul.f32 %v143, %v8544
    %v8853 = vmul.f32 %v144, %v8547
    %v8854 = vmul.f32 %v145, %v8550
    %v8855 = vmul.f32 %v146, %v8553
    %v8856 = vmul.f32 %v147, %v8556
    %v8857 = vmul.f32 %v148, %v8559
    %v8858 = vmul.f32 %v149, %v8562
    %v8859 = vmul.f32 %v150, %v8565
    %v8860 = vmul.f32 %v151, %v8568
    %v8861 = vmul.f32 %v152, %v8571
    %v8862 = vmul.f32 %v153, %v8574
    %v8863 = vmul.f32 %v154, %v8577
    %v8864 = vmul.f32 %v155, %v8580
    %v8865 = vmul.f32 %v156, %v8583
    %v8866 = vmul.f32 %v157, %v8586
    %v8867 = vmul.f32 %v158, %v8589
    %v8868 = vmul.f32 %v159, %v8592
    %v8869 = vmul.f32 %v160, %v8595
    %v8870 = vmul.f32 %v161, %v8598
    %v8871 = vmul.f32 %v162, %v8601
    %v8872 = vmul.f32 %v163, %v8604
    %v8873 = vmul.f32 %v164, %v8607
    %v8874 = vmul.f32 %v165, %v8610
    %v8875 = vmul.f32 %v166, %v8613
    %v8876 = vmul.f32 %v167, %v8616
    %v8877 = vmul.f32 %v168, %v8619
    %v8878 = vmul.f32 %v169, %v8622
    %9007 = vst [vmem:[#allocation1] ss:$4 sm:$0xff] %v8751
    %s9008 = scalar_lea.vmem [#allocation1], 32
    %9009 = vst [vmem:[%s9008] ss:$4 sm:$0xff] %v8752
    %v9010 = vld.sshfl [vmem:[#allocation1] sm:$0xff pattern:$0x73625140]
    %v9011 = vld.sshfl [vmem:[#allocation1 + $0x8] sm:$0xff pattern:$0x73625140]
    %v9012 = vld.sshfl [vmem:[#allocation1 + $0x10] sm:$0xff pattern:$0x73625140]
    %v9013 = vld.sshfl [vmem:[#allocation1 + $0x18] sm:$0xff pattern:$0x73625140]
    %v9014 = vld.sshfl [vmem:[#allocation1 + $0x20] sm:$0xff pattern:$0x73625140]
    %v9015 = vld.sshfl [vmem:[#allocation1 + $0x28] sm:$0xff pattern:$0x73625140]
    %v9016 = vld.sshfl [vmem:[#allocation1 + $0x30] sm:$0xff pattern:$0x73625140]
    %v9017 = vld.sshfl [vmem:[#allocation1 + $0x38] sm:$0xff pattern:$0x73625140]
    %9018 = vst [vmem:[#allocation1] ss:$4 sm:$0xff] %v8753
    %9019 = vst [vmem:[%s9008] ss:$4 sm:$0xff] %v8754
    %v9020 = vld.sshfl [vmem:[#allocation1] sm:$0xff pattern:$0x73625140]
    %v9021 = vld.sshfl [vmem:[#allocation1 + $0x8] sm:$0xff pattern:$0x73625140]
    %v9022 = vld.sshfl [vmem:[#allocation1 + $0x10] sm:$0xff pattern:$0x73625140]
    %v9023 = vld.sshfl [vmem:[#allocation1 + $0x18] sm:$0xff pattern:$0x73625140]
    %v9024 = vld.sshfl [vmem:[#allocation1 + $0x20] sm:$0xff pattern:$0x73625140]
    %v9025 = vld.sshfl [vmem:[#allocation1 + $0x28] sm:$0xff pattern:$0x73625140]
    %v9026 = vld.sshfl [vmem:[#allocation1 + $0x30] sm:$0xff pattern:$0x73625140]
    %v9027 = vld.sshfl [vmem:[#allocation1 + $0x38] sm:$0xff pattern:$0x73625140]
    %9028 = vst [vmem:[#allocation1] ss:$4 sm:$0xff] %v8755
    %9029 = vst [vmem:[%s9008] ss:$4 sm:$0xff] %v8756
    %v9030 = vld.sshfl [vmem:[#allocation1] sm:$0xff pattern:$0x73625140]
    %v9031 = vld.sshfl [vmem:[#allocation1 + $0x8] sm:$0xff pattern:$0x73625140]
    %v9032 = vld.sshfl [vmem:[#allocation1 + $0x10] sm:$0xff pattern:$0x73625140]
    %v9033 = vld.sshfl [vmem:[#allocation1 + $0x18] sm:$0xff pattern:$0x73625140]
    %v9034 = vld.sshfl [vmem:[#allocation1 + $0x20] sm:$0xff pattern:$0x73625140]
    %v9035 = vld.sshfl [vmem:[#allocation1 + $0x28] sm:$0xff pattern:$0x73625140]
    %v9036 = vld.sshfl [vmem:[#allocation1 + $0x30] sm:$0xff pattern:$0x73625140]
    %v9037 = vld.sshfl [vmem:[#allocation1 + $0x38] sm:$0xff pattern:$0x73625140]
    %9038 = vst [vmem:[#allocation1] ss:$4 sm:$0xff] %v8757
    %9039 = vst [vmem:[%s9008] ss:$4 sm:$0xff] %v8758
    %v9040 = vld.sshfl [vmem:[#allocation1] sm:$0xff pattern:$0x73625140]
    %v9041 = vld.sshfl [vmem:[#allocation1 + $0x8] sm:$0xff pattern:$0x73625140]
    %v9042 = vld.sshfl [vmem:[#allocation1 + $0x10] sm:$0xff pattern:$0x73625140]
    %v9043 = vld.sshfl [vmem:[#allocation1 + $0x18] sm:$0xff pattern:$0x73625140]
    %v9044 = vld.sshfl [vmem:[#allocation1 + $0x20] sm:$0xff pattern:$0x73625140]
    %v9045 = vld.sshfl [vmem:[#allocation1 + $0x28] sm:$0xff pattern:$0x73625140]
    %v9046 = vld.sshfl [vmem:[#allocation1 + $0x30] sm:$0xff pattern:$0x73625140]
    %v9047 = vld.sshfl [vmem:[#allocation1 + $0x38] sm:$0xff pattern:$0x73625140]
    %9048 = vst [vmem:[#allocation1] ss:$4 sm:$0xff] %v8759
    %9049 = vst [vmem:[%s9008] ss:$4 sm:$0xff] %v8760
    %v9050 = vld.sshfl [vmem:[#allocation1] sm:$0xff pattern:$0x73625140]
    %v9051 = vld.sshfl [vmem:[#allocation1 + $0x8] sm:$0xff pattern:$0x73625140]
    %v9052 = vld.sshfl [vmem:[#allocation1 + $0x10] sm:$0xff pattern:$0x73625140]
    %v9053 = vld.sshfl [vmem:[#allocation1 + $0x18] sm:$0xff pattern:$0x73625140]
    %v9054 = vld.sshfl [vmem:[#allocation1 + $0x20] sm:$0xff pattern:$0x73625140]
    %v9055 = vld.sshfl [vmem:[#allocation1 + $0x28] sm:$0xff pattern:$0x73625140]
    %v9056 = vld.sshfl [vmem:[#allocation1 + $0x30] sm:$0xff pattern:$0x73625140]
    %v9057 = vld.sshfl [vmem:[#allocation1 + $0x38] sm:$0xff pattern:$0x73625140]
    %9058 = vst [vmem:[#allocation1] ss:$4 sm:$0xff] %v8761
    %9059 = vst [vmem:[%s9008] ss:$4 sm:$0xff] %v8762
    %v9060 = vld.sshfl [vmem:[#allocation1] sm:$0xff pattern:$0x73625140]
    %v9061 = vld.sshfl [vmem:[#allocation1 + $0x8] sm:$0xff pattern:$0x73625140]
    %v9062 = vld.sshfl [vmem:[#allocation1 + $0x10] sm:$0xff pattern:$0x73625140]
    %v9063 = vld.sshfl [vmem:[#allocation1 + $0x18] sm:$0xff pattern:$0x73625140]
    %v9064 = vld.sshfl [vmem:[#allocation1 + $0x20] sm:$0xff pattern:$0x73625140]
    %v9065 = vld.sshfl [vmem:[#allocation1 + $0x28] sm:$0xff pattern:$0x73625140]
    %v9066 = vld.sshfl [vmem:[#allocation1 + $0x30] sm:$0xff pattern:$0x73625140]
    %v9067 = vld.sshfl [vmem:[#allocation1 + $0x38] sm:$0xff pattern:$0x73625140]
    %9068 = vst [vmem:[#allocation1] ss:$4 sm:$0xff] %v8763
    %9069 = vst [vmem:[%s9008] ss:$4 sm:$0xff] %v8764
    %v9070 = vld.sshfl [vmem:[#allocation1] sm:$0xff pattern:$0x73625140]
    %v9071 = vld.sshfl [vmem:[#allocation1 + $0x8] sm:$0xff pattern:$0x73625140]
    %v9072 = vld.sshfl [vmem:[#allocation1 + $0x10] sm:$0xff pattern:$0x73625140]
    %v9073 = vld.sshfl [vmem:[#allocation1 + $0x18] sm:$0xff pattern:$0x73625140]
    %v9074 = vld.sshfl [vmem:[#allocation1 + $0x20] sm:$0xff pattern:$0x73625140]
    %v9075 = vld.sshfl [vmem:[#allocation1 + $0x28] sm:$0xff pattern:$0x73625140]
    %v9076 = vld.sshfl [vmem:[#allocation1 + $0x30] sm:$0xff pattern:$0x73625140]
    %v9077 = vld.sshfl [vmem:[#allocation1 + $0x38] sm:$0xff pattern:$0x73625140]
    %9078 = vst [vmem:[#allocation1] ss:$4 sm:$0xff] %v8765
    %9079 = vst [vmem:[%s9008] ss:$4 sm:$0xff] %v8766
    %v9080 = vld.sshfl [vmem:[#allocation1] sm:$0xff pattern:$0x73625140]
    %v9081 = vld.sshfl [vmem:[#allocation1 + $0x8] sm:$0xff pattern:$0x73625140]
    %v9082 = vld.sshfl [vmem:[#allocation1 + $0x10] sm:$0xff pattern:$0x73625140]
    %v9083 = vld.sshfl [vmem:[#allocation1 + $0x18] sm:$0xff pattern:$0x73625140]
    %v9084 = vld.sshfl [vmem:[#allocation1 + $0x20] sm:$0xff pattern:$0x73625140]
    %v9085 = vld.sshfl [vmem:[#allocation1 + $0x28] sm:$0xff pattern:$0x73625140]
    %v9086 = vld.sshfl [vmem:[#allocation1 + $0x30] sm:$0xff pattern:$0x73625140]
    %v9087 = vld.sshfl [vmem:[#allocation1 + $0x38] sm:$0xff pattern:$0x73625140]
    %9088 = vst [vmem:[#allocation1] ss:$4 sm:$0xff] %v8767
    %9089 = vst [vmem:[%s9008] ss:$4 sm:$0xff] %v8768
    %v9090 = vld.sshfl [vmem:[#allocation1] sm:$0xff pattern:$0x73625140]
    %v9091 = vld.sshfl [vmem:[#allocation1 + $0x8] sm:$0xff pattern:$0x73625140]
    %v9092 = vld.sshfl [vmem:[#allocation1 + $0x10] sm:$0xff pattern:$0x73625140]
    %v9093 = vld.sshfl [vmem:[#allocation1 + $0x18] sm:$0xff pattern:$0x73625140]
    %v9094 = vld.sshfl [vmem:[#allocation1 + $0x20] sm:$0xff pattern:$0x73625140]
    %v9095 = vld.sshfl [vmem:[#allocation1 + $0x28] sm:$0xff pattern:$0x73625140]
    %v9096 = vld.sshfl [vmem:[#allocation1 + $0x30] sm:$0xff pattern:$0x73625140]
    %v9097 = vld.sshfl [vmem:[#allocation1 + $0x38] sm:$0xff pattern:$0x73625140]
    %9098 = vst [vmem:[#allocation1] ss:$4 sm:$0xff] %v8769
    %9099 = vst [vmem:[%s9008] ss:$4 sm:$0xff] %v8770
    %v9100 = vld.sshfl [vmem:[#allocation1] sm:$0xff pattern:$0x73625140]
    %v9101 = vld.sshfl [vmem:[#allocation1 + $0x8] sm:$0xff pattern:$0x73625140]
    %v9102 = vld.sshfl [vmem:[#allocation1 + $0x10] sm:$0xff pattern:$0x73625140]
    %v9103 = vld.sshfl [vmem:[#allocation1 + $0x18] sm:$0xff pattern:$0x73625140]
    %v9104 = vld.sshfl [vmem:[#allocation1 + $0x20] sm:$0xff pattern:$0x73625140]
    %v9105 = vld.sshfl [vmem:[#allocation1 + $0x28] sm:$0xff pattern:$0x73625140]
    %v9106 = vld.sshfl [vmem:[#allocation1 + $0x30] sm:$0xff pattern:$0x73625140]
    %v9107 = vld.sshfl [vmem:[#allocation1 + $0x38] sm:$0xff pattern:$0x73625140]
    %9108 = vst [vmem:[#allocation1] ss:$4 sm:$0xff] %v8771
    %9109 = vst [vmem:[%s9008] ss:$4 sm:$0xff] %v8772
    %v9110 = vld.sshfl [vmem:[#allocation1] sm:$0xff pattern:$0x73625140]
    %v9111 = vld.sshfl [vmem:[#allocation1 + $0x8] sm:$0xff pattern:$0x73625140]
    %v9112 = vld.sshfl [vmem:[#allocation1 + $0x10] sm:$0xff pattern:$0x73625140]
    %v9113 = vld.sshfl [vmem:[#allocation1 + $0x18] sm:$0xff pattern:$0x73625140]
    %v9114 = vld.sshfl [vmem:[#allocation1 + $0x20] sm:$0xff pattern:$0x73625140]
    %v9115 = vld.sshfl [vmem:[#allocation1 + $0x28] sm:$0xff pattern:$0x73625140]
    %v9116 = vld.sshfl [vmem:[#allocation1 + $0x30] sm:$0xff pattern:$0x73625140]
    %v9117 = vld.sshfl [vmem:[#allocation1 + $0x38] sm:$0xff pattern:$0x73625140]
    %9118 = vst [vmem:[#allocation1] ss:$4 sm:$0xff] %v8773
    %9119 = vst [vmem:[%s9008] ss:$4 sm:$0xff] %v8774
    %v9120 = vld.sshfl [vmem:[#allocation1] sm:$0xff pattern:$0x73625140]
    %v9121 = vld.sshfl [vmem:[#allocation1 + $0x8] sm:$0xff pattern:$0x73625140]
    %v9122 = vld.sshfl [vmem:[#allocation1 + $0x10] sm:$0xff pattern:$0x73625140]
    %v9123 = vld.sshfl [vmem:[#allocation1 + $0x18] sm:$0xff pattern:$0x73625140]
    %v9124 = vld.sshfl [vmem:[#allocation1 + $0x20] sm:$0xff pattern:$0x73625140]
    %v9125 = vld.sshfl [vmem:[#allocation1 + $0x28] sm:$0xff pattern:$0x73625140]
    %v9126 = vld.sshfl [vmem:[#allocation1 + $0x30] sm:$0xff pattern:$0x73625140]
    %v9127 = vld.sshfl [vmem:[#allocation1 + $0x38] sm:$0xff pattern:$0x73625140]
    %9128 = vst [vmem:[#allocation1] ss:$4 sm:$0xff] %v8775
    %9129 = vst [vmem:[%s9008] ss:$4 sm:$0xff] %v8776
    %v9130 = vld.sshfl [vmem:[#allocation1] sm:$0xff pattern:$0x73625140]
    %v9131 = vld.sshfl [vmem:[#allocation1 + $0x8] sm:$0xff pattern:$0x73625140]
    %v9132 = vld.sshfl [vmem:[#allocation1 + $0x10] sm:$0xff pattern:$0x73625140]
    %v9133 = vld.sshfl [vmem:[#allocation1 + $0x18] sm:$0xff pattern:$0x73625140]
    %v9134 = vld.sshfl [vmem:[#allocation1 + $0x20] sm:$0xff pattern:$0x73625140]
    %v9135 = vld.sshfl [vmem:[#allocation1 + $0x28] sm:$0xff pattern:$0x73625140]
    %v9136 = vld.sshfl [vmem:[#allocation1 + $0x30] sm:$0xff pattern:$0x73625140]
    %v9137 = vld.sshfl [vmem:[#allocation1 + $0x38] sm:$0xff pattern:$0x73625140]
    %9138 = vst [vmem:[#allocation1] ss:$4 sm:$0xff] %v8777
    %9139 = vst [vmem:[%s9008] ss:$4 sm:$0xff] %v8778
    %v9140 = vld.sshfl [vmem:[#allocation1] sm:$0xff pattern:$0x73625140]
    %v9141 = vld.sshfl [vmem:[#allocation1 + $0x8] sm:$0xff pattern:$0x73625140]
    %v9142 = vld.sshfl [vmem:[#allocation1 + $0x10] sm:$0xff pattern:$0x73625140]
    %v9143 = vld.sshfl [vmem:[#allocation1 + $0x18] sm:$0xff pattern:$0x73625140]
    %v9144 = vld.sshfl [vmem:[#allocation1 + $0x20] sm:$0xff pattern:$0x73625140]
    %v9145 = vld.sshfl [vmem:[#allocation1 + $0x28] sm:$0xff pattern:$0x73625140]
    %v9146 = vld.sshfl [vmem:[#allocation1 + $0x30] sm:$0xff pattern:$0x73625140]
    %v9147 = vld.sshfl [vmem:[#allocation1 + $0x38] sm:$0xff pattern:$0x73625140]
    %9148 = vst [vmem:[#allocation1] ss:$4 sm:$0xff] %v8779
    %9149 = vst [vmem:[%s9008] ss:$4 sm:$0xff] %v8780
    %v9150 = vld.sshfl [vmem:[#allocation1] sm:$0xff pattern:$0x73625140]
    %v9151 = vld.sshfl [vmem:[#allocation1 + $0x8] sm:$0xff pattern:$0x73625140]
    %v9152 = vld.sshfl [vmem:[#allocation1 + $0x10] sm:$0xff pattern:$0x73625140]
    %v9153 = vld.sshfl [vmem:[#allocation1 + $0x18] sm:$0xff pattern:$0x73625140]
    %v9154 = vld.sshfl [vmem:[#allocation1 + $0x20] sm:$0xff pattern:$0x73625140]
    %v9155 = vld.sshfl [vmem:[#allocation1 + $0x28] sm:$0xff pattern:$0x73625140]
    %v9156 = vld.sshfl [vmem:[#allocation1 + $0x30] sm:$0xff pattern:$0x73625140]
    %v9157 = vld.sshfl [vmem:[#allocation1 + $0x38] sm:$0xff pattern:$0x73625140]
    %9158 = vst [vmem:[#allocation1] ss:$4 sm:$0xff] %v8781
    %9159 = vst [vmem:[%s9008] ss:$4 sm:$0xff] %v8782
    %v9160 = vld.sshfl [vmem:[#allocation1] sm:$0xff pattern:$0x73625140]
    %v9161 = vld.sshfl [vmem:[#allocation1 + $0x8] sm:$0xff pattern:$0x73625140]
    %v9162 = vld.sshfl [vmem:[#allocation1 + $0x10] sm:$0xff pattern:$0x73625140]
    %v9163 = vld.sshfl [vmem:[#allocation1 + $0x18] sm:$0xff pattern:$0x73625140]
    %v9164 = vld.sshfl [vmem:[#allocation1 + $0x20] sm:$0xff pattern:$0x73625140]
    %v9165 = vld.sshfl [vmem:[#allocation1 + $0x28] sm:$0xff pattern:$0x73625140]
    %v9166 = vld.sshfl [vmem:[#allocation1 + $0x30] sm:$0xff pattern:$0x73625140]
    %v9167 = vld.sshfl [vmem:[#allocation1 + $0x38] sm:$0xff pattern:$0x73625140]
    %9168 = vst [vmem:[#allocation1] ss:$4 sm:$0xff] %v8783
    %9169 = vst [vmem:[%s9008] ss:$4 sm:$0xff] %v8784
    %v9170 = vld.sshfl [vmem:[#allocation1] sm:$0xff pattern:$0x73625140]
    %v9171 = vld.sshfl [vmem:[#allocation1 + $0x8] sm:$0xff pattern:$0x73625140]
    %v9172 = vld.sshfl [vmem:[#allocation1 + $0x10] sm:$0xff pattern:$0x73625140]
    %v9173 = vld.sshfl [vmem:[#allocation1 + $0x18] sm:$0xff pattern:$0x73625140]
    %v9174 = vld.sshfl [vmem:[#allocation1 + $0x20] sm:$0xff pattern:$0x73625140]
    %v9175 = vld.sshfl [vmem:[#allocation1 + $0x28] sm:$0xff pattern:$0x73625140]
    %v9176 = vld.sshfl [vmem:[#allocation1 + $0x30] sm:$0xff pattern:$0x73625140]
    %v9177 = vld.sshfl [vmem:[#allocation1 + $0x38] sm:$0xff pattern:$0x73625140]
    %9178 = vst [vmem:[#allocation1] ss:$4 sm:$0xff] %v8785
    %9179 = vst [vmem:[%s9008] ss:$4 sm:$0xff] %v8786
    %v9180 = vld.sshfl [vmem:[#allocation1] sm:$0xff pattern:$0x73625140]
    %v9181 = vld.sshfl [vmem:[#allocation1 + $0x8] sm:$0xff pattern:$0x73625140]
    %v9182 = vld.sshfl [vmem:[#allocation1 + $0x10] sm:$0xff pattern:$0x73625140]
    %v9183 = vld.sshfl [vmem:[#allocation1 + $0x18] sm:$0xff pattern:$0x73625140]
    %v9184 = vld.sshfl [vmem:[#allocation1 + $0x20] sm:$0xff pattern:$0x73625140]
    %v9185 = vld.sshfl [vmem:[#allocation1 + $0x28] sm:$0xff pattern:$0x73625140]
    %v9186 = vld.sshfl [vmem:[#allocation1 + $0x30] sm:$0xff pattern:$0x73625140]
    %v9187 = vld.sshfl [vmem:[#allocation1 + $0x38] sm:$0xff pattern:$0x73625140]
    %9188 = vst [vmem:[#allocation1] ss:$4 sm:$0xff] %v8787
    %9189 = vst [vmem:[%s9008] ss:$4 sm:$0xff] %v8788
    %v9190 = vld.sshfl [vmem:[#allocation1] sm:$0xff pattern:$0x73625140]
    %v9191 = vld.sshfl [vmem:[#allocation1 + $0x8] sm:$0xff pattern:$0x73625140]
    %v9192 = vld.sshfl [vmem:[#allocation1 + $0x10] sm:$0xff pattern:$0x73625140]
    %v9193 = vld.sshfl [vmem:[#allocation1 + $0x18] sm:$0xff pattern:$0x73625140]
    %v9194 = vld.sshfl [vmem:[#allocation1 + $0x20] sm:$0xff pattern:$0x73625140]
    %v9195 = vld.sshfl [vmem:[#allocation1 + $0x28] sm:$0xff pattern:$0x73625140]
    %v9196 = vld.sshfl [vmem:[#allocation1 + $0x30] sm:$0xff pattern:$0x73625140]
    %v9197 = vld.sshfl [vmem:[#allocation1 + $0x38] sm:$0xff pattern:$0x73625140]
    %9198 = vst [vmem:[#allocation1] ss:$4 sm:$0xff] %v8789
    %9199 = vst [vmem:[%s9008] ss:$4 sm:$0xff] %v8790
    %v9200 = vld.sshfl [vmem:[#allocation1] sm:$0xff pattern:$0x73625140]
    %v9201 = vld.sshfl [vmem:[#allocation1 + $0x8] sm:$0xff pattern:$0x73625140]
    %v9202 = vld.sshfl [vmem:[#allocation1 + $0x10] sm:$0xff pattern:$0x73625140]
    %v9203 = vld.sshfl [vmem:[#allocation1 + $0x18] sm:$0xff pattern:$0x73625140]
    %v9204 = vld.sshfl [vmem:[#allocation1 + $0x20] sm:$0xff pattern:$0x73625140]
    %v9205 = vld.sshfl [vmem:[#allocation1 + $0x28] sm:$0xff pattern:$0x73625140]
    %v9206 = vld.sshfl [vmem:[#allocation1 + $0x30] sm:$0xff pattern:$0x73625140]
    %v9207 = vld.sshfl [vmem:[#allocation1 + $0x38] sm:$0xff pattern:$0x73625140]
    %9208 = vst [vmem:[#allocation1] ss:$4 sm:$0xff] %v8791
    %9209 = vst [vmem:[%s9008] ss:$4 sm:$0xff] %v8792
    %v9210 = vld.sshfl [vmem:[#allocation1] sm:$0xff pattern:$0x73625140]
    %v9211 = vld.sshfl [vmem:[#allocation1 + $0x8] sm:$0xff pattern:$0x73625140]
    %v9212 = vld.sshfl [vmem:[#allocation1 + $0x10] sm:$0xff pattern:$0x73625140]
    %v9213 = vld.sshfl [vmem:[#allocation1 + $0x18] sm:$0xff pattern:$0x73625140]
    %v9214 = vld.sshfl [vmem:[#allocation1 + $0x20] sm:$0xff pattern:$0x73625140]
    %v9215 = vld.sshfl [vmem:[#allocation1 + $0x28] sm:$0xff pattern:$0x73625140]
    %v9216 = vld.sshfl [vmem:[#allocation1 + $0x30] sm:$0xff pattern:$0x73625140]
    %v9217 = vld.sshfl [vmem:[#allocation1 + $0x38] sm:$0xff pattern:$0x73625140]
    %9218 = vst [vmem:[#allocation1] ss:$4 sm:$0xff] %v8793
    %9219 = vst [vmem:[%s9008] ss:$4 sm:$0xff] %v8794
    %v9220 = vld.sshfl [vmem:[#allocation1] sm:$0xff pattern:$0x73625140]
    %v9221 = vld.sshfl [vmem:[#allocation1 + $0x8] sm:$0xff pattern:$0x73625140]
    %v9222 = vld.sshfl [vmem:[#allocation1 + $0x10] sm:$0xff pattern:$0x73625140]
    %v9223 = vld.sshfl [vmem:[#allocation1 + $0x18] sm:$0xff pattern:$0x73625140]
    %v9224 = vld.sshfl [vmem:[#allocation1 + $0x20] sm:$0xff pattern:$0x73625140]
    %v9225 = vld.sshfl [vmem:[#allocation1 + $0x28] sm:$0xff pattern:$0x73625140]
    %v9226 = vld.sshfl [vmem:[#allocation1 + $0x30] sm:$0xff pattern:$0x73625140]
    %v9227 = vld.sshfl [vmem:[#allocation1 + $0x38] sm:$0xff pattern:$0x73625140]
    %9228 = vst [vmem:[#allocation1] ss:$4 sm:$0xff] %v8795
    %9229 = vst [vmem:[%s9008] ss:$4 sm:$0xff] %v8796
    %v9230 = vld.sshfl [vmem:[#allocation1] sm:$0xff pattern:$0x73625140]
    %v9231 = vld.sshfl [vmem:[#allocation1 + $0x8] sm:$0xff pattern:$0x73625140]
    %v9232 = vld.sshfl [vmem:[#allocation1 + $0x10] sm:$0xff pattern:$0x73625140]
    %v9233 = vld.sshfl [vmem:[#allocation1 + $0x18] sm:$0xff pattern:$0x73625140]
    %v9234 = vld.sshfl [vmem:[#allocation1 + $0x20] sm:$0xff pattern:$0x73625140]
    %v9235 = vld.sshfl [vmem:[#allocation1 + $0x28] sm:$0xff pattern:$0x73625140]
    %v9236 = vld.sshfl [vmem:[#allocation1 + $0x30] sm:$0xff pattern:$0x73625140]
    %v9237 = vld.sshfl [vmem:[#allocation1 + $0x38] sm:$0xff pattern:$0x73625140]
    %9238 = vst [vmem:[#allocation1] ss:$4 sm:$0xff] %v8797
    %9239 = vst [vmem:[%s9008] ss:$4 sm:$0xff] %v8798
    %v9240 = vld.sshfl [vmem:[#allocation1] sm:$0xff pattern:$0x73625140]
    %v9241 = vld.sshfl [vmem:[#allocation1 + $0x8] sm:$0xff pattern:$0x73625140]
    %v9242 = vld.sshfl [vmem:[#allocation1 + $0x10] sm:$0xff pattern:$0x73625140]
    %v9243 = vld.sshfl [vmem:[#allocation1 + $0x18] sm:$0xff pattern:$0x73625140]
    %v9244 = vld.sshfl [vmem:[#allocation1 + $0x20] sm:$0xff pattern:$0x73625140]
    %v9245 = vld.sshfl [vmem:[#allocation1 + $0x28] sm:$0xff pattern:$0x73625140]
    %v9246 = vld.sshfl [vmem:[#allocation1 + $0x30] sm:$0xff pattern:$0x73625140]
    %v9247 = vld.sshfl [vmem:[#allocation1 + $0x38] sm:$0xff pattern:$0x73625140]
    %9248 = vst [vmem:[#allocation1] ss:$4 sm:$0xff] %v8799
    %9249 = vst [vmem:[%s9008] ss:$4 sm:$0xff] %v8800
    %v9250 = vld.sshfl [vmem:[#allocation1] sm:$0xff pattern:$0x73625140]
    %v9251 = vld.sshfl [vmem:[#allocation1 + $0x8] sm:$0xff pattern:$0x73625140]
    %v9252 = vld.sshfl [vmem:[#allocation1 + $0x10] sm:$0xff pattern:$0x73625140]
    %v9253 = vld.sshfl [vmem:[#allocation1 + $0x18] sm:$0xff pattern:$0x73625140]
    %v9254 = vld.sshfl [vmem:[#allocation1 + $0x20] sm:$0xff pattern:$0x73625140]
    %v9255 = vld.sshfl [vmem:[#allocation1 + $0x28] sm:$0xff pattern:$0x73625140]
    %v9256 = vld.sshfl [vmem:[#allocation1 + $0x30] sm:$0xff pattern:$0x73625140]
    %v9257 = vld.sshfl [vmem:[#allocation1 + $0x38] sm:$0xff pattern:$0x73625140]
    %9258 = vst [vmem:[#allocation1] ss:$4 sm:$0xff] %v8801
    %9259 = vst [vmem:[%s9008] ss:$4 sm:$0xff] %v8802
    %v9260 = vld.sshfl [vmem:[#allocation1] sm:$0xff pattern:$0x73625140]
    %v9261 = vld.sshfl [vmem:[#allocation1 + $0x8] sm:$0xff pattern:$0x73625140]
    %v9262 = vld.sshfl [vmem:[#allocation1 + $0x10] sm:$0xff pattern:$0x73625140]
    %v9263 = vld.sshfl [vmem:[#allocation1 + $0x18] sm:$0xff pattern:$0x73625140]
    %v9264 = vld.sshfl [vmem:[#allocation1 + $0x20] sm:$0xff pattern:$0x73625140]
    %v9265 = vld.sshfl [vmem:[#allocation1 + $0x28] sm:$0xff pattern:$0x73625140]
    %v9266 = vld.sshfl [vmem:[#allocation1 + $0x30] sm:$0xff pattern:$0x73625140]
    %v9267 = vld.sshfl [vmem:[#allocation1 + $0x38] sm:$0xff pattern:$0x73625140]
    %9268 = vst [vmem:[#allocation1] ss:$4 sm:$0xff] %v8803
    %9269 = vst [vmem:[%s9008] ss:$4 sm:$0xff] %v8804
    %v9270 = vld.sshfl [vmem:[#allocation1] sm:$0xff pattern:$0x73625140]
    %v9271 = vld.sshfl [vmem:[#allocation1 + $0x8] sm:$0xff pattern:$0x73625140]
    %v9272 = vld.sshfl [vmem:[#allocation1 + $0x10] sm:$0xff pattern:$0x73625140]
    %v9273 = vld.sshfl [vmem:[#allocation1 + $0x18] sm:$0xff pattern:$0x73625140]
    %v9274 = vld.sshfl [vmem:[#allocation1 + $0x20] sm:$0xff pattern:$0x73625140]
    %v9275 = vld.sshfl [vmem:[#allocation1 + $0x28] sm:$0xff pattern:$0x73625140]
    %v9276 = vld.sshfl [vmem:[#allocation1 + $0x30] sm:$0xff pattern:$0x73625140]
    %v9277 = vld.sshfl [vmem:[#allocation1 + $0x38] sm:$0xff pattern:$0x73625140]
    %9278 = vst [vmem:[#allocation1] ss:$4 sm:$0xff] %v8805
    %9279 = vst [vmem:[%s9008] ss:$4 sm:$0xff] %v8806
    %v9280 = vld.sshfl [vmem:[#allocation1] sm:$0xff pattern:$0x73625140]
    %v9281 = vld.sshfl [vmem:[#allocation1 + $0x8] sm:$0xff pattern:$0x73625140]
    %v9282 = vld.sshfl [vmem:[#allocation1 + $0x10] sm:$0xff pattern:$0x73625140]
    %v9283 = vld.sshfl [vmem:[#allocation1 + $0x18] sm:$0xff pattern:$0x73625140]
    %v9284 = vld.sshfl [vmem:[#allocation1 + $0x20] sm:$0xff pattern:$0x73625140]
    %v9285 = vld.sshfl [vmem:[#allocation1 + $0x28] sm:$0xff pattern:$0x73625140]
    %v9286 = vld.sshfl [vmem:[#allocation1 + $0x30] sm:$0xff pattern:$0x73625140]
    %v9287 = vld.sshfl [vmem:[#allocation1 + $0x38] sm:$0xff pattern:$0x73625140]
    %9288 = vst [vmem:[#allocation1] ss:$4 sm:$0xff] %v8807
    %9289 = vst [vmem:[%s9008] ss:$4 sm:$0xff] %v8808
    %v9290 = vld.sshfl [vmem:[#allocation1] sm:$0xff pattern:$0x73625140]
    %v9291 = vld.sshfl [vmem:[#allocation1 + $0x8] sm:$0xff pattern:$0x73625140]
    %v9292 = vld.sshfl [vmem:[#allocation1 + $0x10] sm:$0xff pattern:$0x73625140]
    %v9293 = vld.sshfl [vmem:[#allocation1 + $0x18] sm:$0xff pattern:$0x73625140]
    %v9294 = vld.sshfl [vmem:[#allocation1 + $0x20] sm:$0xff pattern:$0x73625140]
    %v9295 = vld.sshfl [vmem:[#allocation1 + $0x28] sm:$0xff pattern:$0x73625140]
    %v9296 = vld.sshfl [vmem:[#allocation1 + $0x30] sm:$0xff pattern:$0x73625140]
    %v9297 = vld.sshfl [vmem:[#allocation1 + $0x38] sm:$0xff pattern:$0x73625140]
    %9298 = vst [vmem:[#allocation1] ss:$4 sm:$0xff] %v8809
    %9299 = vst [vmem:[%s9008] ss:$4 sm:$0xff] %v8810
    %v9300 = vld.sshfl [vmem:[#allocation1] sm:$0xff pattern:$0x73625140]
    %v9301 = vld.sshfl [vmem:[#allocation1 + $0x8] sm:$0xff pattern:$0x73625140]
    %v9302 = vld.sshfl [vmem:[#allocation1 + $0x10] sm:$0xff pattern:$0x73625140]
    %v9303 = vld.sshfl [vmem:[#allocation1 + $0x18] sm:$0xff pattern:$0x73625140]
    %v9304 = vld.sshfl [vmem:[#allocation1 + $0x20] sm:$0xff pattern:$0x73625140]
    %v9305 = vld.sshfl [vmem:[#allocation1 + $0x28] sm:$0xff pattern:$0x73625140]
    %v9306 = vld.sshfl [vmem:[#allocation1 + $0x30] sm:$0xff pattern:$0x73625140]
    %v9307 = vld.sshfl [vmem:[#allocation1 + $0x38] sm:$0xff pattern:$0x73625140]
    %9308 = vst [vmem:[#allocation1] ss:$4 sm:$0xff] %v8811
    %9309 = vst [vmem:[%s9008] ss:$4 sm:$0xff] %v8812
    %v9310 = vld.sshfl [vmem:[#allocation1] sm:$0xff pattern:$0x73625140]
    %v9311 = vld.sshfl [vmem:[#allocation1 + $0x8] sm:$0xff pattern:$0x73625140]
    %v9312 = vld.sshfl [vmem:[#allocation1 + $0x10] sm:$0xff pattern:$0x73625140]
    %v9313 = vld.sshfl [vmem:[#allocation1 + $0x18] sm:$0xff pattern:$0x73625140]
    %v9314 = vld.sshfl [vmem:[#allocation1 + $0x20] sm:$0xff pattern:$0x73625140]
    %v9315 = vld.sshfl [vmem:[#allocation1 + $0x28] sm:$0xff pattern:$0x73625140]
    %v9316 = vld.sshfl [vmem:[#allocation1 + $0x30] sm:$0xff pattern:$0x73625140]
    %v9317 = vld.sshfl [vmem:[#allocation1 + $0x38] sm:$0xff pattern:$0x73625140]
    %9318 = vst [vmem:[#allocation1] ss:$4 sm:$0xff] %v8813
    %9319 = vst [vmem:[%s9008] ss:$4 sm:$0xff] %v8814
    %v9320 = vld.sshfl [vmem:[#allocation1] sm:$0xff pattern:$0x73625140]
    %v9321 = vld.sshfl [vmem:[#allocation1 + $0x8] sm:$0xff pattern:$0x73625140]
    %v9322 = vld.sshfl [vmem:[#allocation1 + $0x10] sm:$0xff pattern:$0x73625140]
    %v9323 = vld.sshfl [vmem:[#allocation1 + $0x18] sm:$0xff pattern:$0x73625140]
    %v9324 = vld.sshfl [vmem:[#allocation1 + $0x20] sm:$0xff pattern:$0x73625140]
    %v9325 = vld.sshfl [vmem:[#allocation1 + $0x28] sm:$0xff pattern:$0x73625140]
    %v9326 = vld.sshfl [vmem:[#allocation1 + $0x30] sm:$0xff pattern:$0x73625140]
    %v9327 = vld.sshfl [vmem:[#allocation1 + $0x38] sm:$0xff pattern:$0x73625140]
    %9328 = vst [vmem:[#allocation1] ss:$4 sm:$0xff] %v8815
    %9329 = vst [vmem:[%s9008] ss:$4 sm:$0xff] %v8816
    %v9330 = vld.sshfl [vmem:[#allocation1] sm:$0xff pattern:$0x73625140]
    %v9331 = vld.sshfl [vmem:[#allocation1 + $0x8] sm:$0xff pattern:$0x73625140]
    %v9332 = vld.sshfl [vmem:[#allocation1 + $0x10] sm:$0xff pattern:$0x73625140]
    %v9333 = vld.sshfl [vmem:[#allocation1 + $0x18] sm:$0xff pattern:$0x73625140]
    %v9334 = vld.sshfl [vmem:[#allocation1 + $0x20] sm:$0xff pattern:$0x73625140]
    %v9335 = vld.sshfl [vmem:[#allocation1 + $0x28] sm:$0xff pattern:$0x73625140]
    %v9336 = vld.sshfl [vmem:[#allocation1 + $0x30] sm:$0xff pattern:$0x73625140]
    %v9337 = vld.sshfl [vmem:[#allocation1 + $0x38] sm:$0xff pattern:$0x73625140]
    %9338 = vst [vmem:[#allocation1] ss:$4 sm:$0xff] %v8817
    %9339 = vst [vmem:[%s9008] ss:$4 sm:$0xff] %v8818
    %v9340 = vld.sshfl [vmem:[#allocation1] sm:$0xff pattern:$0x73625140]
    %v9341 = vld.sshfl [vmem:[#allocation1 + $0x8] sm:$0xff pattern:$0x73625140]
    %v9342 = vld.sshfl [vmem:[#allocation1 + $0x10] sm:$0xff pattern:$0x73625140]
    %v9343 = vld.sshfl [vmem:[#allocation1 + $0x18] sm:$0xff pattern:$0x73625140]
    %v9344 = vld.sshfl [vmem:[#allocation1 + $0x20] sm:$0xff pattern:$0x73625140]
    %v9345 = vld.sshfl [vmem:[#allocation1 + $0x28] sm:$0xff pattern:$0x73625140]
    %v9346 = vld.sshfl [vmem:[#allocation1 + $0x30] sm:$0xff pattern:$0x73625140]
    %v9347 = vld.sshfl [vmem:[#allocation1 + $0x38] sm:$0xff pattern:$0x73625140]
    %9348 = vst [vmem:[#allocation1] ss:$4 sm:$0xff] %v8819
    %9349 = vst [vmem:[%s9008] ss:$4 sm:$0xff] %v8820
    %v9350 = vld.sshfl [vmem:[#allocation1] sm:$0xff pattern:$0x73625140]
    %v9351 = vld.sshfl [vmem:[#allocation1 + $0x8] sm:$0xff pattern:$0x73625140]
    %v9352 = vld.sshfl [vmem:[#allocation1 + $0x10] sm:$0xff pattern:$0x73625140]
    %v9353 = vld.sshfl [vmem:[#allocation1 + $0x18] sm:$0xff pattern:$0x73625140]
    %v9354 = vld.sshfl [vmem:[#allocation1 + $0x20] sm:$0xff pattern:$0x73625140]
    %v9355 = vld.sshfl [vmem:[#allocation1 + $0x28] sm:$0xff pattern:$0x73625140]
    %v9356 = vld.sshfl [vmem:[#allocation1 + $0x30] sm:$0xff pattern:$0x73625140]
    %v9357 = vld.sshfl [vmem:[#allocation1 + $0x38] sm:$0xff pattern:$0x73625140]
    %9358 = vst [vmem:[#allocation1] ss:$4 sm:$0xff] %v8821
    %9359 = vst [vmem:[%s9008] ss:$4 sm:$0xff] %v8822
    %v9360 = vld.sshfl [vmem:[#allocation1] sm:$0xff pattern:$0x73625140]
    %v9361 = vld.sshfl [vmem:[#allocation1 + $0x8] sm:$0xff pattern:$0x73625140]
    %v9362 = vld.sshfl [vmem:[#allocation1 + $0x10] sm:$0xff pattern:$0x73625140]
    %v9363 = vld.sshfl [vmem:[#allocation1 + $0x18] sm:$0xff pattern:$0x73625140]
    %v9364 = vld.sshfl [vmem:[#allocation1 + $0x20] sm:$0xff pattern:$0x73625140]
    %v9365 = vld.sshfl [vmem:[#allocation1 + $0x28] sm:$0xff pattern:$0x73625140]
    %v9366 = vld.sshfl [vmem:[#allocation1 + $0x30] sm:$0xff pattern:$0x73625140]
    %v9367 = vld.sshfl [vmem:[#allocation1 + $0x38] sm:$0xff pattern:$0x73625140]
    %9368 = vst [vmem:[#allocation1] ss:$4 sm:$0xff] %v8823
    %9369 = vst [vmem:[%s9008] ss:$4 sm:$0xff] %v8824
    %v9370 = vld.sshfl [vmem:[#allocation1] sm:$0xff pattern:$0x73625140]
    %v9371 = vld.sshfl [vmem:[#allocation1 + $0x8] sm:$0xff pattern:$0x73625140]
    %v9372 = vld.sshfl [vmem:[#allocation1 + $0x10] sm:$0xff pattern:$0x73625140]
    %v9373 = vld.sshfl [vmem:[#allocation1 + $0x18] sm:$0xff pattern:$0x73625140]
    %v9374 = vld.sshfl [vmem:[#allocation1 + $0x20] sm:$0xff pattern:$0x73625140]
    %v9375 = vld.sshfl [vmem:[#allocation1 + $0x28] sm:$0xff pattern:$0x73625140]
    %v9376 = vld.sshfl [vmem:[#allocation1 + $0x30] sm:$0xff pattern:$0x73625140]
    %v9377 = vld.sshfl [vmem:[#allocation1 + $0x38] sm:$0xff pattern:$0x73625140]
    %9378 = vst [vmem:[#allocation1] ss:$4 sm:$0xff] %v8825
    %9379 = vst [vmem:[%s9008] ss:$4 sm:$0xff] %v8826
    %v9380 = vld.sshfl [vmem:[#allocation1] sm:$0xff pattern:$0x73625140]
    %v9381 = vld.sshfl [vmem:[#allocation1 + $0x8] sm:$0xff pattern:$0x73625140]
    %v9382 = vld.sshfl [vmem:[#allocation1 + $0x10] sm:$0xff pattern:$0x73625140]
    %v9383 = vld.sshfl [vmem:[#allocation1 + $0x18] sm:$0xff pattern:$0x73625140]
    %v9384 = vld.sshfl [vmem:[#allocation1 + $0x20] sm:$0xff pattern:$0x73625140]
    %v9385 = vld.sshfl [vmem:[#allocation1 + $0x28] sm:$0xff pattern:$0x73625140]
    %v9386 = vld.sshfl [vmem:[#allocation1 + $0x30] sm:$0xff pattern:$0x73625140]
    %v9387 = vld.sshfl [vmem:[#allocation1 + $0x38] sm:$0xff pattern:$0x73625140]
    %9388 = vst [vmem:[#allocation1] ss:$4 sm:$0xff] %v8827
    %9389 = vst [vmem:[%s9008] ss:$4 sm:$0xff] %v8828
    %v9390 = vld.sshfl [vmem:[#allocation1] sm:$0xff pattern:$0x73625140]
    %v9391 = vld.sshfl [vmem:[#allocation1 + $0x8] sm:$0xff pattern:$0x73625140]
    %v9392 = vld.sshfl [vmem:[#allocation1 + $0x10] sm:$0xff pattern:$0x73625140]
    %v9393 = vld.sshfl [vmem:[#allocation1 + $0x18] sm:$0xff pattern:$0x73625140]
    %v9394 = vld.sshfl [vmem:[#allocation1 + $0x20] sm:$0xff pattern:$0x73625140]
    %v9395 = vld.sshfl [vmem:[#allocation1 + $0x28] sm:$0xff pattern:$0x73625140]
    %v9396 = vld.sshfl [vmem:[#allocation1 + $0x30] sm:$0xff pattern:$0x73625140]
    %v9397 = vld.sshfl [vmem:[#allocation1 + $0x38] sm:$0xff pattern:$0x73625140]
    %9398 = vst [vmem:[#allocation1] ss:$4 sm:$0xff] %v8829
    %9399 = vst [vmem:[%s9008] ss:$4 sm:$0xff] %v8830
    %v9400 = vld.sshfl [vmem:[#allocation1] sm:$0xff pattern:$0x73625140]
    %v9401 = vld.sshfl [vmem:[#allocation1 + $0x8] sm:$0xff pattern:$0x73625140]
    %v9402 = vld.sshfl [vmem:[#allocation1 + $0x10] sm:$0xff pattern:$0x73625140]
    %v9403 = vld.sshfl [vmem:[#allocation1 + $0x18] sm:$0xff pattern:$0x73625140]
    %v9404 = vld.sshfl [vmem:[#allocation1 + $0x20] sm:$0xff pattern:$0x73625140]
    %v9405 = vld.sshfl [vmem:[#allocation1 + $0x28] sm:$0xff pattern:$0x73625140]
    %v9406 = vld.sshfl [vmem:[#allocation1 + $0x30] sm:$0xff pattern:$0x73625140]
    %v9407 = vld.sshfl [vmem:[#allocation1 + $0x38] sm:$0xff pattern:$0x73625140]
    %9408 = vst [vmem:[#allocation1] ss:$4 sm:$0xff] %v8831
    %9409 = vst [vmem:[%s9008] ss:$4 sm:$0xff] %v8832
    %v9410 = vld.sshfl [vmem:[#allocation1] sm:$0xff pattern:$0x73625140]
    %v9411 = vld.sshfl [vmem:[#allocation1 + $0x8] sm:$0xff pattern:$0x73625140]
    %v9412 = vld.sshfl [vmem:[#allocation1 + $0x10] sm:$0xff pattern:$0x73625140]
    %v9413 = vld.sshfl [vmem:[#allocation1 + $0x18] sm:$0xff pattern:$0x73625140]
    %v9414 = vld.sshfl [vmem:[#allocation1 + $0x20] sm:$0xff pattern:$0x73625140]
    %v9415 = vld.sshfl [vmem:[#allocation1 + $0x28] sm:$0xff pattern:$0x73625140]
    %v9416 = vld.sshfl [vmem:[#allocation1 + $0x30] sm:$0xff pattern:$0x73625140]
    %v9417 = vld.sshfl [vmem:[#allocation1 + $0x38] sm:$0xff pattern:$0x73625140]
    %9418 = vst [vmem:[#allocation1] ss:$4 sm:$0xff] %v8833
    %9419 = vst [vmem:[%s9008] ss:$4 sm:$0xff] %v8834
    %v9420 = vld.sshfl [vmem:[#allocation1] sm:$0xff pattern:$0x73625140]
    %v9421 = vld.sshfl [vmem:[#allocation1 + $0x8] sm:$0xff pattern:$0x73625140]
    %v9422 = vld.sshfl [vmem:[#allocation1 + $0x10] sm:$0xff pattern:$0x73625140]
    %v9423 = vld.sshfl [vmem:[#allocation1 + $0x18] sm:$0xff pattern:$0x73625140]
    %v9424 = vld.sshfl [vmem:[#allocation1 + $0x20] sm:$0xff pattern:$0x73625140]
    %v9425 = vld.sshfl [vmem:[#allocation1 + $0x28] sm:$0xff pattern:$0x73625140]
    %v9426 = vld.sshfl [vmem:[#allocation1 + $0x30] sm:$0xff pattern:$0x73625140]
    %v9427 = vld.sshfl [vmem:[#allocation1 + $0x38] sm:$0xff pattern:$0x73625140]
    %9428 = vst [vmem:[#allocation1] ss:$4 sm:$0xff] %v8835
    %9429 = vst [vmem:[%s9008] ss:$4 sm:$0xff] %v8836
    %v9430 = vld.sshfl [vmem:[#allocation1] sm:$0xff pattern:$0x73625140]
    %v9431 = vld.sshfl [vmem:[#allocation1 + $0x8] sm:$0xff pattern:$0x73625140]
    %v9432 = vld.sshfl [vmem:[#allocation1 + $0x10] sm:$0xff pattern:$0x73625140]
    %v9433 = vld.sshfl [vmem:[#allocation1 + $0x18] sm:$0xff pattern:$0x73625140]
    %v9434 = vld.sshfl [vmem:[#allocation1 + $0x20] sm:$0xff pattern:$0x73625140]
    %v9435 = vld.sshfl [vmem:[#allocation1 + $0x28] sm:$0xff pattern:$0x73625140]
    %v9436 = vld.sshfl [vmem:[#allocation1 + $0x30] sm:$0xff pattern:$0x73625140]
    %v9437 = vld.sshfl [vmem:[#allocation1 + $0x38] sm:$0xff pattern:$0x73625140]
    %9438 = vst [vmem:[#allocation1] ss:$4 sm:$0xff] %v8837
    %9439 = vst [vmem:[%s9008] ss:$4 sm:$0xff] %v8838
    %v9440 = vld.sshfl [vmem:[#allocation1] sm:$0xff pattern:$0x73625140]
    %v9441 = vld.sshfl [vmem:[#allocation1 + $0x8] sm:$0xff pattern:$0x73625140]
    %v9442 = vld.sshfl [vmem:[#allocation1 + $0x10] sm:$0xff pattern:$0x73625140]
    %v9443 = vld.sshfl [vmem:[#allocation1 + $0x18] sm:$0xff pattern:$0x73625140]
    %v9444 = vld.sshfl [vmem:[#allocation1 + $0x20] sm:$0xff pattern:$0x73625140]
    %v9445 = vld.sshfl [vmem:[#allocation1 + $0x28] sm:$0xff pattern:$0x73625140]
    %v9446 = vld.sshfl [vmem:[#allocation1 + $0x30] sm:$0xff pattern:$0x73625140]
    %v9447 = vld.sshfl [vmem:[#allocation1 + $0x38] sm:$0xff pattern:$0x73625140]
    %9448 = vst [vmem:[#allocation1] ss:$4 sm:$0xff] %v8839
    %9449 = vst [vmem:[%s9008] ss:$4 sm:$0xff] %v8840
    %v9450 = vld.sshfl [vmem:[#allocation1] sm:$0xff pattern:$0x73625140]
    %v9451 = vld.sshfl [vmem:[#allocation1 + $0x8] sm:$0xff pattern:$0x73625140]
    %v9452 = vld.sshfl [vmem:[#allocation1 + $0x10] sm:$0xff pattern:$0x73625140]
    %v9453 = vld.sshfl [vmem:[#allocation1 + $0x18] sm:$0xff pattern:$0x73625140]
    %v9454 = vld.sshfl [vmem:[#allocation1 + $0x20] sm:$0xff pattern:$0x73625140]
    %v9455 = vld.sshfl [vmem:[#allocation1 + $0x28] sm:$0xff pattern:$0x73625140]
    %v9456 = vld.sshfl [vmem:[#allocation1 + $0x30] sm:$0xff pattern:$0x73625140]
    %v9457 = vld.sshfl [vmem:[#allocation1 + $0x38] sm:$0xff pattern:$0x73625140]
    %9458 = vst [vmem:[#allocation1] ss:$4 sm:$0xff] %v8841
    %9459 = vst [vmem:[%s9008] ss:$4 sm:$0xff] %v8842
    %v9460 = vld.sshfl [vmem:[#allocation1] sm:$0xff pattern:$0x73625140]
    %v9461 = vld.sshfl [vmem:[#allocation1 + $0x8] sm:$0xff pattern:$0x73625140]
    %v9462 = vld.sshfl [vmem:[#allocation1 + $0x10] sm:$0xff pattern:$0x73625140]
    %v9463 = vld.sshfl [vmem:[#allocation1 + $0x18] sm:$0xff pattern:$0x73625140]
    %v9464 = vld.sshfl [vmem:[#allocation1 + $0x20] sm:$0xff pattern:$0x73625140]
    %v9465 = vld.sshfl [vmem:[#allocation1 + $0x28] sm:$0xff pattern:$0x73625140]
    %v9466 = vld.sshfl [vmem:[#allocation1 + $0x30] sm:$0xff pattern:$0x73625140]
    %v9467 = vld.sshfl [vmem:[#allocation1 + $0x38] sm:$0xff pattern:$0x73625140]
    %9468 = vst [vmem:[#allocation1] ss:$4 sm:$0xff] %v8843
    %9469 = vst [vmem:[%s9008] ss:$4 sm:$0xff] %v8844
    %v9470 = vld.sshfl [vmem:[#allocation1] sm:$0xff pattern:$0x73625140]
    %v9471 = vld.sshfl [vmem:[#allocation1 + $0x8] sm:$0xff pattern:$0x73625140]
    %v9472 = vld.sshfl [vmem:[#allocation1 + $0x10] sm:$0xff pattern:$0x73625140]
    %v9473 = vld.sshfl [vmem:[#allocation1 + $0x18] sm:$0xff pattern:$0x73625140]
    %v9474 = vld.sshfl [vmem:[#allocation1 + $0x20] sm:$0xff pattern:$0x73625140]
    %v9475 = vld.sshfl [vmem:[#allocation1 + $0x28] sm:$0xff pattern:$0x73625140]
    %v9476 = vld.sshfl [vmem:[#allocation1 + $0x30] sm:$0xff pattern:$0x73625140]
    %v9477 = vld.sshfl [vmem:[#allocation1 + $0x38] sm:$0xff pattern:$0x73625140]
    %9478 = vst [vmem:[#allocation1] ss:$4 sm:$0xff] %v8845
    %9479 = vst [vmem:[%s9008] ss:$4 sm:$0xff] %v8846
    %v9480 = vld.sshfl [vmem:[#allocation1] sm:$0xff pattern:$0x73625140]
    %v9481 = vld.sshfl [vmem:[#allocation1 + $0x8] sm:$0xff pattern:$0x73625140]
    %v9482 = vld.sshfl [vmem:[#allocation1 + $0x10] sm:$0xff pattern:$0x73625140]
    %v9483 = vld.sshfl [vmem:[#allocation1 + $0x18] sm:$0xff pattern:$0x73625140]
    %v9484 = vld.sshfl [vmem:[#allocation1 + $0x20] sm:$0xff pattern:$0x73625140]
    %v9485 = vld.sshfl [vmem:[#allocation1 + $0x28] sm:$0xff pattern:$0x73625140]
    %v9486 = vld.sshfl [vmem:[#allocation1 + $0x30] sm:$0xff pattern:$0x73625140]
    %v9487 = vld.sshfl [vmem:[#allocation1 + $0x38] sm:$0xff pattern:$0x73625140]
    %9488 = vst [vmem:[#allocation1] ss:$4 sm:$0xff] %v8847
    %9489 = vst [vmem:[%s9008] ss:$4 sm:$0xff] %v8848
    %v9490 = vld.sshfl [vmem:[#allocation1] sm:$0xff pattern:$0x73625140]
    %v9491 = vld.sshfl [vmem:[#allocation1 + $0x8] sm:$0xff pattern:$0x73625140]
    %v9492 = vld.sshfl [vmem:[#allocation1 + $0x10] sm:$0xff pattern:$0x73625140]
    %v9493 = vld.sshfl [vmem:[#allocation1 + $0x18] sm:$0xff pattern:$0x73625140]
    %v9494 = vld.sshfl [vmem:[#allocation1 + $0x20] sm:$0xff pattern:$0x73625140]
    %v9495 = vld.sshfl [vmem:[#allocation1 + $0x28] sm:$0xff pattern:$0x73625140]
    %v9496 = vld.sshfl [vmem:[#allocation1 + $0x30] sm:$0xff pattern:$0x73625140]
    %v9497 = vld.sshfl [vmem:[#allocation1 + $0x38] sm:$0xff pattern:$0x73625140]
    %9498 = vst [vmem:[#allocation1] ss:$4 sm:$0xff] %v8849
    %9499 = vst [vmem:[%s9008] ss:$4 sm:$0xff] %v8850
    %v9500 = vld.sshfl [vmem:[#allocation1] sm:$0xff pattern:$0x73625140]
    %v9501 = vld.sshfl [vmem:[#allocation1 + $0x8] sm:$0xff pattern:$0x73625140]
    %v9502 = vld.sshfl [vmem:[#allocation1 + $0x10] sm:$0xff pattern:$0x73625140]
    %v9503 = vld.sshfl [vmem:[#allocation1 + $0x18] sm:$0xff pattern:$0x73625140]
    %v9504 = vld.sshfl [vmem:[#allocation1 + $0x20] sm:$0xff pattern:$0x73625140]
    %v9505 = vld.sshfl [vmem:[#allocation1 + $0x28] sm:$0xff pattern:$0x73625140]
    %v9506 = vld.sshfl [vmem:[#allocation1 + $0x30] sm:$0xff pattern:$0x73625140]
    %v9507 = vld.sshfl [vmem:[#allocation1 + $0x38] sm:$0xff pattern:$0x73625140]
    %9508 = vst [vmem:[#allocation1] ss:$4 sm:$0xff] %v8851
    %9509 = vst [vmem:[%s9008] ss:$4 sm:$0xff] %v8852
    %v9510 = vld.sshfl [vmem:[#allocation1] sm:$0xff pattern:$0x73625140]
    %v9511 = vld.sshfl [vmem:[#allocation1 + $0x8] sm:$0xff pattern:$0x73625140]
    %v9512 = vld.sshfl [vmem:[#allocation1 + $0x10] sm:$0xff pattern:$0x73625140]
    %v9513 = vld.sshfl [vmem:[#allocation1 + $0x18] sm:$0xff pattern:$0x73625140]
    %v9514 = vld.sshfl [vmem:[#allocation1 + $0x20] sm:$0xff pattern:$0x73625140]
    %v9515 = vld.sshfl [vmem:[#allocation1 + $0x28] sm:$0xff pattern:$0x73625140]
    %v9516 = vld.sshfl [vmem:[#allocation1 + $0x30] sm:$0xff pattern:$0x73625140]
    %v9517 = vld.sshfl [vmem:[#allocation1 + $0x38] sm:$0xff pattern:$0x73625140]
    %9518 = vst [vmem:[#allocation1] ss:$4 sm:$0xff] %v8853
    %9519 = vst [vmem:[%s9008] ss:$4 sm:$0xff] %v8854
    %v9520 = vld.sshfl [vmem:[#allocation1] sm:$0xff pattern:$0x73625140]
    %v9521 = vld.sshfl [vmem:[#allocation1 + $0x8] sm:$0xff pattern:$0x73625140]
    %v9522 = vld.sshfl [vmem:[#allocation1 + $0x10] sm:$0xff pattern:$0x73625140]
    %v9523 = vld.sshfl [vmem:[#allocation1 + $0x18] sm:$0xff pattern:$0x73625140]
    %v9524 = vld.sshfl [vmem:[#allocation1 + $0x20] sm:$0xff pattern:$0x73625140]
    %v9525 = vld.sshfl [vmem:[#allocation1 + $0x28] sm:$0xff pattern:$0x73625140]
    %v9526 = vld.sshfl [vmem:[#allocation1 + $0x30] sm:$0xff pattern:$0x73625140]
    %v9527 = vld.sshfl [vmem:[#allocation1 + $0x38] sm:$0xff pattern:$0x73625140]
    %9528 = vst [vmem:[#allocation1] ss:$4 sm:$0xff] %v8855
    %9529 = vst [vmem:[%s9008] ss:$4 sm:$0xff] %v8856
    %v9530 = vld.sshfl [vmem:[#allocation1] sm:$0xff pattern:$0x73625140]
    %v9531 = vld.sshfl [vmem:[#allocation1 + $0x8] sm:$0xff pattern:$0x73625140]
    %v9532 = vld.sshfl [vmem:[#allocation1 + $0x10] sm:$0xff pattern:$0x73625140]
    %v9533 = vld.sshfl [vmem:[#allocation1 + $0x18] sm:$0xff pattern:$0x73625140]
    %v9534 = vld.sshfl [vmem:[#allocation1 + $0x20] sm:$0xff pattern:$0x73625140]
    %v9535 = vld.sshfl [vmem:[#allocation1 + $0x28] sm:$0xff pattern:$0x73625140]
    %v9536 = vld.sshfl [vmem:[#allocation1 + $0x30] sm:$0xff pattern:$0x73625140]
    %v9537 = vld.sshfl [vmem:[#allocation1 + $0x38] sm:$0xff pattern:$0x73625140]
    %9538 = vst [vmem:[#allocation1] ss:$4 sm:$0xff] %v8857
    %9539 = vst [vmem:[%s9008] ss:$4 sm:$0xff] %v8858
    %v9540 = vld.sshfl [vmem:[#allocation1] sm:$0xff pattern:$0x73625140]
    %v9541 = vld.sshfl [vmem:[#allocation1 + $0x8] sm:$0xff pattern:$0x73625140]
    %v9542 = vld.sshfl [vmem:[#allocation1 + $0x10] sm:$0xff pattern:$0x73625140]
    %v9543 = vld.sshfl [vmem:[#allocation1 + $0x18] sm:$0xff pattern:$0x73625140]
    %v9544 = vld.sshfl [vmem:[#allocation1 + $0x20] sm:$0xff pattern:$0x73625140]
    %v9545 = vld.sshfl [vmem:[#allocation1 + $0x28] sm:$0xff pattern:$0x73625140]
    %v9546 = vld.sshfl [vmem:[#allocation1 + $0x30] sm:$0xff pattern:$0x73625140]
    %v9547 = vld.sshfl [vmem:[#allocation1 + $0x38] sm:$0xff pattern:$0x73625140]
    %9548 = vst [vmem:[#allocation1] ss:$4 sm:$0xff] %v8859
    %9549 = vst [vmem:[%s9008] ss:$4 sm:$0xff] %v8860
    %v9550 = vld.sshfl [vmem:[#allocation1] sm:$0xff pattern:$0x73625140]
    %v9551 = vld.sshfl [vmem:[#allocation1 + $0x8] sm:$0xff pattern:$0x73625140]
    %v9552 = vld.sshfl [vmem:[#allocation1 + $0x10] sm:$0xff pattern:$0x73625140]
    %v9553 = vld.sshfl [vmem:[#allocation1 + $0x18] sm:$0xff pattern:$0x73625140]
    %v9554 = vld.sshfl [vmem:[#allocation1 + $0x20] sm:$0xff pattern:$0x73625140]
    %v9555 = vld.sshfl [vmem:[#allocation1 + $0x28] sm:$0xff pattern:$0x73625140]
    %v9556 = vld.sshfl [vmem:[#allocation1 + $0x30] sm:$0xff pattern:$0x73625140]
    %v9557 = vld.sshfl [vmem:[#allocation1 + $0x38] sm:$0xff pattern:$0x73625140]
    %9558 = vst [vmem:[#allocation1] ss:$4 sm:$0xff] %v8861
    %9559 = vst [vmem:[%s9008] ss:$4 sm:$0xff] %v8862
    %v9560 = vld.sshfl [vmem:[#allocation1] sm:$0xff pattern:$0x73625140]
    %v9561 = vld.sshfl [vmem:[#allocation1 + $0x8] sm:$0xff pattern:$0x73625140]
    %v9562 = vld.sshfl [vmem:[#allocation1 + $0x10] sm:$0xff pattern:$0x73625140]
    %v9563 = vld.sshfl [vmem:[#allocation1 + $0x18] sm:$0xff pattern:$0x73625140]
    %v9564 = vld.sshfl [vmem:[#allocation1 + $0x20] sm:$0xff pattern:$0x73625140]
    %v9565 = vld.sshfl [vmem:[#allocation1 + $0x28] sm:$0xff pattern:$0x73625140]
    %v9566 = vld.sshfl [vmem:[#allocation1 + $0x30] sm:$0xff pattern:$0x73625140]
    %v9567 = vld.sshfl [vmem:[#allocation1 + $0x38] sm:$0xff pattern:$0x73625140]
    %9568 = vst [vmem:[#allocation1] ss:$4 sm:$0xff] %v8863
    %9569 = vst [vmem:[%s9008] ss:$4 sm:$0xff] %v8864
    %v9570 = vld.sshfl [vmem:[#allocation1] sm:$0xff pattern:$0x73625140]
    %v9571 = vld.sshfl [vmem:[#allocation1 + $0x8] sm:$0xff pattern:$0x73625140]
    %v9572 = vld.sshfl [vmem:[#allocation1 + $0x10] sm:$0xff pattern:$0x73625140]
    %v9573 = vld.sshfl [vmem:[#allocation1 + $0x18] sm:$0xff pattern:$0x73625140]
    %v9574 = vld.sshfl [vmem:[#allocation1 + $0x20] sm:$0xff pattern:$0x73625140]
    %v9575 = vld.sshfl [vmem:[#allocation1 + $0x28] sm:$0xff pattern:$0x73625140]
    %v9576 = vld.sshfl [vmem:[#allocation1 + $0x30] sm:$0xff pattern:$0x73625140]
    %v9577 = vld.sshfl [vmem:[#allocation1 + $0x38] sm:$0xff pattern:$0x73625140]
    %9578 = vst [vmem:[#allocation1] ss:$4 sm:$0xff] %v8865
    %9579 = vst [vmem:[%s9008] ss:$4 sm:$0xff] %v8866
    %v9580 = vld.sshfl [vmem:[#allocation1] sm:$0xff pattern:$0x73625140]
    %v9581 = vld.sshfl [vmem:[#allocation1 + $0x8] sm:$0xff pattern:$0x73625140]
    %v9582 = vld.sshfl [vmem:[#allocation1 + $0x10] sm:$0xff pattern:$0x73625140]
    %v9583 = vld.sshfl [vmem:[#allocation1 + $0x18] sm:$0xff pattern:$0x73625140]
    %v9584 = vld.sshfl [vmem:[#allocation1 + $0x20] sm:$0xff pattern:$0x73625140]
    %v9585 = vld.sshfl [vmem:[#allocation1 + $0x28] sm:$0xff pattern:$0x73625140]
    %v9586 = vld.sshfl [vmem:[#allocation1 + $0x30] sm:$0xff pattern:$0x73625140]
    %v9587 = vld.sshfl [vmem:[#allocation1 + $0x38] sm:$0xff pattern:$0x73625140]
    %9588 = vst [vmem:[#allocation1] ss:$4 sm:$0xff] %v8867
    %9589 = vst [vmem:[%s9008] ss:$4 sm:$0xff] %v8868
    %v9590 = vld.sshfl [vmem:[#allocation1] sm:$0xff pattern:$0x73625140]
    %v9591 = vld.sshfl [vmem:[#allocation1 + $0x8] sm:$0xff pattern:$0x73625140]
    %v9592 = vld.sshfl [vmem:[#allocation1 + $0x10] sm:$0xff pattern:$0x73625140]
    %v9593 = vld.sshfl [vmem:[#allocation1 + $0x18] sm:$0xff pattern:$0x73625140]
    %v9594 = vld.sshfl [vmem:[#allocation1 + $0x20] sm:$0xff pattern:$0x73625140]
    %v9595 = vld.sshfl [vmem:[#allocation1 + $0x28] sm:$0xff pattern:$0x73625140]
    %v9596 = vld.sshfl [vmem:[#allocation1 + $0x30] sm:$0xff pattern:$0x73625140]
    %v9597 = vld.sshfl [vmem:[#allocation1 + $0x38] sm:$0xff pattern:$0x73625140]
    %9598 = vst [vmem:[#allocation1] ss:$4 sm:$0xff] %v8869
    %9599 = vst [vmem:[%s9008] ss:$4 sm:$0xff] %v8870
    %v9600 = vld.sshfl [vmem:[#allocation1] sm:$0xff pattern:$0x73625140]
    %v9601 = vld.sshfl [vmem:[#allocation1 + $0x8] sm:$0xff pattern:$0x73625140]
    %v9602 = vld.sshfl [vmem:[#allocation1 + $0x10] sm:$0xff pattern:$0x73625140]
    %v9603 = vld.sshfl [vmem:[#allocation1 + $0x18] sm:$0xff pattern:$0x73625140]
    %v9604 = vld.sshfl [vmem:[#allocation1 + $0x20] sm:$0xff pattern:$0x73625140]
    %v9605 = vld.sshfl [vmem:[#allocation1 + $0x28] sm:$0xff pattern:$0x73625140]
    %v9606 = vld.sshfl [vmem:[#allocation1 + $0x30] sm:$0xff pattern:$0x73625140]
    %v9607 = vld.sshfl [vmem:[#allocation1 + $0x38] sm:$0xff pattern:$0x73625140]
    %9608 = vst [vmem:[#allocation1] ss:$4 sm:$0xff] %v8871
    %9609 = vst [vmem:[%s9008] ss:$4 sm:$0xff] %v8872
    %v9610 = vld.sshfl [vmem:[#allocation1] sm:$0xff pattern:$0x73625140]
    %v9611 = vld.sshfl [vmem:[#allocation1 + $0x8] sm:$0xff pattern:$0x73625140]
    %v9612 = vld.sshfl [vmem:[#allocation1 + $0x10] sm:$0xff pattern:$0x73625140]
    %v9613 = vld.sshfl [vmem:[#allocation1 + $0x18] sm:$0xff pattern:$0x73625140]
    %v9614 = vld.sshfl [vmem:[#allocation1 + $0x20] sm:$0xff pattern:$0x73625140]
    %v9615 = vld.sshfl [vmem:[#allocation1 + $0x28] sm:$0xff pattern:$0x73625140]
    %v9616 = vld.sshfl [vmem:[#allocation1 + $0x30] sm:$0xff pattern:$0x73625140]
    %v9617 = vld.sshfl [vmem:[#allocation1 + $0x38] sm:$0xff pattern:$0x73625140]
    %9618 = vst [vmem:[#allocation1] ss:$4 sm:$0xff] %v8873
    %9619 = vst [vmem:[%s9008] ss:$4 sm:$0xff] %v8874
    %v9620 = vld.sshfl [vmem:[#allocation1] sm:$0xff pattern:$0x73625140]
    %v9621 = vld.sshfl [vmem:[#allocation1 + $0x8] sm:$0xff pattern:$0x73625140]
    %v9622 = vld.sshfl [vmem:[#allocation1 + $0x10] sm:$0xff pattern:$0x73625140]
    %v9623 = vld.sshfl [vmem:[#allocation1 + $0x18] sm:$0xff pattern:$0x73625140]
    %v9624 = vld.sshfl [vmem:[#allocation1 + $0x20] sm:$0xff pattern:$0x73625140]
    %v9625 = vld.sshfl [vmem:[#allocation1 + $0x28] sm:$0xff pattern:$0x73625140]
    %v9626 = vld.sshfl [vmem:[#allocation1 + $0x30] sm:$0xff pattern:$0x73625140]
    %v9627 = vld.sshfl [vmem:[#allocation1 + $0x38] sm:$0xff pattern:$0x73625140]
    %9628 = vst [vmem:[#allocation1] ss:$4 sm:$0xff] %v8875
    %9629 = vst [vmem:[%s9008] ss:$4 sm:$0xff] %v8876
    %v9630 = vld.sshfl [vmem:[#allocation1] sm:$0xff pattern:$0x73625140]
    %v9631 = vld.sshfl [vmem:[#allocation1 + $0x8] sm:$0xff pattern:$0x73625140]
    %v9632 = vld.sshfl [vmem:[#allocation1 + $0x10] sm:$0xff pattern:$0x73625140]
    %v9633 = vld.sshfl [vmem:[#allocation1 + $0x18] sm:$0xff pattern:$0x73625140]
    %v9634 = vld.sshfl [vmem:[#allocation1 + $0x20] sm:$0xff pattern:$0x73625140]
    %v9635 = vld.sshfl [vmem:[#allocation1 + $0x28] sm:$0xff pattern:$0x73625140]
    %v9636 = vld.sshfl [vmem:[#allocation1 + $0x30] sm:$0xff pattern:$0x73625140]
    %v9637 = vld.sshfl [vmem:[#allocation1 + $0x38] sm:$0xff pattern:$0x73625140]
    %9638 = vst [vmem:[#allocation1] ss:$4 sm:$0xff] %v8877
    %9639 = vst [vmem:[%s9008] ss:$4 sm:$0xff] %v8878
    %v9640 = vld.sshfl [vmem:[#allocation1] sm:$0xff pattern:$0x73625140]
    %v9641 = vld.sshfl [vmem:[#allocation1 + $0x8] sm:$0xff pattern:$0x73625140]
    %v9642 = vld.sshfl [vmem:[#allocation1 + $0x10] sm:$0xff pattern:$0x73625140]
    %v9643 = vld.sshfl [vmem:[#allocation1 + $0x18] sm:$0xff pattern:$0x73625140]
    %v9644 = vld.sshfl [vmem:[#allocation1 + $0x20] sm:$0xff pattern:$0x73625140]
    %v9645 = vld.sshfl [vmem:[#allocation1 + $0x28] sm:$0xff pattern:$0x73625140]
    %v9646 = vld.sshfl [vmem:[#allocation1 + $0x30] sm:$0xff pattern:$0x73625140]
    %v9647 = vld.sshfl [vmem:[#allocation1 + $0x38] sm:$0xff pattern:$0x73625140]
    %v10160 = vsel %vm2858, %v9010, 0.0
    %v10161 = vsel %vm2858, %v9011, 0.0
    %v10162 = vadd.f32 %v10160, %v10161
    %v10163 = vsel %vm2858, %v9012, 0.0
    %v10164 = vadd.f32 %v10162, %v10163
    %v10165 = vsel %vm2858, %v9013, 0.0
    %v10166 = vadd.f32 %v10164, %v10165
    %v10167 = vsel %vm2858, %v9014, 0.0
    %v10168 = vadd.f32 %v10166, %v10167
    %v10169 = vsel %vm2858, %v9015, 0.0
    %v10170 = vadd.f32 %v10168, %v10169
    %v10171 = vsel %vm2858, %v9016, 0.0
    %v10172 = vadd.f32 %v10170, %v10171
    %v10173 = vsel %vm2858, %v9017, 0.0
    %v10174 = vadd.f32 %v10172, %v10173
    %v10175 = vsel %vm2858, %v9020, 0.0
    %v10176 = vadd.f32 %v10174, %v10175
    %v10177 = vsel %vm2858, %v9021, 0.0
    %v10178 = vadd.f32 %v10176, %v10177
    %v10179 = vsel %vm2858, %v9022, 0.0
    %v10180 = vadd.f32 %v10178, %v10179
    %v10181 = vsel %vm2858, %v9023, 0.0
    %v10182 = vadd.f32 %v10180, %v10181
    %v10183 = vsel %vm2858, %v9024, 0.0
    %v10184 = vadd.f32 %v10182, %v10183
    %v10185 = vsel %vm2858, %v9025, 0.0
    %v10186 = vadd.f32 %v10184, %v10185
    %v10187 = vsel %vm2858, %v9026, 0.0
    %v10188 = vadd.f32 %v10186, %v10187
    %v10189 = vsel %vm2858, %v9027, 0.0
    %v10190 = vadd.f32 %v10188, %v10189
    %v10191 = vsel %vm2858, %v9030, 0.0
    %v10192 = vadd.f32 %v10190, %v10191
    %v10193 = vsel %vm2858, %v9031, 0.0
    %v10194 = vadd.f32 %v10192, %v10193
    %v10195 = vsel %vm2858, %v9032, 0.0
    %v10196 = vadd.f32 %v10194, %v10195
    %v10197 = vsel %vm2858, %v9033, 0.0
    %v10198 = vadd.f32 %v10196, %v10197
    %v10199 = vsel %vm2858, %v9034, 0.0
    %v10200 = vadd.f32 %v10198, %v10199
    %v10201 = vsel %vm2858, %v9035, 0.0
    %v10202 = vadd.f32 %v10200, %v10201
    %v10203 = vsel %vm2858, %v9036, 0.0
    %v10204 = vadd.f32 %v10202, %v10203
    %v10205 = vsel %vm2858, %v9037, 0.0
    %v10206 = vadd.f32 %v10204, %v10205
    %v10207 = vsel %vm2858, %v9040, 0.0
    %v10208 = vadd.f32 %v10206, %v10207
    %v10209 = vsel %vm2858, %v9041, 0.0
    %v10210 = vadd.f32 %v10208, %v10209
    %v10211 = vsel %vm2858, %v9042, 0.0
    %v10212 = vadd.f32 %v10210, %v10211
    %v10213 = vsel %vm2858, %v9043, 0.0
    %v10214 = vadd.f32 %v10212, %v10213
    %v10215 = vsel %vm2858, %v9044, 0.0
    %v10216 = vadd.f32 %v10214, %v10215
    %v10217 = vsel %vm2858, %v9045, 0.0
    %v10218 = vadd.f32 %v10216, %v10217
    %v10219 = vsel %vm2858, %v9046, 0.0
    %v10220 = vadd.f32 %v10218, %v10219
    %v10221 = vsel %vm2858, %v9047, 0.0
    %v10222 = vadd.f32 %v10220, %v10221
    %v10223 = vsel %vm2858, %v9050, 0.0
    %v10224 = vadd.f32 %v10222, %v10223
    %v10225 = vsel %vm2858, %v9051, 0.0
    %v10226 = vadd.f32 %v10224, %v10225
    %v10227 = vsel %vm2858, %v9052, 0.0
    %v10228 = vadd.f32 %v10226, %v10227
    %v10229 = vsel %vm2858, %v9053, 0.0
    %v10230 = vadd.f32 %v10228, %v10229
    %v10231 = vsel %vm2858, %v9054, 0.0
    %v10232 = vadd.f32 %v10230, %v10231
    %v10233 = vsel %vm2858, %v9055, 0.0
    %v10234 = vadd.f32 %v10232, %v10233
    %v10235 = vsel %vm2858, %v9056, 0.0
    %v10236 = vadd.f32 %v10234, %v10235
    %v10237 = vsel %vm2858, %v9057, 0.0
    %v10238 = vadd.f32 %v10236, %v10237
    %v10239 = vsel %vm2858, %v9060, 0.0
    %v10240 = vadd.f32 %v10238, %v10239
    %v10241 = vsel %vm2858, %v9061, 0.0
    %v10242 = vadd.f32 %v10240, %v10241
    %v10243 = vsel %vm2858, %v9062, 0.0
    %v10244 = vadd.f32 %v10242, %v10243
    %v10245 = vsel %vm2858, %v9063, 0.0
    %v10246 = vadd.f32 %v10244, %v10245
    %v10247 = vsel %vm2858, %v9064, 0.0
    %v10248 = vadd.f32 %v10246, %v10247
    %v10249 = vsel %vm2858, %v9065, 0.0
    %v10250 = vadd.f32 %v10248, %v10249
    %v10251 = vsel %vm2858, %v9066, 0.0
    %v10252 = vadd.f32 %v10250, %v10251
    %v10253 = vsel %vm2858, %v9067, 0.0
    %v10254 = vadd.f32 %v10252, %v10253
    %v10255 = vsel %vm2858, %v9070, 0.0
    %v10256 = vadd.f32 %v10254, %v10255
    %v10257 = vsel %vm2858, %v9071, 0.0
    %v10258 = vadd.f32 %v10256, %v10257
    %v10259 = vsel %vm2858, %v9072, 0.0
    %v10260 = vadd.f32 %v10258, %v10259
    %v10261 = vsel %vm2858, %v9073, 0.0
    %v10262 = vadd.f32 %v10260, %v10261
    %v10263 = vsel %vm2858, %v9074, 0.0
    %v10264 = vadd.f32 %v10262, %v10263
    %v10265 = vsel %vm2858, %v9075, 0.0
    %v10266 = vadd.f32 %v10264, %v10265
    %v10267 = vsel %vm2858, %v9076, 0.0
    %v10268 = vadd.f32 %v10266, %v10267
    %v10269 = vsel %vm2858, %v9077, 0.0
    %v10270 = vadd.f32 %v10268, %v10269
    %v10271 = vsel %vm2858, %v9080, 0.0
    %v10272 = vadd.f32 %v10270, %v10271
    %v10273 = vsel %vm2858, %v9081, 0.0
    %v10274 = vadd.f32 %v10272, %v10273
    %v10275 = vsel %vm2858, %v9082, 0.0
    %v10276 = vadd.f32 %v10274, %v10275
    %v10277 = vsel %vm2858, %v9083, 0.0
    %v10278 = vadd.f32 %v10276, %v10277
    %v10279 = vsel %vm2858, %v9084, 0.0
    %v10280 = vadd.f32 %v10278, %v10279
    %v10281 = vsel %vm2858, %v9085, 0.0
    %v10282 = vadd.f32 %v10280, %v10281
    %v10283 = vsel %vm2858, %v9086, 0.0
    %v10284 = vadd.f32 %v10282, %v10283
    %v10285 = vsel %vm2858, %v9087, 0.0
    %v10286 = vadd.f32 %v10284, %v10285
    %v10287 = vsel %vm2858, %v9090, 0.0
    %v10288 = vadd.f32 %v10286, %v10287
    %v10289 = vsel %vm2858, %v9091, 0.0
    %v10290 = vadd.f32 %v10288, %v10289
    %v10291 = vsel %vm2858, %v9092, 0.0
    %v10292 = vadd.f32 %v10290, %v10291
    %v10293 = vsel %vm2858, %v9093, 0.0
    %v10294 = vadd.f32 %v10292, %v10293
    %v10295 = vsel %vm2858, %v9094, 0.0
    %v10296 = vadd.f32 %v10294, %v10295
    %v10297 = vsel %vm2858, %v9095, 0.0
    %v10298 = vadd.f32 %v10296, %v10297
    %v10299 = vsel %vm2858, %v9096, 0.0
    %v10300 = vadd.f32 %v10298, %v10299
    %v10301 = vsel %vm2858, %v9097, 0.0
    %v10302 = vadd.f32 %v10300, %v10301
    %v10303 = vsel %vm2858, %v9100, 0.0
    %v10304 = vadd.f32 %v10302, %v10303
    %v10305 = vsel %vm2858, %v9101, 0.0
    %v10306 = vadd.f32 %v10304, %v10305
    %v10307 = vsel %vm2858, %v9102, 0.0
    %v10308 = vadd.f32 %v10306, %v10307
    %v10309 = vsel %vm2858, %v9103, 0.0
    %v10310 = vadd.f32 %v10308, %v10309
    %v10311 = vsel %vm2858, %v9104, 0.0
    %v10312 = vadd.f32 %v10310, %v10311
    %v10313 = vsel %vm2858, %v9105, 0.0
    %v10314 = vadd.f32 %v10312, %v10313
    %v10315 = vsel %vm2858, %v9106, 0.0
    %v10316 = vadd.f32 %v10314, %v10315
    %v10317 = vsel %vm2858, %v9107, 0.0
    %v10318 = vadd.f32 %v10316, %v10317
    %v10319 = vsel %vm2858, %v9110, 0.0
    %v10320 = vadd.f32 %v10318, %v10319
    %v10321 = vsel %vm2858, %v9111, 0.0
    %v10322 = vadd.f32 %v10320, %v10321
    %v10323 = vsel %vm2858, %v9112, 0.0
    %v10324 = vadd.f32 %v10322, %v10323
    %v10325 = vsel %vm2858, %v9113, 0.0
    %v10326 = vadd.f32 %v10324, %v10325
    %v10327 = vsel %vm2858, %v9114, 0.0
    %v10328 = vadd.f32 %v10326, %v10327
    %v10329 = vsel %vm2858, %v9115, 0.0
    %v10330 = vadd.f32 %v10328, %v10329
    %v10331 = vsel %vm2858, %v9116, 0.0
    %v10332 = vadd.f32 %v10330, %v10331
    %v10333 = vsel %vm2858, %v9117, 0.0
    %v10334 = vadd.f32 %v10332, %v10333
    %v10335 = vsel %vm2858, %v9120, 0.0
    %v10336 = vadd.f32 %v10334, %v10335
    %v10337 = vsel %vm2858, %v9121, 0.0
    %v10338 = vadd.f32 %v10336, %v10337
    %v10339 = vsel %vm2858, %v9122, 0.0
    %v10340 = vadd.f32 %v10338, %v10339
    %v10341 = vsel %vm2858, %v9123, 0.0
    %v10342 = vadd.f32 %v10340, %v10341
    %v10343 = vsel %vm2858, %v9124, 0.0
    %v10344 = vadd.f32 %v10342, %v10343
    %v10345 = vsel %vm2858, %v9125, 0.0
    %v10346 = vadd.f32 %v10344, %v10345
    %v10347 = vsel %vm2858, %v9126, 0.0
    %v10348 = vadd.f32 %v10346, %v10347
    %v10349 = vsel %vm2858, %v9127, 0.0
    %v10350 = vadd.f32 %v10348, %v10349
    %v10351 = vsel %vm2858, %v9130, 0.0
    %v10352 = vadd.f32 %v10350, %v10351
    %v10353 = vsel %vm2858, %v9131, 0.0
    %v10354 = vadd.f32 %v10352, %v10353
    %v10355 = vsel %vm2858, %v9132, 0.0
    %v10356 = vadd.f32 %v10354, %v10355
    %v10357 = vsel %vm2858, %v9133, 0.0
    %v10358 = vadd.f32 %v10356, %v10357
    %v10359 = vsel %vm2858, %v9134, 0.0
    %v10360 = vadd.f32 %v10358, %v10359
    %v10361 = vsel %vm2858, %v9135, 0.0
    %v10362 = vadd.f32 %v10360, %v10361
    %v10363 = vsel %vm2858, %v9136, 0.0
    %v10364 = vadd.f32 %v10362, %v10363
    %v10365 = vsel %vm2858, %v9137, 0.0
    %v10366 = vadd.f32 %v10364, %v10365
    %v10367 = vsel %vm2858, %v9140, 0.0
    %v10368 = vadd.f32 %v10366, %v10367
    %v10369 = vsel %vm2858, %v9141, 0.0
    %v10370 = vadd.f32 %v10368, %v10369
    %v10371 = vsel %vm2858, %v9142, 0.0
    %v10372 = vadd.f32 %v10370, %v10371
    %v10373 = vsel %vm2858, %v9143, 0.0
    %v10374 = vadd.f32 %v10372, %v10373
    %v10375 = vsel %vm2858, %v9144, 0.0
    %v10376 = vadd.f32 %v10374, %v10375
    %v10377 = vsel %vm2858, %v9145, 0.0
    %v10378 = vadd.f32 %v10376, %v10377
    %v10379 = vsel %vm2858, %v9146, 0.0
    %v10380 = vadd.f32 %v10378, %v10379
    %v10381 = vsel %vm2858, %v9147, 0.0
    %v10382 = vadd.f32 %v10380, %v10381
    %v10383 = vsel %vm2858, %v9150, 0.0
    %v10384 = vadd.f32 %v10382, %v10383
    %v10385 = vsel %vm2858, %v9151, 0.0
    %v10386 = vadd.f32 %v10384, %v10385
    %v10387 = vsel %vm2858, %v9152, 0.0
    %v10388 = vadd.f32 %v10386, %v10387
    %v10389 = vsel %vm2858, %v9153, 0.0
    %v10390 = vadd.f32 %v10388, %v10389
    %v10391 = vsel %vm2858, %v9154, 0.0
    %v10392 = vadd.f32 %v10390, %v10391
    %v10393 = vsel %vm2858, %v9155, 0.0
    %v10394 = vadd.f32 %v10392, %v10393
    %v10395 = vsel %vm2858, %v9156, 0.0
    %v10396 = vadd.f32 %v10394, %v10395
    %v10397 = vsel %vm2858, %v9157, 0.0
    %v10398 = vadd.f32 %v10396, %v10397
    %v10399 = vsel %vm2858, %v9160, 0.0
    %v10400 = vadd.f32 %v10398, %v10399
    %v10401 = vsel %vm2858, %v9161, 0.0
    %v10402 = vadd.f32 %v10400, %v10401
    %v10403 = vsel %vm2858, %v9162, 0.0
    %v10404 = vadd.f32 %v10402, %v10403
    %v10405 = vsel %vm2858, %v9163, 0.0
    %v10406 = vadd.f32 %v10404, %v10405
    %v10407 = vsel %vm2858, %v9164, 0.0
    %v10408 = vadd.f32 %v10406, %v10407
    %v10409 = vsel %vm2858, %v9165, 0.0
    %v10410 = vadd.f32 %v10408, %v10409
    %v10411 = vsel %vm2858, %v9166, 0.0
    %v10412 = vadd.f32 %v10410, %v10411
    %v10413 = vsel %vm2858, %v9167, 0.0
    %v10414 = vadd.f32 %v10412, %v10413
    %v10415 = vsel %vm2858, %v9170, 0.0
    %v10416 = vadd.f32 %v10414, %v10415
    %v10417 = vsel %vm2858, %v9171, 0.0
    %v10418 = vadd.f32 %v10416, %v10417
    %v10419 = vsel %vm2858, %v9172, 0.0
    %v10420 = vadd.f32 %v10418, %v10419
    %v10421 = vsel %vm2858, %v9173, 0.0
    %v10422 = vadd.f32 %v10420, %v10421
    %v10423 = vsel %vm2858, %v9174, 0.0
    %v10424 = vadd.f32 %v10422, %v10423
    %v10425 = vsel %vm2858, %v9175, 0.0
    %v10426 = vadd.f32 %v10424, %v10425
    %v10427 = vsel %vm2858, %v9176, 0.0
    %v10428 = vadd.f32 %v10426, %v10427
    %v10429 = vsel %vm2858, %v9177, 0.0
    %v10430 = vadd.f32 %v10428, %v10429
    %v10431 = vsel %vm2858, %v9180, 0.0
    %v10432 = vadd.f32 %v10430, %v10431
    %v10433 = vsel %vm2858, %v9181, 0.0
    %v10434 = vadd.f32 %v10432, %v10433
    %v10435 = vsel %vm2858, %v9182, 0.0
    %v10436 = vadd.f32 %v10434, %v10435
    %v10437 = vsel %vm2858, %v9183, 0.0
    %v10438 = vadd.f32 %v10436, %v10437
    %v10439 = vsel %vm2858, %v9184, 0.0
    %v10440 = vadd.f32 %v10438, %v10439
    %v10441 = vsel %vm2858, %v9185, 0.0
    %v10442 = vadd.f32 %v10440, %v10441
    %v10443 = vsel %vm2858, %v9186, 0.0
    %v10444 = vadd.f32 %v10442, %v10443
    %v10445 = vsel %vm2858, %v9187, 0.0
    %v10446 = vadd.f32 %v10444, %v10445
    %v10447 = vsel %vm2858, %v9190, 0.0
    %v10448 = vadd.f32 %v10446, %v10447
    %v10449 = vsel %vm2858, %v9191, 0.0
    %v10450 = vadd.f32 %v10448, %v10449
    %v10451 = vsel %vm2858, %v9192, 0.0
    %v10452 = vadd.f32 %v10450, %v10451
    %v10453 = vsel %vm2858, %v9193, 0.0
    %v10454 = vadd.f32 %v10452, %v10453
    %v10455 = vsel %vm2858, %v9194, 0.0
    %v10456 = vadd.f32 %v10454, %v10455
    %v10457 = vsel %vm2858, %v9195, 0.0
    %v10458 = vadd.f32 %v10456, %v10457
    %v10459 = vsel %vm2858, %v9196, 0.0
    %v10460 = vadd.f32 %v10458, %v10459
    %v10461 = vsel %vm2858, %v9197, 0.0
    %v10462 = vadd.f32 %v10460, %v10461
    %v10463 = vsel %vm2858, %v9200, 0.0
    %v10464 = vadd.f32 %v10462, %v10463
    %v10465 = vsel %vm2858, %v9201, 0.0
    %v10466 = vadd.f32 %v10464, %v10465
    %v10467 = vsel %vm2858, %v9202, 0.0
    %v10468 = vadd.f32 %v10466, %v10467
    %v10469 = vsel %vm2858, %v9203, 0.0
    %v10470 = vadd.f32 %v10468, %v10469
    %v10471 = vsel %vm2858, %v9204, 0.0
    %v10472 = vadd.f32 %v10470, %v10471
    %v10473 = vsel %vm2858, %v9205, 0.0
    %v10474 = vadd.f32 %v10472, %v10473
    %v10475 = vsel %vm2858, %v9206, 0.0
    %v10476 = vadd.f32 %v10474, %v10475
    %v10477 = vsel %vm2858, %v9207, 0.0
    %v10478 = vadd.f32 %v10476, %v10477
    %v10479 = vsel %vm2858, %v9210, 0.0
    %v10480 = vadd.f32 %v10478, %v10479
    %v10481 = vsel %vm2858, %v9211, 0.0
    %v10482 = vadd.f32 %v10480, %v10481
    %v10483 = vsel %vm2858, %v9212, 0.0
    %v10484 = vadd.f32 %v10482, %v10483
    %v10485 = vsel %vm2858, %v9213, 0.0
    %v10486 = vadd.f32 %v10484, %v10485
    %v10487 = vsel %vm2858, %v9214, 0.0
    %v10488 = vadd.f32 %v10486, %v10487
    %v10489 = vsel %vm2858, %v9215, 0.0
    %v10490 = vadd.f32 %v10488, %v10489
    %v10491 = vsel %vm2858, %v9216, 0.0
    %v10492 = vadd.f32 %v10490, %v10491
    %v10493 = vsel %vm2858, %v9217, 0.0
    %v10494 = vadd.f32 %v10492, %v10493
    %v10495 = vsel %vm2858, %v9220, 0.0
    %v10496 = vadd.f32 %v10494, %v10495
    %v10497 = vsel %vm2858, %v9221, 0.0
    %v10498 = vadd.f32 %v10496, %v10497
    %v10499 = vsel %vm2858, %v9222, 0.0
    %v10500 = vadd.f32 %v10498, %v10499
    %v10501 = vsel %vm2858, %v9223, 0.0
    %v10502 = vadd.f32 %v10500, %v10501
    %v10503 = vsel %vm2858, %v9224, 0.0
    %v10504 = vadd.f32 %v10502, %v10503
    %v10505 = vsel %vm2858, %v9225, 0.0
    %v10506 = vadd.f32 %v10504, %v10505
    %v10507 = vsel %vm2858, %v9226, 0.0
    %v10508 = vadd.f32 %v10506, %v10507
    %v10509 = vsel %vm2858, %v9227, 0.0
    %v10510 = vadd.f32 %v10508, %v10509
    %v10511 = vsel %vm2858, %v9230, 0.0
    %v10512 = vadd.f32 %v10510, %v10511
    %v10513 = vsel %vm2858, %v9231, 0.0
    %v10514 = vadd.f32 %v10512, %v10513
    %v10515 = vsel %vm2858, %v9232, 0.0
    %v10516 = vadd.f32 %v10514, %v10515
    %v10517 = vsel %vm2858, %v9233, 0.0
    %v10518 = vadd.f32 %v10516, %v10517
    %v10519 = vsel %vm2858, %v9234, 0.0
    %v10520 = vadd.f32 %v10518, %v10519
    %v10521 = vsel %vm2858, %v9235, 0.0
    %v10522 = vadd.f32 %v10520, %v10521
    %v10523 = vsel %vm2858, %v9236, 0.0
    %v10524 = vadd.f32 %v10522, %v10523
    %v10525 = vsel %vm2858, %v9237, 0.0
    %v10526 = vadd.f32 %v10524, %v10525
    %v10527 = vsel %vm2858, %v9240, 0.0
    %v10528 = vadd.f32 %v10526, %v10527
    %v10529 = vsel %vm2858, %v9241, 0.0
    %v10530 = vadd.f32 %v10528, %v10529
    %v10531 = vsel %vm2858, %v9242, 0.0
    %v10532 = vadd.f32 %v10530, %v10531
    %v10533 = vsel %vm2858, %v9243, 0.0
    %v10534 = vadd.f32 %v10532, %v10533
    %v10535 = vsel %vm2858, %v9244, 0.0
    %v10536 = vadd.f32 %v10534, %v10535
    %v10537 = vsel %vm2858, %v9245, 0.0
    %v10538 = vadd.f32 %v10536, %v10537
    %v10539 = vsel %vm2858, %v9246, 0.0
    %v10540 = vadd.f32 %v10538, %v10539
    %v10541 = vsel %vm2858, %v9247, 0.0
    %v10542 = vadd.f32 %v10540, %v10541
    %v10543 = vsel %vm2858, %v9250, 0.0
    %v10544 = vadd.f32 %v10542, %v10543
    %v10545 = vsel %vm2858, %v9251, 0.0
    %v10546 = vadd.f32 %v10544, %v10545
    %v10547 = vsel %vm2858, %v9252, 0.0
    %v10548 = vadd.f32 %v10546, %v10547
    %v10549 = vsel %vm2858, %v9253, 0.0
    %v10550 = vadd.f32 %v10548, %v10549
    %v10551 = vsel %vm2858, %v9254, 0.0
    %v10552 = vadd.f32 %v10550, %v10551
    %v10553 = vsel %vm2858, %v9255, 0.0
    %v10554 = vadd.f32 %v10552, %v10553
    %v10555 = vsel %vm2858, %v9256, 0.0
    %v10556 = vadd.f32 %v10554, %v10555
    %v10557 = vsel %vm2858, %v9257, 0.0
    %v10558 = vadd.f32 %v10556, %v10557
    %v10559 = vsel %vm2858, %v9260, 0.0
    %v10560 = vadd.f32 %v10558, %v10559
    %v10561 = vsel %vm2858, %v9261, 0.0
    %v10562 = vadd.f32 %v10560, %v10561
    %v10563 = vsel %vm2858, %v9262, 0.0
    %v10564 = vadd.f32 %v10562, %v10563
    %v10565 = vsel %vm2858, %v9263, 0.0
    %v10566 = vadd.f32 %v10564, %v10565
    %v10567 = vsel %vm2858, %v9264, 0.0
    %v10568 = vadd.f32 %v10566, %v10567
    %v10569 = vsel %vm2858, %v9265, 0.0
    %v10570 = vadd.f32 %v10568, %v10569
    %v10571 = vsel %vm2858, %v9266, 0.0
    %v10572 = vadd.f32 %v10570, %v10571
    %v10573 = vsel %vm2858, %v9267, 0.0
    %v10574 = vadd.f32 %v10572, %v10573
    %v10575 = vsel %vm2858, %v9270, 0.0
    %v10576 = vadd.f32 %v10574, %v10575
    %v10577 = vsel %vm2858, %v9271, 0.0
    %v10578 = vadd.f32 %v10576, %v10577
    %v10579 = vsel %vm2858, %v9272, 0.0
    %v10580 = vadd.f32 %v10578, %v10579
    %v10581 = vsel %vm2858, %v9273, 0.0
    %v10582 = vadd.f32 %v10580, %v10581
    %v10583 = vsel %vm2858, %v9274, 0.0
    %v10584 = vadd.f32 %v10582, %v10583
    %v10585 = vsel %vm2858, %v9275, 0.0
    %v10586 = vadd.f32 %v10584, %v10585
    %v10587 = vsel %vm2858, %v9276, 0.0
    %v10588 = vadd.f32 %v10586, %v10587
    %v10589 = vsel %vm2858, %v9277, 0.0
    %v10590 = vadd.f32 %v10588, %v10589
    %v10591 = vsel %vm2858, %v9280, 0.0
    %v10592 = vadd.f32 %v10590, %v10591
    %v10593 = vsel %vm2858, %v9281, 0.0
    %v10594 = vadd.f32 %v10592, %v10593
    %v10595 = vsel %vm2858, %v9282, 0.0
    %v10596 = vadd.f32 %v10594, %v10595
    %v10597 = vsel %vm2858, %v9283, 0.0
    %v10598 = vadd.f32 %v10596, %v10597
    %v10599 = vsel %vm2858, %v9284, 0.0
    %v10600 = vadd.f32 %v10598, %v10599
    %v10601 = vsel %vm2858, %v9285, 0.0
    %v10602 = vadd.f32 %v10600, %v10601
    %v10603 = vsel %vm2858, %v9286, 0.0
    %v10604 = vadd.f32 %v10602, %v10603
    %v10605 = vsel %vm2858, %v9287, 0.0
    %v10606 = vadd.f32 %v10604, %v10605
    %v10607 = vsel %vm2858, %v9290, 0.0
    %v10608 = vadd.f32 %v10606, %v10607
    %v10609 = vsel %vm2858, %v9291, 0.0
    %v10610 = vadd.f32 %v10608, %v10609
    %v10611 = vsel %vm2858, %v9292, 0.0
    %v10612 = vadd.f32 %v10610, %v10611
    %v10613 = vsel %vm2858, %v9293, 0.0
    %v10614 = vadd.f32 %v10612, %v10613
    %v10615 = vsel %vm2858, %v9294, 0.0
    %v10616 = vadd.f32 %v10614, %v10615
    %v10617 = vsel %vm2858, %v9295, 0.0
    %v10618 = vadd.f32 %v10616, %v10617
    %v10619 = vsel %vm2858, %v9296, 0.0
    %v10620 = vadd.f32 %v10618, %v10619
    %v10621 = vsel %vm2858, %v9297, 0.0
    %v10622 = vadd.f32 %v10620, %v10621
    %v10623 = vsel %vm2858, %v9300, 0.0
    %v10624 = vadd.f32 %v10622, %v10623
    %v10625 = vsel %vm2858, %v9301, 0.0
    %v10626 = vadd.f32 %v10624, %v10625
    %v10627 = vsel %vm2858, %v9302, 0.0
    %v10628 = vadd.f32 %v10626, %v10627
    %v10629 = vsel %vm2858, %v9303, 0.0
    %v10630 = vadd.f32 %v10628, %v10629
    %v10631 = vsel %vm2858, %v9304, 0.0
    %v10632 = vadd.f32 %v10630, %v10631
    %v10633 = vsel %vm2858, %v9305, 0.0
    %v10634 = vadd.f32 %v10632, %v10633
    %v10635 = vsel %vm2858, %v9306, 0.0
    %v10636 = vadd.f32 %v10634, %v10635
    %v10637 = vsel %vm2858, %v9307, 0.0
    %v10638 = vadd.f32 %v10636, %v10637
    %v10639 = vsel %vm2858, %v9310, 0.0
    %v10640 = vadd.f32 %v10638, %v10639
    %v10641 = vsel %vm2858, %v9311, 0.0
    %v10642 = vadd.f32 %v10640, %v10641
    %v10643 = vsel %vm2858, %v9312, 0.0
    %v10644 = vadd.f32 %v10642, %v10643
    %v10645 = vsel %vm2858, %v9313, 0.0
    %v10646 = vadd.f32 %v10644, %v10645
    %v10647 = vsel %vm2858, %v9314, 0.0
    %v10648 = vadd.f32 %v10646, %v10647
    %v10649 = vsel %vm2858, %v9315, 0.0
    %v10650 = vadd.f32 %v10648, %v10649
    %v10651 = vsel %vm2858, %v9316, 0.0
    %v10652 = vadd.f32 %v10650, %v10651
    %v10653 = vsel %vm2858, %v9317, 0.0
    %v10654 = vadd.f32 %v10652, %v10653
    %v10655 = vsel %vm2858, %v9320, 0.0
    %v10656 = vadd.f32 %v10654, %v10655
    %v10657 = vsel %vm2858, %v9321, 0.0
    %v10658 = vadd.f32 %v10656, %v10657
    %v10659 = vsel %vm2858, %v9322, 0.0
    %v10660 = vadd.f32 %v10658, %v10659
    %v10661 = vsel %vm2858, %v9323, 0.0
    %v10662 = vadd.f32 %v10660, %v10661
    %v10663 = vsel %vm2858, %v9324, 0.0
    %v10664 = vadd.f32 %v10662, %v10663
    %v10665 = vsel %vm2858, %v9325, 0.0
    %v10666 = vadd.f32 %v10664, %v10665
    %v10667 = vsel %vm2858, %v9326, 0.0
    %v10668 = vadd.f32 %v10666, %v10667
    %v10669 = vsel %vm2858, %v9327, 0.0
    %v10670 = vadd.f32 %v10668, %v10669
    %v10671 = vsel %vm2858, %v9330, 0.0
    %v10672 = vadd.f32 %v10670, %v10671
    %v10673 = vsel %vm2858, %v9331, 0.0
    %v10674 = vadd.f32 %v10672, %v10673
    %v10675 = vsel %vm2858, %v9332, 0.0
    %v10676 = vadd.f32 %v10674, %v10675
    %v10677 = vsel %vm2858, %v9333, 0.0
    %v10678 = vadd.f32 %v10676, %v10677
    %v10679 = vsel %vm2858, %v9334, 0.0
    %v10680 = vadd.f32 %v10678, %v10679
    %v10681 = vsel %vm2858, %v9335, 0.0
    %v10682 = vadd.f32 %v10680, %v10681
    %v10683 = vsel %vm2858, %v9336, 0.0
    %v10684 = vadd.f32 %v10682, %v10683
    %v10685 = vsel %vm2858, %v9337, 0.0
    %v10686 = vadd.f32 %v10684, %v10685
    %v10687 = vsel %vm2858, %v9340, 0.0
    %v10688 = vadd.f32 %v10686, %v10687
    %v10689 = vsel %vm2858, %v9341, 0.0
    %v10690 = vadd.f32 %v10688, %v10689
    %v10691 = vsel %vm2858, %v9342, 0.0
    %v10692 = vadd.f32 %v10690, %v10691
    %v10693 = vsel %vm2858, %v9343, 0.0
    %v10694 = vadd.f32 %v10692, %v10693
    %v10695 = vsel %vm2858, %v9344, 0.0
    %v10696 = vadd.f32 %v10694, %v10695
    %v10697 = vsel %vm2858, %v9345, 0.0
    %v10698 = vadd.f32 %v10696, %v10697
    %v10699 = vsel %vm2858, %v9346, 0.0
    %v10700 = vadd.f32 %v10698, %v10699
    %v10701 = vsel %vm2858, %v9347, 0.0
    %v10702 = vadd.f32 %v10700, %v10701
    %v10703 = vsel %vm2858, %v9350, 0.0
    %v10704 = vadd.f32 %v10702, %v10703
    %v10705 = vsel %vm2858, %v9351, 0.0
    %v10706 = vadd.f32 %v10704, %v10705
    %v10707 = vsel %vm2858, %v9352, 0.0
    %v10708 = vadd.f32 %v10706, %v10707
    %v10709 = vsel %vm2858, %v9353, 0.0
    %v10710 = vadd.f32 %v10708, %v10709
    %v10711 = vsel %vm2858, %v9354, 0.0
    %v10712 = vadd.f32 %v10710, %v10711
    %v10713 = vsel %vm2858, %v9355, 0.0
    %v10714 = vadd.f32 %v10712, %v10713
    %v10715 = vsel %vm2858, %v9356, 0.0
    %v10716 = vadd.f32 %v10714, %v10715
    %v10717 = vsel %vm2858, %v9357, 0.0
    %v10718 = vadd.f32 %v10716, %v10717
    %v10719 = vsel %vm2858, %v9360, 0.0
    %v10720 = vadd.f32 %v10718, %v10719
    %v10721 = vsel %vm2858, %v9361, 0.0
    %v10722 = vadd.f32 %v10720, %v10721
    %v10723 = vsel %vm2858, %v9362, 0.0
    %v10724 = vadd.f32 %v10722, %v10723
    %v10725 = vsel %vm2858, %v9363, 0.0
    %v10726 = vadd.f32 %v10724, %v10725
    %v10727 = vsel %vm2858, %v9364, 0.0
    %v10728 = vadd.f32 %v10726, %v10727
    %v10729 = vsel %vm2858, %v9365, 0.0
    %v10730 = vadd.f32 %v10728, %v10729
    %v10731 = vsel %vm2858, %v9366, 0.0
    %v10732 = vadd.f32 %v10730, %v10731
    %v10733 = vsel %vm2858, %v9367, 0.0
    %v10734 = vadd.f32 %v10732, %v10733
    %v10735 = vsel %vm2858, %v9370, 0.0
    %v10736 = vadd.f32 %v10734, %v10735
    %v10737 = vsel %vm2858, %v9371, 0.0
    %v10738 = vadd.f32 %v10736, %v10737
    %v10739 = vsel %vm2858, %v9372, 0.0
    %v10740 = vadd.f32 %v10738, %v10739
    %v10741 = vsel %vm2858, %v9373, 0.0
    %v10742 = vadd.f32 %v10740, %v10741
    %v10743 = vsel %vm2858, %v9374, 0.0
    %v10744 = vadd.f32 %v10742, %v10743
    %v10745 = vsel %vm2858, %v9375, 0.0
    %v10746 = vadd.f32 %v10744, %v10745
    %v10747 = vsel %vm2858, %v9376, 0.0
    %v10748 = vadd.f32 %v10746, %v10747
    %v10749 = vsel %vm2858, %v9377, 0.0
    %v10750 = vadd.f32 %v10748, %v10749
    %v10751 = vsel %vm2858, %v9380, 0.0
    %v10752 = vadd.f32 %v10750, %v10751
    %v10753 = vsel %vm2858, %v9381, 0.0
    %v10754 = vadd.f32 %v10752, %v10753
    %v10755 = vsel %vm2858, %v9382, 0.0
    %v10756 = vadd.f32 %v10754, %v10755
    %v10757 = vsel %vm2858, %v9383, 0.0
    %v10758 = vadd.f32 %v10756, %v10757
    %v10759 = vsel %vm2858, %v9384, 0.0
    %v10760 = vadd.f32 %v10758, %v10759
    %v10761 = vsel %vm2858, %v9385, 0.0
    %v10762 = vadd.f32 %v10760, %v10761
    %v10763 = vsel %vm2858, %v9386, 0.0
    %v10764 = vadd.f32 %v10762, %v10763
    %v10765 = vsel %vm2858, %v9387, 0.0
    %v10766 = vadd.f32 %v10764, %v10765
    %v10767 = vsel %vm2858, %v9390, 0.0
    %v10768 = vadd.f32 %v10766, %v10767
    %v10769 = vsel %vm2858, %v9391, 0.0
    %v10770 = vadd.f32 %v10768, %v10769
    %v10771 = vsel %vm2858, %v9392, 0.0
    %v10772 = vadd.f32 %v10770, %v10771
    %v10773 = vsel %vm2858, %v9393, 0.0
    %v10774 = vadd.f32 %v10772, %v10773
    %v10775 = vsel %vm2858, %v9394, 0.0
    %v10776 = vadd.f32 %v10774, %v10775
    %v10777 = vsel %vm2858, %v9395, 0.0
    %v10778 = vadd.f32 %v10776, %v10777
    %v10779 = vsel %vm2858, %v9396, 0.0
    %v10780 = vadd.f32 %v10778, %v10779
    %v10781 = vsel %vm2858, %v9397, 0.0
    %v10782 = vadd.f32 %v10780, %v10781
    %v10783 = vsel %vm2858, %v9400, 0.0
    %v10784 = vadd.f32 %v10782, %v10783
    %v10785 = vsel %vm2858, %v9401, 0.0
    %v10786 = vadd.f32 %v10784, %v10785
    %v10787 = vsel %vm2858, %v9402, 0.0
    %v10788 = vadd.f32 %v10786, %v10787
    %v10789 = vsel %vm2858, %v9403, 0.0
    %v10790 = vadd.f32 %v10788, %v10789
    %v10791 = vsel %vm2858, %v9404, 0.0
    %v10792 = vadd.f32 %v10790, %v10791
    %v10793 = vsel %vm2858, %v9405, 0.0
    %v10794 = vadd.f32 %v10792, %v10793
    %v10795 = vsel %vm2858, %v9406, 0.0
    %v10796 = vadd.f32 %v10794, %v10795
    %v10797 = vsel %vm2858, %v9407, 0.0
    %v10798 = vadd.f32 %v10796, %v10797
    %v10799 = vsel %vm2858, %v9410, 0.0
    %v10800 = vadd.f32 %v10798, %v10799
    %v10801 = vsel %vm2858, %v9411, 0.0
    %v10802 = vadd.f32 %v10800, %v10801
    %v10803 = vsel %vm2858, %v9412, 0.0
    %v10804 = vadd.f32 %v10802, %v10803
    %v10805 = vsel %vm2858, %v9413, 0.0
    %v10806 = vadd.f32 %v10804, %v10805
    %v10807 = vsel %vm2858, %v9414, 0.0
    %v10808 = vadd.f32 %v10806, %v10807
    %v10809 = vsel %vm2858, %v9415, 0.0
    %v10810 = vadd.f32 %v10808, %v10809
    %v10811 = vsel %vm2858, %v9416, 0.0
    %v10812 = vadd.f32 %v10810, %v10811
    %v10813 = vsel %vm2858, %v9417, 0.0
    %v10814 = vadd.f32 %v10812, %v10813
    %v10815 = vsel %vm2858, %v9420, 0.0
    %v10816 = vadd.f32 %v10814, %v10815
    %v10817 = vsel %vm2858, %v9421, 0.0
    %v10818 = vadd.f32 %v10816, %v10817
    %v10819 = vsel %vm2858, %v9422, 0.0
    %v10820 = vadd.f32 %v10818, %v10819
    %v10821 = vsel %vm2858, %v9423, 0.0
    %v10822 = vadd.f32 %v10820, %v10821
    %v10823 = vsel %vm2858, %v9424, 0.0
    %v10824 = vadd.f32 %v10822, %v10823
    %v10825 = vsel %vm2858, %v9425, 0.0
    %v10826 = vadd.f32 %v10824, %v10825
    %v10827 = vsel %vm2858, %v9426, 0.0
    %v10828 = vadd.f32 %v10826, %v10827
    %v10829 = vsel %vm2858, %v9427, 0.0
    %v10830 = vadd.f32 %v10828, %v10829
    %v10831 = vsel %vm2858, %v9430, 0.0
    %v10832 = vadd.f32 %v10830, %v10831
    %v10833 = vsel %vm2858, %v9431, 0.0
    %v10834 = vadd.f32 %v10832, %v10833
    %v10835 = vsel %vm2858, %v9432, 0.0
    %v10836 = vadd.f32 %v10834, %v10835
    %v10837 = vsel %vm2858, %v9433, 0.0
    %v10838 = vadd.f32 %v10836, %v10837
    %v10839 = vsel %vm2858, %v9434, 0.0
    %v10840 = vadd.f32 %v10838, %v10839
    %v10841 = vsel %vm2858, %v9435, 0.0
    %v10842 = vadd.f32 %v10840, %v10841
    %v10843 = vsel %vm2858, %v9436, 0.0
    %v10844 = vadd.f32 %v10842, %v10843
    %v10845 = vsel %vm2858, %v9437, 0.0
    %v10846 = vadd.f32 %v10844, %v10845
    %v10847 = vsel %vm2858, %v9440, 0.0
    %v10848 = vadd.f32 %v10846, %v10847
    %v10849 = vsel %vm2858, %v9441, 0.0
    %v10850 = vadd.f32 %v10848, %v10849
    %v10851 = vsel %vm2858, %v9442, 0.0
    %v10852 = vadd.f32 %v10850, %v10851
    %v10853 = vsel %vm2858, %v9443, 0.0
    %v10854 = vadd.f32 %v10852, %v10853
    %v10855 = vsel %vm2858, %v9444, 0.0
    %v10856 = vadd.f32 %v10854, %v10855
    %v10857 = vsel %vm2858, %v9445, 0.0
    %v10858 = vadd.f32 %v10856, %v10857
    %v10859 = vsel %vm2858, %v9446, 0.0
    %v10860 = vadd.f32 %v10858, %v10859
    %v10861 = vsel %vm2858, %v9447, 0.0
    %v10862 = vadd.f32 %v10860, %v10861
    %v10863 = vsel %vm2858, %v9450, 0.0
    %v10864 = vadd.f32 %v10862, %v10863
    %v10865 = vsel %vm2858, %v9451, 0.0
    %v10866 = vadd.f32 %v10864, %v10865
    %v10867 = vsel %vm2858, %v9452, 0.0
    %v10868 = vadd.f32 %v10866, %v10867
    %v10869 = vsel %vm2858, %v9453, 0.0
    %v10870 = vadd.f32 %v10868, %v10869
    %v10871 = vsel %vm2858, %v9454, 0.0
    %v10872 = vadd.f32 %v10870, %v10871
    %v10873 = vsel %vm2858, %v9455, 0.0
    %v10874 = vadd.f32 %v10872, %v10873
    %v10875 = vsel %vm2858, %v9456, 0.0
    %v10876 = vadd.f32 %v10874, %v10875
    %v10877 = vsel %vm2858, %v9457, 0.0
    %v10878 = vadd.f32 %v10876, %v10877
    %v10879 = vsel %vm2858, %v9460, 0.0
    %v10880 = vadd.f32 %v10878, %v10879
    %v10881 = vsel %vm2858, %v9461, 0.0
    %v10882 = vadd.f32 %v10880, %v10881
    %v10883 = vsel %vm2858, %v9462, 0.0
    %v10884 = vadd.f32 %v10882, %v10883
    %v10885 = vsel %vm2858, %v9463, 0.0
    %v10886 = vadd.f32 %v10884, %v10885
    %v10887 = vsel %vm2858, %v9464, 0.0
    %v10888 = vadd.f32 %v10886, %v10887
    %v10889 = vsel %vm2858, %v9465, 0.0
    %v10890 = vadd.f32 %v10888, %v10889
    %v10891 = vsel %vm2858, %v9466, 0.0
    %v10892 = vadd.f32 %v10890, %v10891
    %v10893 = vsel %vm2858, %v9467, 0.0
    %v10894 = vadd.f32 %v10892, %v10893
    %v10895 = vsel %vm2858, %v9470, 0.0
    %v10896 = vadd.f32 %v10894, %v10895
    %v10897 = vsel %vm2858, %v9471, 0.0
    %v10898 = vadd.f32 %v10896, %v10897
    %v10899 = vsel %vm2858, %v9472, 0.0
    %v10900 = vadd.f32 %v10898, %v10899
    %v10901 = vsel %vm2858, %v9473, 0.0
    %v10902 = vadd.f32 %v10900, %v10901
    %v10903 = vsel %vm2858, %v9474, 0.0
    %v10904 = vadd.f32 %v10902, %v10903
    %v10905 = vsel %vm2858, %v9475, 0.0
    %v10906 = vadd.f32 %v10904, %v10905
    %v10907 = vsel %vm2858, %v9476, 0.0
    %v10908 = vadd.f32 %v10906, %v10907
    %v10909 = vsel %vm2858, %v9477, 0.0
    %v10910 = vadd.f32 %v10908, %v10909
    %v10911 = vsel %vm2858, %v9480, 0.0
    %v10912 = vadd.f32 %v10910, %v10911
    %v10913 = vsel %vm2858, %v9481, 0.0
    %v10914 = vadd.f32 %v10912, %v10913
    %v10915 = vsel %vm2858, %v9482, 0.0
    %v10916 = vadd.f32 %v10914, %v10915
    %v10917 = vsel %vm2858, %v9483, 0.0
    %v10918 = vadd.f32 %v10916, %v10917
    %v10919 = vsel %vm2858, %v9484, 0.0
    %v10920 = vadd.f32 %v10918, %v10919
    %v10921 = vsel %vm2858, %v9485, 0.0
    %v10922 = vadd.f32 %v10920, %v10921
    %v10923 = vsel %vm2858, %v9486, 0.0
    %v10924 = vadd.f32 %v10922, %v10923
    %v10925 = vsel %vm2858, %v9487, 0.0
    %v10926 = vadd.f32 %v10924, %v10925
    %v10927 = vsel %vm2858, %v9490, 0.0
    %v10928 = vadd.f32 %v10926, %v10927
    %v10929 = vsel %vm2858, %v9491, 0.0
    %v10930 = vadd.f32 %v10928, %v10929
    %v10931 = vsel %vm2858, %v9492, 0.0
    %v10932 = vadd.f32 %v10930, %v10931
    %v10933 = vsel %vm2858, %v9493, 0.0
    %v10934 = vadd.f32 %v10932, %v10933
    %v10935 = vsel %vm2858, %v9494, 0.0
    %v10936 = vadd.f32 %v10934, %v10935
    %v10937 = vsel %vm2858, %v9495, 0.0
    %v10938 = vadd.f32 %v10936, %v10937
    %v10939 = vsel %vm2858, %v9496, 0.0
    %v10940 = vadd.f32 %v10938, %v10939
    %v10941 = vsel %vm2858, %v9497, 0.0
    %v10942 = vadd.f32 %v10940, %v10941
    %v10943 = vsel %vm2858, %v9500, 0.0
    %v10944 = vadd.f32 %v10942, %v10943
    %v10945 = vsel %vm2858, %v9501, 0.0
    %v10946 = vadd.f32 %v10944, %v10945
    %v10947 = vsel %vm2858, %v9502, 0.0
    %v10948 = vadd.f32 %v10946, %v10947
    %v10949 = vsel %vm2858, %v9503, 0.0
    %v10950 = vadd.f32 %v10948, %v10949
    %v10951 = vsel %vm2858, %v9504, 0.0
    %v10952 = vadd.f32 %v10950, %v10951
    %v10953 = vsel %vm2858, %v9505, 0.0
    %v10954 = vadd.f32 %v10952, %v10953
    %v10955 = vsel %vm2858, %v9506, 0.0
    %v10956 = vadd.f32 %v10954, %v10955
    %v10957 = vsel %vm2858, %v9507, 0.0
    %v10958 = vadd.f32 %v10956, %v10957
    %v10959 = vsel %vm2858, %v9510, 0.0
    %v10960 = vadd.f32 %v10958, %v10959
    %v10961 = vsel %vm2858, %v9511, 0.0
    %v10962 = vadd.f32 %v10960, %v10961
    %v10963 = vsel %vm2858, %v9512, 0.0
    %v10964 = vadd.f32 %v10962, %v10963
    %v10965 = vsel %vm2858, %v9513, 0.0
    %v10966 = vadd.f32 %v10964, %v10965
    %v10967 = vsel %vm2858, %v9514, 0.0
    %v10968 = vadd.f32 %v10966, %v10967
    %v10969 = vsel %vm2858, %v9515, 0.0
    %v10970 = vadd.f32 %v10968, %v10969
    %v10971 = vsel %vm2858, %v9516, 0.0
    %v10972 = vadd.f32 %v10970, %v10971
    %v10973 = vsel %vm2858, %v9517, 0.0
    %v10974 = vadd.f32 %v10972, %v10973
    %v10975 = vsel %vm2858, %v9520, 0.0
    %v10976 = vadd.f32 %v10974, %v10975
    %v10977 = vsel %vm2858, %v9521, 0.0
    %v10978 = vadd.f32 %v10976, %v10977
    %v10979 = vsel %vm2858, %v9522, 0.0
    %v10980 = vadd.f32 %v10978, %v10979
    %v10981 = vsel %vm2858, %v9523, 0.0
    %v10982 = vadd.f32 %v10980, %v10981
    %v10983 = vsel %vm2858, %v9524, 0.0
    %v10984 = vadd.f32 %v10982, %v10983
    %v10985 = vsel %vm2858, %v9525, 0.0
    %v10986 = vadd.f32 %v10984, %v10985
    %v10987 = vsel %vm2858, %v9526, 0.0
    %v10988 = vadd.f32 %v10986, %v10987
    %v10989 = vsel %vm2858, %v9527, 0.0
    %v10990 = vadd.f32 %v10988, %v10989
    %v10991 = vsel %vm2858, %v9530, 0.0
    %v10992 = vadd.f32 %v10990, %v10991
    %v10993 = vsel %vm2858, %v9531, 0.0
    %v10994 = vadd.f32 %v10992, %v10993
    %v10995 = vsel %vm2858, %v9532, 0.0
    %v10996 = vadd.f32 %v10994, %v10995
    %v10997 = vsel %vm2858, %v9533, 0.0
    %v10998 = vadd.f32 %v10996, %v10997
    %v10999 = vsel %vm2858, %v9534, 0.0
    %v11000 = vadd.f32 %v10998, %v10999
    %v11001 = vsel %vm2858, %v9535, 0.0
    %v11002 = vadd.f32 %v11000, %v11001
    %v11003 = vsel %vm2858, %v9536, 0.0
    %v11004 = vadd.f32 %v11002, %v11003
    %v11005 = vsel %vm2858, %v9537, 0.0
    %v11006 = vadd.f32 %v11004, %v11005
    %v11007 = vsel %vm2858, %v9540, 0.0
    %v11008 = vadd.f32 %v11006, %v11007
    %v11009 = vsel %vm2858, %v9541, 0.0
    %v11010 = vadd.f32 %v11008, %v11009
    %v11011 = vsel %vm2858, %v9542, 0.0
    %v11012 = vadd.f32 %v11010, %v11011
    %v11013 = vsel %vm2858, %v9543, 0.0
    %v11014 = vadd.f32 %v11012, %v11013
    %v11015 = vsel %vm2858, %v9544, 0.0
    %v11016 = vadd.f32 %v11014, %v11015
    %v11017 = vsel %vm2858, %v9545, 0.0
    %v11018 = vadd.f32 %v11016, %v11017
    %v11019 = vsel %vm2858, %v9546, 0.0
    %v11020 = vadd.f32 %v11018, %v11019
    %v11021 = vsel %vm2858, %v9547, 0.0
    %v11022 = vadd.f32 %v11020, %v11021
    %v11023 = vsel %vm2858, %v9550, 0.0
    %v11024 = vadd.f32 %v11022, %v11023
    %v11025 = vsel %vm2858, %v9551, 0.0
    %v11026 = vadd.f32 %v11024, %v11025
    %v11027 = vsel %vm2858, %v9552, 0.0
    %v11028 = vadd.f32 %v11026, %v11027
    %v11029 = vsel %vm2858, %v9553, 0.0
    %v11030 = vadd.f32 %v11028, %v11029
    %v11031 = vsel %vm2858, %v9554, 0.0
    %v11032 = vadd.f32 %v11030, %v11031
    %v11033 = vsel %vm2858, %v9555, 0.0
    %v11034 = vadd.f32 %v11032, %v11033
    %v11035 = vsel %vm2858, %v9556, 0.0
    %v11036 = vadd.f32 %v11034, %v11035
    %v11037 = vsel %vm2858, %v9557, 0.0
    %v11038 = vadd.f32 %v11036, %v11037
    %v11039 = vsel %vm2858, %v9560, 0.0
    %v11040 = vadd.f32 %v11038, %v11039
    %v11041 = vsel %vm2858, %v9561, 0.0
    %v11042 = vadd.f32 %v11040, %v11041
    %v11043 = vsel %vm2858, %v9562, 0.0
    %v11044 = vadd.f32 %v11042, %v11043
    %v11045 = vsel %vm2858, %v9563, 0.0
    %v11046 = vadd.f32 %v11044, %v11045
    %v11047 = vsel %vm2858, %v9564, 0.0
    %v11048 = vadd.f32 %v11046, %v11047
    %v11049 = vsel %vm2858, %v9565, 0.0
    %v11050 = vadd.f32 %v11048, %v11049
    %v11051 = vsel %vm2858, %v9566, 0.0
    %v11052 = vadd.f32 %v11050, %v11051
    %v11053 = vsel %vm2858, %v9567, 0.0
    %v11054 = vadd.f32 %v11052, %v11053
    %v11055 = vsel %vm2858, %v9570, 0.0
    %v11056 = vadd.f32 %v11054, %v11055
    %v11057 = vsel %vm2858, %v9571, 0.0
    %v11058 = vadd.f32 %v11056, %v11057
    %v11059 = vsel %vm2858, %v9572, 0.0
    %v11060 = vadd.f32 %v11058, %v11059
    %v11061 = vsel %vm2858, %v9573, 0.0
    %v11062 = vadd.f32 %v11060, %v11061
    %v11063 = vsel %vm2858, %v9574, 0.0
    %v11064 = vadd.f32 %v11062, %v11063
    %v11065 = vsel %vm2858, %v9575, 0.0
    %v11066 = vadd.f32 %v11064, %v11065
    %v11067 = vsel %vm2858, %v9576, 0.0
    %v11068 = vadd.f32 %v11066, %v11067
    %v11069 = vsel %vm2858, %v9577, 0.0
    %v11070 = vadd.f32 %v11068, %v11069
    %v11071 = vsel %vm2858, %v9580, 0.0
    %v11072 = vadd.f32 %v11070, %v11071
    %v11073 = vsel %vm2858, %v9581, 0.0
    %v11074 = vadd.f32 %v11072, %v11073
    %v11075 = vsel %vm2858, %v9582, 0.0
    %v11076 = vadd.f32 %v11074, %v11075
    %v11077 = vsel %vm2858, %v9583, 0.0
    %v11078 = vadd.f32 %v11076, %v11077
    %v11079 = vsel %vm2858, %v9584, 0.0
    %v11080 = vadd.f32 %v11078, %v11079
    %v11081 = vsel %vm2858, %v9585, 0.0
    %v11082 = vadd.f32 %v11080, %v11081
    %v11083 = vsel %vm2858, %v9586, 0.0
    %v11084 = vadd.f32 %v11082, %v11083
    %v11085 = vsel %vm2858, %v9587, 0.0
    %v11086 = vadd.f32 %v11084, %v11085
    %v11087 = vsel %vm2858, %v9590, 0.0
    %v11088 = vadd.f32 %v11086, %v11087
    %v11089 = vsel %vm2858, %v9591, 0.0
    %v11090 = vadd.f32 %v11088, %v11089
    %v11091 = vsel %vm2858, %v9592, 0.0
    %v11092 = vadd.f32 %v11090, %v11091
    %v11093 = vsel %vm2858, %v9593, 0.0
    %v11094 = vadd.f32 %v11092, %v11093
    %v11095 = vsel %vm2858, %v9594, 0.0
    %v11096 = vadd.f32 %v11094, %v11095
    %v11097 = vsel %vm2858, %v9595, 0.0
    %v11098 = vadd.f32 %v11096, %v11097
    %v11099 = vsel %vm2858, %v9596, 0.0
    %v11100 = vadd.f32 %v11098, %v11099
    %v11101 = vsel %vm2858, %v9597, 0.0
    %v11102 = vadd.f32 %v11100, %v11101
    %v11103 = vsel %vm2858, %v9600, 0.0
    %v11104 = vadd.f32 %v11102, %v11103
    %v11105 = vsel %vm2858, %v9601, 0.0
    %v11106 = vadd.f32 %v11104, %v11105
    %v11107 = vsel %vm2858, %v9602, 0.0
    %v11108 = vadd.f32 %v11106, %v11107
    %v11109 = vsel %vm2858, %v9603, 0.0
    %v11110 = vadd.f32 %v11108, %v11109
    %v11111 = vsel %vm2858, %v9604, 0.0
    %v11112 = vadd.f32 %v11110, %v11111
    %v11113 = vsel %vm2858, %v9605, 0.0
    %v11114 = vadd.f32 %v11112, %v11113
    %v11115 = vsel %vm2858, %v9606, 0.0
    %v11116 = vadd.f32 %v11114, %v11115
    %v11117 = vsel %vm2858, %v9607, 0.0
    %v11118 = vadd.f32 %v11116, %v11117
    %v11119 = vsel %vm2858, %v9610, 0.0
    %v11120 = vadd.f32 %v11118, %v11119
    %v11121 = vsel %vm2858, %v9611, 0.0
    %v11122 = vadd.f32 %v11120, %v11121
    %v11123 = vsel %vm2858, %v9612, 0.0
    %v11124 = vadd.f32 %v11122, %v11123
    %v11125 = vsel %vm2858, %v9613, 0.0
    %v11126 = vadd.f32 %v11124, %v11125
    %v11127 = vsel %vm2858, %v9614, 0.0
    %v11128 = vadd.f32 %v11126, %v11127
    %v11129 = vsel %vm2858, %v9615, 0.0
    %v11130 = vadd.f32 %v11128, %v11129
    %v11131 = vsel %vm2858, %v9616, 0.0
    %v11132 = vadd.f32 %v11130, %v11131
    %v11133 = vsel %vm2858, %v9617, 0.0
    %v11134 = vadd.f32 %v11132, %v11133
    %v11135 = vsel %vm2858, %v9620, 0.0
    %v11136 = vadd.f32 %v11134, %v11135
    %v11137 = vsel %vm2858, %v9621, 0.0
    %v11138 = vadd.f32 %v11136, %v11137
    %v11139 = vsel %vm2858, %v9622, 0.0
    %v11140 = vadd.f32 %v11138, %v11139
    %v11141 = vsel %vm2858, %v9623, 0.0
    %v11142 = vadd.f32 %v11140, %v11141
    %v11143 = vsel %vm2858, %v9624, 0.0
    %v11144 = vadd.f32 %v11142, %v11143
    %v11145 = vsel %vm2858, %v9625, 0.0
    %v11146 = vadd.f32 %v11144, %v11145
    %v11147 = vsel %vm2858, %v9626, 0.0
    %v11148 = vadd.f32 %v11146, %v11147
    %v11149 = vsel %vm2858, %v9627, 0.0
    %v11150 = vadd.f32 %v11148, %v11149
    %v11151 = vsel %vm2858, %v9630, 0.0
    %v11152 = vadd.f32 %v11150, %v11151
    %v11153 = vsel %vm2858, %v9631, 0.0
    %v11154 = vadd.f32 %v11152, %v11153
    %v11155 = vsel %vm2858, %v9632, 0.0
    %v11156 = vadd.f32 %v11154, %v11155
    %v11157 = vsel %vm2858, %v9633, 0.0
    %v11158 = vadd.f32 %v11156, %v11157
    %v11159 = vsel %vm2858, %v9634, 0.0
    %v11160 = vadd.f32 %v11158, %v11159
    %v11161 = vsel %vm2858, %v9635, 0.0
    %v11162 = vadd.f32 %v11160, %v11161
    %v11163 = vsel %vm2858, %v9636, 0.0
    %v11164 = vadd.f32 %v11162, %v11163
    %v11165 = vsel %vm2858, %v9637, 0.0
    %v11166 = vadd.f32 %v11164, %v11165
    %v11167 = vsel %vm2858, %v9640, 0.0
    %v11168 = vadd.f32 %v11166, %v11167
    %v11169 = vsel %vm2858, %v9641, 0.0
    %v11170 = vadd.f32 %v11168, %v11169
    %v11171 = vsel %vm2858, %v9642, 0.0
    %v11172 = vadd.f32 %v11170, %v11171
    %v11173 = vsel %vm2858, %v9643, 0.0
    %v11174 = vadd.f32 %v11172, %v11173
    %v11175 = vsel %vm2858, %v9644, 0.0
    %v11176 = vadd.f32 %v11174, %v11175
    %v11177 = vsel %vm2858, %v9645, 0.0
    %v11178 = vadd.f32 %v11176, %v11177
    %v11179 = vsel %vm2858, %v9646, 0.0
    %v11180 = vadd.f32 %v11178, %v11179
    %v11181 = vsel %vm2858, %v9647, 0.0
    %v11182 = vadd.f32 %v11180, %v11181
    %11183 = vadd.xlane.f32.xlu0 %v11182
    %v11184 = vpop.xlane.xlu0 %11183
    %v11185 = vld [vmem:[#allocation5] sm:$0x3]
    %vm11186 = vcmp.eq.s32.totalorder %v29, 0
    %v11187 = vsel %vm11186, %v5806, %v11184
    %v11188 = vadd.f32 %v11185, %v11187
    %vm11189 = vcmask 9216
    %11190 = vst.msk [vmem:[#allocation5] sm:$0x3] %vm11189, %v11188
    // Predicated region
    $region22: #{hybrid_model_forward.1} parent=1 // pred_check
      %p11191 = pneg %p30
    $region23: #{hybrid_model_forward.1} parent=1 // pred_check_branch
      %11193 = sbr.rel (%p11191) target = $region25
    $region24: #{hybrid_model_forward.1} parent=1 // pred_region
      %v11194 = vld [vmem:[#allocation5] sm:$0x3]
      %v11195 = vsel %vm11189, %v11194, -inf
      %11196 = vmax.xlane.f32.xlu0 %v11195
      %v11197 = vpop.xlane.xlu0 %11196
      %v11198 = vsub.f32 %v11194, %v11197
      %v11199 = vmul.f32 %v11198, 1.442695
      %v11200 = vpow.pop %v11199
      %v11201 = vsel %vm11189, %v11200, 0.0
      %11202 = vadd.xlane.f32.xlu0 %v11201
      %v11203 = vpop.xlane.xlu0 %11202
      %v11204 = vlog2.pop %v11203
      %v11205 = vmul.f32 %v11204, 0.6931472
      %v11206 = vsub.f32 %v11198, %v11205
      %11207 = vst.msk [vmem:[#allocation5] sm:$0x3] %vm11189, %v11206
    $region25: #{hybrid_model_forward.1} parent=1 // pred_fallthru
      _
    // Predicated region
    $region26: #{hybrid_model_forward.1} parent=1 // pred_check
      _
    $region27: #{hybrid_model_forward.1} parent=1 // pred_check_branch
      %11209 = sbr.rel (0) target = $region29
    $region28: #{hybrid_model_forward.1} parent=1 // pred_region
      %11211 = vsyncadd [#allocation3], 0
      %s11213 = sshll.u32 [#allocation5], 4
      %s11214 = int_to_ptr.vmem [resolvable:$true] %s11213
      %s11215 = sshll.u32 %s3, 4
      %s11216 = int_to_ptr.hbm [resolvable:$true] %s11215
      %11218 = dma.vmem_to_hbm [thread:$0]  %s11214, 32, %s11216, [#allocation3]
    $region29: #{hybrid_model_forward.1} parent=1 // pred_fallthru
      _
    // Predicated region
    $region30: #{hybrid_model_forward.1} parent=1 // pred_check
      _
    $region31: #{hybrid_model_forward.1} parent=1 // pred_check_branch
      %11220 = sbr.rel (0) target = $region33
    $region32: #{hybrid_model_forward.1} parent=1 // pred_region
      %11222 = dma.done [#allocation3], 32
    $region33: #{hybrid_model_forward.1} parent=1 // pred_fallthru
      _
    %11223 = vsyncpa [#allocation3], 1
    %11224 = vsyncpa [#allocation4], 1

</llo_original>
